<compile_context>
chip_gen: v5e
topology: v5e:2x2
jax: 0.10.0
libtpu: 0.0.40
codegen_flags: <defaults>
</compile_context>

<pallas_src>
import jax
import jax.numpy as jnp
from jax import lax
from jax.experimental import pallas as pl
from jax.experimental.pallas import tpu as pltpu
import numpy as np

INPUT_DIM = 30
HIDDEN = 128
NUM_LAYERS = 2
LIN_HIDDEN = 84
OUTPUT_DIM = 63
OUT_PAD = 128          # lane-dense padded output width


def lstm_mlp_kernel(x_ref,
                    wih0_ref, whh0_ref, b0_ref,
                    w1_ref, b1_ref,
                    wl_ref, bl_ref, wo_ref, bo_ref,
                    h0_ref, c0_ref,
                    out_ref, hN_ref, cN_ref,
                    xproj_ref, h1hist_ref):
    T = x_ref.shape[0]
    H = HIDDEN
    f32 = jnp.float32
    bf16 = jnp.bfloat16

    # ---- Prologue: batched layer-0 input projection for all timesteps ----
    xproj_ref[...] = (
        jnp.dot(x_ref[...].astype(bf16), wih0_ref[...],
                preferred_element_type=f32)
        + b0_ref[...])                                   # (T, 4H) f32

    def gates(g, c):
        # gate column order is (i, f, o | g): one sigmoid slab + one tanh slab
        s = jax.nn.sigmoid(g[:, 0:3 * H])                # (1, 3H)
        i = s[:, 0:H]
        f = s[:, H:2 * H]
        o = s[:, 2 * H:3 * H]
        gg = jnp.tanh(g[:, 3 * H:4 * H])
        c_n = f * c + i * gg
        h_n = o * jnp.tanh(c_n)
        return h_n, c_n

    def step(t, carry):
        h0, c0, h1, c1 = carry                           # each (1, H) f32

        # ---- LSTM layer 0: recurrent matmul only (input part precomputed) ----
        g0 = (xproj_ref[pl.ds(t, 1), :]
              + jnp.dot(h0.astype(bf16), whh0_ref[...],
                        preferred_element_type=f32))     # (1, 4H)
        h0n, c0n = gates(g0, c0)

        # ---- LSTM layer 1: fused [W_ih1; W_hh1] matmul (K = 2H) ----
        # (dropout skipped: eval semantics)
        hcat = jnp.concatenate([h0n.astype(bf16), h1.astype(bf16)], axis=1)
        g1 = (jnp.dot(hcat, w1_ref[...], preferred_element_type=f32)
              + b1_ref[...])                             # (1, 4H)
        h1n, c1n = gates(g1, c1)

        # record layer-1 hidden state for the deferred output MLP
        h1hist_ref[pl.ds(t, 1), :] = h1n
        return (h0n, c0n, h1n, c1n)

    h0 = h0_ref[0:1, :]
    c0 = c0_ref[0:1, :]
    h1 = h0_ref[1:2, :]
    c1 = c0_ref[1:2, :]

    unroll = True if T <= 32 else 8
    h0f, c0f, h1f, c1f = lax.fori_loop(0, T, step, (h0, c0, h1, c1),
                                       unroll=unroll)

    hN_ref[0:1, :] = h0f
    hN_ref[1:2, :] = h1f
    cN_ref[0:1, :] = c0f
    cN_ref[1:2, :] = c1f

    # ---- Epilogue: deferred Linear(128->84) + Linear(84->63), batched over T ----
    lin = (jnp.dot(h1hist_ref[...].astype(bf16), wl_ref[...],
                   preferred_element_type=f32)
           + bl_ref[...])                                # (T, 128) (cols 84: zero)
    out_ref[...] = (jnp.dot(lin.astype(bf16), wo_ref[...],
                            preferred_element_type=f32)
                    + bo_ref[...])                       # (T, 128), lane-dense store


def init_params(key):
    """Canonical PyTorch-layout parameters, U(-1/sqrt(fan_in_H), ...)."""
    k = 1.0 / np.sqrt(HIDDEN)
    ko = 1.0 / np.sqrt(LIN_HIDDEN)
    keys = jax.random.split(key, 12)

    def u(kk, shape, scale):
        return jax.random.uniform(kk, shape, jnp.float32, minval=-scale, maxval=scale)

    return dict(
        w_ih_l0=u(keys[0], (4 * HIDDEN, INPUT_DIM), k),
        w_hh_l0=u(keys[1], (4 * HIDDEN, HIDDEN), k),
        b_ih_l0=u(keys[2], (4 * HIDDEN,), k),
        b_hh_l0=u(keys[3], (4 * HIDDEN,), k),
        w_ih_l1=u(keys[4], (4 * HIDDEN, HIDDEN), k),
        w_hh_l1=u(keys[5], (4 * HIDDEN, HIDDEN), k),
        b_ih_l1=u(keys[6], (4 * HIDDEN,), k),
        b_hh_l1=u(keys[7], (4 * HIDDEN,), k),
        w_lin=u(keys[8], (LIN_HIDDEN, HIDDEN), k),
        b_lin=u(keys[9], (LIN_HIDDEN,), k),
        w_out=u(keys[10], (OUTPUT_DIM, LIN_HIDDEN), ko),
        b_out=u(keys[11], (OUTPUT_DIM,), ko),
    )


def prepare_kernel_params(p):
    """Kernel layout: gate columns permuted to (i,f,o,g), weights transposed to
    (K, N), bf16 matmul weights, f32 biases, fused layer-1 weight, lane-dense
    padded output Linears."""
    H = HIDDEN
    bf16 = jnp.bfloat16
    perm = np.concatenate([np.arange(0, 2 * H),          # i, f
                           np.arange(3 * H, 4 * H),      # o
                           np.arange(2 * H, 3 * H)])     # g

    def prep_lstm(w_ih, w_hh, b_ih, b_hh):
        w_ih_t = w_ih[perm].T.astype(bf16)               # (K_in, 4H)
        w_hh_t = w_hh[perm].T.astype(bf16)               # (H,   4H)
        b = (b_ih + b_hh)[perm].reshape(1, -1)           # (1,  4H) f32
        return w_ih_t, w_hh_t, b

    wih0, whh0, b0 = prep_lstm(p["w_ih_l0"], p["w_hh_l0"], p["b_ih_l0"], p["b_hh_l0"])
    wih1, whh1, b1 = prep_lstm(p["w_ih_l1"], p["w_hh_l1"], p["b_ih_l1"], p["b_hh_l1"])
    w1 = jnp.concatenate([wih1, whh1], axis=0)           # (2H, 4H) bf16

    # Linear(128 -> 84) padded to 128 output lanes
    wl = jnp.zeros((H, OUT_PAD), jnp.float32).at[:, :LIN_HIDDEN].set(p["w_lin"].T)
    bl = jnp.zeros((1, OUT_PAD), jnp.float32).at[:, :LIN_HIDDEN].set(p["b_lin"])
    # Linear(84 -> 63) padded to (128, 128)
    wo = jnp.zeros((OUT_PAD, OUT_PAD), jnp.float32).at[:LIN_HIDDEN, :OUTPUT_DIM].set(p["w_out"].T)
    bo = jnp.zeros((1, OUT_PAD), jnp.float32).at[:, :OUTPUT_DIM].set(p["b_out"])

    return dict(wih0=wih0, whh0=whh0, b0=b0,
                w1=w1, b1=b1,
                wl=wl.astype(bf16), bl=bl,
                wo=wo.astype(bf16), bo=bo)


def real_time_hand_lstm_forward(x_btf, params, h_init, c_init):
    """x_btf: (1, T, 30) batch_first; h_init/c_init: (2, 1, 128)."""
    assert x_btf.shape[0] == 1, "module's stored (h, c) imply batch = 1"
    T = x_btf.shape[1]
    kp = prepare_kernel_params(params)    # layout plumbing (precompute once in prod)
    x_tf = x_btf[0]                       # (T, 30)
    h0 = h_init[:, 0, :]                  # (2, 128)
    c0 = c_init[:, 0, :]                  # (2, 128)

    vspec = pl.BlockSpec(memory_space=pltpu.MemorySpace.VMEM)
    out_shapes = (
        jax.ShapeDtypeStruct((T, OUT_PAD), jnp.float32),          # padded output
        jax.ShapeDtypeStruct((NUM_LAYERS, HIDDEN), jnp.float32),  # h_N
        jax.ShapeDtypeStruct((NUM_LAYERS, HIDDEN), jnp.float32),  # c_N
    )
    out_pad, h_new, c_new = pl.pallas_call(
        lstm_mlp_kernel,
        out_shape=out_shapes,
        in_specs=[vspec] * 12,
        out_specs=(vspec, vspec, vspec),
        scratch_shapes=[pltpu.VMEM((T, 4 * HIDDEN), jnp.float32),  # X @ W_ih0 + b0
                        pltpu.VMEM((T, HIDDEN), jnp.float32)],     # per-step h1
    )(x_tf,
      kp["wih0"], kp["whh0"], kp["b0"],
      kp["w1"], kp["b1"],
      kp["wl"], kp["bl"], kp["wo"], kp["bo"],
      h0, c0)

    out = out_pad[:, :OUTPUT_DIM]
    return out[None, :, :], h_new[:, None, :], c_new[:, None, :]


def reference_forward(x_btf, params, h_init, c_init):
    """Pure-JAX reference (canonical PyTorch gate layout), mirroring the
    kernel's bf16-weight / f32-accumulation matmul precision."""
    H = HIDDEN
    bf16 = jnp.bfloat16
    f32 = jnp.float32
    x = x_btf[0]

    wih0 = params["w_ih_l0"].T.astype(bf16)
    whh0 = params["w_hh_l0"].T.astype(bf16)
    b0 = params["b_ih_l0"] + params["b_hh_l0"]
    wih1 = params["w_ih_l1"].T.astype(bf16)
    whh1 = params["w_hh_l1"].T.astype(bf16)
    b1 = params["b_ih_l1"] + params["b_hh_l1"]
    wl = params["w_lin"].T.astype(bf16)
    bl = params["b_lin"]
    wo = params["w_out"].T.astype(bf16)
    bo = params["b_out"]

    xproj = jnp.dot(x.astype(bf16), wih0, preferred_element_type=f32) + b0

    def cell(g, c):
        i = jax.nn.sigmoid(g[0:H])
        f = jax.nn.sigmoid(g[H:2 * H])
        gg = jnp.tanh(g[2 * H:3 * H])
        o = jax.nn.sigmoid(g[3 * H:4 * H])
        c_n = f * c + i * gg
        h_n = o * jnp.tanh(c_n)
        return h_n, c_n

    def step(carry, inp):
        h0, c0, h1, c1 = carry
        g0 = inp + jnp.dot(h0.astype(bf16), whh0, preferred_element_type=f32)
        h0, c0 = cell(g0, c0)
        g1 = (jnp.dot(h0.astype(bf16), wih1, preferred_element_type=f32)
              + jnp.dot(h1.astype(bf16), whh1, preferred_element_type=f32) + b1)
        h1, c1 = cell(g1, c1)
        return (h0, c0, h1, c1), h1

    carry0 = (h_init[0, 0], c_init[0, 0], h_init[1, 0], c_init[1, 0])
    (h0f, c0f, h1f, c1f), h1s = lax.scan(step, carry0, xproj)

    lin = jnp.dot(h1s.astype(bf16), wl, preferred_element_type=f32) + bl
    y = jnp.dot(lin.astype(bf16), wo, preferred_element_type=f32) + bo
    h_new = jnp.stack([h0f, h1f])[:, None, :]
    c_new = jnp.stack([c0f, c1f])[:, None, :]
    return y[None, :, :], h_new, c_new


if __name__ == "__main__":
    key = jax.random.PRNGKey(0)
    k_param, k_x = jax.random.split(key)

    params = init_params(k_param)

    B, T = 1, 8                    # batch must be 1 (module stores h, c with batch 1)
    x = jax.random.normal(k_x, (B, T, INPUT_DIM), dtype=jnp.float32)
    h_init = jnp.zeros((NUM_LAYERS, 1, HIDDEN), jnp.float32)
    c_init = jnp.zeros((NUM_LAYERS, 1, HIDDEN), jnp.float32)

    out, h_new, c_new = real_time_hand_lstm_forward(x, params, h_init, c_init)
    out = jax.block_until_ready(out)

    ref_out, ref_h, ref_c = reference_forward(x, params, h_init, c_init)
    ref_out = jax.block_until_ready(ref_out)

    np.testing.assert_allclose(np.asarray(out), np.asarray(ref_out), rtol=5e-3, atol=5e-3)
    np.testing.assert_allclose(np.asarray(h_new), np.asarray(ref_h), rtol=5e-3, atol=5e-3)
    np.testing.assert_allclose(np.asarray(c_new), np.asarray(ref_c), rtol=5e-3, atol=5e-3)

    assert out.shape == (B, T, OUTPUT_DIM)
    assert h_new.shape == (NUM_LAYERS, 1, HIDDEN)
    assert c_new.shape == (NUM_LAYERS, 1, HIDDEN)
    print("KERNEL_OK")
</pallas_src>

<mosaic_0001>
module attributes {stable_mosaic.version = 11 : i64} {
  func.func @lstm_mlp_kernel(%arg0: memref<8x30xf32, #tpu.memory_space<vmem>>, %arg1: memref<30x512xbf16, #tpu.memory_space<vmem>>, %arg2: memref<128x512xbf16, #tpu.memory_space<vmem>>, %arg3: memref<1x512xf32, #tpu.memory_space<vmem>>, %arg4: memref<256x512xbf16, #tpu.memory_space<vmem>>, %arg5: memref<1x512xf32, #tpu.memory_space<vmem>>, %arg6: memref<128x128xbf16, #tpu.memory_space<vmem>>, %arg7: memref<1x128xf32, #tpu.memory_space<vmem>>, %arg8: memref<128x128xbf16, #tpu.memory_space<vmem>>, %arg9: memref<1x128xf32, #tpu.memory_space<vmem>>, %arg10: memref<2x128xf32, #tpu.memory_space<vmem>>, %arg11: memref<2x128xf32, #tpu.memory_space<vmem>>, %arg12: memref<8x128xf32, #tpu.memory_space<vmem>>, %arg13: memref<2x128xf32, #tpu.memory_space<vmem>>, %arg14: memref<2x128xf32, #tpu.memory_space<vmem>>, %arg15: memref<8x512xf32, #tpu.memory_space<vmem>>, %arg16: memref<8x128xf32, #tpu.memory_space<vmem>>) attributes {dimension_semantics = [], scalar_prefetch = 0 : i64, scratch_operands = 2 : i64, tpu.core_type = #tpu.core_type<tc>} {
    %c0 = arith.constant 0 : index
    %c0_0 = arith.constant 0 : index
    %0 = vector.load %arg0[%c0, %c0_0] : memref<8x30xf32, #tpu.memory_space<vmem>>, vector<8x30xf32>
    %1 = arith.truncf %0 : vector<8x30xf32> to vector<8x30xbf16>
    %c0_1 = arith.constant 0 : index
    %c0_2 = arith.constant 0 : index
    %2 = vector.load %arg1[%c0_1, %c0_2] : memref<30x512xbf16, #tpu.memory_space<vmem>>, vector<30x512xbf16>
    %cst = arith.constant dense<0.000000e+00> : vector<8x512xf32>
    %3 = tpu.matmul %1, %2, %cst {dimension_numbers = #tpu.dot_dimension_numbers<[1], [0], [0], [1], [0, 0, 1, 1], [], []>} : vector<8x30xbf16>, vector<30x512xbf16>, vector<8x512xf32> -> vector<8x512xf32>
    %c0_3 = arith.constant 0 : index
    %c0_4 = arith.constant 0 : index
    %4 = vector.load %arg3[%c0_3, %c0_4] : memref<1x512xf32, #tpu.memory_space<vmem>>, vector<1x512xf32>
    %5 = vector.broadcast %4 : vector<1x512xf32> to vector<8x512xf32>
    %6 = arith.addf %3, %5 : vector<8x512xf32>
    %c0_5 = arith.constant 0 : index
    %c0_6 = arith.constant 0 : index
    %7 = vector.load %arg15[%c0_5, %c0_6] : memref<8x512xf32, #tpu.memory_space<vmem>>, vector<8x512xf32>
    tpu.vector_store %arg15[%c0_5, %c0_6], %6 {strides = array<i32>} : memref<8x512xf32, #tpu.memory_space<vmem>>, vector<8x512xf32>,
    %c0_7 = arith.constant 0 : index
    %c0_8 = arith.constant 0 : index
    %8 = vector.load %arg10[%c0_7, %c0_8] : memref<2x128xf32, #tpu.memory_space<vmem>>, vector<1x128xf32>
    %c0_9 = arith.constant 0 : index
    %c0_10 = arith.constant 0 : index
    %9 = vector.load %arg11[%c0_9, %c0_10] : memref<2x128xf32, #tpu.memory_space<vmem>>, vector<1x128xf32>
    %c1 = arith.constant 1 : index
    %c0_11 = arith.constant 0 : index
    %10 = vector.load %arg10[%c1, %c0_11] : memref<2x128xf32, #tpu.memory_space<vmem>>, vector<1x128xf32>
    %c1_12 = arith.constant 1 : index
    %c0_13 = arith.constant 0 : index
    %11 = vector.load %arg11[%c1_12, %c0_13] : memref<2x128xf32, #tpu.memory_space<vmem>>, vector<1x128xf32>
    %c0_i32 = arith.constant 0 : i32
    %12 = arith.index_cast %c0_i32 : i32 to index
    %c0_14 = arith.constant 0 : index
    %13 = vector.load %arg15[%12, %c0_14] : memref<8x512xf32, #tpu.memory_space<vmem>>, vector<1x512xf32>
    %14 = arith.truncf %8 : vector<1x128xf32> to vector<1x128xbf16>
    %c0_15 = arith.constant 0 : index
    %c0_16 = arith.constant 0 : index
    %15 = vector.load %arg2[%c0_15, %c0_16] : memref<128x512xbf16, #tpu.memory_space<vmem>>, vector<128x512xbf16>
    %cst_17 = arith.constant dense<0.000000e+00> : vector<1x512xf32>
    %16 = tpu.matmul %14, %15, %cst_17 {dimension_numbers = #tpu.dot_dimension_numbers<[1], [0], [0], [1], [0, 0, 1, 1], [], []>} : vector<1x128xbf16>, vector<128x512xbf16>, vector<1x512xf32> -> vector<1x512xf32>
    %17 = arith.addf %13, %16 : vector<1x512xf32>
    %18 = vector.extract_strided_slice %17 {offsets = [0, 0], sizes = [1, 384], strides = [1, 1]} : vector<1x512xf32> to vector<1x384xf32>
    %19 = arith.negf %18 : vector<1x384xf32>
    %20 = math.exp %19 : vector<1x384xf32>
    %cst_18 = arith.constant 1.000000e+00 : f32
    %21 = vector.broadcast %cst_18 : f32 to vector<1x384xf32>
    %22 = arith.addf %21, %20 : vector<1x384xf32>
    %23 = arith.divf %21, %22 : vector<1x384xf32>
    %24 = vector.extract_strided_slice %23 {offsets = [0, 0], sizes = [1, 128], strides = [1, 1]} : vector<1x384xf32> to vector<1x128xf32>
    %25 = vector.extract_strided_slice %23 {offsets = [0, 128], sizes = [1, 128], strides = [1, 1]} : vector<1x384xf32> to vector<1x128xf32>
    %26 = vector.extract_strided_slice %23 {offsets = [0, 256], sizes = [1, 128], strides = [1, 1]} : vector<1x384xf32> to vector<1x128xf32>
    %27 = vector.extract_strided_slice %17 {offsets = [0, 384], sizes = [1, 128], strides = [1, 1]} : vector<1x512xf32> to vector<1x128xf32>
    %28 = math.tanh %27 : vector<1x128xf32>
    %29 = arith.mulf %25, %9 : vector<1x128xf32>
    %30 = arith.mulf %24, %28 : vector<1x128xf32>
    %31 = arith.addf %29, %30 : vector<1x128xf32>
    %32 = math.tanh %31 : vector<1x128xf32>
    %33 = arith.mulf %26, %32 : vector<1x128xf32>
    %34 = arith.truncf %33 : vector<1x128xf32> to vector<1x128xbf16>
    %35 = arith.truncf %10 : vector<1x128xf32> to vector<1x128xbf16>
    %36 = tpu.concatenate %34, %35 in 1 : vector<1x128xbf16>, vector<1x128xbf16> -> vector<1x256xbf16>
    %c0_19 = arith.constant 0 : index
    %c0_20 = arith.constant 0 : index
    %37 = vector.load %arg4[%c0_19, %c0_20] : memref<256x512xbf16, #tpu.memory_space<vmem>>, vector<256x512xbf16>
    %cst_21 = arith.constant dense<0.000000e+00> : vector<1x512xf32>
    %38 = tpu.matmul %36, %37, %cst_21 {dimension_numbers = #tpu.dot_dimension_numbers<[1], [0], [0], [1], [0, 0, 1, 1], [], []>} : vector<1x256xbf16>, vector<256x512xbf16>, vector<1x512xf32> -> vector<1x512xf32>
    %c0_22 = arith.constant 0 : index
    %c0_23 = arith.constant 0 : index
    %39 = vector.load %arg5[%c0_22, %c0_23] : memref<1x512xf32, #tpu.memory_space<vmem>>, vector<1x512xf32>
    %40 = arith.addf %38, %39 : vector<1x512xf32>
    %41 = vector.extract_strided_slice %40 {offsets = [0, 0], sizes = [1, 384], strides = [1, 1]} : vector<1x512xf32> to vector<1x384xf32>
    %42 = arith.negf %41 : vector<1x384xf32>
    %43 = math.exp %42 : vector<1x384xf32>
    %cst_24 = arith.constant 1.000000e+00 : f32
    %44 = vector.broadcast %cst_24 : f32 to vector<1x384xf32>
    %45 = arith.addf %44, %43 : vector<1x384xf32>
    %46 = arith.divf %44, %45 : vector<1x384xf32>
    %47 = vector.extract_strided_slice %46 {offsets = [0, 0], sizes = [1, 128], strides = [1, 1]} : vector<1x384xf32> to vector<1x128xf32>
    %48 = vector.extract_strided_slice %46 {offsets = [0, 128], sizes = [1, 128], strides = [1, 1]} : vector<1x384xf32> to vector<1x128xf32>
    %49 = vector.extract_strided_slice %46 {offsets = [0, 256], sizes = [1, 128], strides = [1, 1]} : vector<1x384xf32> to vector<1x128xf32>
    %50 = vector.extract_strided_slice %40 {offsets = [0, 384], sizes = [1, 128], strides = [1, 1]} : vector<1x512xf32> to vector<1x128xf32>
    %51 = math.tanh %50 : vector<1x128xf32>
    %52 = arith.mulf %48, %11 : vector<1x128xf32>
    %53 = arith.mulf %47, %51 : vector<1x128xf32>
    %54 = arith.addf %52, %53 : vector<1x128xf32>
    %55 = math.tanh %54 : vector<1x128xf32>
    %56 = arith.mulf %49, %55 : vector<1x128xf32>
    %57 = arith.index_cast %c0_i32 : i32 to index
    %c0_25 = arith.constant 0 : index
    %58 = vector.load %arg16[%57, %c0_25] : memref<8x128xf32, #tpu.memory_space<vmem>>, vector<1x128xf32>
    tpu.vector_store %arg16[%57, %c0_25], %56 {strides = array<i32>} : memref<8x128xf32, #tpu.memory_space<vmem>>, vector<1x128xf32>,
    %c1_i32 = arith.constant 1 : i32
    %59 = arith.index_cast %c1_i32 : i32 to index
    %c0_26 = arith.constant 0 : index
    %60 = vector.load %arg15[%59, %c0_26] : memref<8x512xf32, #tpu.memory_space<vmem>>, vector<1x512xf32>
    %61 = arith.truncf %33 : vector<1x128xf32> to vector<1x128xbf16>
    %c0_27 = arith.constant 0 : index
    %c0_28 = arith.constant 0 : index
    %62 = vector.load %arg2[%c0_27, %c0_28] : memref<128x512xbf16, #tpu.memory_space<vmem>>, vector<128x512xbf16>
    %cst_29 = arith.constant dense<0.000000e+00> : vector<1x512xf32>
    %63 = tpu.matmul %61, %62, %cst_29 {dimension_numbers = #tpu.dot_dimension_numbers<[1], [0], [0], [1], [0, 0, 1, 1], [], []>} : vector<1x128xbf16>, vector<128x512xbf16>, vector<1x512xf32> -> vector<1x512xf32>
    %64 = arith.addf %60, %63 : vector<1x512xf32>
    %65 = vector.extract_strided_slice %64 {offsets = [0, 0], sizes = [1, 384], strides = [1, 1]} : vector<1x512xf32> to vector<1x384xf32>
    %66 = arith.negf %65 : vector<1x384xf32>
    %67 = math.exp %66 : vector<1x384xf32>
    %cst_30 = arith.constant 1.000000e+00 : f32
    %68 = vector.broadcast %cst_30 : f32 to vector<1x384xf32>
    %69 = arith.addf %68, %67 : vector<1x384xf32>
    %70 = arith.divf %68, %69 : vector<1x384xf32>
    %71 = vector.extract_strided_slice %70 {offsets = [0, 0], sizes = [1, 128], strides = [1, 1]} : vector<1x384xf32> to vector<1x128xf32>
    %72 = vector.extract_strided_slice %70 {offsets = [0, 128], sizes = [1, 128], strides = [1, 1]} : vector<1x384xf32> to vector<1x128xf32>
    %73 = vector.extract_strided_slice %70 {offsets = [0, 256], sizes = [1, 128], strides = [1, 1]} : vector<1x384xf32> to vector<1x128xf32>
    %74 = vector.extract_strided_slice %64 {offsets = [0, 384], sizes = [1, 128], strides = [1, 1]} : vector<1x512xf32> to vector<1x128xf32>
    %75 = math.tanh %74 : vector<1x128xf32>
    %76 = arith.mulf %72, %31 : vector<1x128xf32>
    %77 = arith.mulf %71, %75 : vector<1x128xf32>
    %78 = arith.addf %76, %77 : vector<1x128xf32>
    %79 = math.tanh %78 : vector<1x128xf32>
    %80 = arith.mulf %73, %79 : vector<1x128xf32>
    %81 = arith.truncf %80 : vector<1x128xf32> to vector<1x128xbf16>
    %82 = arith.truncf %56 : vector<1x128xf32> to vector<1x128xbf16>
    %83 = tpu.concatenate %81, %82 in 1 : vector<1x128xbf16>, vector<1x128xbf16> -> vector<1x256xbf16>
    %c0_31 = arith.constant 0 : index
    %c0_32 = arith.constant 0 : index
    %84 = vector.load %arg4[%c0_31, %c0_32] : memref<256x512xbf16, #tpu.memory_space<vmem>>, vector<256x512xbf16>
    %cst_33 = arith.constant dense<0.000000e+00> : vector<1x512xf32>
    %85 = tpu.matmul %83, %84, %cst_33 {dimension_numbers = #tpu.dot_dimension_numbers<[1], [0], [0], [1], [0, 0, 1, 1], [], []>} : vector<1x256xbf16>, vector<256x512xbf16>, vector<1x512xf32> -> vector<1x512xf32>
    %c0_34 = arith.constant 0 : index
    %c0_35 = arith.constant 0 : index
    %86 = vector.load %arg5[%c0_34, %c0_35] : memref<1x512xf32, #tpu.memory_space<vmem>>, vector<1x512xf32>
    %87 = arith.addf %85, %86 : vector<1x512xf32>
    %88 = vector.extract_strided_slice %87 {offsets = [0, 0], sizes = [1, 384], strides = [1, 1]} : vector<1x512xf32> to vector<1x384xf32>
    %89 = arith.negf %88 : vector<1x384xf32>
    %90 = math.exp %89 : vector<1x384xf32>
    %cst_36 = arith.constant 1.000000e+00 : f32
    %91 = vector.broadcast %cst_36 : f32 to vector<1x384xf32>
    %92 = arith.addf %91, %90 : vector<1x384xf32>
    %93 = arith.divf %91, %92 : vector<1x384xf32>
    %94 = vector.extract_strided_slice %93 {offsets = [0, 0], sizes = [1, 128], strides = [1, 1]} : vector<1x384xf32> to vector<1x128xf32>
    %95 = vector.extract_strided_slice %93 {offsets = [0, 128], sizes = [1, 128], strides = [1, 1]} : vector<1x384xf32> to vector<1x128xf32>
    %96 = vector.extract_strided_slice %93 {offsets = [0, 256], sizes = [1, 128], strides = [1, 1]} : vector<1x384xf32> to vector<1x128xf32>
    %97 = vector.extract_strided_slice %87 {offsets = [0, 384], sizes = [1, 128], strides = [1, 1]} : vector<1x512xf32> to vector<1x128xf32>
    %98 = math.tanh %97 : vector<1x128xf32>
    %99 = arith.mulf %95, %54 : vector<1x128xf32>
    %100 = arith.mulf %94, %98 : vector<1x128xf32>
    %101 = arith.addf %99, %100 : vector<1x128xf32>
    %102 = math.tanh %101 : vector<1x128xf32>
    %103 = arith.mulf %96, %102 : vector<1x128xf32>
    %104 = arith.index_cast %c1_i32 : i32 to index
    %c0_37 = arith.constant 0 : index
    %105 = vector.load %arg16[%104, %c0_37] : memref<8x128xf32, #tpu.memory_space<vmem>>, vector<1x128xf32>
    tpu.vector_store %arg16[%104, %c0_37], %103 {strides = array<i32>} : memref<8x128xf32, #tpu.memory_space<vmem>>, vector<1x128xf32>,
    %c2_i32 = arith.constant 2 : i32
    %106 = arith.index_cast %c2_i32 : i32 to index
    %c0_38 = arith.constant 0 : index
    %107 = vector.load %arg15[%106, %c0_38] : memref<8x512xf32, #tpu.memory_space<vmem>>, vector<1x512xf32>
    %108 = arith.truncf %80 : vector<1x128xf32> to vector<1x128xbf16>
    %c0_39 = arith.constant 0 : index
    %c0_40 = arith.constant 0 : index
    %109 = vector.load %arg2[%c0_39, %c0_40] : memref<128x512xbf16, #tpu.memory_space<vmem>>, vector<128x512xbf16>
    %cst_41 = arith.constant dense<0.000000e+00> : vector<1x512xf32>
    %110 = tpu.matmul %108, %109, %cst_41 {dimension_numbers = #tpu.dot_dimension_numbers<[1], [0], [0], [1], [0, 0, 1, 1], [], []>} : vector<1x128xbf16>, vector<128x512xbf16>, vector<1x512xf32> -> vector<1x512xf32>
    %111 = arith.addf %107, %110 : vector<1x512xf32>
    %112 = vector.extract_strided_slice %111 {offsets = [0, 0], sizes = [1, 384], strides = [1, 1]} : vector<1x512xf32> to vector<1x384xf32>
    %113 = arith.negf %112 : vector<1x384xf32>
    %114 = math.exp %113 : vector<1x384xf32>
    %cst_42 = arith.constant 1.000000e+00 : f32
    %115 = vector.broadcast %cst_42 : f32 to vector<1x384xf32>
    %116 = arith.addf %115, %114 : vector<1x384xf32>
    %117 = arith.divf %115, %116 : vector<1x384xf32>
    %118 = vector.extract_strided_slice %117 {offsets = [0, 0], sizes = [1, 128], strides = [1, 1]} : vector<1x384xf32> to vector<1x128xf32>
    %119 = vector.extract_strided_slice %117 {offsets = [0, 128], sizes = [1, 128], strides = [1, 1]} : vector<1x384xf32> to vector<1x128xf32>
    %120 = vector.extract_strided_slice %117 {offsets = [0, 256], sizes = [1, 128], strides = [1, 1]} : vector<1x384xf32> to vector<1x128xf32>
    %121 = vector.extract_strided_slice %111 {offsets = [0, 384], sizes = [1, 128], strides = [1, 1]} : vector<1x512xf32> to vector<1x128xf32>
    %122 = math.tanh %121 : vector<1x128xf32>
    %123 = arith.mulf %119, %78 : vector<1x128xf32>
    %124 = arith.mulf %118, %122 : vector<1x128xf32>
    %125 = arith.addf %123, %124 : vector<1x128xf32>
    %126 = math.tanh %125 : vector<1x128xf32>
    %127 = arith.mulf %120, %126 : vector<1x128xf32>
    %128 = arith.truncf %127 : vector<1x128xf32> to vector<1x128xbf16>
    %129 = arith.truncf %103 : vector<1x128xf32> to vector<1x128xbf16>
    %130 = tpu.concatenate %128, %129 in 1 : vector<1x128xbf16>, vector<1x128xbf16> -> vector<1x256xbf16>
    %c0_43 = arith.constant 0 : index
    %c0_44 = arith.constant 0 : index
    %131 = vector.load %arg4[%c0_43, %c0_44] : memref<256x512xbf16, #tpu.memory_space<vmem>>, vector<256x512xbf16>
    %cst_45 = arith.constant dense<0.000000e+00> : vector<1x512xf32>
    %132 = tpu.matmul %130, %131, %cst_45 {dimension_numbers = #tpu.dot_dimension_numbers<[1], [0], [0], [1], [0, 0, 1, 1], [], []>} : vector<1x256xbf16>, vector<256x512xbf16>, vector<1x512xf32> -> vector<1x512xf32>
    %c0_46 = arith.constant 0 : index
    %c0_47 = arith.constant 0 : index
    %133 = vector.load %arg5[%c0_46, %c0_47] : memref<1x512xf32, #tpu.memory_space<vmem>>, vector<1x512xf32>
    %134 = arith.addf %132, %133 : vector<1x512xf32>
    %135 = vector.extract_strided_slice %134 {offsets = [0, 0], sizes = [1, 384], strides = [1, 1]} : vector<1x512xf32> to vector<1x384xf32>
    %136 = arith.negf %135 : vector<1x384xf32>
    %137 = math.exp %136 : vector<1x384xf32>
    %cst_48 = arith.constant 1.000000e+00 : f32
    %138 = vector.broadcast %cst_48 : f32 to vector<1x384xf32>
    %139 = arith.addf %138, %137 : vector<1x384xf32>
    %140 = arith.divf %138, %139 : vector<1x384xf32>
    %141 = vector.extract_strided_slice %140 {offsets = [0, 0], sizes = [1, 128], strides = [1, 1]} : vector<1x384xf32> to vector<1x128xf32>
    %142 = vector.extract_strided_slice %140 {offsets = [0, 128], sizes = [1, 128], strides = [1, 1]} : vector<1x384xf32> to vector<1x128xf32>
    %143 = vector.extract_strided_slice %140 {offsets = [0, 256], sizes = [1, 128], strides = [1, 1]} : vector<1x384xf32> to vector<1x128xf32>
    %144 = vector.extract_strided_slice %134 {offsets = [0, 384], sizes = [1, 128], strides = [1, 1]} : vector<1x512xf32> to vector<1x128xf32>
    %145 = math.tanh %144 : vector<1x128xf32>
    %146 = arith.mulf %142, %101 : vector<1x128xf32>
    %147 = arith.mulf %141, %145 : vector<1x128xf32>
    %148 = arith.addf %146, %147 : vector<1x128xf32>
    %149 = math.tanh %148 : vector<1x128xf32>
    %150 = arith.mulf %143, %149 : vector<1x128xf32>
    %151 = arith.index_cast %c2_i32 : i32 to index
    %c0_49 = arith.constant 0 : index
    %152 = vector.load %arg16[%151, %c0_49] : memref<8x128xf32, #tpu.memory_space<vmem>>, vector<1x128xf32>
    tpu.vector_store %arg16[%151, %c0_49], %150 {strides = array<i32>} : memref<8x128xf32, #tpu.memory_space<vmem>>, vector<1x128xf32>,
    %c3_i32 = arith.constant 3 : i32
    %153 = arith.index_cast %c3_i32 : i32 to index
    %c0_50 = arith.constant 0 : index
    %154 = vector.load %arg15[%153, %c0_50] : memref<8x512xf32, #tpu.memory_space<vmem>>, vector<1x512xf32>
    %155 = arith.truncf %127 : vector<1x128xf32> to vector<1x128xbf16>
    %c0_51 = arith.constant 0 : index
    %c0_52 = arith.constant 0 : index
    %156 = vector.load %arg2[%c0_51, %c0_52] : memref<128x512xbf16, #tpu.memory_space<vmem>>, vector<128x512xbf16>
    %cst_53 = arith.constant dense<0.000000e+00> : vector<1x512xf32>
    %157 = tpu.matmul %155, %156, %cst_53 {dimension_numbers = #tpu.dot_dimension_numbers<[1], [0], [0], [1], [0, 0, 1, 1], [], []>} : vector<1x128xbf16>, vector<128x512xbf16>, vector<1x512xf32> -> vector<1x512xf32>
    %158 = arith.addf %154, %157 : vector<1x512xf32>
    %159 = vector.extract_strided_slice %158 {offsets = [0, 0], sizes = [1, 384], strides = [1, 1]} : vector<1x512xf32> to vector<1x384xf32>
    %160 = arith.negf %159 : vector<1x384xf32>
    %161 = math.exp %160 : vector<1x384xf32>
    %cst_54 = arith.constant 1.000000e+00 : f32
    %162 = vector.broadcast %cst_54 : f32 to vector<1x384xf32>
    %163 = arith.addf %162, %161 : vector<1x384xf32>
    %164 = arith.divf %162, %163 : vector<1x384xf32>
    %165 = vector.extract_strided_slice %164 {offsets = [0, 0], sizes = [1, 128], strides = [1, 1]} : vector<1x384xf32> to vector<1x128xf32>
    %166 = vector.extract_strided_slice %164 {offsets = [0, 128], sizes = [1, 128], strides = [1, 1]} : vector<1x384xf32> to vector<1x128xf32>
    %167 = vector.extract_strided_slice %164 {offsets = [0, 256], sizes = [1, 128], strides = [1, 1]} : vector<1x384xf32> to vector<1x128xf32>
    %168 = vector.extract_strided_slice %158 {offsets = [0, 384], sizes = [1, 128], strides = [1, 1]} : vector<1x512xf32> to vector<1x128xf32>
    %169 = math.tanh %168 : vector<1x128xf32>
    %170 = arith.mulf %166, %125 : vector<1x128xf32>
    %171 = arith.mulf %165, %169 : vector<1x128xf32>
    %172 = arith.addf %170, %171 : vector<1x128xf32>
    %173 = math.tanh %172 : vector<1x128xf32>
    %174 = arith.mulf %167, %173 : vector<1x128xf32>
    %175 = arith.truncf %174 : vector<1x128xf32> to vector<1x128xbf16>
    %176 = arith.truncf %150 : vector<1x128xf32> to vector<1x128xbf16>
    %177 = tpu.concatenate %175, %176 in 1 : vector<1x128xbf16>, vector<1x128xbf16> -> vector<1x256xbf16>
    %c0_55 = arith.constant 0 : index
    %c0_56 = arith.constant 0 : index
    %178 = vector.load %arg4[%c0_55, %c0_56] : memref<256x512xbf16, #tpu.memory_space<vmem>>, vector<256x512xbf16>
    %cst_57 = arith.constant dense<0.000000e+00> : vector<1x512xf32>
    %179 = tpu.matmul %177, %178, %cst_57 {dimension_numbers = #tpu.dot_dimension_numbers<[1], [0], [0], [1], [0, 0, 1, 1], [], []>} : vector<1x256xbf16>, vector<256x512xbf16>, vector<1x512xf32> -> vector<1x512xf32>
    %c0_58 = arith.constant 0 : index
    %c0_59 = arith.constant 0 : index
    %180 = vector.load %arg5[%c0_58, %c0_59] : memref<1x512xf32, #tpu.memory_space<vmem>>, vector<1x512xf32>
    %181 = arith.addf %179, %180 : vector<1x512xf32>
    %182 = vector.extract_strided_slice %181 {offsets = [0, 0], sizes = [1, 384], strides = [1, 1]} : vector<1x512xf32> to vector<1x384xf32>
    %183 = arith.negf %182 : vector<1x384xf32>
    %184 = math.exp %183 : vector<1x384xf32>
    %cst_60 = arith.constant 1.000000e+00 : f32
    %185 = vector.broadcast %cst_60 : f32 to vector<1x384xf32>
    %186 = arith.addf %185, %184 : vector<1x384xf32>
    %187 = arith.divf %185, %186 : vector<1x384xf32>
    %188 = vector.extract_strided_slice %187 {offsets = [0, 0], sizes = [1, 128], strides = [1, 1]} : vector<1x384xf32> to vector<1x128xf32>
    %189 = vector.extract_strided_slice %187 {offsets = [0, 128], sizes = [1, 128], strides = [1, 1]} : vector<1x384xf32> to vector<1x128xf32>
    %190 = vector.extract_strided_slice %187 {offsets = [0, 256], sizes = [1, 128], strides = [1, 1]} : vector<1x384xf32> to vector<1x128xf32>
    %191 = vector.extract_strided_slice %181 {offsets = [0, 384], sizes = [1, 128], strides = [1, 1]} : vector<1x512xf32> to vector<1x128xf32>
    %192 = math.tanh %191 : vector<1x128xf32>
    %193 = arith.mulf %189, %148 : vector<1x128xf32>
    %194 = arith.mulf %188, %192 : vector<1x128xf32>
    %195 = arith.addf %193, %194 : vector<1x128xf32>
    %196 = math.tanh %195 : vector<1x128xf32>
    %197 = arith.mulf %190, %196 : vector<1x128xf32>
    %198 = arith.index_cast %c3_i32 : i32 to index
    %c0_61 = arith.constant 0 : index
    %199 = vector.load %arg16[%198, %c0_61] : memref<8x128xf32, #tpu.memory_space<vmem>>, vector<1x128xf32>
    tpu.vector_store %arg16[%198, %c0_61], %197 {strides = array<i32>} : memref<8x128xf32, #tpu.memory_space<vmem>>, vector<1x128xf32>,
    %c4_i32 = arith.constant 4 : i32
    %200 = arith.index_cast %c4_i32 : i32 to index
    %c0_62 = arith.constant 0 : index
    %201 = vector.load %arg15[%200, %c0_62] : memref<8x512xf32, #tpu.memory_space<vmem>>, vector<1x512xf32>
    %202 = arith.truncf %174 : vector<1x128xf32> to vector<1x128xbf16>
    %c0_63 = arith.constant 0 : index
    %c0_64 = arith.constant 0 : index
    %203 = vector.load %arg2[%c0_63, %c0_64] : memref<128x512xbf16, #tpu.memory_space<vmem>>, vector<128x512xbf16>
    %cst_65 = arith.constant dense<0.000000e+00> : vector<1x512xf32>
    %204 = tpu.matmul %202, %203, %cst_65 {dimension_numbers = #tpu.dot_dimension_numbers<[1], [0], [0], [1], [0, 0, 1, 1], [], []>} : vector<1x128xbf16>, vector<128x512xbf16>, vector<1x512xf32> -> vector<1x512xf32>
    %205 = arith.addf %201, %204 : vector<1x512xf32>
    %206 = vector.extract_strided_slice %205 {offsets = [0, 0], sizes = [1, 384], strides = [1, 1]} : vector<1x512xf32> to vector<1x384xf32>
    %207 = arith.negf %206 : vector<1x384xf32>
    %208 = math.exp %207 : vector<1x384xf32>
    %cst_66 = arith.constant 1.000000e+00 : f32
    %209 = vector.broadcast %cst_66 : f32 to vector<1x384xf32>
    %210 = arith.addf %209, %208 : vector<1x384xf32>
    %211 = arith.divf %209, %210 : vector<1x384xf32>
    %212 = vector.extract_strided_slice %211 {offsets = [0, 0], sizes = [1, 128], strides = [1, 1]} : vector<1x384xf32> to vector<1x128xf32>
    %213 = vector.extract_strided_slice %211 {offsets = [0, 128], sizes = [1, 128], strides = [1, 1]} : vector<1x384xf32> to vector<1x128xf32>
    %214 = vector.extract_strided_slice %211 {offsets = [0, 256], sizes = [1, 128], strides = [1, 1]} : vector<1x384xf32> to vector<1x128xf32>
    %215 = vector.extract_strided_slice %205 {offsets = [0, 384], sizes = [1, 128], strides = [1, 1]} : vector<1x512xf32> to vector<1x128xf32>
    %216 = math.tanh %215 : vector<1x128xf32>
    %217 = arith.mulf %213, %172 : vector<1x128xf32>
    %218 = arith.mulf %212, %216 : vector<1x128xf32>
    %219 = arith.addf %217, %218 : vector<1x128xf32>
    %220 = math.tanh %219 : vector<1x128xf32>
    %221 = arith.mulf %214, %220 : vector<1x128xf32>
    %222 = arith.truncf %221 : vector<1x128xf32> to vector<1x128xbf16>
    %223 = arith.truncf %197 : vector<1x128xf32> to vector<1x128xbf16>
    %224 = tpu.concatenate %222, %223 in 1 : vector<1x128xbf16>, vector<1x128xbf16> -> vector<1x256xbf16>
    %c0_67 = arith.constant 0 : index
    %c0_68 = arith.constant 0 : index
    %225 = vector.load %arg4[%c0_67, %c0_68] : memref<256x512xbf16, #tpu.memory_space<vmem>>, vector<256x512xbf16>
    %cst_69 = arith.constant dense<0.000000e+00> : vector<1x512xf32>
    %226 = tpu.matmul %224, %225, %cst_69 {dimension_numbers = #tpu.dot_dimension_numbers<[1], [0], [0], [1], [0, 0, 1, 1], [], []>} : vector<1x256xbf16>, vector<256x512xbf16>, vector<1x512xf32> -> vector<1x512xf32>
    %c0_70 = arith.constant 0 : index
    %c0_71 = arith.constant 0 : index
    %227 = vector.load %arg5[%c0_70, %c0_71] : memref<1x512xf32, #tpu.memory_space<vmem>>, vector<1x512xf32>
    %228 = arith.addf %226, %227 : vector<1x512xf32>
    %229 = vector.extract_strided_slice %228 {offsets = [0, 0], sizes = [1, 384], strides = [1, 1]} : vector<1x512xf32> to vector<1x384xf32>
    %230 = arith.negf %229 : vector<1x384xf32>
    %231 = math.exp %230 : vector<1x384xf32>
    %cst_72 = arith.constant 1.000000e+00 : f32
    %232 = vector.broadcast %cst_72 : f32 to vector<1x384xf32>
    %233 = arith.addf %232, %231 : vector<1x384xf32>
    %234 = arith.divf %232, %233 : vector<1x384xf32>
    %235 = vector.extract_strided_slice %234 {offsets = [0, 0], sizes = [1, 128], strides = [1, 1]} : vector<1x384xf32> to vector<1x128xf32>
    %236 = vector.extract_strided_slice %234 {offsets = [0, 128], sizes = [1, 128], strides = [1, 1]} : vector<1x384xf32> to vector<1x128xf32>
    %237 = vector.extract_strided_slice %234 {offsets = [0, 256], sizes = [1, 128], strides = [1, 1]} : vector<1x384xf32> to vector<1x128xf32>
    %238 = vector.extract_strided_slice %228 {offsets = [0, 384], sizes = [1, 128], strides = [1, 1]} : vector<1x512xf32> to vector<1x128xf32>
    %239 = math.tanh %238 : vector<1x128xf32>
    %240 = arith.mulf %236, %195 : vector<1x128xf32>
    %241 = arith.mulf %235, %239 : vector<1x128xf32>
    %242 = arith.addf %240, %241 : vector<1x128xf32>
    %243 = math.tanh %242 : vector<1x128xf32>
    %244 = arith.mulf %237, %243 : vector<1x128xf32>
    %245 = arith.index_cast %c4_i32 : i32 to index
    %c0_73 = arith.constant 0 : index
    %246 = vector.load %arg16[%245, %c0_73] : memref<8x128xf32, #tpu.memory_space<vmem>>, vector<1x128xf32>
    tpu.vector_store %arg16[%245, %c0_73], %244 {strides = array<i32>} : memref<8x128xf32, #tpu.memory_space<vmem>>, vector<1x128xf32>,
    %c5_i32 = arith.constant 5 : i32
    %247 = arith.index_cast %c5_i32 : i32 to index
    %c0_74 = arith.constant 0 : index
    %248 = vector.load %arg15[%247, %c0_74] : memref<8x512xf32, #tpu.memory_space<vmem>>, vector<1x512xf32>
    %249 = arith.truncf %221 : vector<1x128xf32> to vector<1x128xbf16>
    %c0_75 = arith.constant 0 : index
    %c0_76 = arith.constant 0 : index
    %250 = vector.load %arg2[%c0_75, %c0_76] : memref<128x512xbf16, #tpu.memory_space<vmem>>, vector<128x512xbf16>
    %cst_77 = arith.constant dense<0.000000e+00> : vector<1x512xf32>
    %251 = tpu.matmul %249, %250, %cst_77 {dimension_numbers = #tpu.dot_dimension_numbers<[1], [0], [0], [1], [0, 0, 1, 1], [], []>} : vector<1x128xbf16>, vector<128x512xbf16>, vector<1x512xf32> -> vector<1x512xf32>
    %252 = arith.addf %248, %251 : vector<1x512xf32>
    %253 = vector.extract_strided_slice %252 {offsets = [0, 0], sizes = [1, 384], strides = [1, 1]} : vector<1x512xf32> to vector<1x384xf32>
    %254 = arith.negf %253 : vector<1x384xf32>
    %255 = math.exp %254 : vector<1x384xf32>
    %cst_78 = arith.constant 1.000000e+00 : f32
    %256 = vector.broadcast %cst_78 : f32 to vector<1x384xf32>
    %257 = arith.addf %256, %255 : vector<1x384xf32>
    %258 = arith.divf %256, %257 : vector<1x384xf32>
    %259 = vector.extract_strided_slice %258 {offsets = [0, 0], sizes = [1, 128], strides = [1, 1]} : vector<1x384xf32> to vector<1x128xf32>
    %260 = vector.extract_strided_slice %258 {offsets = [0, 128], sizes = [1, 128], strides = [1, 1]} : vector<1x384xf32> to vector<1x128xf32>
    %261 = vector.extract_strided_slice %258 {offsets = [0, 256], sizes = [1, 128], strides = [1, 1]} : vector<1x384xf32> to vector<1x128xf32>
    %262 = vector.extract_strided_slice %252 {offsets = [0, 384], sizes = [1, 128], strides = [1, 1]} : vector<1x512xf32> to vector<1x128xf32>
    %263 = math.tanh %262 : vector<1x128xf32>
    %264 = arith.mulf %260, %219 : vector<1x128xf32>
    %265 = arith.mulf %259, %263 : vector<1x128xf32>
    %266 = arith.addf %264, %265 : vector<1x128xf32>
    %267 = math.tanh %266 : vector<1x128xf32>
    %268 = arith.mulf %261, %267 : vector<1x128xf32>
    %269 = arith.truncf %268 : vector<1x128xf32> to vector<1x128xbf16>
    %270 = arith.truncf %244 : vector<1x128xf32> to vector<1x128xbf16>
    %271 = tpu.concatenate %269, %270 in 1 : vector<1x128xbf16>, vector<1x128xbf16> -> vector<1x256xbf16>
    %c0_79 = arith.constant 0 : index
    %c0_80 = arith.constant 0 : index
    %272 = vector.load %arg4[%c0_79, %c0_80] : memref<256x512xbf16, #tpu.memory_space<vmem>>, vector<256x512xbf16>
    %cst_81 = arith.constant dense<0.000000e+00> : vector<1x512xf32>
    %273 = tpu.matmul %271, %272, %cst_81 {dimension_numbers = #tpu.dot_dimension_numbers<[1], [0], [0], [1], [0, 0, 1, 1], [], []>} : vector<1x256xbf16>, vector<256x512xbf16>, vector<1x512xf32> -> vector<1x512xf32>
    %c0_82 = arith.constant 0 : index
    %c0_83 = arith.constant 0 : index
    %274 = vector.load %arg5[%c0_82, %c0_83] : memref<1x512xf32, #tpu.memory_space<vmem>>, vector<1x512xf32>
    %275 = arith.addf %273, %274 : vector<1x512xf32>
    %276 = vector.extract_strided_slice %275 {offsets = [0, 0], sizes = [1, 384], strides = [1, 1]} : vector<1x512xf32> to vector<1x384xf32>
    %277 = arith.negf %276 : vector<1x384xf32>
    %278 = math.exp %277 : vector<1x384xf32>
    %cst_84 = arith.constant 1.000000e+00 : f32
    %279 = vector.broadcast %cst_84 : f32 to vector<1x384xf32>
    %280 = arith.addf %279, %278 : vector<1x384xf32>
    %281 = arith.divf %279, %280 : vector<1x384xf32>
    %282 = vector.extract_strided_slice %281 {offsets = [0, 0], sizes = [1, 128], strides = [1, 1]} : vector<1x384xf32> to vector<1x128xf32>
    %283 = vector.extract_strided_slice %281 {offsets = [0, 128], sizes = [1, 128], strides = [1, 1]} : vector<1x384xf32> to vector<1x128xf32>
    %284 = vector.extract_strided_slice %281 {offsets = [0, 256], sizes = [1, 128], strides = [1, 1]} : vector<1x384xf32> to vector<1x128xf32>
    %285 = vector.extract_strided_slice %275 {offsets = [0, 384], sizes = [1, 128], strides = [1, 1]} : vector<1x512xf32> to vector<1x128xf32>
    %286 = math.tanh %285 : vector<1x128xf32>
    %287 = arith.mulf %283, %242 : vector<1x128xf32>
    %288 = arith.mulf %282, %286 : vector<1x128xf32>
    %289 = arith.addf %287, %288 : vector<1x128xf32>
    %290 = math.tanh %289 : vector<1x128xf32>
    %291 = arith.mulf %284, %290 : vector<1x128xf32>
    %292 = arith.index_cast %c5_i32 : i32 to index
    %c0_85 = arith.constant 0 : index
    %293 = vector.load %arg16[%292, %c0_85] : memref<8x128xf32, #tpu.memory_space<vmem>>, vector<1x128xf32>
    tpu.vector_store %arg16[%292, %c0_85], %291 {strides = array<i32>} : memref<8x128xf32, #tpu.memory_space<vmem>>, vector<1x128xf32>,
    %c6_i32 = arith.constant 6 : i32
    %294 = arith.index_cast %c6_i32 : i32 to index
    %c0_86 = arith.constant 0 : index
    %295 = vector.load %arg15[%294, %c0_86] : memref<8x512xf32, #tpu.memory_space<vmem>>, vector<1x512xf32>
    %296 = arith.truncf %268 : vector<1x128xf32> to vector<1x128xbf16>
    %c0_87 = arith.constant 0 : index
    %c0_88 = arith.constant 0 : index
    %297 = vector.load %arg2[%c0_87, %c0_88] : memref<128x512xbf16, #tpu.memory_space<vmem>>, vector<128x512xbf16>
    %cst_89 = arith.constant dense<0.000000e+00> : vector<1x512xf32>
    %298 = tpu.matmul %296, %297, %cst_89 {dimension_numbers = #tpu.dot_dimension_numbers<[1], [0], [0], [1], [0, 0, 1, 1], [], []>} : vector<1x128xbf16>, vector<128x512xbf16>, vector<1x512xf32> -> vector<1x512xf32>
    %299 = arith.addf %295, %298 : vector<1x512xf32>
    %300 = vector.extract_strided_slice %299 {offsets = [0, 0], sizes = [1, 384], strides = [1, 1]} : vector<1x512xf32> to vector<1x384xf32>
    %301 = arith.negf %300 : vector<1x384xf32>
    %302 = math.exp %301 : vector<1x384xf32>
    %cst_90 = arith.constant 1.000000e+00 : f32
    %303 = vector.broadcast %cst_90 : f32 to vector<1x384xf32>
    %304 = arith.addf %303, %302 : vector<1x384xf32>
    %305 = arith.divf %303, %304 : vector<1x384xf32>
    %306 = vector.extract_strided_slice %305 {offsets = [0, 0], sizes = [1, 128], strides = [1, 1]} : vector<1x384xf32> to vector<1x128xf32>
    %307 = vector.extract_strided_slice %305 {offsets = [0, 128], sizes = [1, 128], strides = [1, 1]} : vector<1x384xf32> to vector<1x128xf32>
    %308 = vector.extract_strided_slice %305 {offsets = [0, 256], sizes = [1, 128], strides = [1, 1]} : vector<1x384xf32> to vector<1x128xf32>
    %309 = vector.extract_strided_slice %299 {offsets = [0, 384], sizes = [1, 128], strides = [1, 1]} : vector<1x512xf32> to vector<1x128xf32>
    %310 = math.tanh %309 : vector<1x128xf32>
    %311 = arith.mulf %307, %266 : vector<1x128xf32>
    %312 = arith.mulf %306, %310 : vector<1x128xf32>
    %313 = arith.addf %311, %312 : vector<1x128xf32>
    %314 = math.tanh %313 : vector<1x128xf32>
    %315 = arith.mulf %308, %314 : vector<1x128xf32>
    %316 = arith.truncf %315 : vector<1x128xf32> to vector<1x128xbf16>
    %317 = arith.truncf %291 : vector<1x128xf32> to vector<1x128xbf16>
    %318 = tpu.concatenate %316, %317 in 1 : vector<1x128xbf16>, vector<1x128xbf16> -> vector<1x256xbf16>
    %c0_91 = arith.constant 0 : index
    %c0_92 = arith.constant 0 : index
    %319 = vector.load %arg4[%c0_91, %c0_92] : memref<256x512xbf16, #tpu.memory_space<vmem>>, vector<256x512xbf16>
    %cst_93 = arith.constant dense<0.000000e+00> : vector<1x512xf32>
    %320 = tpu.matmul %318, %319, %cst_93 {dimension_numbers = #tpu.dot_dimension_numbers<[1], [0], [0], [1], [0, 0, 1, 1], [], []>} : vector<1x256xbf16>, vector<256x512xbf16>, vector<1x512xf32> -> vector<1x512xf32>
    %c0_94 = arith.constant 0 : index
    %c0_95 = arith.constant 0 : index
    %321 = vector.load %arg5[%c0_94, %c0_95] : memref<1x512xf32, #tpu.memory_space<vmem>>, vector<1x512xf32>
    %322 = arith.addf %320, %321 : vector<1x512xf32>
    %323 = vector.extract_strided_slice %322 {offsets = [0, 0], sizes = [1, 384], strides = [1, 1]} : vector<1x512xf32> to vector<1x384xf32>
    %324 = arith.negf %323 : vector<1x384xf32>
    %325 = math.exp %324 : vector<1x384xf32>
    %cst_96 = arith.constant 1.000000e+00 : f32
    %326 = vector.broadcast %cst_96 : f32 to vector<1x384xf32>
    %327 = arith.addf %326, %325 : vector<1x384xf32>
    %328 = arith.divf %326, %327 : vector<1x384xf32>
    %329 = vector.extract_strided_slice %328 {offsets = [0, 0], sizes = [1, 128], strides = [1, 1]} : vector<1x384xf32> to vector<1x128xf32>
    %330 = vector.extract_strided_slice %328 {offsets = [0, 128], sizes = [1, 128], strides = [1, 1]} : vector<1x384xf32> to vector<1x128xf32>
    %331 = vector.extract_strided_slice %328 {offsets = [0, 256], sizes = [1, 128], strides = [1, 1]} : vector<1x384xf32> to vector<1x128xf32>
    %332 = vector.extract_strided_slice %322 {offsets = [0, 384], sizes = [1, 128], strides = [1, 1]} : vector<1x512xf32> to vector<1x128xf32>
    %333 = math.tanh %332 : vector<1x128xf32>
    %334 = arith.mulf %330, %289 : vector<1x128xf32>
    %335 = arith.mulf %329, %333 : vector<1x128xf32>
    %336 = arith.addf %334, %335 : vector<1x128xf32>
    %337 = math.tanh %336 : vector<1x128xf32>
    %338 = arith.mulf %331, %337 : vector<1x128xf32>
    %339 = arith.index_cast %c6_i32 : i32 to index
    %c0_97 = arith.constant 0 : index
    %340 = vector.load %arg16[%339, %c0_97] : memref<8x128xf32, #tpu.memory_space<vmem>>, vector<1x128xf32>
    tpu.vector_store %arg16[%339, %c0_97], %338 {strides = array<i32>} : memref<8x128xf32, #tpu.memory_space<vmem>>, vector<1x128xf32>,
    %c7_i32 = arith.constant 7 : i32
    %341 = arith.index_cast %c7_i32 : i32 to index
    %c0_98 = arith.constant 0 : index
    %342 = vector.load %arg15[%341, %c0_98] : memref<8x512xf32, #tpu.memory_space<vmem>>, vector<1x512xf32>
    %343 = arith.truncf %315 : vector<1x128xf32> to vector<1x128xbf16>
    %c0_99 = arith.constant 0 : index
    %c0_100 = arith.constant 0 : index
    %344 = vector.load %arg2[%c0_99, %c0_100] : memref<128x512xbf16, #tpu.memory_space<vmem>>, vector<128x512xbf16>
    %cst_101 = arith.constant dense<0.000000e+00> : vector<1x512xf32>
    %345 = tpu.matmul %343, %344, %cst_101 {dimension_numbers = #tpu.dot_dimension_numbers<[1], [0], [0], [1], [0, 0, 1, 1], [], []>} : vector<1x128xbf16>, vector<128x512xbf16>, vector<1x512xf32> -> vector<1x512xf32>
    %346 = arith.addf %342, %345 : vector<1x512xf32>
    %347 = vector.extract_strided_slice %346 {offsets = [0, 0], sizes = [1, 384], strides = [1, 1]} : vector<1x512xf32> to vector<1x384xf32>
    %348 = arith.negf %347 : vector<1x384xf32>
    %349 = math.exp %348 : vector<1x384xf32>
    %cst_102 = arith.constant 1.000000e+00 : f32
    %350 = vector.broadcast %cst_102 : f32 to vector<1x384xf32>
    %351 = arith.addf %350, %349 : vector<1x384xf32>
    %352 = arith.divf %350, %351 : vector<1x384xf32>
    %353 = vector.extract_strided_slice %352 {offsets = [0, 0], sizes = [1, 128], strides = [1, 1]} : vector<1x384xf32> to vector<1x128xf32>
    %354 = vector.extract_strided_slice %352 {offsets = [0, 128], sizes = [1, 128], strides = [1, 1]} : vector<1x384xf32> to vector<1x128xf32>
    %355 = vector.extract_strided_slice %352 {offsets = [0, 256], sizes = [1, 128], strides = [1, 1]} : vector<1x384xf32> to vector<1x128xf32>
    %356 = vector.extract_strided_slice %346 {offsets = [0, 384], sizes = [1, 128], strides = [1, 1]} : vector<1x512xf32> to vector<1x128xf32>
    %357 = math.tanh %356 : vector<1x128xf32>
    %358 = arith.mulf %354, %313 : vector<1x128xf32>
    %359 = arith.mulf %353, %357 : vector<1x128xf32>
    %360 = arith.addf %358, %359 : vector<1x128xf32>
    %361 = math.tanh %360 : vector<1x128xf32>
    %362 = arith.mulf %355, %361 : vector<1x128xf32>
    %363 = arith.truncf %362 : vector<1x128xf32> to vector<1x128xbf16>
    %364 = arith.truncf %338 : vector<1x128xf32> to vector<1x128xbf16>
    %365 = tpu.concatenate %363, %364 in 1 : vector<1x128xbf16>, vector<1x128xbf16> -> vector<1x256xbf16>
    %c0_103 = arith.constant 0 : index
    %c0_104 = arith.constant 0 : index
    %366 = vector.load %arg4[%c0_103, %c0_104] : memref<256x512xbf16, #tpu.memory_space<vmem>>, vector<256x512xbf16>
    %cst_105 = arith.constant dense<0.000000e+00> : vector<1x512xf32>
    %367 = tpu.matmul %365, %366, %cst_105 {dimension_numbers = #tpu.dot_dimension_numbers<[1], [0], [0], [1], [0, 0, 1, 1], [], []>} : vector<1x256xbf16>, vector<256x512xbf16>, vector<1x512xf32> -> vector<1x512xf32>
    %c0_106 = arith.constant 0 : index
    %c0_107 = arith.constant 0 : index
    %368 = vector.load %arg5[%c0_106, %c0_107] : memref<1x512xf32, #tpu.memory_space<vmem>>, vector<1x512xf32>
    %369 = arith.addf %367, %368 : vector<1x512xf32>
    %370 = vector.extract_strided_slice %369 {offsets = [0, 0], sizes = [1, 384], strides = [1, 1]} : vector<1x512xf32> to vector<1x384xf32>
    %371 = arith.negf %370 : vector<1x384xf32>
    %372 = math.exp %371 : vector<1x384xf32>
    %cst_108 = arith.constant 1.000000e+00 : f32
    %373 = vector.broadcast %cst_108 : f32 to vector<1x384xf32>
    %374 = arith.addf %373, %372 : vector<1x384xf32>
    %375 = arith.divf %373, %374 : vector<1x384xf32>
    %376 = vector.extract_strided_slice %375 {offsets = [0, 0], sizes = [1, 128], strides = [1, 1]} : vector<1x384xf32> to vector<1x128xf32>
    %377 = vector.extract_strided_slice %375 {offsets = [0, 128], sizes = [1, 128], strides = [1, 1]} : vector<1x384xf32> to vector<1x128xf32>
    %378 = vector.extract_strided_slice %375 {offsets = [0, 256], sizes = [1, 128], strides = [1, 1]} : vector<1x384xf32> to vector<1x128xf32>
    %379 = vector.extract_strided_slice %369 {offsets = [0, 384], sizes = [1, 128], strides = [1, 1]} : vector<1x512xf32> to vector<1x128xf32>
    %380 = math.tanh %379 : vector<1x128xf32>
    %381 = arith.mulf %377, %336 : vector<1x128xf32>
    %382 = arith.mulf %376, %380 : vector<1x128xf32>
    %383 = arith.addf %381, %382 : vector<1x128xf32>
    %384 = math.tanh %383 : vector<1x128xf32>
    %385 = arith.mulf %378, %384 : vector<1x128xf32>
    %386 = arith.index_cast %c7_i32 : i32 to index
    %c0_109 = arith.constant 0 : index
    %387 = vector.load %arg16[%386, %c0_109] : memref<8x128xf32, #tpu.memory_space<vmem>>, vector<1x128xf32>
    tpu.vector_store %arg16[%386, %c0_109], %385 {strides = array<i32>} : memref<8x128xf32, #tpu.memory_space<vmem>>, vector<1x128xf32>,
    %c8_i32 = arith.constant 8 : i32
    %c0_110 = arith.constant 0 : index
    %c0_111 = arith.constant 0 : index
    %388 = vector.load %arg13[%c0_110, %c0_111] : memref<2x128xf32, #tpu.memory_space<vmem>>, vector<1x128xf32>
    tpu.vector_store %arg13[%c0_110, %c0_111], %362 {strides = array<i32>} : memref<2x128xf32, #tpu.memory_space<vmem>>, vector<1x128xf32>,
    %c1_112 = arith.constant 1 : index
    %c0_113 = arith.constant 0 : index
    %389 = vector.load %arg13[%c1_112, %c0_113] : memref<2x128xf32, #tpu.memory_space<vmem>>, vector<1x128xf32>
    tpu.vector_store %arg13[%c1_112, %c0_113], %385 {strides = array<i32>} : memref<2x128xf32, #tpu.memory_space<vmem>>, vector<1x128xf32>,
    %c0_114 = arith.constant 0 : index
    %c0_115 = arith.constant 0 : index
    %390 = vector.load %arg14[%c0_114, %c0_115] : memref<2x128xf32, #tpu.memory_space<vmem>>, vector<1x128xf32>
    tpu.vector_store %arg14[%c0_114, %c0_115], %360 {strides = array<i32>} : memref<2x128xf32, #tpu.memory_space<vmem>>, vector<1x128xf32>,
    %c1_116 = arith.constant 1 : index
    %c0_117 = arith.constant 0 : index
    %391 = vector.load %arg14[%c1_116, %c0_117] : memref<2x128xf32, #tpu.memory_space<vmem>>, vector<1x128xf32>
    tpu.vector_store %arg14[%c1_116, %c0_117], %383 {strides = array<i32>} : memref<2x128xf32, #tpu.memory_space<vmem>>, vector<1x128xf32>,
    %c0_118 = arith.constant 0 : index
    %c0_119 = arith.constant 0 : index
    %392 = vector.load %arg16[%c0_118, %c0_119] : memref<8x128xf32, #tpu.memory_space<vmem>>, vector<8x128xf32>
    %393 = arith.truncf %392 : vector<8x128xf32> to vector<8x128xbf16>
    %c0_120 = arith.constant 0 : index
    %c0_121 = arith.constant 0 : index
    %394 = vector.load %arg6[%c0_120, %c0_121] : memref<128x128xbf16, #tpu.memory_space<vmem>>, vector<128x128xbf16>
    %cst_122 = arith.constant dense<0.000000e+00> : vector<8x128xf32>
    %395 = tpu.matmul %393, %394, %cst_122 {dimension_numbers = #tpu.dot_dimension_numbers<[1], [0], [0], [1], [0, 0, 1, 1], [], []>} : vector<8x128xbf16>, vector<128x128xbf16>, vector<8x128xf32> -> vector<8x128xf32>
    %c0_123 = arith.constant 0 : index
    %c0_124 = arith.constant 0 : index
    %396 = vector.load %arg7[%c0_123, %c0_124] : memref<1x128xf32, #tpu.memory_space<vmem>>, vector<1x128xf32>
    %397 = vector.broadcast %396 : vector<1x128xf32> to vector<8x128xf32>
    %398 = arith.addf %395, %397 : vector<8x128xf32>
    %399 = arith.truncf %398 : vector<8x128xf32> to vector<8x128xbf16>
    %c0_125 = arith.constant 0 : index
    %c0_126 = arith.constant 0 : index
    %400 = vector.load %arg8[%c0_125, %c0_126] : memref<128x128xbf16, #tpu.memory_space<vmem>>, vector<128x128xbf16>
    %cst_127 = arith.constant dense<0.000000e+00> : vector<8x128xf32>
    %401 = tpu.matmul %399, %400, %cst_127 {dimension_numbers = #tpu.dot_dimension_numbers<[1], [0], [0], [1], [0, 0, 1, 1], [], []>} : vector<8x128xbf16>, vector<128x128xbf16>, vector<8x128xf32> -> vector<8x128xf32>
    %c0_128 = arith.constant 0 : index
    %c0_129 = arith.constant 0 : index
    %402 = vector.load %arg9[%c0_128, %c0_129] : memref<1x128xf32, #tpu.memory_space<vmem>>, vector<1x128xf32>
    %403 = vector.broadcast %402 : vector<1x128xf32> to vector<8x128xf32>
    %404 = arith.addf %401, %403 : vector<8x128xf32>
    %c0_130 = arith.constant 0 : index
    %c0_131 = arith.constant 0 : index
    %405 = vector.load %arg12[%c0_130, %c0_131] : memref<8x128xf32, #tpu.memory_space<vmem>>, vector<8x128xf32>
    tpu.vector_store %arg12[%c0_130, %c0_131], %404 {strides = array<i32>} : memref<8x128xf32, #tpu.memory_space<vmem>>, vector<8x128xf32>,
    return
  }
}

</mosaic_0001>

<llo_original>
// kernel: tpu_custom_call.1
$region0: #{tpu_custom_call.1}
  #allocation0 [shape = 'u32[]', space=smem, size = 0x4, offset = 0x4, fixed_abs, tag = 'smem constant byte address 0x4 - core index']
  #allocation1 [shape = 'u32[72,128]{1,0:T(1,128)}', space=vmem, size = 0x9000, scoped, tag = 'internal scratch']
  #allocation2 [shape = 'f32[8,512]{1,0:T(8,128)}', space=vmem, size = 0x4000, scoped, tag = 'scratch operand']
  #allocation3 [shape = 'f32[8,128]{1,0:T(8,128)}', space=vmem, size = 0x1000, scoped, tag = 'scratch operand']
  %s0 = inlined_call_operand.hbm [shape: f32[8,30], index: 0, kind: input, shape index: {}]
  %s1 = inlined_call_operand.hbm [shape: bf16[30,512], index: 1, kind: input, shape index: {}]
  %s2 = inlined_call_operand.hbm [shape: bf16[128,512], index: 2, kind: input, shape index: {}]
  %s3 = inlined_call_operand.hbm [shape: f32[1,512], index: 3, kind: input, shape index: {}]
  %s4 = inlined_call_operand.hbm [shape: bf16[256,512], index: 4, kind: input, shape index: {}]
  %s5 = inlined_call_operand.vmem [shape: f32[1,512], index: 5, kind: input, shape index: {}]
  %s6 = inlined_call_operand.hbm [shape: bf16[128,128], index: 6, kind: input, shape index: {}]
  %s7 = inlined_call_operand.hbm [shape: f32[1,128], index: 7, kind: input, shape index: {}]
  %s8 = inlined_call_operand.hbm [shape: bf16[128,128], index: 8, kind: input, shape index: {}]
  %s9 = inlined_call_operand.hbm [shape: f32[1,128], index: 9, kind: input, shape index: {}]
  %s10 = inlined_call_operand.vmem [shape: f32[2,128], index: 10, kind: input, shape index: {}]
  %s11 = inlined_call_operand.vmem [shape: f32[2,128], index: 11, kind: input, shape index: {}]
  %s12 = inlined_call_operand.hbm [shape: f32[8,128], index: 12, kind: output, shape index: {0}]
  %s13 = inlined_call_operand.hbm [shape: f32[2,128], index: 13, kind: output, shape index: {1}]
  %s14 = inlined_call_operand.hbm [shape: f32[2,128], index: 14, kind: output, shape index: {2}]
  %15 = xla_tuple %s12, %s13, %s14
  %s16 = sld [smem:[#allocation0]]
  $region110: #{tpu_custom_call.1} parent=0
    _
  %s18 = ssub.s32 1, %s16
  %s19 = scalar_select 0, %s18, %s16
  $region1: #{tpu_custom_call.1} parent=0
    #allocation4 [shape = 'u8[4096]{0}', space=vmem, size = 0x1000, scoped, tag = 'input window, operand 0, single buffered']
    #allocation5 [shape = 's32[1]{0}', space=sflag, size = 0x4, scoped, tag = 'scoped memory for tpu_custom_call.1']
    #allocation6 [shape = 's32[1]{0}', space=sflag, size = 0x4, scoped, tag = 'scoped memory for tpu_custom_call.1']
    #allocation7 [shape = 'u8[32768]{0}', space=vmem, size = 0x8000, scoped, tag = 'input window, operand 1, single buffered']
    #allocation8 [shape = 's32[1]{0}', space=sflag, size = 0x4, scoped, tag = 'scoped memory for tpu_custom_call.1']
    #allocation9 [shape = 'u8[131072]{0}', space=vmem, size = 0x20000, scoped, tag = 'input window, operand 2, single buffered']
    #allocation10 [shape = 'u8[2048]{0}', space=vmem, size = 0x800, scoped, tag = 'input window, operand 3, single buffered']
    #allocation11 [shape = 's32[1]{0}', space=sflag, size = 0x4, scoped, tag = 'scoped memory for tpu_custom_call.1']
    #allocation12 [shape = 'u8[262144]{0}', space=vmem, size = 0x40000, scoped, tag = 'input window, operand 4, single buffered']
    #allocation13 [shape = 'u8[32768]{0}', space=vmem, size = 0x8000, scoped, tag = 'input window, operand 6, single buffered']
    #allocation14 [shape = 's32[1]{0}', space=sflag, size = 0x4, scoped, tag = 'scoped memory for tpu_custom_call.1']
    #allocation15 [shape = 'u8[512]{0}', space=vmem, size = 0x400, scoped, tag = 'input window, operand 7, single buffered']
    #allocation16 [shape = 'u8[32768]{0}', space=vmem, size = 0x8000, scoped, tag = 'input window, operand 8, single buffered']
    #allocation17 [shape = 's32[1]{0}', space=sflag, size = 0x4, scoped, tag = 'scoped memory for tpu_custom_call.1']
    #allocation18 [shape = 'u8[512]{0}', space=vmem, size = 0x400, scoped, tag = 'input window, operand 9, single buffered']
    #allocation19 [shape = 'u8[4096]{0}', space=vmem, size = 0x1000, scoped, tag = 'output window, operand 0, single buffered']
    #allocation20 [shape = 'u8[1024]{0}', space=vmem, size = 0x400, scoped, tag = 'output window, operand 1, single buffered']
    #allocation21 [shape = 's32[1]{0}', space=sflag, size = 0x4, scoped, tag = 'scoped memory for tpu_custom_call.1']
    #allocation22 [shape = 'u8[1024]{0}', space=vmem, size = 0x400, scoped, tag = 'output window, operand 2, single buffered']
    %20 = vsyncpa [#allocation5], 0
    %21 = vsyncpa [#allocation8], 0
    %22 = vsyncpa [#allocation11], 0
    %23 = vsyncpa [#allocation14], 0
    %24 = vsyncpa [#allocation17], 0
    %25 = vsyncpa [#allocation6], 0
    %26 = vsyncpa [#allocation21], 0
    // Predicated region
    $region2: #{tpu_custom_call.1} parent=1 // pred_check
      _
    $region3: #{tpu_custom_call.1} parent=1 // pred_check_branch
      %28 = sbr.rel (0) target = $region5
    $region4: #{tpu_custom_call.1} parent=1 // pred_region
      %30 = vsyncadd [#allocation5], 0
      %s32 = sshll.u32 %s0, 4
      %s33 = int_to_ptr.hbm [resolvable:$true] %s32
      %s34 = sshll.u32 [#allocation4], 4
      %s35 = int_to_ptr.vmem [resolvable:$true] %s34
      %37 = dma.hbm_to_vmem [thread:$0]  %s33, 128, %s35, [#allocation5]
    $region5: #{tpu_custom_call.1} parent=1 // pred_fallthru
      _
    // Predicated region
    $region6: #{tpu_custom_call.1} parent=1 // pred_check
      _
    $region7: #{tpu_custom_call.1} parent=1 // pred_check_branch
      %39 = sbr.rel (0) target = $region9
    $region8: #{tpu_custom_call.1} parent=1 // pred_region
      %41 = vsyncadd [#allocation8], 0
      %s42 = sshll.u32 %s1, 4
      %s43 = int_to_ptr.hbm [resolvable:$true] %s42
      %s44 = sshll.u32 [#allocation7], 4
      %s45 = int_to_ptr.vmem [resolvable:$true] %s44
      %50 = dma.hbm_to_vmem [thread:$0]  %s43, 1024, %s45, [#allocation8], 256, 256, 16
    $region9: #{tpu_custom_call.1} parent=1 // pred_fallthru
      _
    // Predicated region
    $region10: #{tpu_custom_call.1} parent=1 // pred_check
      _
    $region11: #{tpu_custom_call.1} parent=1 // pred_check_branch
      %52 = sbr.rel (0) target = $region13
    $region12: #{tpu_custom_call.1} parent=1 // pred_region
      %54 = vsyncadd [#allocation8], 0
      %s55 = sshll.u32 %s2, 4
      %s56 = int_to_ptr.hbm [resolvable:$true] %s55
      %s57 = sshll.u32 [#allocation9], 4
      %s58 = int_to_ptr.vmem [resolvable:$true] %s57
      %63 = dma.hbm_to_vmem [thread:$0]  %s56, 4096, %s58, [#allocation8], 256, 256, 16
    $region13: #{tpu_custom_call.1} parent=1 // pred_fallthru
      _
    // Predicated region
    $region14: #{tpu_custom_call.1} parent=1 // pred_check
      _
    $region15: #{tpu_custom_call.1} parent=1 // pred_check_branch
      %65 = sbr.rel (0) target = $region17
    $region16: #{tpu_custom_call.1} parent=1 // pred_region
      %67 = vsyncadd [#allocation11], 0
      %s69 = sshll.u32 %s3, 4
      %s70 = int_to_ptr.hbm [resolvable:$true] %s69
      %s71 = sshll.u32 [#allocation10], 4
      %s72 = int_to_ptr.vmem [resolvable:$true] %s71
      %74 = dma.hbm_to_vmem [thread:$0]  %s70, 64, %s72, [#allocation11]
    $region17: #{tpu_custom_call.1} parent=1 // pred_fallthru
      _
    // Predicated region
    $region18: #{tpu_custom_call.1} parent=1 // pred_check
      _
    $region19: #{tpu_custom_call.1} parent=1 // pred_check_branch
      %76 = sbr.rel (0) target = $region21
    $region20: #{tpu_custom_call.1} parent=1 // pred_region
      %78 = vsyncadd [#allocation11], 0
      %s79 = sshll.u32 %s4, 4
      %s80 = int_to_ptr.hbm [resolvable:$true] %s79
      %s81 = sshll.u32 [#allocation12], 4
      %s82 = int_to_ptr.vmem [resolvable:$true] %s81
      %87 = dma.hbm_to_vmem [thread:$0]  %s80, 8192, %s82, [#allocation11], 256, 256, 16
    $region21: #{tpu_custom_call.1} parent=1 // pred_fallthru
      _
    // Predicated region
    $region22: #{tpu_custom_call.1} parent=1 // pred_check
      _
    $region23: #{tpu_custom_call.1} parent=1 // pred_check_branch
      %89 = sbr.rel (0) target = $region25
    $region24: #{tpu_custom_call.1} parent=1 // pred_region
      _
    $region25: #{tpu_custom_call.1} parent=1 // pred_fallthru
      _
    // Predicated region
    $region26: #{tpu_custom_call.1} parent=1 // pred_check
      _
    $region27: #{tpu_custom_call.1} parent=1 // pred_check_branch
      %91 = sbr.rel (0) target = $region29
    $region28: #{tpu_custom_call.1} parent=1 // pred_region
      %93 = vsyncadd [#allocation14], 0
      %s94 = sshll.u32 %s6, 4
      %s95 = int_to_ptr.hbm [resolvable:$true] %s94
      %s96 = sshll.u32 [#allocation13], 4
      %s97 = int_to_ptr.vmem [resolvable:$true] %s96
      %102 = dma.hbm_to_vmem [thread:$0]  %s95, 1024, %s97, [#allocation14], 64, 64, 4
    $region29: #{tpu_custom_call.1} parent=1 // pred_fallthru
      _
    // Predicated region
    $region30: #{tpu_custom_call.1} parent=1 // pred_check
      _
    $region31: #{tpu_custom_call.1} parent=1 // pred_check_branch
      %104 = sbr.rel (0) target = $region33
    $region32: #{tpu_custom_call.1} parent=1 // pred_region
      %106 = vsyncadd [#allocation14], 0
      %s108 = sshll.u32 %s7, 4
      %s109 = int_to_ptr.hbm [resolvable:$true] %s108
      %s110 = sshll.u32 [#allocation15], 4
      %s111 = int_to_ptr.vmem [resolvable:$true] %s110
      %113 = dma.hbm_to_vmem [thread:$0]  %s109, 16, %s111, [#allocation14]
    $region33: #{tpu_custom_call.1} parent=1 // pred_fallthru
      _
    // Predicated region
    $region34: #{tpu_custom_call.1} parent=1 // pred_check
      _
    $region35: #{tpu_custom_call.1} parent=1 // pred_check_branch
      %115 = sbr.rel (0) target = $region37
    $region36: #{tpu_custom_call.1} parent=1 // pred_region
      %117 = vsyncadd [#allocation17], 0
      %s118 = sshll.u32 %s8, 4
      %s119 = int_to_ptr.hbm [resolvable:$true] %s118
      %s120 = sshll.u32 [#allocation16], 4
      %s121 = int_to_ptr.vmem [resolvable:$true] %s120
      %126 = dma.hbm_to_vmem [thread:$0]  %s119, 1024, %s121, [#allocation17], 64, 64, 4
    $region37: #{tpu_custom_call.1} parent=1 // pred_fallthru
      _
    // Predicated region
    $region38: #{tpu_custom_call.1} parent=1 // pred_check
      _
    $region39: #{tpu_custom_call.1} parent=1 // pred_check_branch
      %128 = sbr.rel (0) target = $region41
    $region40: #{tpu_custom_call.1} parent=1 // pred_region
      %130 = vsyncadd [#allocation17], 0
      %s132 = sshll.u32 %s9, 4
      %s133 = int_to_ptr.hbm [resolvable:$true] %s132
      %s134 = sshll.u32 [#allocation18], 4
      %s135 = int_to_ptr.vmem [resolvable:$true] %s134
      %137 = dma.hbm_to_vmem [thread:$0]  %s133, 16, %s135, [#allocation17]
    $region41: #{tpu_custom_call.1} parent=1 // pred_fallthru
      _
    // Predicated region
    $region42: #{tpu_custom_call.1} parent=1 // pred_check
      _
    $region43: #{tpu_custom_call.1} parent=1 // pred_check_branch
      %139 = sbr.rel (0) target = $region45
    $region44: #{tpu_custom_call.1} parent=1 // pred_region
      _
    $region45: #{tpu_custom_call.1} parent=1 // pred_fallthru
      _
    // Predicated region
    $region46: #{tpu_custom_call.1} parent=1 // pred_check
      _
    $region47: #{tpu_custom_call.1} parent=1 // pred_check_branch
      %141 = sbr.rel (0) target = $region49
    $region48: #{tpu_custom_call.1} parent=1 // pred_region
      _
    $region49: #{tpu_custom_call.1} parent=1 // pred_fallthru
      _
    // Predicated region
    $region50: #{tpu_custom_call.1} parent=1 // pred_check
      _
    $region51: #{tpu_custom_call.1} parent=1 // pred_check_branch
      %143 = sbr.rel (0) target = $region53
    $region52: #{tpu_custom_call.1} parent=1 // pred_region
      %145 = dma.done [#allocation5], 128
    $region53: #{tpu_custom_call.1} parent=1 // pred_fallthru
      _
    // Predicated region
    $region54: #{tpu_custom_call.1} parent=1 // pred_check
      _
    $region55: #{tpu_custom_call.1} parent=1 // pred_check_branch
      %147 = sbr.rel (0) target = $region57
    $region56: #{tpu_custom_call.1} parent=1 // pred_region
      %149 = dma.done [#allocation8], 1024
    $region57: #{tpu_custom_call.1} parent=1 // pred_fallthru
      _
    // Predicated region
    $region58: #{tpu_custom_call.1} parent=1 // pred_check
      _
    $region59: #{tpu_custom_call.1} parent=1 // pred_check_branch
      %151 = sbr.rel (0) target = $region61
    $region60: #{tpu_custom_call.1} parent=1 // pred_region
      %153 = dma.done [#allocation8], 4096
    $region61: #{tpu_custom_call.1} parent=1 // pred_fallthru
      _
    // Predicated region
    $region62: #{tpu_custom_call.1} parent=1 // pred_check
      _
    $region63: #{tpu_custom_call.1} parent=1 // pred_check_branch
      %155 = sbr.rel (0) target = $region65
    $region64: #{tpu_custom_call.1} parent=1 // pred_region
      %157 = dma.done [#allocation11], 64
    $region65: #{tpu_custom_call.1} parent=1 // pred_fallthru
      _
    // Predicated region
    $region66: #{tpu_custom_call.1} parent=1 // pred_check
      _
    $region67: #{tpu_custom_call.1} parent=1 // pred_check_branch
      %159 = sbr.rel (0) target = $region69
    $region68: #{tpu_custom_call.1} parent=1 // pred_region
      %161 = dma.done [#allocation11], 8192
    $region69: #{tpu_custom_call.1} parent=1 // pred_fallthru
      _
    // Predicated region
    $region70: #{tpu_custom_call.1} parent=1 // pred_check
      _
    $region71: #{tpu_custom_call.1} parent=1 // pred_check_branch
      %163 = sbr.rel (0) target = $region73
    $region72: #{tpu_custom_call.1} parent=1 // pred_region
      %165 = dma.done [#allocation14], 1024
    $region73: #{tpu_custom_call.1} parent=1 // pred_fallthru
      _
    // Predicated region
    $region74: #{tpu_custom_call.1} parent=1 // pred_check
      _
    $region75: #{tpu_custom_call.1} parent=1 // pred_check_branch
      %167 = sbr.rel (0) target = $region77
    $region76: #{tpu_custom_call.1} parent=1 // pred_region
      %169 = dma.done [#allocation14], 16
    $region77: #{tpu_custom_call.1} parent=1 // pred_fallthru
      _
    // Predicated region
    $region78: #{tpu_custom_call.1} parent=1 // pred_check
      _
    $region79: #{tpu_custom_call.1} parent=1 // pred_check_branch
      %171 = sbr.rel (0) target = $region81
    $region80: #{tpu_custom_call.1} parent=1 // pred_region
      %173 = dma.done [#allocation17], 1024
    $region81: #{tpu_custom_call.1} parent=1 // pred_fallthru
      _
    // Predicated region
    $region82: #{tpu_custom_call.1} parent=1 // pred_check
      _
    $region83: #{tpu_custom_call.1} parent=1 // pred_check_branch
      %175 = sbr.rel (0) target = $region85
    $region84: #{tpu_custom_call.1} parent=1 // pred_region
      %177 = dma.done [#allocation17], 16
    $region85: #{tpu_custom_call.1} parent=1 // pred_fallthru
      _
    %v179 = vld [vmem:[#allocation4] sm:$0xff]
    %v180 = vpack.c.bf16 %v179, %v179
    %v181 = vld [vmem:[#allocation7] sm:$0xff]
    %v182 = vld [vmem:[#allocation7 + $0x8] sm:$0xff]
    %v183 = vld [vmem:[#allocation7 + $0x10] sm:$0xff]
    %v184 = vld [vmem:[#allocation7 + $0x18] sm:$0xff]
    %v185 = vld [vmem:[#allocation7 + $0x20] sm:$0xff]
    %v186 = vld [vmem:[#allocation7 + $0x28] sm:$0xff]
    %v187 = vld [vmem:[#allocation7 + $0x30] sm:$0x77]
    %v188 = vld [vmem:[#allocation7 + $0x38] sm:$0x77]
    %v189 = vld [vmem:[#allocation10] sm:$0xf]
    %v191 = vperm.slane %v189, 0
    %v192 = vperm.slane %v189, 1
    %v193 = vperm.slane %v189, 2
    %v194 = vperm.slane %v189, 3
    %v207 = vunpack.c.l.b16 %v181
    %v208 = vunpack.c.h.b16 %v181
    %v209 = vunpack.c.l.b16 %v182
    %v210 = vunpack.c.h.b16 %v182
    %v211 = vunpack.c.l.b16 %v183
    %v212 = vunpack.c.h.b16 %v183
    %v213 = vunpack.c.l.b16 %v184
    %v214 = vunpack.c.h.b16 %v184
    %v215 = vunpack.c.l.b16 %v185
    %v216 = vunpack.c.h.b16 %v185
    %v217 = vunpack.c.l.b16 %v186
    %v218 = vunpack.c.h.b16 %v186
    %v219 = vunpack.c.l.b16 %v187
    %v220 = vunpack.c.h.b16 %v187
    %v221 = vunpack.c.l.b16 %v188
    %v222 = vunpack.c.h.b16 %v188
    %v223 = vpack.c.b16 %v211, %v207
    %v224 = vpack.c.b16 %v212, %v208
    %v225 = vpack.c.b16 %v213, %v209
    %v226 = vpack.c.b16 %v214, %v210
    %v227 = vpack.c.b16 %v219, %v215
    %v228 = vpack.c.b16 %v220, %v216
    %v229 = vpack.c.b16 %v221, %v217
    %v230 = vpack.c.b16 %v222, %v218
    %vm235 = vcmask 244736
    %v237 = vsel %vm235, %v180, 0
    %vm239 = vcmask 1046528
    %v241 = vsel %vm239, %v227, 0
    %v244 = vsel %vm239, %v228, 0
    %v247 = vsel %vm239, %v229, 0
    %v250 = vsel %vm239, %v230, 0
    %252 = vmatpush.bf16.msra.mxu0 0
    %253 = vmatpush.bf16.msra.mxu0 0
    %254 = vmatpush.bf16.msra.mxu0 0
    %255 = vmatpush.bf16.msra.mxu0 0
    %256 = vmatpush.bf16.msra.mxu0 0
    %257 = vmatpush.bf16.msra.mxu0 0
    %258 = vmatpush.bf16.msra.mxu0 %v241
    %259 = vmatpush.bf16.msra.mxu0 %v223
    %260 = vmatmul.bf16.gmra.mxu0 %v237
    %v261 = vpop.f32.mrf.mxu0
    %v262 = vadd.f32 %v191, %v261
    %v263 = vpop.f32.mrf.mxu0
    %264 = vdwg.mxu0
    %265 = vmatpush.bf16.msra.mxu0 0
    %266 = vmatpush.bf16.msra.mxu0 0
    %267 = vmatpush.bf16.msra.mxu0 0
    %268 = vmatpush.bf16.msra.mxu0 0
    %269 = vmatpush.bf16.msra.mxu0 0
    %270 = vmatpush.bf16.msra.mxu0 0
    %271 = vmatpush.bf16.msra.mxu0 %v244
    %272 = vmatpush.bf16.msra.mxu0 %v224
    %273 = vmatmul.bf16.gmra.mxu0 %v237
    %v274 = vpop.f32.mrf.mxu0
    %v275 = vadd.f32 %v192, %v274
    %v276 = vpop.f32.mrf.mxu0
    %277 = vdwg.mxu0
    %278 = vmatpush.bf16.msra.mxu0 0
    %279 = vmatpush.bf16.msra.mxu0 0
    %280 = vmatpush.bf16.msra.mxu0 0
    %281 = vmatpush.bf16.msra.mxu0 0
    %282 = vmatpush.bf16.msra.mxu0 0
    %283 = vmatpush.bf16.msra.mxu0 0
    %284 = vmatpush.bf16.msra.mxu0 %v247
    %285 = vmatpush.bf16.msra.mxu0 %v225
    %286 = vmatmul.bf16.gmra.mxu0 %v237
    %v287 = vpop.f32.mrf.mxu0
    %v288 = vadd.f32 %v193, %v287
    %v289 = vpop.f32.mrf.mxu0
    %290 = vdwg.mxu0
    %291 = vmatpush.bf16.msra.mxu0 0
    %292 = vmatpush.bf16.msra.mxu0 0
    %293 = vmatpush.bf16.msra.mxu0 0
    %294 = vmatpush.bf16.msra.mxu0 0
    %295 = vmatpush.bf16.msra.mxu0 0
    %296 = vmatpush.bf16.msra.mxu0 0
    %297 = vmatpush.bf16.msra.mxu0 %v250
    %298 = vmatpush.bf16.msra.mxu0 %v226
    %299 = vmatmul.bf16.gmra.mxu0 %v237
    %v300 = vpop.f32.mrf.mxu0
    %v301 = vadd.f32 %v194, %v300
    %v302 = vpop.f32.mrf.mxu0
    %303 = vdwg.mxu0
    %304 = vst [vmem:[#allocation2] sm:$0xff] %v262
    %305 = vst [vmem:[#allocation2 + $0x8] sm:$0xff] %v275
    %306 = vst [vmem:[#allocation2 + $0x10] sm:$0xff] %v288
    %307 = vst [vmem:[#allocation2 + $0x18] sm:$0xff] %v301
    %v308 = vld [vmem:[%s10] sm:$0x1]
    %v309 = vld [vmem:[%s11] sm:$0x1]
    %v310 = vld [vmem:[%s10 + $0x1] sm:$0x1]
    %v311 = vld [vmem:[%s11 + $0x1] sm:$0x1]
    %v312 = vld [vmem:[#allocation2] ss:$8 sm:$0xf]
    %v313 = vpack.c.bf16 %v308, %v308
    %v314 = vld [vmem:[#allocation9] sm:$0xff]
    %v315 = vld [vmem:[#allocation9 + $0x8] sm:$0xff]
    %v316 = vld [vmem:[#allocation9 + $0x10] sm:$0xff]
    %v317 = vld [vmem:[#allocation9 + $0x18] sm:$0xff]
    %v318 = vld [vmem:[#allocation9 + $0x20] sm:$0xff]
    %v319 = vld [vmem:[#allocation9 + $0x28] sm:$0xff]
    %v320 = vld [vmem:[#allocation9 + $0x30] sm:$0xff]
    %v321 = vld [vmem:[#allocation9 + $0x38] sm:$0xff]
    %v322 = vld [vmem:[#allocation9 + $0x40] sm:$0xff]
    %v323 = vld [vmem:[#allocation9 + $0x48] sm:$0xff]
    %v324 = vld [vmem:[#allocation9 + $0x50] sm:$0xff]
    %v325 = vld [vmem:[#allocation9 + $0x58] sm:$0xff]
    %v326 = vld [vmem:[#allocation9 + $0x60] sm:$0xff]
    %v327 = vld [vmem:[#allocation9 + $0x68] sm:$0xff]
    %v328 = vld [vmem:[#allocation9 + $0x70] sm:$0xff]
    %v329 = vld [vmem:[#allocation9 + $0x78] sm:$0xff]
    %v330 = vld [vmem:[#allocation9 + $0x80] sm:$0xff]
    %v331 = vld [vmem:[#allocation9 + $0x88] sm:$0xff]
    %v332 = vld [vmem:[#allocation9 + $0x90] sm:$0xff]
    %v333 = vld [vmem:[#allocation9 + $0x98] sm:$0xff]
    %v334 = vld [vmem:[#allocation9 + $0xa0] sm:$0xff]
    %v335 = vld [vmem:[#allocation9 + $0xa8] sm:$0xff]
    %v336 = vld [vmem:[#allocation9 + $0xb0] sm:$0xff]
    %v337 = vld [vmem:[#allocation9 + $0xb8] sm:$0xff]
    %v338 = vld [vmem:[#allocation9 + $0xc0] sm:$0xff]
    %v339 = vld [vmem:[#allocation9 + $0xc8] sm:$0xff]
    %v340 = vld [vmem:[#allocation9 + $0xd0] sm:$0xff]
    %v341 = vld [vmem:[#allocation9 + $0xd8] sm:$0xff]
    %v342 = vld [vmem:[#allocation9 + $0xe0] sm:$0xff]
    %v343 = vld [vmem:[#allocation9 + $0xe8] sm:$0xff]
    %v344 = vld [vmem:[#allocation9 + $0xf0] sm:$0xff]
    %v345 = vld [vmem:[#allocation9 + $0xf8] sm:$0xff]
    %v378 = vunpack.c.l.b16 %v314
    %v379 = vunpack.c.h.b16 %v314
    %v380 = vunpack.c.l.b16 %v315
    %v381 = vunpack.c.h.b16 %v315
    %v382 = vunpack.c.l.b16 %v316
    %v383 = vunpack.c.h.b16 %v316
    %v384 = vunpack.c.l.b16 %v317
    %v385 = vunpack.c.h.b16 %v317
    %v386 = vunpack.c.l.b16 %v318
    %v387 = vunpack.c.h.b16 %v318
    %v388 = vunpack.c.l.b16 %v319
    %v389 = vunpack.c.h.b16 %v319
    %v390 = vunpack.c.l.b16 %v320
    %v391 = vunpack.c.h.b16 %v320
    %v392 = vunpack.c.l.b16 %v321
    %v393 = vunpack.c.h.b16 %v321
    %v394 = vunpack.c.l.b16 %v322
    %v395 = vunpack.c.h.b16 %v322
    %v396 = vunpack.c.l.b16 %v323
    %v397 = vunpack.c.h.b16 %v323
    %v398 = vunpack.c.l.b16 %v324
    %v399 = vunpack.c.h.b16 %v324
    %v400 = vunpack.c.l.b16 %v325
    %v401 = vunpack.c.h.b16 %v325
    %v402 = vunpack.c.l.b16 %v326
    %v403 = vunpack.c.h.b16 %v326
    %v404 = vunpack.c.l.b16 %v327
    %v405 = vunpack.c.h.b16 %v327
    %v406 = vunpack.c.l.b16 %v328
    %v407 = vunpack.c.h.b16 %v328
    %v408 = vunpack.c.l.b16 %v329
    %v409 = vunpack.c.h.b16 %v329
    %v410 = vunpack.c.l.b16 %v330
    %v411 = vunpack.c.h.b16 %v330
    %v412 = vunpack.c.l.b16 %v331
    %v413 = vunpack.c.h.b16 %v331
    %v414 = vunpack.c.l.b16 %v332
    %v415 = vunpack.c.h.b16 %v332
    %v416 = vunpack.c.l.b16 %v333
    %v417 = vunpack.c.h.b16 %v333
    %v418 = vunpack.c.l.b16 %v334
    %v419 = vunpack.c.h.b16 %v334
    %v420 = vunpack.c.l.b16 %v335
    %v421 = vunpack.c.h.b16 %v335
    %v422 = vunpack.c.l.b16 %v336
    %v423 = vunpack.c.h.b16 %v336
    %v424 = vunpack.c.l.b16 %v337
    %v425 = vunpack.c.h.b16 %v337
    %v426 = vunpack.c.l.b16 %v338
    %v427 = vunpack.c.h.b16 %v338
    %v428 = vunpack.c.l.b16 %v339
    %v429 = vunpack.c.h.b16 %v339
    %v430 = vunpack.c.l.b16 %v340
    %v431 = vunpack.c.h.b16 %v340
    %v432 = vunpack.c.l.b16 %v341
    %v433 = vunpack.c.h.b16 %v341
    %v434 = vunpack.c.l.b16 %v342
    %v435 = vunpack.c.h.b16 %v342
    %v436 = vunpack.c.l.b16 %v343
    %v437 = vunpack.c.h.b16 %v343
    %v438 = vunpack.c.l.b16 %v344
    %v439 = vunpack.c.h.b16 %v344
    %v440 = vunpack.c.l.b16 %v345
    %v441 = vunpack.c.h.b16 %v345
    %v442 = vpack.c.b16 %v382, %v378
    %v443 = vpack.c.b16 %v383, %v379
    %v444 = vpack.c.b16 %v384, %v380
    %v445 = vpack.c.b16 %v385, %v381
    %v446 = vpack.c.b16 %v390, %v386
    %v447 = vpack.c.b16 %v391, %v387
    %v448 = vpack.c.b16 %v392, %v388
    %v449 = vpack.c.b16 %v393, %v389
    %v450 = vpack.c.b16 %v398, %v394
    %v451 = vpack.c.b16 %v399, %v395
    %v452 = vpack.c.b16 %v400, %v396
    %v453 = vpack.c.b16 %v401, %v397
    %v454 = vpack.c.b16 %v406, %v402
    %v455 = vpack.c.b16 %v407, %v403
    %v456 = vpack.c.b16 %v408, %v404
    %v457 = vpack.c.b16 %v409, %v405
    %v458 = vpack.c.b16 %v414, %v410
    %v459 = vpack.c.b16 %v415, %v411
    %v460 = vpack.c.b16 %v416, %v412
    %v461 = vpack.c.b16 %v417, %v413
    %v462 = vpack.c.b16 %v422, %v418
    %v463 = vpack.c.b16 %v423, %v419
    %v464 = vpack.c.b16 %v424, %v420
    %v465 = vpack.c.b16 %v425, %v421
    %v466 = vpack.c.b16 %v430, %v426
    %v467 = vpack.c.b16 %v431, %v427
    %v468 = vpack.c.b16 %v432, %v428
    %v469 = vpack.c.b16 %v433, %v429
    %v470 = vpack.c.b16 %v438, %v434
    %v471 = vpack.c.b16 %v439, %v435
    %v472 = vpack.c.b16 %v440, %v436
    %v473 = vpack.c.b16 %v441, %v437
    %506 = vmatpush.bf16.msra.mxu0 %v470
    %507 = vmatpush.bf16.msra.mxu0 %v466
    %508 = vmatpush.bf16.msra.mxu0 %v462
    %509 = vmatpush.bf16.msra.mxu0 %v458
    %510 = vmatpush.bf16.msra.mxu0 %v454
    %511 = vmatpush.bf16.msra.mxu0 %v450
    %512 = vmatpush.bf16.msra.mxu0 %v446
    %513 = vmatpush.bf16.msra.mxu0 %v442
    %514 = vmatmul.bf16.gmra.mxu0 %v313
    %v515 = vpop.f32.mrf.mxu0
    %v516 = vadd.f32 0.0, %v515
    %v517 = vpop.f32.mrf.mxu0
    %518 = vdwg.mxu0
    %519 = vmatpush.bf16.msra.mxu0 %v471
    %520 = vmatpush.bf16.msra.mxu0 %v467
    %521 = vmatpush.bf16.msra.mxu0 %v463
    %522 = vmatpush.bf16.msra.mxu0 %v459
    %523 = vmatpush.bf16.msra.mxu0 %v455
    %524 = vmatpush.bf16.msra.mxu0 %v451
    %525 = vmatpush.bf16.msra.mxu0 %v447
    %526 = vmatpush.bf16.msra.mxu0 %v443
    %527 = vmatmul.bf16.gmra.mxu0 %v313
    %v528 = vpop.f32.mrf.mxu0
    %v529 = vadd.f32 0.0, %v528
    %v530 = vpop.f32.mrf.mxu0
    %531 = vdwg.mxu0
    %532 = vmatpush.bf16.msra.mxu0 %v472
    %533 = vmatpush.bf16.msra.mxu0 %v468
    %534 = vmatpush.bf16.msra.mxu0 %v464
    %535 = vmatpush.bf16.msra.mxu0 %v460
    %536 = vmatpush.bf16.msra.mxu0 %v456
    %537 = vmatpush.bf16.msra.mxu0 %v452
    %538 = vmatpush.bf16.msra.mxu0 %v448
    %539 = vmatpush.bf16.msra.mxu0 %v444
    %540 = vmatmul.bf16.gmra.mxu0 %v313
    %v541 = vpop.f32.mrf.mxu0
    %v542 = vadd.f32 0.0, %v541
    %v543 = vpop.f32.mrf.mxu0
    %544 = vdwg.mxu0
    %545 = vmatpush.bf16.msra.mxu0 %v473
    %546 = vmatpush.bf16.msra.mxu0 %v469
    %547 = vmatpush.bf16.msra.mxu0 %v465
    %548 = vmatpush.bf16.msra.mxu0 %v461
    %549 = vmatpush.bf16.msra.mxu0 %v457
    %550 = vmatpush.bf16.msra.mxu0 %v453
    %551 = vmatpush.bf16.msra.mxu0 %v449
    %552 = vmatpush.bf16.msra.mxu0 %v445
    %553 = vmatmul.bf16.gmra.mxu0 %v313
    %v554 = vpop.f32.mrf.mxu0
    %v555 = vadd.f32 0.0, %v554
    %v556 = vpop.f32.mrf.mxu0
    %557 = vdwg.mxu0
    %v562 = vrot.slane %v529, 7
    %v563 = vrot.slane %v542, 6
    %v564 = vrot.slane %v555, 5
    %vm565 = vcmask 1040384
    %v566 = vsel %vm565, %v516, %v562
    %vm567 = vcmask 1042434
    %v568 = vsel %vm567, %v563, %v564
    %vm569 = vcmask 1041408
    %v570 = vsel %vm569, %v566, %v568
    %v572 = vadd.f32 %v312, %v570
    %v573 = vxor.u32 %v572, 2147483648
    %v574 = vmul.f32 %v573, 1.442695
    %v575 = vpow.pop %v574
    %v576 = vadd.f32 %v575, 1.0
    %v577 = vrcp.pop %v576
    %v578 = vmul.f32 %v576, %v577
    %v579 = vsub.f32 1.0, %v578
    %v580 = vmul.f32 %v577, %v579
    %v581 = vadd.f32 %v577, %v580
    %vm582 = vweird.f32 %v576
    %vm583 = vweird.f32 %v577
    %vm584 = vmor %vm582, %vm583
    %v585 = vsel %vm584, %v577, %v581
    %v586 = vand.u32 2147483647, %v576
    %vm587 = vcmp.eq.f32.partialorder %v586, 8.507059e+37
    %v588 = vand.u32 %v576, 2147483648
    %v589 = vor.u32 1.1754944e-38, %v588
    %v590 = vsel %vm587, %v589, %v585
    %v591 = vmul.f32 1.0, %v590
    %v593 = vrot.slane %v572, 3
    %v595 = vtanh.pop %v593
    %v597 = vrot.slane %v591, 1
    %v599 = vmul.f32 %v597, %v309
    %v600 = vmul.f32 %v591, %v595
    %v601 = vadd.f32 %v599, %v600
    %v602 = vtanh.pop %v601
    %v603 = vrot.slane %v591, 2
    %v605 = vmul.f32 %v603, %v602
    %v606 = vpack.c.bf16 %v605, %v605
    %v607 = vpack.c.bf16 %v310, %v310
    %v608 = vld [vmem:[#allocation12] sm:$0xff]
    %v609 = vld [vmem:[#allocation12 + $0x8] sm:$0xff]
    %v610 = vld [vmem:[#allocation12 + $0x10] sm:$0xff]
    %v611 = vld [vmem:[#allocation12 + $0x18] sm:$0xff]
    %v612 = vld [vmem:[#allocation12 + $0x20] sm:$0xff]
    %v613 = vld [vmem:[#allocation12 + $0x28] sm:$0xff]
    %v614 = vld [vmem:[#allocation12 + $0x30] sm:$0xff]
    %v615 = vld [vmem:[#allocation12 + $0x38] sm:$0xff]
    %v616 = vld [vmem:[#allocation12 + $0x40] sm:$0xff]
    %v617 = vld [vmem:[#allocation12 + $0x48] sm:$0xff]
    %v618 = vld [vmem:[#allocation12 + $0x50] sm:$0xff]
    %v619 = vld [vmem:[#allocation12 + $0x58] sm:$0xff]
    %v620 = vld [vmem:[#allocation12 + $0x60] sm:$0xff]
    %v621 = vld [vmem:[#allocation12 + $0x68] sm:$0xff]
    %v622 = vld [vmem:[#allocation12 + $0x70] sm:$0xff]
    %v623 = vld [vmem:[#allocation12 + $0x78] sm:$0xff]
    %v624 = vld [vmem:[#allocation12 + $0x80] sm:$0xff]
    %v625 = vld [vmem:[#allocation12 + $0x88] sm:$0xff]
    %v626 = vld [vmem:[#allocation12 + $0x90] sm:$0xff]
    %v627 = vld [vmem:[#allocation12 + $0x98] sm:$0xff]
    %v628 = vld [vmem:[#allocation12 + $0xa0] sm:$0xff]
    %v629 = vld [vmem:[#allocation12 + $0xa8] sm:$0xff]
    %v630 = vld [vmem:[#allocation12 + $0xb0] sm:$0xff]
    %v631 = vld [vmem:[#allocation12 + $0xb8] sm:$0xff]
    %v632 = vld [vmem:[#allocation12 + $0xc0] sm:$0xff]
    %v633 = vld [vmem:[#allocation12 + $0xc8] sm:$0xff]
    %v634 = vld [vmem:[#allocation12 + $0xd0] sm:$0xff]
    %v635 = vld [vmem:[#allocation12 + $0xd8] sm:$0xff]
    %v636 = vld [vmem:[#allocation12 + $0xe0] sm:$0xff]
    %v637 = vld [vmem:[#allocation12 + $0xe8] sm:$0xff]
    %v638 = vld [vmem:[#allocation12 + $0xf0] sm:$0xff]
    %v639 = vld [vmem:[#allocation12 + $0xf8] sm:$0xff]
    %v640 = vld [vmem:[#allocation12 + $0x100] sm:$0xff]
    %v641 = vld [vmem:[#allocation12 + $0x108] sm:$0xff]
    %v642 = vld [vmem:[#allocation12 + $0x110] sm:$0xff]
    %v643 = vld [vmem:[#allocation12 + $0x118] sm:$0xff]
    %v644 = vld [vmem:[#allocation12 + $0x120] sm:$0xff]
    %v645 = vld [vmem:[#allocation12 + $0x128] sm:$0xff]
    %v646 = vld [vmem:[#allocation12 + $0x130] sm:$0xff]
    %v647 = vld [vmem:[#allocation12 + $0x138] sm:$0xff]
    %v648 = vld [vmem:[#allocation12 + $0x140] sm:$0xff]
    %v649 = vld [vmem:[#allocation12 + $0x148] sm:$0xff]
    %v650 = vld [vmem:[#allocation12 + $0x150] sm:$0xff]
    %v651 = vld [vmem:[#allocation12 + $0x158] sm:$0xff]
    %v652 = vld [vmem:[#allocation12 + $0x160] sm:$0xff]
    %v653 = vld [vmem:[#allocation12 + $0x168] sm:$0xff]
    %v654 = vld [vmem:[#allocation12 + $0x170] sm:$0xff]
    %v655 = vld [vmem:[#allocation12 + $0x178] sm:$0xff]
    %v656 = vld [vmem:[#allocation12 + $0x180] sm:$0xff]
    %v657 = vld [vmem:[#allocation12 + $0x188] sm:$0xff]
    %v658 = vld [vmem:[#allocation12 + $0x190] sm:$0xff]
    %v659 = vld [vmem:[#allocation12 + $0x198] sm:$0xff]
    %v660 = vld [vmem:[#allocation12 + $0x1a0] sm:$0xff]
    %v661 = vld [vmem:[#allocation12 + $0x1a8] sm:$0xff]
    %v662 = vld [vmem:[#allocation12 + $0x1b0] sm:$0xff]
    %v663 = vld [vmem:[#allocation12 + $0x1b8] sm:$0xff]
    %v664 = vld [vmem:[#allocation12 + $0x1c0] sm:$0xff]
    %v665 = vld [vmem:[#allocation12 + $0x1c8] sm:$0xff]
    %v666 = vld [vmem:[#allocation12 + $0x1d0] sm:$0xff]
    %v667 = vld [vmem:[#allocation12 + $0x1d8] sm:$0xff]
    %v668 = vld [vmem:[#allocation12 + $0x1e0] sm:$0xff]
    %v669 = vld [vmem:[#allocation12 + $0x1e8] sm:$0xff]
    %v670 = vld [vmem:[#allocation12 + $0x1f0] sm:$0xff]
    %v671 = vld [vmem:[#allocation12 + $0x1f8] sm:$0xff]
    %v672 = vld [vmem:[%s5] sm:$0xf]
    %v737 = vunpack.c.l.b16 %v608
    %v738 = vunpack.c.h.b16 %v608
    %v739 = vunpack.c.l.b16 %v609
    %v740 = vunpack.c.h.b16 %v609
    %v741 = vunpack.c.l.b16 %v610
    %v742 = vunpack.c.h.b16 %v610
    %v743 = vunpack.c.l.b16 %v611
    %v744 = vunpack.c.h.b16 %v611
    %v745 = vunpack.c.l.b16 %v612
    %v746 = vunpack.c.h.b16 %v612
    %v747 = vunpack.c.l.b16 %v613
    %v748 = vunpack.c.h.b16 %v613
    %v749 = vunpack.c.l.b16 %v614
    %v750 = vunpack.c.h.b16 %v614
    %v751 = vunpack.c.l.b16 %v615
    %v752 = vunpack.c.h.b16 %v615
    %v753 = vunpack.c.l.b16 %v616
    %v754 = vunpack.c.h.b16 %v616
    %v755 = vunpack.c.l.b16 %v617
    %v756 = vunpack.c.h.b16 %v617
    %v757 = vunpack.c.l.b16 %v618
    %v758 = vunpack.c.h.b16 %v618
    %v759 = vunpack.c.l.b16 %v619
    %v760 = vunpack.c.h.b16 %v619
    %v761 = vunpack.c.l.b16 %v620
    %v762 = vunpack.c.h.b16 %v620
    %v763 = vunpack.c.l.b16 %v621
    %v764 = vunpack.c.h.b16 %v621
    %v765 = vunpack.c.l.b16 %v622
    %v766 = vunpack.c.h.b16 %v622
    %v767 = vunpack.c.l.b16 %v623
    %v768 = vunpack.c.h.b16 %v623
    %v769 = vunpack.c.l.b16 %v624
    %v770 = vunpack.c.h.b16 %v624
    %v771 = vunpack.c.l.b16 %v625
    %v772 = vunpack.c.h.b16 %v625
    %v773 = vunpack.c.l.b16 %v626
    %v774 = vunpack.c.h.b16 %v626
    %v775 = vunpack.c.l.b16 %v627
    %v776 = vunpack.c.h.b16 %v627
    %v777 = vunpack.c.l.b16 %v628
    %v778 = vunpack.c.h.b16 %v628
    %v779 = vunpack.c.l.b16 %v629
    %v780 = vunpack.c.h.b16 %v629
    %v781 = vunpack.c.l.b16 %v630
    %v782 = vunpack.c.h.b16 %v630
    %v783 = vunpack.c.l.b16 %v631
    %v784 = vunpack.c.h.b16 %v631
    %v785 = vunpack.c.l.b16 %v632
    %v786 = vunpack.c.h.b16 %v632
    %v787 = vunpack.c.l.b16 %v633
    %v788 = vunpack.c.h.b16 %v633
    %v789 = vunpack.c.l.b16 %v634
    %v790 = vunpack.c.h.b16 %v634
    %v791 = vunpack.c.l.b16 %v635
    %v792 = vunpack.c.h.b16 %v635
    %v793 = vunpack.c.l.b16 %v636
    %v794 = vunpack.c.h.b16 %v636
    %v795 = vunpack.c.l.b16 %v637
    %v796 = vunpack.c.h.b16 %v637
    %v797 = vunpack.c.l.b16 %v638
    %v798 = vunpack.c.h.b16 %v638
    %v799 = vunpack.c.l.b16 %v639
    %v800 = vunpack.c.h.b16 %v639
    %v801 = vunpack.c.l.b16 %v640
    %v802 = vunpack.c.h.b16 %v640
    %v803 = vunpack.c.l.b16 %v641
    %v804 = vunpack.c.h.b16 %v641
    %v805 = vunpack.c.l.b16 %v642
    %v806 = vunpack.c.h.b16 %v642
    %v807 = vunpack.c.l.b16 %v643
    %v808 = vunpack.c.h.b16 %v643
    %v809 = vunpack.c.l.b16 %v644
    %v810 = vunpack.c.h.b16 %v644
    %v811 = vunpack.c.l.b16 %v645
    %v812 = vunpack.c.h.b16 %v645
    %v813 = vunpack.c.l.b16 %v646
    %v814 = vunpack.c.h.b16 %v646
    %v815 = vunpack.c.l.b16 %v647
    %v816 = vunpack.c.h.b16 %v647
    %v817 = vunpack.c.l.b16 %v648
    %v818 = vunpack.c.h.b16 %v648
    %v819 = vunpack.c.l.b16 %v649
    %v820 = vunpack.c.h.b16 %v649
    %v821 = vunpack.c.l.b16 %v650
    %v822 = vunpack.c.h.b16 %v650
    %v823 = vunpack.c.l.b16 %v651
    %v824 = vunpack.c.h.b16 %v651
    %v825 = vunpack.c.l.b16 %v652
    %v826 = vunpack.c.h.b16 %v652
    %v827 = vunpack.c.l.b16 %v653
    %v828 = vunpack.c.h.b16 %v653
    %v829 = vunpack.c.l.b16 %v654
    %v830 = vunpack.c.h.b16 %v654
    %v831 = vunpack.c.l.b16 %v655
    %v832 = vunpack.c.h.b16 %v655
    %v833 = vunpack.c.l.b16 %v656
    %v834 = vunpack.c.h.b16 %v656
    %v835 = vunpack.c.l.b16 %v657
    %v836 = vunpack.c.h.b16 %v657
    %v837 = vunpack.c.l.b16 %v658
    %v838 = vunpack.c.h.b16 %v658
    %v839 = vunpack.c.l.b16 %v659
    %v840 = vunpack.c.h.b16 %v659
    %v841 = vunpack.c.l.b16 %v660
    %v842 = vunpack.c.h.b16 %v660
    %v843 = vunpack.c.l.b16 %v661
    %v844 = vunpack.c.h.b16 %v661
    %v845 = vunpack.c.l.b16 %v662
    %v846 = vunpack.c.h.b16 %v662
    %v847 = vunpack.c.l.b16 %v663
    %v848 = vunpack.c.h.b16 %v663
    %v849 = vunpack.c.l.b16 %v664
    %v850 = vunpack.c.h.b16 %v664
    %v851 = vunpack.c.l.b16 %v665
    %v852 = vunpack.c.h.b16 %v665
    %v853 = vunpack.c.l.b16 %v666
    %v854 = vunpack.c.h.b16 %v666
    %v855 = vunpack.c.l.b16 %v667
    %v856 = vunpack.c.h.b16 %v667
    %v857 = vunpack.c.l.b16 %v668
    %v858 = vunpack.c.h.b16 %v668
    %v859 = vunpack.c.l.b16 %v669
    %v860 = vunpack.c.h.b16 %v669
    %v861 = vunpack.c.l.b16 %v670
    %v862 = vunpack.c.h.b16 %v670
    %v863 = vunpack.c.l.b16 %v671
    %v864 = vunpack.c.h.b16 %v671
    %v865 = vpack.c.b16 %v741, %v737
    %v866 = vpack.c.b16 %v742, %v738
    %v867 = vpack.c.b16 %v743, %v739
    %v868 = vpack.c.b16 %v744, %v740
    %v869 = vpack.c.b16 %v749, %v745
    %v870 = vpack.c.b16 %v750, %v746
    %v871 = vpack.c.b16 %v751, %v747
    %v872 = vpack.c.b16 %v752, %v748
    %v873 = vpack.c.b16 %v757, %v753
    %v874 = vpack.c.b16 %v758, %v754
    %v875 = vpack.c.b16 %v759, %v755
    %v876 = vpack.c.b16 %v760, %v756
    %v877 = vpack.c.b16 %v765, %v761
    %v878 = vpack.c.b16 %v766, %v762
    %v879 = vpack.c.b16 %v767, %v763
    %v880 = vpack.c.b16 %v768, %v764
    %v881 = vpack.c.b16 %v773, %v769
    %v882 = vpack.c.b16 %v774, %v770
    %v883 = vpack.c.b16 %v775, %v771
    %v884 = vpack.c.b16 %v776, %v772
    %v885 = vpack.c.b16 %v781, %v777
    %v886 = vpack.c.b16 %v782, %v778
    %v887 = vpack.c.b16 %v783, %v779
    %v888 = vpack.c.b16 %v784, %v780
    %v889 = vpack.c.b16 %v789, %v785
    %v890 = vpack.c.b16 %v790, %v786
    %v891 = vpack.c.b16 %v791, %v787
    %v892 = vpack.c.b16 %v792, %v788
    %v893 = vpack.c.b16 %v797, %v793
    %v894 = vpack.c.b16 %v798, %v794
    %v895 = vpack.c.b16 %v799, %v795
    %v896 = vpack.c.b16 %v800, %v796
    %v897 = vpack.c.b16 %v805, %v801
    %v898 = vpack.c.b16 %v806, %v802
    %v899 = vpack.c.b16 %v807, %v803
    %v900 = vpack.c.b16 %v808, %v804
    %v901 = vpack.c.b16 %v813, %v809
    %v902 = vpack.c.b16 %v814, %v810
    %v903 = vpack.c.b16 %v815, %v811
    %v904 = vpack.c.b16 %v816, %v812
    %v905 = vpack.c.b16 %v821, %v817
    %v906 = vpack.c.b16 %v822, %v818
    %v907 = vpack.c.b16 %v823, %v819
    %v908 = vpack.c.b16 %v824, %v820
    %v909 = vpack.c.b16 %v829, %v825
    %v910 = vpack.c.b16 %v830, %v826
    %v911 = vpack.c.b16 %v831, %v827
    %v912 = vpack.c.b16 %v832, %v828
    %v913 = vpack.c.b16 %v837, %v833
    %v914 = vpack.c.b16 %v838, %v834
    %v915 = vpack.c.b16 %v839, %v835
    %v916 = vpack.c.b16 %v840, %v836
    %v917 = vpack.c.b16 %v845, %v841
    %v918 = vpack.c.b16 %v846, %v842
    %v919 = vpack.c.b16 %v847, %v843
    %v920 = vpack.c.b16 %v848, %v844
    %v921 = vpack.c.b16 %v853, %v849
    %v922 = vpack.c.b16 %v854, %v850
    %v923 = vpack.c.b16 %v855, %v851
    %v924 = vpack.c.b16 %v856, %v852
    %v925 = vpack.c.b16 %v861, %v857
    %v926 = vpack.c.b16 %v862, %v858
    %v927 = vpack.c.b16 %v863, %v859
    %v928 = vpack.c.b16 %v864, %v860
    %v994 = vperm.slane %v672, 0
    %v995 = vperm.slane %v672, 1
    %v996 = vperm.slane %v672, 2
    %v997 = vperm.slane %v672, 3
    %1002 = vmatpush.bf16.msra.mxu0 %v893
    %1003 = vmatpush.bf16.msra.mxu0 %v889
    %1004 = vmatpush.bf16.msra.mxu0 %v885
    %1005 = vmatpush.bf16.msra.mxu0 %v881
    %1006 = vmatpush.bf16.msra.mxu0 %v877
    %1007 = vmatpush.bf16.msra.mxu0 %v873
    %1008 = vmatpush.bf16.msra.mxu0 %v869
    %1009 = vmatpush.bf16.msra.mxu0 %v865
    %1010 = vmatmul.bf16.gmra.mxu0 %v606
    %v1011 = vpop.f32.mrf.mxu0
    %v1012 = vadd.f32 %v994, %v1011
    %v1013 = vpop.f32.mrf.mxu0
    %1014 = vdwg.mxu0
    %1015 = vmatpush.bf16.msra.mxu0 %v925
    %1016 = vmatpush.bf16.msra.mxu0 %v921
    %1017 = vmatpush.bf16.msra.mxu0 %v917
    %1018 = vmatpush.bf16.msra.mxu0 %v913
    %1019 = vmatpush.bf16.msra.mxu0 %v909
    %1020 = vmatpush.bf16.msra.mxu0 %v905
    %1021 = vmatpush.bf16.msra.mxu0 %v901
    %1022 = vmatpush.bf16.msra.mxu0 %v897
    %1023 = vmatmul.bf16.gmra.mxu0 %v607
    %v1024 = vpop.f32.mrf.mxu0
    %v1025 = vadd.f32 %v1012, %v1024
    %v1026 = vpop.f32.mrf.mxu0
    %1027 = vdwg.mxu0
    %1028 = vmatpush.bf16.msra.mxu0 %v894
    %1029 = vmatpush.bf16.msra.mxu0 %v890
    %1030 = vmatpush.bf16.msra.mxu0 %v886
    %1031 = vmatpush.bf16.msra.mxu0 %v882
    %1032 = vmatpush.bf16.msra.mxu0 %v878
    %1033 = vmatpush.bf16.msra.mxu0 %v874
    %1034 = vmatpush.bf16.msra.mxu0 %v870
    %1035 = vmatpush.bf16.msra.mxu0 %v866
    %1036 = vmatmul.bf16.gmra.mxu0 %v606
    %v1037 = vpop.f32.mrf.mxu0
    %v1038 = vadd.f32 %v995, %v1037
    %v1039 = vpop.f32.mrf.mxu0
    %1040 = vdwg.mxu0
    %1041 = vmatpush.bf16.msra.mxu0 %v926
    %1042 = vmatpush.bf16.msra.mxu0 %v922
    %1043 = vmatpush.bf16.msra.mxu0 %v918
    %1044 = vmatpush.bf16.msra.mxu0 %v914
    %1045 = vmatpush.bf16.msra.mxu0 %v910
    %1046 = vmatpush.bf16.msra.mxu0 %v906
    %1047 = vmatpush.bf16.msra.mxu0 %v902
    %1048 = vmatpush.bf16.msra.mxu0 %v898
    %1049 = vmatmul.bf16.gmra.mxu0 %v607
    %v1050 = vpop.f32.mrf.mxu0
    %v1051 = vadd.f32 %v1038, %v1050
    %v1052 = vpop.f32.mrf.mxu0
    %1053 = vdwg.mxu0
    %1054 = vmatpush.bf16.msra.mxu0 %v895
    %1055 = vmatpush.bf16.msra.mxu0 %v891
    %1056 = vmatpush.bf16.msra.mxu0 %v887
    %1057 = vmatpush.bf16.msra.mxu0 %v883
    %1058 = vmatpush.bf16.msra.mxu0 %v879
    %1059 = vmatpush.bf16.msra.mxu0 %v875
    %1060 = vmatpush.bf16.msra.mxu0 %v871
    %1061 = vmatpush.bf16.msra.mxu0 %v867
    %1062 = vmatmul.bf16.gmra.mxu0 %v606
    %v1063 = vpop.f32.mrf.mxu0
    %v1064 = vadd.f32 %v996, %v1063
    %v1065 = vpop.f32.mrf.mxu0
    %1066 = vdwg.mxu0
    %1067 = vmatpush.bf16.msra.mxu0 %v927
    %1068 = vmatpush.bf16.msra.mxu0 %v923
    %1069 = vmatpush.bf16.msra.mxu0 %v919
    %1070 = vmatpush.bf16.msra.mxu0 %v915
    %1071 = vmatpush.bf16.msra.mxu0 %v911
    %1072 = vmatpush.bf16.msra.mxu0 %v907
    %1073 = vmatpush.bf16.msra.mxu0 %v903
    %1074 = vmatpush.bf16.msra.mxu0 %v899
    %1075 = vmatmul.bf16.gmra.mxu0 %v607
    %v1076 = vpop.f32.mrf.mxu0
    %v1077 = vadd.f32 %v1064, %v1076
    %v1078 = vpop.f32.mrf.mxu0
    %1079 = vdwg.mxu0
    %1080 = vmatpush.bf16.msra.mxu0 %v896
    %1081 = vmatpush.bf16.msra.mxu0 %v892
    %1082 = vmatpush.bf16.msra.mxu0 %v888
    %1083 = vmatpush.bf16.msra.mxu0 %v884
    %1084 = vmatpush.bf16.msra.mxu0 %v880
    %1085 = vmatpush.bf16.msra.mxu0 %v876
    %1086 = vmatpush.bf16.msra.mxu0 %v872
    %1087 = vmatpush.bf16.msra.mxu0 %v868
    %1088 = vmatmul.bf16.gmra.mxu0 %v606
    %v1089 = vpop.f32.mrf.mxu0
    %v1090 = vadd.f32 %v997, %v1089
    %v1091 = vpop.f32.mrf.mxu0
    %1092 = vdwg.mxu0
    %1093 = vmatpush.bf16.msra.mxu0 %v928
    %1094 = vmatpush.bf16.msra.mxu0 %v924
    %1095 = vmatpush.bf16.msra.mxu0 %v920
    %1096 = vmatpush.bf16.msra.mxu0 %v916
    %1097 = vmatpush.bf16.msra.mxu0 %v912
    %1098 = vmatpush.bf16.msra.mxu0 %v908
    %1099 = vmatpush.bf16.msra.mxu0 %v904
    %1100 = vmatpush.bf16.msra.mxu0 %v900
    %1101 = vmatmul.bf16.gmra.mxu0 %v607
    %v1102 = vpop.f32.mrf.mxu0
    %v1103 = vadd.f32 %v1090, %v1102
    %v1104 = vpop.f32.mrf.mxu0
    %1105 = vdwg.mxu0
    %v1106 = vxor.u32 %v1025, 2147483648
    %v1107 = vxor.u32 %v1051, 2147483648
    %v1108 = vxor.u32 %v1077, 2147483648
    %v1109 = vmul.f32 %v1106, 1.442695
    %v1110 = vpow.pop %v1109
    %v1111 = vmul.f32 %v1107, 1.442695
    %v1112 = vpow.pop %v1111
    %v1113 = vmul.f32 %v1108, 1.442695
    %v1114 = vpow.pop %v1113
    %v1115 = vadd.f32 %v1110, 1.0
    %v1116 = vadd.f32 %v1112, 1.0
    %v1117 = vadd.f32 %v1114, 1.0
    %v1118 = vrcp.pop %v1115
    %v1119 = vmul.f32 %v1115, %v1118
    %v1120 = vsub.f32 1.0, %v1119
    %v1121 = vmul.f32 %v1118, %v1120
    %v1122 = vadd.f32 %v1118, %v1121
    %vm1123 = vweird.f32 %v1115
    %vm1124 = vweird.f32 %v1118
    %vm1125 = vmor %vm1123, %vm1124
    %v1126 = vsel %vm1125, %v1118, %v1122
    %v1127 = vand.u32 2147483647, %v1115
    %vm1128 = vcmp.eq.f32.partialorder %v1127, 8.507059e+37
    %v1129 = vand.u32 %v1115, 2147483648
    %v1130 = vor.u32 1.1754944e-38, %v1129
    %v1131 = vsel %vm1128, %v1130, %v1126
    %v1132 = vmul.f32 1.0, %v1131
    %v1133 = vrcp.pop %v1116
    %v1134 = vmul.f32 %v1116, %v1133
    %v1135 = vsub.f32 1.0, %v1134
    %v1136 = vmul.f32 %v1133, %v1135
    %v1137 = vadd.f32 %v1133, %v1136
    %vm1138 = vweird.f32 %v1116
    %vm1139 = vweird.f32 %v1133
    %vm1140 = vmor %vm1138, %vm1139
    %v1141 = vsel %vm1140, %v1133, %v1137
    %v1142 = vand.u32 2147483647, %v1116
    %vm1143 = vcmp.eq.f32.partialorder %v1142, 8.507059e+37
    %v1144 = vand.u32 %v1116, 2147483648
    %v1145 = vor.u32 1.1754944e-38, %v1144
    %v1146 = vsel %vm1143, %v1145, %v1141
    %v1147 = vmul.f32 1.0, %v1146
    %v1148 = vrcp.pop %v1117
    %v1149 = vmul.f32 %v1117, %v1148
    %v1150 = vsub.f32 1.0, %v1149
    %v1151 = vmul.f32 %v1148, %v1150
    %v1152 = vadd.f32 %v1148, %v1151
    %vm1153 = vweird.f32 %v1117
    %vm1154 = vweird.f32 %v1148
    %vm1155 = vmor %vm1153, %vm1154
    %v1156 = vsel %vm1155, %v1148, %v1152
    %v1157 = vand.u32 2147483647, %v1117
    %vm1158 = vcmp.eq.f32.partialorder %v1157, 8.507059e+37
    %v1159 = vand.u32 %v1117, 2147483648
    %v1160 = vor.u32 1.1754944e-38, %v1159
    %v1161 = vsel %vm1158, %v1160, %v1156
    %v1162 = vmul.f32 1.0, %v1161
    %v1163 = vtanh.pop %v1103
    %v1164 = vmul.f32 %v1147, %v311
    %v1165 = vmul.f32 %v1132, %v1163
    %v1166 = vadd.f32 %v1164, %v1165
    %v1167 = vtanh.pop %v1166
    %v1168 = vmul.f32 %v1162, %v1167
    %1169 = vst [vmem:[#allocation3] sm:$0x1] %v1168
    %s1170 = scalar_lea.vmem [#allocation2], 1
    %v1171 = vld [vmem:[%s1170] ss:$8 sm:$0xf]
    %v1172 = vld [vmem:[#allocation9] sm:$0xff]
    %v1173 = vld [vmem:[#allocation9 + $0x8] sm:$0xff]
    %v1174 = vld [vmem:[#allocation9 + $0x10] sm:$0xff]
    %v1175 = vld [vmem:[#allocation9 + $0x18] sm:$0xff]
    %v1176 = vld [vmem:[#allocation9 + $0x20] sm:$0xff]
    %v1177 = vld [vmem:[#allocation9 + $0x28] sm:$0xff]
    %v1178 = vld [vmem:[#allocation9 + $0x30] sm:$0xff]
    %v1179 = vld [vmem:[#allocation9 + $0x38] sm:$0xff]
    %v1180 = vld [vmem:[#allocation9 + $0x40] sm:$0xff]
    %v1181 = vld [vmem:[#allocation9 + $0x48] sm:$0xff]
    %v1182 = vld [vmem:[#allocation9 + $0x50] sm:$0xff]
    %v1183 = vld [vmem:[#allocation9 + $0x58] sm:$0xff]
    %v1184 = vld [vmem:[#allocation9 + $0x60] sm:$0xff]
    %v1185 = vld [vmem:[#allocation9 + $0x68] sm:$0xff]
    %v1186 = vld [vmem:[#allocation9 + $0x70] sm:$0xff]
    %v1187 = vld [vmem:[#allocation9 + $0x78] sm:$0xff]
    %v1188 = vld [vmem:[#allocation9 + $0x80] sm:$0xff]
    %v1189 = vld [vmem:[#allocation9 + $0x88] sm:$0xff]
    %v1190 = vld [vmem:[#allocation9 + $0x90] sm:$0xff]
    %v1191 = vld [vmem:[#allocation9 + $0x98] sm:$0xff]
    %v1192 = vld [vmem:[#allocation9 + $0xa0] sm:$0xff]
    %v1193 = vld [vmem:[#allocation9 + $0xa8] sm:$0xff]
    %v1194 = vld [vmem:[#allocation9 + $0xb0] sm:$0xff]
    %v1195 = vld [vmem:[#allocation9 + $0xb8] sm:$0xff]
    %v1196 = vld [vmem:[#allocation9 + $0xc0] sm:$0xff]
    %v1197 = vld [vmem:[#allocation9 + $0xc8] sm:$0xff]
    %v1198 = vld [vmem:[#allocation9 + $0xd0] sm:$0xff]
    %v1199 = vld [vmem:[#allocation9 + $0xd8] sm:$0xff]
    %v1200 = vld [vmem:[#allocation9 + $0xe0] sm:$0xff]
    %v1201 = vld [vmem:[#allocation9 + $0xe8] sm:$0xff]
    %v1202 = vld [vmem:[#allocation9 + $0xf0] sm:$0xff]
    %v1203 = vld [vmem:[#allocation9 + $0xf8] sm:$0xff]
    %v1236 = vunpack.c.l.b16 %v1172
    %v1237 = vunpack.c.h.b16 %v1172
    %v1238 = vunpack.c.l.b16 %v1173
    %v1239 = vunpack.c.h.b16 %v1173
    %v1240 = vunpack.c.l.b16 %v1174
    %v1241 = vunpack.c.h.b16 %v1174
    %v1242 = vunpack.c.l.b16 %v1175
    %v1243 = vunpack.c.h.b16 %v1175
    %v1244 = vunpack.c.l.b16 %v1176
    %v1245 = vunpack.c.h.b16 %v1176
    %v1246 = vunpack.c.l.b16 %v1177
    %v1247 = vunpack.c.h.b16 %v1177
    %v1248 = vunpack.c.l.b16 %v1178
    %v1249 = vunpack.c.h.b16 %v1178
    %v1250 = vunpack.c.l.b16 %v1179
    %v1251 = vunpack.c.h.b16 %v1179
    %v1252 = vunpack.c.l.b16 %v1180
    %v1253 = vunpack.c.h.b16 %v1180
    %v1254 = vunpack.c.l.b16 %v1181
    %v1255 = vunpack.c.h.b16 %v1181
    %v1256 = vunpack.c.l.b16 %v1182
    %v1257 = vunpack.c.h.b16 %v1182
    %v1258 = vunpack.c.l.b16 %v1183
    %v1259 = vunpack.c.h.b16 %v1183
    %v1260 = vunpack.c.l.b16 %v1184
    %v1261 = vunpack.c.h.b16 %v1184
    %v1262 = vunpack.c.l.b16 %v1185
    %v1263 = vunpack.c.h.b16 %v1185
    %v1264 = vunpack.c.l.b16 %v1186
    %v1265 = vunpack.c.h.b16 %v1186
    %v1266 = vunpack.c.l.b16 %v1187
    %v1267 = vunpack.c.h.b16 %v1187
    %v1268 = vunpack.c.l.b16 %v1188
    %v1269 = vunpack.c.h.b16 %v1188
    %v1270 = vunpack.c.l.b16 %v1189
    %v1271 = vunpack.c.h.b16 %v1189
    %v1272 = vunpack.c.l.b16 %v1190
    %v1273 = vunpack.c.h.b16 %v1190
    %v1274 = vunpack.c.l.b16 %v1191
    %v1275 = vunpack.c.h.b16 %v1191
    %v1276 = vunpack.c.l.b16 %v1192
    %v1277 = vunpack.c.h.b16 %v1192
    %v1278 = vunpack.c.l.b16 %v1193
    %v1279 = vunpack.c.h.b16 %v1193
    %v1280 = vunpack.c.l.b16 %v1194
    %v1281 = vunpack.c.h.b16 %v1194
    %v1282 = vunpack.c.l.b16 %v1195
    %v1283 = vunpack.c.h.b16 %v1195
    %v1284 = vunpack.c.l.b16 %v1196
    %v1285 = vunpack.c.h.b16 %v1196
    %v1286 = vunpack.c.l.b16 %v1197
    %v1287 = vunpack.c.h.b16 %v1197
    %v1288 = vunpack.c.l.b16 %v1198
    %v1289 = vunpack.c.h.b16 %v1198
    %v1290 = vunpack.c.l.b16 %v1199
    %v1291 = vunpack.c.h.b16 %v1199
    %v1292 = vunpack.c.l.b16 %v1200
    %v1293 = vunpack.c.h.b16 %v1200
    %v1294 = vunpack.c.l.b16 %v1201
    %v1295 = vunpack.c.h.b16 %v1201
    %v1296 = vunpack.c.l.b16 %v1202
    %v1297 = vunpack.c.h.b16 %v1202
    %v1298 = vunpack.c.l.b16 %v1203
    %v1299 = vunpack.c.h.b16 %v1203
    %v1300 = vpack.c.b16 %v1240, %v1236
    %v1301 = vpack.c.b16 %v1241, %v1237
    %v1302 = vpack.c.b16 %v1242, %v1238
    %v1303 = vpack.c.b16 %v1243, %v1239
    %v1304 = vpack.c.b16 %v1248, %v1244
    %v1305 = vpack.c.b16 %v1249, %v1245
    %v1306 = vpack.c.b16 %v1250, %v1246
    %v1307 = vpack.c.b16 %v1251, %v1247
    %v1308 = vpack.c.b16 %v1256, %v1252
    %v1309 = vpack.c.b16 %v1257, %v1253
    %v1310 = vpack.c.b16 %v1258, %v1254
    %v1311 = vpack.c.b16 %v1259, %v1255
    %v1312 = vpack.c.b16 %v1264, %v1260
    %v1313 = vpack.c.b16 %v1265, %v1261
    %v1314 = vpack.c.b16 %v1266, %v1262
    %v1315 = vpack.c.b16 %v1267, %v1263
    %v1316 = vpack.c.b16 %v1272, %v1268
    %v1317 = vpack.c.b16 %v1273, %v1269
    %v1318 = vpack.c.b16 %v1274, %v1270
    %v1319 = vpack.c.b16 %v1275, %v1271
    %v1320 = vpack.c.b16 %v1280, %v1276
    %v1321 = vpack.c.b16 %v1281, %v1277
    %v1322 = vpack.c.b16 %v1282, %v1278
    %v1323 = vpack.c.b16 %v1283, %v1279
    %v1324 = vpack.c.b16 %v1288, %v1284
    %v1325 = vpack.c.b16 %v1289, %v1285
    %v1326 = vpack.c.b16 %v1290, %v1286
    %v1327 = vpack.c.b16 %v1291, %v1287
    %v1328 = vpack.c.b16 %v1296, %v1292
    %v1329 = vpack.c.b16 %v1297, %v1293
    %v1330 = vpack.c.b16 %v1298, %v1294
    %v1331 = vpack.c.b16 %v1299, %v1295
    %1364 = vmatpush.bf16.msra.mxu0 %v1328
    %1365 = vmatpush.bf16.msra.mxu0 %v1324
    %1366 = vmatpush.bf16.msra.mxu0 %v1320
    %1367 = vmatpush.bf16.msra.mxu0 %v1316
    %1368 = vmatpush.bf16.msra.mxu0 %v1312
    %1369 = vmatpush.bf16.msra.mxu0 %v1308
    %1370 = vmatpush.bf16.msra.mxu0 %v1304
    %1371 = vmatpush.bf16.msra.mxu0 %v1300
    %1372 = vmatmul.bf16.gmra.mxu0 %v606
    %v1373 = vpop.f32.mrf.mxu0
    %v1374 = vadd.f32 0.0, %v1373
    %v1375 = vpop.f32.mrf.mxu0
    %1376 = vdwg.mxu0
    %1377 = vmatpush.bf16.msra.mxu0 %v1329
    %1378 = vmatpush.bf16.msra.mxu0 %v1325
    %1379 = vmatpush.bf16.msra.mxu0 %v1321
    %1380 = vmatpush.bf16.msra.mxu0 %v1317
    %1381 = vmatpush.bf16.msra.mxu0 %v1313
    %1382 = vmatpush.bf16.msra.mxu0 %v1309
    %1383 = vmatpush.bf16.msra.mxu0 %v1305
    %1384 = vmatpush.bf16.msra.mxu0 %v1301
    %1385 = vmatmul.bf16.gmra.mxu0 %v606
    %v1386 = vpop.f32.mrf.mxu0
    %v1387 = vadd.f32 0.0, %v1386
    %v1388 = vpop.f32.mrf.mxu0
    %1389 = vdwg.mxu0
    %1390 = vmatpush.bf16.msra.mxu0 %v1330
    %1391 = vmatpush.bf16.msra.mxu0 %v1326
    %1392 = vmatpush.bf16.msra.mxu0 %v1322
    %1393 = vmatpush.bf16.msra.mxu0 %v1318
    %1394 = vmatpush.bf16.msra.mxu0 %v1314
    %1395 = vmatpush.bf16.msra.mxu0 %v1310
    %1396 = vmatpush.bf16.msra.mxu0 %v1306
    %1397 = vmatpush.bf16.msra.mxu0 %v1302
    %1398 = vmatmul.bf16.gmra.mxu0 %v606
    %v1399 = vpop.f32.mrf.mxu0
    %v1400 = vadd.f32 0.0, %v1399
    %v1401 = vpop.f32.mrf.mxu0
    %1402 = vdwg.mxu0
    %1403 = vmatpush.bf16.msra.mxu0 %v1331
    %1404 = vmatpush.bf16.msra.mxu0 %v1327
    %1405 = vmatpush.bf16.msra.mxu0 %v1323
    %1406 = vmatpush.bf16.msra.mxu0 %v1319
    %1407 = vmatpush.bf16.msra.mxu0 %v1315
    %1408 = vmatpush.bf16.msra.mxu0 %v1311
    %1409 = vmatpush.bf16.msra.mxu0 %v1307
    %1410 = vmatpush.bf16.msra.mxu0 %v1303
    %1411 = vmatmul.bf16.gmra.mxu0 %v606
    %v1412 = vpop.f32.mrf.mxu0
    %v1413 = vadd.f32 0.0, %v1412
    %v1414 = vpop.f32.mrf.mxu0
    %1415 = vdwg.mxu0
    %v1420 = vrot.slane %v1387, 7
    %v1421 = vrot.slane %v1400, 6
    %v1422 = vrot.slane %v1413, 5
    %v1423 = vsel %vm565, %v1374, %v1420
    %v1424 = vsel %vm567, %v1421, %v1422
    %v1425 = vsel %vm569, %v1423, %v1424
    %v1427 = vadd.f32 %v1171, %v1425
    %v1428 = vxor.u32 %v1427, 2147483648
    %v1429 = vmul.f32 %v1428, 1.442695
    %v1430 = vpow.pop %v1429
    %v1431 = vadd.f32 %v1430, 1.0
    %v1432 = vrcp.pop %v1431
    %v1433 = vmul.f32 %v1431, %v1432
    %v1434 = vsub.f32 1.0, %v1433
    %v1435 = vmul.f32 %v1432, %v1434
    %v1436 = vadd.f32 %v1432, %v1435
    %vm1437 = vweird.f32 %v1431
    %vm1438 = vweird.f32 %v1432
    %vm1439 = vmor %vm1437, %vm1438
    %v1440 = vsel %vm1439, %v1432, %v1436
    %v1441 = vand.u32 2147483647, %v1431
    %vm1442 = vcmp.eq.f32.partialorder %v1441, 8.507059e+37
    %v1443 = vand.u32 %v1431, 2147483648
    %v1444 = vor.u32 1.1754944e-38, %v1443
    %v1445 = vsel %vm1442, %v1444, %v1440
    %v1446 = vmul.f32 1.0, %v1445
    %v1448 = vrot.slane %v1427, 3
    %v1450 = vtanh.pop %v1448
    %v1452 = vrot.slane %v1446, 1
    %v1454 = vmul.f32 %v1452, %v601
    %v1455 = vmul.f32 %v1446, %v1450
    %v1456 = vadd.f32 %v1454, %v1455
    %v1457 = vtanh.pop %v1456
    %v1458 = vrot.slane %v1446, 2
    %v1460 = vmul.f32 %v1458, %v1457
    %v1461 = vpack.c.bf16 %v1460, %v1460
    %v1462 = vpack.c.bf16 %v1168, %v1168
    %v1463 = vld [vmem:[#allocation12] sm:$0xff]
    %v1464 = vld [vmem:[#allocation12 + $0x8] sm:$0xff]
    %v1465 = vld [vmem:[#allocation12 + $0x10] sm:$0xff]
    %v1466 = vld [vmem:[#allocation12 + $0x18] sm:$0xff]
    %v1467 = vld [vmem:[#allocation12 + $0x20] sm:$0xff]
    %v1468 = vld [vmem:[#allocation12 + $0x28] sm:$0xff]
    %v1469 = vld [vmem:[#allocation12 + $0x30] sm:$0xff]
    %v1470 = vld [vmem:[#allocation12 + $0x38] sm:$0xff]
    %v1471 = vld [vmem:[#allocation12 + $0x40] sm:$0xff]
    %v1472 = vld [vmem:[#allocation12 + $0x48] sm:$0xff]
    %v1473 = vld [vmem:[#allocation12 + $0x50] sm:$0xff]
    %v1474 = vld [vmem:[#allocation12 + $0x58] sm:$0xff]
    %v1475 = vld [vmem:[#allocation12 + $0x60] sm:$0xff]
    %v1476 = vld [vmem:[#allocation12 + $0x68] sm:$0xff]
    %v1477 = vld [vmem:[#allocation12 + $0x70] sm:$0xff]
    %v1478 = vld [vmem:[#allocation12 + $0x78] sm:$0xff]
    %v1479 = vld [vmem:[#allocation12 + $0x80] sm:$0xff]
    %v1480 = vld [vmem:[#allocation12 + $0x88] sm:$0xff]
    %v1481 = vld [vmem:[#allocation12 + $0x90] sm:$0xff]
    %v1482 = vld [vmem:[#allocation12 + $0x98] sm:$0xff]
    %v1483 = vld [vmem:[#allocation12 + $0xa0] sm:$0xff]
    %v1484 = vld [vmem:[#allocation12 + $0xa8] sm:$0xff]
    %v1485 = vld [vmem:[#allocation12 + $0xb0] sm:$0xff]
    %v1486 = vld [vmem:[#allocation12 + $0xb8] sm:$0xff]
    %v1487 = vld [vmem:[#allocation12 + $0xc0] sm:$0xff]
    %v1488 = vld [vmem:[#allocation12 + $0xc8] sm:$0xff]
    %v1489 = vld [vmem:[#allocation12 + $0xd0] sm:$0xff]
    %v1490 = vld [vmem:[#allocation12 + $0xd8] sm:$0xff]
    %v1491 = vld [vmem:[#allocation12 + $0xe0] sm:$0xff]
    %v1492 = vld [vmem:[#allocation12 + $0xe8] sm:$0xff]
    %v1493 = vld [vmem:[#allocation12 + $0xf0] sm:$0xff]
    %v1494 = vld [vmem:[#allocation12 + $0xf8] sm:$0xff]
    %v1495 = vld [vmem:[#allocation12 + $0x100] sm:$0xff]
    %v1496 = vld [vmem:[#allocation12 + $0x108] sm:$0xff]
    %v1497 = vld [vmem:[#allocation12 + $0x110] sm:$0xff]
    %v1498 = vld [vmem:[#allocation12 + $0x118] sm:$0xff]
    %v1499 = vld [vmem:[#allocation12 + $0x120] sm:$0xff]
    %v1500 = vld [vmem:[#allocation12 + $0x128] sm:$0xff]
    %v1501 = vld [vmem:[#allocation12 + $0x130] sm:$0xff]
    %v1502 = vld [vmem:[#allocation12 + $0x138] sm:$0xff]
    %v1503 = vld [vmem:[#allocation12 + $0x140] sm:$0xff]
    %v1504 = vld [vmem:[#allocation12 + $0x148] sm:$0xff]
    %v1505 = vld [vmem:[#allocation12 + $0x150] sm:$0xff]
    %v1506 = vld [vmem:[#allocation12 + $0x158] sm:$0xff]
    %v1507 = vld [vmem:[#allocation12 + $0x160] sm:$0xff]
    %v1508 = vld [vmem:[#allocation12 + $0x168] sm:$0xff]
    %v1509 = vld [vmem:[#allocation12 + $0x170] sm:$0xff]
    %v1510 = vld [vmem:[#allocation12 + $0x178] sm:$0xff]
    %v1511 = vld [vmem:[#allocation12 + $0x180] sm:$0xff]
    %v1512 = vld [vmem:[#allocation12 + $0x188] sm:$0xff]
    %v1513 = vld [vmem:[#allocation12 + $0x190] sm:$0xff]
    %v1514 = vld [vmem:[#allocation12 + $0x198] sm:$0xff]
    %v1515 = vld [vmem:[#allocation12 + $0x1a0] sm:$0xff]
    %v1516 = vld [vmem:[#allocation12 + $0x1a8] sm:$0xff]
    %v1517 = vld [vmem:[#allocation12 + $0x1b0] sm:$0xff]
    %v1518 = vld [vmem:[#allocation12 + $0x1b8] sm:$0xff]
    %v1519 = vld [vmem:[#allocation12 + $0x1c0] sm:$0xff]
    %v1520 = vld [vmem:[#allocation12 + $0x1c8] sm:$0xff]
    %v1521 = vld [vmem:[#allocation12 + $0x1d0] sm:$0xff]
    %v1522 = vld [vmem:[#allocation12 + $0x1d8] sm:$0xff]
    %v1523 = vld [vmem:[#allocation12 + $0x1e0] sm:$0xff]
    %v1524 = vld [vmem:[#allocation12 + $0x1e8] sm:$0xff]
    %v1525 = vld [vmem:[#allocation12 + $0x1f0] sm:$0xff]
    %v1526 = vld [vmem:[#allocation12 + $0x1f8] sm:$0xff]
    %v1527 = vld [vmem:[%s5] sm:$0xf]
    %v1592 = vunpack.c.l.b16 %v1463
    %v1593 = vunpack.c.h.b16 %v1463
    %v1594 = vunpack.c.l.b16 %v1464
    %v1595 = vunpack.c.h.b16 %v1464
    %v1596 = vunpack.c.l.b16 %v1465
    %v1597 = vunpack.c.h.b16 %v1465
    %v1598 = vunpack.c.l.b16 %v1466
    %v1599 = vunpack.c.h.b16 %v1466
    %v1600 = vunpack.c.l.b16 %v1467
    %v1601 = vunpack.c.h.b16 %v1467
    %v1602 = vunpack.c.l.b16 %v1468
    %v1603 = vunpack.c.h.b16 %v1468
    %v1604 = vunpack.c.l.b16 %v1469
    %v1605 = vunpack.c.h.b16 %v1469
    %v1606 = vunpack.c.l.b16 %v1470
    %v1607 = vunpack.c.h.b16 %v1470
    %v1608 = vunpack.c.l.b16 %v1471
    %v1609 = vunpack.c.h.b16 %v1471
    %v1610 = vunpack.c.l.b16 %v1472
    %v1611 = vunpack.c.h.b16 %v1472
    %v1612 = vunpack.c.l.b16 %v1473
    %v1613 = vunpack.c.h.b16 %v1473
    %v1614 = vunpack.c.l.b16 %v1474
    %v1615 = vunpack.c.h.b16 %v1474
    %v1616 = vunpack.c.l.b16 %v1475
    %v1617 = vunpack.c.h.b16 %v1475
    %v1618 = vunpack.c.l.b16 %v1476
    %v1619 = vunpack.c.h.b16 %v1476
    %v1620 = vunpack.c.l.b16 %v1477
    %v1621 = vunpack.c.h.b16 %v1477
    %v1622 = vunpack.c.l.b16 %v1478
    %v1623 = vunpack.c.h.b16 %v1478
    %v1624 = vunpack.c.l.b16 %v1479
    %v1625 = vunpack.c.h.b16 %v1479
    %v1626 = vunpack.c.l.b16 %v1480
    %v1627 = vunpack.c.h.b16 %v1480
    %v1628 = vunpack.c.l.b16 %v1481
    %v1629 = vunpack.c.h.b16 %v1481
    %v1630 = vunpack.c.l.b16 %v1482
    %v1631 = vunpack.c.h.b16 %v1482
    %v1632 = vunpack.c.l.b16 %v1483
    %v1633 = vunpack.c.h.b16 %v1483
    %v1634 = vunpack.c.l.b16 %v1484
    %v1635 = vunpack.c.h.b16 %v1484
    %v1636 = vunpack.c.l.b16 %v1485
    %v1637 = vunpack.c.h.b16 %v1485
    %v1638 = vunpack.c.l.b16 %v1486
    %v1639 = vunpack.c.h.b16 %v1486
    %v1640 = vunpack.c.l.b16 %v1487
    %v1641 = vunpack.c.h.b16 %v1487
    %v1642 = vunpack.c.l.b16 %v1488
    %v1643 = vunpack.c.h.b16 %v1488
    %v1644 = vunpack.c.l.b16 %v1489
    %v1645 = vunpack.c.h.b16 %v1489
    %v1646 = vunpack.c.l.b16 %v1490
    %v1647 = vunpack.c.h.b16 %v1490
    %v1648 = vunpack.c.l.b16 %v1491
    %v1649 = vunpack.c.h.b16 %v1491
    %v1650 = vunpack.c.l.b16 %v1492
    %v1651 = vunpack.c.h.b16 %v1492
    %v1652 = vunpack.c.l.b16 %v1493
    %v1653 = vunpack.c.h.b16 %v1493
    %v1654 = vunpack.c.l.b16 %v1494
    %v1655 = vunpack.c.h.b16 %v1494
    %v1656 = vunpack.c.l.b16 %v1495
    %v1657 = vunpack.c.h.b16 %v1495
    %v1658 = vunpack.c.l.b16 %v1496
    %v1659 = vunpack.c.h.b16 %v1496
    %v1660 = vunpack.c.l.b16 %v1497
    %v1661 = vunpack.c.h.b16 %v1497
    %v1662 = vunpack.c.l.b16 %v1498
    %v1663 = vunpack.c.h.b16 %v1498
    %v1664 = vunpack.c.l.b16 %v1499
    %v1665 = vunpack.c.h.b16 %v1499
    %v1666 = vunpack.c.l.b16 %v1500
    %v1667 = vunpack.c.h.b16 %v1500
    %v1668 = vunpack.c.l.b16 %v1501
    %v1669 = vunpack.c.h.b16 %v1501
    %v1670 = vunpack.c.l.b16 %v1502
    %v1671 = vunpack.c.h.b16 %v1502
    %v1672 = vunpack.c.l.b16 %v1503
    %v1673 = vunpack.c.h.b16 %v1503
    %v1674 = vunpack.c.l.b16 %v1504
    %v1675 = vunpack.c.h.b16 %v1504
    %v1676 = vunpack.c.l.b16 %v1505
    %v1677 = vunpack.c.h.b16 %v1505
    %v1678 = vunpack.c.l.b16 %v1506
    %v1679 = vunpack.c.h.b16 %v1506
    %v1680 = vunpack.c.l.b16 %v1507
    %v1681 = vunpack.c.h.b16 %v1507
    %v1682 = vunpack.c.l.b16 %v1508
    %v1683 = vunpack.c.h.b16 %v1508
    %v1684 = vunpack.c.l.b16 %v1509
    %v1685 = vunpack.c.h.b16 %v1509
    %v1686 = vunpack.c.l.b16 %v1510
    %v1687 = vunpack.c.h.b16 %v1510
    %v1688 = vunpack.c.l.b16 %v1511
    %v1689 = vunpack.c.h.b16 %v1511
    %v1690 = vunpack.c.l.b16 %v1512
    %v1691 = vunpack.c.h.b16 %v1512
    %v1692 = vunpack.c.l.b16 %v1513
    %v1693 = vunpack.c.h.b16 %v1513
    %v1694 = vunpack.c.l.b16 %v1514
    %v1695 = vunpack.c.h.b16 %v1514
    %v1696 = vunpack.c.l.b16 %v1515
    %v1697 = vunpack.c.h.b16 %v1515
    %v1698 = vunpack.c.l.b16 %v1516
    %v1699 = vunpack.c.h.b16 %v1516
    %v1700 = vunpack.c.l.b16 %v1517
    %v1701 = vunpack.c.h.b16 %v1517
    %v1702 = vunpack.c.l.b16 %v1518
    %v1703 = vunpack.c.h.b16 %v1518
    %v1704 = vunpack.c.l.b16 %v1519
    %v1705 = vunpack.c.h.b16 %v1519
    %v1706 = vunpack.c.l.b16 %v1520
    %v1707 = vunpack.c.h.b16 %v1520
    %v1708 = vunpack.c.l.b16 %v1521
    %v1709 = vunpack.c.h.b16 %v1521
    %v1710 = vunpack.c.l.b16 %v1522
    %v1711 = vunpack.c.h.b16 %v1522
    %v1712 = vunpack.c.l.b16 %v1523
    %v1713 = vunpack.c.h.b16 %v1523
    %v1714 = vunpack.c.l.b16 %v1524
    %v1715 = vunpack.c.h.b16 %v1524
    %v1716 = vunpack.c.l.b16 %v1525
    %v1717 = vunpack.c.h.b16 %v1525
    %v1718 = vunpack.c.l.b16 %v1526
    %v1719 = vunpack.c.h.b16 %v1526
    %v1720 = vpack.c.b16 %v1596, %v1592
    %v1721 = vpack.c.b16 %v1597, %v1593
    %v1722 = vpack.c.b16 %v1598, %v1594
    %v1723 = vpack.c.b16 %v1599, %v1595
    %v1724 = vpack.c.b16 %v1604, %v1600
    %v1725 = vpack.c.b16 %v1605, %v1601
    %v1726 = vpack.c.b16 %v1606, %v1602
    %v1727 = vpack.c.b16 %v1607, %v1603
    %v1728 = vpack.c.b16 %v1612, %v1608
    %v1729 = vpack.c.b16 %v1613, %v1609
    %v1730 = vpack.c.b16 %v1614, %v1610
    %v1731 = vpack.c.b16 %v1615, %v1611
    %v1732 = vpack.c.b16 %v1620, %v1616
    %v1733 = vpack.c.b16 %v1621, %v1617
    %v1734 = vpack.c.b16 %v1622, %v1618
    %v1735 = vpack.c.b16 %v1623, %v1619
    %v1736 = vpack.c.b16 %v1628, %v1624
    %v1737 = vpack.c.b16 %v1629, %v1625
    %v1738 = vpack.c.b16 %v1630, %v1626
    %v1739 = vpack.c.b16 %v1631, %v1627
    %v1740 = vpack.c.b16 %v1636, %v1632
    %v1741 = vpack.c.b16 %v1637, %v1633
    %v1742 = vpack.c.b16 %v1638, %v1634
    %v1743 = vpack.c.b16 %v1639, %v1635
    %v1744 = vpack.c.b16 %v1644, %v1640
    %v1745 = vpack.c.b16 %v1645, %v1641
    %v1746 = vpack.c.b16 %v1646, %v1642
    %v1747 = vpack.c.b16 %v1647, %v1643
    %v1748 = vpack.c.b16 %v1652, %v1648
    %v1749 = vpack.c.b16 %v1653, %v1649
    %v1750 = vpack.c.b16 %v1654, %v1650
    %v1751 = vpack.c.b16 %v1655, %v1651
    %v1752 = vpack.c.b16 %v1660, %v1656
    %v1753 = vpack.c.b16 %v1661, %v1657
    %v1754 = vpack.c.b16 %v1662, %v1658
    %v1755 = vpack.c.b16 %v1663, %v1659
    %v1756 = vpack.c.b16 %v1668, %v1664
    %v1757 = vpack.c.b16 %v1669, %v1665
    %v1758 = vpack.c.b16 %v1670, %v1666
    %v1759 = vpack.c.b16 %v1671, %v1667
    %v1760 = vpack.c.b16 %v1676, %v1672
    %v1761 = vpack.c.b16 %v1677, %v1673
    %v1762 = vpack.c.b16 %v1678, %v1674
    %v1763 = vpack.c.b16 %v1679, %v1675
    %v1764 = vpack.c.b16 %v1684, %v1680
    %v1765 = vpack.c.b16 %v1685, %v1681
    %v1766 = vpack.c.b16 %v1686, %v1682
    %v1767 = vpack.c.b16 %v1687, %v1683
    %v1768 = vpack.c.b16 %v1692, %v1688
    %v1769 = vpack.c.b16 %v1693, %v1689
    %v1770 = vpack.c.b16 %v1694, %v1690
    %v1771 = vpack.c.b16 %v1695, %v1691
    %v1772 = vpack.c.b16 %v1700, %v1696
    %v1773 = vpack.c.b16 %v1701, %v1697
    %v1774 = vpack.c.b16 %v1702, %v1698
    %v1775 = vpack.c.b16 %v1703, %v1699
    %v1776 = vpack.c.b16 %v1708, %v1704
    %v1777 = vpack.c.b16 %v1709, %v1705
    %v1778 = vpack.c.b16 %v1710, %v1706
    %v1779 = vpack.c.b16 %v1711, %v1707
    %v1780 = vpack.c.b16 %v1716, %v1712
    %v1781 = vpack.c.b16 %v1717, %v1713
    %v1782 = vpack.c.b16 %v1718, %v1714
    %v1783 = vpack.c.b16 %v1719, %v1715
    %v1849 = vperm.slane %v1527, 0
    %v1850 = vperm.slane %v1527, 1
    %v1851 = vperm.slane %v1527, 2
    %v1852 = vperm.slane %v1527, 3
    %1857 = vmatpush.bf16.msra.mxu0 %v1748
    %1858 = vmatpush.bf16.msra.mxu0 %v1744
    %1859 = vmatpush.bf16.msra.mxu0 %v1740
    %1860 = vmatpush.bf16.msra.mxu0 %v1736
    %1861 = vmatpush.bf16.msra.mxu0 %v1732
    %1862 = vmatpush.bf16.msra.mxu0 %v1728
    %1863 = vmatpush.bf16.msra.mxu0 %v1724
    %1864 = vmatpush.bf16.msra.mxu0 %v1720
    %1865 = vmatmul.bf16.gmra.mxu0 %v1461
    %v1866 = vpop.f32.mrf.mxu0
    %v1867 = vadd.f32 %v1849, %v1866
    %v1868 = vpop.f32.mrf.mxu0
    %1869 = vdwg.mxu0
    %1870 = vmatpush.bf16.msra.mxu0 %v1780
    %1871 = vmatpush.bf16.msra.mxu0 %v1776
    %1872 = vmatpush.bf16.msra.mxu0 %v1772
    %1873 = vmatpush.bf16.msra.mxu0 %v1768
    %1874 = vmatpush.bf16.msra.mxu0 %v1764
    %1875 = vmatpush.bf16.msra.mxu0 %v1760
    %1876 = vmatpush.bf16.msra.mxu0 %v1756
    %1877 = vmatpush.bf16.msra.mxu0 %v1752
    %1878 = vmatmul.bf16.gmra.mxu0 %v1462
    %v1879 = vpop.f32.mrf.mxu0
    %v1880 = vadd.f32 %v1867, %v1879
    %v1881 = vpop.f32.mrf.mxu0
    %1882 = vdwg.mxu0
    %1883 = vmatpush.bf16.msra.mxu0 %v1749
    %1884 = vmatpush.bf16.msra.mxu0 %v1745
    %1885 = vmatpush.bf16.msra.mxu0 %v1741
    %1886 = vmatpush.bf16.msra.mxu0 %v1737
    %1887 = vmatpush.bf16.msra.mxu0 %v1733
    %1888 = vmatpush.bf16.msra.mxu0 %v1729
    %1889 = vmatpush.bf16.msra.mxu0 %v1725
    %1890 = vmatpush.bf16.msra.mxu0 %v1721
    %1891 = vmatmul.bf16.gmra.mxu0 %v1461
    %v1892 = vpop.f32.mrf.mxu0
    %v1893 = vadd.f32 %v1850, %v1892
    %v1894 = vpop.f32.mrf.mxu0
    %1895 = vdwg.mxu0
    %1896 = vmatpush.bf16.msra.mxu0 %v1781
    %1897 = vmatpush.bf16.msra.mxu0 %v1777
    %1898 = vmatpush.bf16.msra.mxu0 %v1773
    %1899 = vmatpush.bf16.msra.mxu0 %v1769
    %1900 = vmatpush.bf16.msra.mxu0 %v1765
    %1901 = vmatpush.bf16.msra.mxu0 %v1761
    %1902 = vmatpush.bf16.msra.mxu0 %v1757
    %1903 = vmatpush.bf16.msra.mxu0 %v1753
    %1904 = vmatmul.bf16.gmra.mxu0 %v1462
    %v1905 = vpop.f32.mrf.mxu0
    %v1906 = vadd.f32 %v1893, %v1905
    %v1907 = vpop.f32.mrf.mxu0
    %1908 = vdwg.mxu0
    %1909 = vmatpush.bf16.msra.mxu0 %v1750
    %1910 = vmatpush.bf16.msra.mxu0 %v1746
    %1911 = vmatpush.bf16.msra.mxu0 %v1742
    %1912 = vmatpush.bf16.msra.mxu0 %v1738
    %1913 = vmatpush.bf16.msra.mxu0 %v1734
    %1914 = vmatpush.bf16.msra.mxu0 %v1730
    %1915 = vmatpush.bf16.msra.mxu0 %v1726
    %1916 = vmatpush.bf16.msra.mxu0 %v1722
    %1917 = vmatmul.bf16.gmra.mxu0 %v1461
    %v1918 = vpop.f32.mrf.mxu0
    %v1919 = vadd.f32 %v1851, %v1918
    %v1920 = vpop.f32.mrf.mxu0
    %1921 = vdwg.mxu0
    %1922 = vmatpush.bf16.msra.mxu0 %v1782
    %1923 = vmatpush.bf16.msra.mxu0 %v1778
    %1924 = vmatpush.bf16.msra.mxu0 %v1774
    %1925 = vmatpush.bf16.msra.mxu0 %v1770
    %1926 = vmatpush.bf16.msra.mxu0 %v1766
    %1927 = vmatpush.bf16.msra.mxu0 %v1762
    %1928 = vmatpush.bf16.msra.mxu0 %v1758
    %1929 = vmatpush.bf16.msra.mxu0 %v1754
    %1930 = vmatmul.bf16.gmra.mxu0 %v1462
    %v1931 = vpop.f32.mrf.mxu0
    %v1932 = vadd.f32 %v1919, %v1931
    %v1933 = vpop.f32.mrf.mxu0
    %1934 = vdwg.mxu0
    %1935 = vmatpush.bf16.msra.mxu0 %v1751
    %1936 = vmatpush.bf16.msra.mxu0 %v1747
    %1937 = vmatpush.bf16.msra.mxu0 %v1743
    %1938 = vmatpush.bf16.msra.mxu0 %v1739
    %1939 = vmatpush.bf16.msra.mxu0 %v1735
    %1940 = vmatpush.bf16.msra.mxu0 %v1731
    %1941 = vmatpush.bf16.msra.mxu0 %v1727
    %1942 = vmatpush.bf16.msra.mxu0 %v1723
    %1943 = vmatmul.bf16.gmra.mxu0 %v1461
    %v1944 = vpop.f32.mrf.mxu0
    %v1945 = vadd.f32 %v1852, %v1944
    %v1946 = vpop.f32.mrf.mxu0
    %1947 = vdwg.mxu0
    %1948 = vmatpush.bf16.msra.mxu0 %v1783
    %1949 = vmatpush.bf16.msra.mxu0 %v1779
    %1950 = vmatpush.bf16.msra.mxu0 %v1775
    %1951 = vmatpush.bf16.msra.mxu0 %v1771
    %1952 = vmatpush.bf16.msra.mxu0 %v1767
    %1953 = vmatpush.bf16.msra.mxu0 %v1763
    %1954 = vmatpush.bf16.msra.mxu0 %v1759
    %1955 = vmatpush.bf16.msra.mxu0 %v1755
    %1956 = vmatmul.bf16.gmra.mxu0 %v1462
    %v1957 = vpop.f32.mrf.mxu0
    %v1958 = vadd.f32 %v1945, %v1957
    %v1959 = vpop.f32.mrf.mxu0
    %1960 = vdwg.mxu0
    %v1961 = vxor.u32 %v1880, 2147483648
    %v1962 = vxor.u32 %v1906, 2147483648
    %v1963 = vxor.u32 %v1932, 2147483648
    %v1964 = vmul.f32 %v1961, 1.442695
    %v1965 = vpow.pop %v1964
    %v1966 = vmul.f32 %v1962, 1.442695
    %v1967 = vpow.pop %v1966
    %v1968 = vmul.f32 %v1963, 1.442695
    %v1969 = vpow.pop %v1968
    %v1970 = vadd.f32 %v1965, 1.0
    %v1971 = vadd.f32 %v1967, 1.0
    %v1972 = vadd.f32 %v1969, 1.0
    %v1973 = vrcp.pop %v1970
    %v1974 = vmul.f32 %v1970, %v1973
    %v1975 = vsub.f32 1.0, %v1974
    %v1976 = vmul.f32 %v1973, %v1975
    %v1977 = vadd.f32 %v1973, %v1976
    %vm1978 = vweird.f32 %v1970
    %vm1979 = vweird.f32 %v1973
    %vm1980 = vmor %vm1978, %vm1979
    %v1981 = vsel %vm1980, %v1973, %v1977
    %v1982 = vand.u32 2147483647, %v1970
    %vm1983 = vcmp.eq.f32.partialorder %v1982, 8.507059e+37
    %v1984 = vand.u32 %v1970, 2147483648
    %v1985 = vor.u32 1.1754944e-38, %v1984
    %v1986 = vsel %vm1983, %v1985, %v1981
    %v1987 = vmul.f32 1.0, %v1986
    %v1988 = vrcp.pop %v1971
    %v1989 = vmul.f32 %v1971, %v1988
    %v1990 = vsub.f32 1.0, %v1989
    %v1991 = vmul.f32 %v1988, %v1990
    %v1992 = vadd.f32 %v1988, %v1991
    %vm1993 = vweird.f32 %v1971
    %vm1994 = vweird.f32 %v1988
    %vm1995 = vmor %vm1993, %vm1994
    %v1996 = vsel %vm1995, %v1988, %v1992
    %v1997 = vand.u32 2147483647, %v1971
    %vm1998 = vcmp.eq.f32.partialorder %v1997, 8.507059e+37
    %v1999 = vand.u32 %v1971, 2147483648
    %v2000 = vor.u32 1.1754944e-38, %v1999
    %v2001 = vsel %vm1998, %v2000, %v1996
    %v2002 = vmul.f32 1.0, %v2001
    %v2003 = vrcp.pop %v1972
    %v2004 = vmul.f32 %v1972, %v2003
    %v2005 = vsub.f32 1.0, %v2004
    %v2006 = vmul.f32 %v2003, %v2005
    %v2007 = vadd.f32 %v2003, %v2006
    %vm2008 = vweird.f32 %v1972
    %vm2009 = vweird.f32 %v2003
    %vm2010 = vmor %vm2008, %vm2009
    %v2011 = vsel %vm2010, %v2003, %v2007
    %v2012 = vand.u32 2147483647, %v1972
    %vm2013 = vcmp.eq.f32.partialorder %v2012, 8.507059e+37
    %v2014 = vand.u32 %v1972, 2147483648
    %v2015 = vor.u32 1.1754944e-38, %v2014
    %v2016 = vsel %vm2013, %v2015, %v2011
    %v2017 = vmul.f32 1.0, %v2016
    %v2018 = vtanh.pop %v1958
    %v2019 = vmul.f32 %v2002, %v1166
    %v2020 = vmul.f32 %v1987, %v2018
    %v2021 = vadd.f32 %v2019, %v2020
    %v2022 = vtanh.pop %v2021
    %v2023 = vmul.f32 %v2017, %v2022
    %2024 = vst [vmem:[#allocation3 + $0x1] sm:$0x1] %v2023
    %s2025 = scalar_lea.vmem [#allocation2], 2
    %v2026 = vld [vmem:[%s2025] ss:$8 sm:$0xf]
    %v2027 = vld [vmem:[#allocation9] sm:$0xff]
    %v2028 = vld [vmem:[#allocation9 + $0x8] sm:$0xff]
    %v2029 = vld [vmem:[#allocation9 + $0x10] sm:$0xff]
    %v2030 = vld [vmem:[#allocation9 + $0x18] sm:$0xff]
    %v2031 = vld [vmem:[#allocation9 + $0x20] sm:$0xff]
    %v2032 = vld [vmem:[#allocation9 + $0x28] sm:$0xff]
    %v2033 = vld [vmem:[#allocation9 + $0x30] sm:$0xff]
    %v2034 = vld [vmem:[#allocation9 + $0x38] sm:$0xff]
    %v2035 = vld [vmem:[#allocation9 + $0x40] sm:$0xff]
    %v2036 = vld [vmem:[#allocation9 + $0x48] sm:$0xff]
    %v2037 = vld [vmem:[#allocation9 + $0x50] sm:$0xff]
    %v2038 = vld [vmem:[#allocation9 + $0x58] sm:$0xff]
    %v2039 = vld [vmem:[#allocation9 + $0x60] sm:$0xff]
    %v2040 = vld [vmem:[#allocation9 + $0x68] sm:$0xff]
    %v2041 = vld [vmem:[#allocation9 + $0x70] sm:$0xff]
    %v2042 = vld [vmem:[#allocation9 + $0x78] sm:$0xff]
    %v2043 = vld [vmem:[#allocation9 + $0x80] sm:$0xff]
    %v2044 = vld [vmem:[#allocation9 + $0x88] sm:$0xff]
    %v2045 = vld [vmem:[#allocation9 + $0x90] sm:$0xff]
    %v2046 = vld [vmem:[#allocation9 + $0x98] sm:$0xff]
    %v2047 = vld [vmem:[#allocation9 + $0xa0] sm:$0xff]
    %v2048 = vld [vmem:[#allocation9 + $0xa8] sm:$0xff]
    %v2049 = vld [vmem:[#allocation9 + $0xb0] sm:$0xff]
    %v2050 = vld [vmem:[#allocation9 + $0xb8] sm:$0xff]
    %v2051 = vld [vmem:[#allocation9 + $0xc0] sm:$0xff]
    %v2052 = vld [vmem:[#allocation9 + $0xc8] sm:$0xff]
    %v2053 = vld [vmem:[#allocation9 + $0xd0] sm:$0xff]
    %v2054 = vld [vmem:[#allocation9 + $0xd8] sm:$0xff]
    %v2055 = vld [vmem:[#allocation9 + $0xe0] sm:$0xff]
    %v2056 = vld [vmem:[#allocation9 + $0xe8] sm:$0xff]
    %v2057 = vld [vmem:[#allocation9 + $0xf0] sm:$0xff]
    %v2058 = vld [vmem:[#allocation9 + $0xf8] sm:$0xff]
    %v2091 = vunpack.c.l.b16 %v2027
    %v2092 = vunpack.c.h.b16 %v2027
    %v2093 = vunpack.c.l.b16 %v2028
    %v2094 = vunpack.c.h.b16 %v2028
    %v2095 = vunpack.c.l.b16 %v2029
    %v2096 = vunpack.c.h.b16 %v2029
    %v2097 = vunpack.c.l.b16 %v2030
    %v2098 = vunpack.c.h.b16 %v2030
    %v2099 = vunpack.c.l.b16 %v2031
    %v2100 = vunpack.c.h.b16 %v2031
    %v2101 = vunpack.c.l.b16 %v2032
    %v2102 = vunpack.c.h.b16 %v2032
    %v2103 = vunpack.c.l.b16 %v2033
    %v2104 = vunpack.c.h.b16 %v2033
    %v2105 = vunpack.c.l.b16 %v2034
    %v2106 = vunpack.c.h.b16 %v2034
    %v2107 = vunpack.c.l.b16 %v2035
    %v2108 = vunpack.c.h.b16 %v2035
    %v2109 = vunpack.c.l.b16 %v2036
    %v2110 = vunpack.c.h.b16 %v2036
    %v2111 = vunpack.c.l.b16 %v2037
    %v2112 = vunpack.c.h.b16 %v2037
    %v2113 = vunpack.c.l.b16 %v2038
    %v2114 = vunpack.c.h.b16 %v2038
    %v2115 = vunpack.c.l.b16 %v2039
    %v2116 = vunpack.c.h.b16 %v2039
    %v2117 = vunpack.c.l.b16 %v2040
    %v2118 = vunpack.c.h.b16 %v2040
    %v2119 = vunpack.c.l.b16 %v2041
    %v2120 = vunpack.c.h.b16 %v2041
    %v2121 = vunpack.c.l.b16 %v2042
    %v2122 = vunpack.c.h.b16 %v2042
    %v2123 = vunpack.c.l.b16 %v2043
    %v2124 = vunpack.c.h.b16 %v2043
    %v2125 = vunpack.c.l.b16 %v2044
    %v2126 = vunpack.c.h.b16 %v2044
    %v2127 = vunpack.c.l.b16 %v2045
    %v2128 = vunpack.c.h.b16 %v2045
    %v2129 = vunpack.c.l.b16 %v2046
    %v2130 = vunpack.c.h.b16 %v2046
    %v2131 = vunpack.c.l.b16 %v2047
    %v2132 = vunpack.c.h.b16 %v2047
    %v2133 = vunpack.c.l.b16 %v2048
    %v2134 = vunpack.c.h.b16 %v2048
    %v2135 = vunpack.c.l.b16 %v2049
    %v2136 = vunpack.c.h.b16 %v2049
    %v2137 = vunpack.c.l.b16 %v2050
    %v2138 = vunpack.c.h.b16 %v2050
    %v2139 = vunpack.c.l.b16 %v2051
    %v2140 = vunpack.c.h.b16 %v2051
    %v2141 = vunpack.c.l.b16 %v2052
    %v2142 = vunpack.c.h.b16 %v2052
    %v2143 = vunpack.c.l.b16 %v2053
    %v2144 = vunpack.c.h.b16 %v2053
    %v2145 = vunpack.c.l.b16 %v2054
    %v2146 = vunpack.c.h.b16 %v2054
    %v2147 = vunpack.c.l.b16 %v2055
    %v2148 = vunpack.c.h.b16 %v2055
    %v2149 = vunpack.c.l.b16 %v2056
    %v2150 = vunpack.c.h.b16 %v2056
    %v2151 = vunpack.c.l.b16 %v2057
    %v2152 = vunpack.c.h.b16 %v2057
    %v2153 = vunpack.c.l.b16 %v2058
    %v2154 = vunpack.c.h.b16 %v2058
    %v2155 = vpack.c.b16 %v2095, %v2091
    %v2156 = vpack.c.b16 %v2096, %v2092
    %v2157 = vpack.c.b16 %v2097, %v2093
    %v2158 = vpack.c.b16 %v2098, %v2094
    %v2159 = vpack.c.b16 %v2103, %v2099
    %v2160 = vpack.c.b16 %v2104, %v2100
    %v2161 = vpack.c.b16 %v2105, %v2101
    %v2162 = vpack.c.b16 %v2106, %v2102
    %v2163 = vpack.c.b16 %v2111, %v2107
    %v2164 = vpack.c.b16 %v2112, %v2108
    %v2165 = vpack.c.b16 %v2113, %v2109
    %v2166 = vpack.c.b16 %v2114, %v2110
    %v2167 = vpack.c.b16 %v2119, %v2115
    %v2168 = vpack.c.b16 %v2120, %v2116
    %v2169 = vpack.c.b16 %v2121, %v2117
    %v2170 = vpack.c.b16 %v2122, %v2118
    %v2171 = vpack.c.b16 %v2127, %v2123
    %v2172 = vpack.c.b16 %v2128, %v2124
    %v2173 = vpack.c.b16 %v2129, %v2125
    %v2174 = vpack.c.b16 %v2130, %v2126
    %v2175 = vpack.c.b16 %v2135, %v2131
    %v2176 = vpack.c.b16 %v2136, %v2132
    %v2177 = vpack.c.b16 %v2137, %v2133
    %v2178 = vpack.c.b16 %v2138, %v2134
    %v2179 = vpack.c.b16 %v2143, %v2139
    %v2180 = vpack.c.b16 %v2144, %v2140
    %v2181 = vpack.c.b16 %v2145, %v2141
    %v2182 = vpack.c.b16 %v2146, %v2142
    %v2183 = vpack.c.b16 %v2151, %v2147
    %v2184 = vpack.c.b16 %v2152, %v2148
    %v2185 = vpack.c.b16 %v2153, %v2149
    %v2186 = vpack.c.b16 %v2154, %v2150
    %2219 = vmatpush.bf16.msra.mxu0 %v2183
    %2220 = vmatpush.bf16.msra.mxu0 %v2179
    %2221 = vmatpush.bf16.msra.mxu0 %v2175
    %2222 = vmatpush.bf16.msra.mxu0 %v2171
    %2223 = vmatpush.bf16.msra.mxu0 %v2167
    %2224 = vmatpush.bf16.msra.mxu0 %v2163
    %2225 = vmatpush.bf16.msra.mxu0 %v2159
    %2226 = vmatpush.bf16.msra.mxu0 %v2155
    %2227 = vmatmul.bf16.gmra.mxu0 %v1461
    %v2228 = vpop.f32.mrf.mxu0
    %v2229 = vadd.f32 0.0, %v2228
    %v2230 = vpop.f32.mrf.mxu0
    %2231 = vdwg.mxu0
    %2232 = vmatpush.bf16.msra.mxu0 %v2184
    %2233 = vmatpush.bf16.msra.mxu0 %v2180
    %2234 = vmatpush.bf16.msra.mxu0 %v2176
    %2235 = vmatpush.bf16.msra.mxu0 %v2172
    %2236 = vmatpush.bf16.msra.mxu0 %v2168
    %2237 = vmatpush.bf16.msra.mxu0 %v2164
    %2238 = vmatpush.bf16.msra.mxu0 %v2160
    %2239 = vmatpush.bf16.msra.mxu0 %v2156
    %2240 = vmatmul.bf16.gmra.mxu0 %v1461
    %v2241 = vpop.f32.mrf.mxu0
    %v2242 = vadd.f32 0.0, %v2241
    %v2243 = vpop.f32.mrf.mxu0
    %2244 = vdwg.mxu0
    %2245 = vmatpush.bf16.msra.mxu0 %v2185
    %2246 = vmatpush.bf16.msra.mxu0 %v2181
    %2247 = vmatpush.bf16.msra.mxu0 %v2177
    %2248 = vmatpush.bf16.msra.mxu0 %v2173
    %2249 = vmatpush.bf16.msra.mxu0 %v2169
    %2250 = vmatpush.bf16.msra.mxu0 %v2165
    %2251 = vmatpush.bf16.msra.mxu0 %v2161
    %2252 = vmatpush.bf16.msra.mxu0 %v2157
    %2253 = vmatmul.bf16.gmra.mxu0 %v1461
    %v2254 = vpop.f32.mrf.mxu0
    %v2255 = vadd.f32 0.0, %v2254
    %v2256 = vpop.f32.mrf.mxu0
    %2257 = vdwg.mxu0
    %2258 = vmatpush.bf16.msra.mxu0 %v2186
    %2259 = vmatpush.bf16.msra.mxu0 %v2182
    %2260 = vmatpush.bf16.msra.mxu0 %v2178
    %2261 = vmatpush.bf16.msra.mxu0 %v2174
    %2262 = vmatpush.bf16.msra.mxu0 %v2170
    %2263 = vmatpush.bf16.msra.mxu0 %v2166
    %2264 = vmatpush.bf16.msra.mxu0 %v2162
    %2265 = vmatpush.bf16.msra.mxu0 %v2158
    %2266 = vmatmul.bf16.gmra.mxu0 %v1461
    %v2267 = vpop.f32.mrf.mxu0
    %v2268 = vadd.f32 0.0, %v2267
    %v2269 = vpop.f32.mrf.mxu0
    %2270 = vdwg.mxu0
    %v2275 = vrot.slane %v2242, 7
    %v2276 = vrot.slane %v2255, 6
    %v2277 = vrot.slane %v2268, 5
    %v2278 = vsel %vm565, %v2229, %v2275
    %v2279 = vsel %vm567, %v2276, %v2277
    %v2280 = vsel %vm569, %v2278, %v2279
    %v2282 = vadd.f32 %v2026, %v2280
    %v2283 = vxor.u32 %v2282, 2147483648
    %v2284 = vmul.f32 %v2283, 1.442695
    %v2285 = vpow.pop %v2284
    %v2286 = vadd.f32 %v2285, 1.0
    %v2287 = vrcp.pop %v2286
    %v2288 = vmul.f32 %v2286, %v2287
    %v2289 = vsub.f32 1.0, %v2288
    %v2290 = vmul.f32 %v2287, %v2289
    %v2291 = vadd.f32 %v2287, %v2290
    %vm2292 = vweird.f32 %v2286
    %vm2293 = vweird.f32 %v2287
    %vm2294 = vmor %vm2292, %vm2293
    %v2295 = vsel %vm2294, %v2287, %v2291
    %v2296 = vand.u32 2147483647, %v2286
    %vm2297 = vcmp.eq.f32.partialorder %v2296, 8.507059e+37
    %v2298 = vand.u32 %v2286, 2147483648
    %v2299 = vor.u32 1.1754944e-38, %v2298
    %v2300 = vsel %vm2297, %v2299, %v2295
    %v2301 = vmul.f32 1.0, %v2300
    %v2303 = vrot.slane %v2282, 3
    %v2305 = vtanh.pop %v2303
    %v2307 = vrot.slane %v2301, 1
    %v2309 = vmul.f32 %v2307, %v1456
    %v2310 = vmul.f32 %v2301, %v2305
    %v2311 = vadd.f32 %v2309, %v2310
    %v2312 = vtanh.pop %v2311
    %v2313 = vrot.slane %v2301, 2
    %v2315 = vmul.f32 %v2313, %v2312
    %v2316 = vpack.c.bf16 %v2315, %v2315
    %v2317 = vpack.c.bf16 %v2023, %v2023
    %v2318 = vld [vmem:[#allocation12] sm:$0xff]
    %v2319 = vld [vmem:[#allocation12 + $0x8] sm:$0xff]
    %v2320 = vld [vmem:[#allocation12 + $0x10] sm:$0xff]
    %v2321 = vld [vmem:[#allocation12 + $0x18] sm:$0xff]
    %v2322 = vld [vmem:[#allocation12 + $0x20] sm:$0xff]
    %v2323 = vld [vmem:[#allocation12 + $0x28] sm:$0xff]
    %v2324 = vld [vmem:[#allocation12 + $0x30] sm:$0xff]
    %v2325 = vld [vmem:[#allocation12 + $0x38] sm:$0xff]
    %v2326 = vld [vmem:[#allocation12 + $0x40] sm:$0xff]
    %v2327 = vld [vmem:[#allocation12 + $0x48] sm:$0xff]
    %v2328 = vld [vmem:[#allocation12 + $0x50] sm:$0xff]
    %v2329 = vld [vmem:[#allocation12 + $0x58] sm:$0xff]
    %v2330 = vld [vmem:[#allocation12 + $0x60] sm:$0xff]
    %v2331 = vld [vmem:[#allocation12 + $0x68] sm:$0xff]
    %v2332 = vld [vmem:[#allocation12 + $0x70] sm:$0xff]
    %v2333 = vld [vmem:[#allocation12 + $0x78] sm:$0xff]
    %v2334 = vld [vmem:[#allocation12 + $0x80] sm:$0xff]
    %v2335 = vld [vmem:[#allocation12 + $0x88] sm:$0xff]
    %v2336 = vld [vmem:[#allocation12 + $0x90] sm:$0xff]
    %v2337 = vld [vmem:[#allocation12 + $0x98] sm:$0xff]
    %v2338 = vld [vmem:[#allocation12 + $0xa0] sm:$0xff]
    %v2339 = vld [vmem:[#allocation12 + $0xa8] sm:$0xff]
    %v2340 = vld [vmem:[#allocation12 + $0xb0] sm:$0xff]
    %v2341 = vld [vmem:[#allocation12 + $0xb8] sm:$0xff]
    %v2342 = vld [vmem:[#allocation12 + $0xc0] sm:$0xff]
    %v2343 = vld [vmem:[#allocation12 + $0xc8] sm:$0xff]
    %v2344 = vld [vmem:[#allocation12 + $0xd0] sm:$0xff]
    %v2345 = vld [vmem:[#allocation12 + $0xd8] sm:$0xff]
    %v2346 = vld [vmem:[#allocation12 + $0xe0] sm:$0xff]
    %v2347 = vld [vmem:[#allocation12 + $0xe8] sm:$0xff]
    %v2348 = vld [vmem:[#allocation12 + $0xf0] sm:$0xff]
    %v2349 = vld [vmem:[#allocation12 + $0xf8] sm:$0xff]
    %v2350 = vld [vmem:[#allocation12 + $0x100] sm:$0xff]
    %v2351 = vld [vmem:[#allocation12 + $0x108] sm:$0xff]
    %v2352 = vld [vmem:[#allocation12 + $0x110] sm:$0xff]
    %v2353 = vld [vmem:[#allocation12 + $0x118] sm:$0xff]
    %v2354 = vld [vmem:[#allocation12 + $0x120] sm:$0xff]
    %v2355 = vld [vmem:[#allocation12 + $0x128] sm:$0xff]
    %v2356 = vld [vmem:[#allocation12 + $0x130] sm:$0xff]
    %v2357 = vld [vmem:[#allocation12 + $0x138] sm:$0xff]
    %v2358 = vld [vmem:[#allocation12 + $0x140] sm:$0xff]
    %v2359 = vld [vmem:[#allocation12 + $0x148] sm:$0xff]
    %v2360 = vld [vmem:[#allocation12 + $0x150] sm:$0xff]
    %v2361 = vld [vmem:[#allocation12 + $0x158] sm:$0xff]
    %v2362 = vld [vmem:[#allocation12 + $0x160] sm:$0xff]
    %v2363 = vld [vmem:[#allocation12 + $0x168] sm:$0xff]
    %v2364 = vld [vmem:[#allocation12 + $0x170] sm:$0xff]
    %v2365 = vld [vmem:[#allocation12 + $0x178] sm:$0xff]
    %v2366 = vld [vmem:[#allocation12 + $0x180] sm:$0xff]
    %v2367 = vld [vmem:[#allocation12 + $0x188] sm:$0xff]
    %v2368 = vld [vmem:[#allocation12 + $0x190] sm:$0xff]
    %v2369 = vld [vmem:[#allocation12 + $0x198] sm:$0xff]
    %v2370 = vld [vmem:[#allocation12 + $0x1a0] sm:$0xff]
    %v2371 = vld [vmem:[#allocation12 + $0x1a8] sm:$0xff]
    %v2372 = vld [vmem:[#allocation12 + $0x1b0] sm:$0xff]
    %v2373 = vld [vmem:[#allocation12 + $0x1b8] sm:$0xff]
    %v2374 = vld [vmem:[#allocation12 + $0x1c0] sm:$0xff]
    %v2375 = vld [vmem:[#allocation12 + $0x1c8] sm:$0xff]
    %v2376 = vld [vmem:[#allocation12 + $0x1d0] sm:$0xff]
    %v2377 = vld [vmem:[#allocation12 + $0x1d8] sm:$0xff]
    %v2378 = vld [vmem:[#allocation12 + $0x1e0] sm:$0xff]
    %v2379 = vld [vmem:[#allocation12 + $0x1e8] sm:$0xff]
    %v2380 = vld [vmem:[#allocation12 + $0x1f0] sm:$0xff]
    %v2381 = vld [vmem:[#allocation12 + $0x1f8] sm:$0xff]
    %v2382 = vld [vmem:[%s5] sm:$0xf]
    %v2447 = vunpack.c.l.b16 %v2318
    %v2448 = vunpack.c.h.b16 %v2318
    %v2449 = vunpack.c.l.b16 %v2319
    %v2450 = vunpack.c.h.b16 %v2319
    %v2451 = vunpack.c.l.b16 %v2320
    %v2452 = vunpack.c.h.b16 %v2320
    %v2453 = vunpack.c.l.b16 %v2321
    %v2454 = vunpack.c.h.b16 %v2321
    %v2455 = vunpack.c.l.b16 %v2322
    %v2456 = vunpack.c.h.b16 %v2322
    %v2457 = vunpack.c.l.b16 %v2323
    %v2458 = vunpack.c.h.b16 %v2323
    %v2459 = vunpack.c.l.b16 %v2324
    %v2460 = vunpack.c.h.b16 %v2324
    %v2461 = vunpack.c.l.b16 %v2325
    %v2462 = vunpack.c.h.b16 %v2325
    %v2463 = vunpack.c.l.b16 %v2326
    %v2464 = vunpack.c.h.b16 %v2326
    %v2465 = vunpack.c.l.b16 %v2327
    %v2466 = vunpack.c.h.b16 %v2327
    %v2467 = vunpack.c.l.b16 %v2328
    %v2468 = vunpack.c.h.b16 %v2328
    %v2469 = vunpack.c.l.b16 %v2329
    %v2470 = vunpack.c.h.b16 %v2329
    %v2471 = vunpack.c.l.b16 %v2330
    %v2472 = vunpack.c.h.b16 %v2330
    %v2473 = vunpack.c.l.b16 %v2331
    %v2474 = vunpack.c.h.b16 %v2331
    %v2475 = vunpack.c.l.b16 %v2332
    %v2476 = vunpack.c.h.b16 %v2332
    %v2477 = vunpack.c.l.b16 %v2333
    %v2478 = vunpack.c.h.b16 %v2333
    %v2479 = vunpack.c.l.b16 %v2334
    %v2480 = vunpack.c.h.b16 %v2334
    %v2481 = vunpack.c.l.b16 %v2335
    %v2482 = vunpack.c.h.b16 %v2335
    %v2483 = vunpack.c.l.b16 %v2336
    %v2484 = vunpack.c.h.b16 %v2336
    %v2485 = vunpack.c.l.b16 %v2337
    %v2486 = vunpack.c.h.b16 %v2337
    %v2487 = vunpack.c.l.b16 %v2338
    %v2488 = vunpack.c.h.b16 %v2338
    %v2489 = vunpack.c.l.b16 %v2339
    %v2490 = vunpack.c.h.b16 %v2339
    %v2491 = vunpack.c.l.b16 %v2340
    %v2492 = vunpack.c.h.b16 %v2340
    %v2493 = vunpack.c.l.b16 %v2341
    %v2494 = vunpack.c.h.b16 %v2341
    %v2495 = vunpack.c.l.b16 %v2342
    %v2496 = vunpack.c.h.b16 %v2342
    %v2497 = vunpack.c.l.b16 %v2343
    %v2498 = vunpack.c.h.b16 %v2343
    %v2499 = vunpack.c.l.b16 %v2344
    %v2500 = vunpack.c.h.b16 %v2344
    %v2501 = vunpack.c.l.b16 %v2345
    %v2502 = vunpack.c.h.b16 %v2345
    %v2503 = vunpack.c.l.b16 %v2346
    %v2504 = vunpack.c.h.b16 %v2346
    %v2505 = vunpack.c.l.b16 %v2347
    %v2506 = vunpack.c.h.b16 %v2347
    %v2507 = vunpack.c.l.b16 %v2348
    %v2508 = vunpack.c.h.b16 %v2348
    %v2509 = vunpack.c.l.b16 %v2349
    %v2510 = vunpack.c.h.b16 %v2349
    %v2511 = vunpack.c.l.b16 %v2350
    %v2512 = vunpack.c.h.b16 %v2350
    %v2513 = vunpack.c.l.b16 %v2351
    %v2514 = vunpack.c.h.b16 %v2351
    %v2515 = vunpack.c.l.b16 %v2352
    %v2516 = vunpack.c.h.b16 %v2352
    %v2517 = vunpack.c.l.b16 %v2353
    %v2518 = vunpack.c.h.b16 %v2353
    %v2519 = vunpack.c.l.b16 %v2354
    %v2520 = vunpack.c.h.b16 %v2354
    %v2521 = vunpack.c.l.b16 %v2355
    %v2522 = vunpack.c.h.b16 %v2355
    %v2523 = vunpack.c.l.b16 %v2356
    %v2524 = vunpack.c.h.b16 %v2356
    %v2525 = vunpack.c.l.b16 %v2357
    %v2526 = vunpack.c.h.b16 %v2357
    %v2527 = vunpack.c.l.b16 %v2358
    %v2528 = vunpack.c.h.b16 %v2358
    %v2529 = vunpack.c.l.b16 %v2359
    %v2530 = vunpack.c.h.b16 %v2359
    %v2531 = vunpack.c.l.b16 %v2360
    %v2532 = vunpack.c.h.b16 %v2360
    %v2533 = vunpack.c.l.b16 %v2361
    %v2534 = vunpack.c.h.b16 %v2361
    %v2535 = vunpack.c.l.b16 %v2362
    %v2536 = vunpack.c.h.b16 %v2362
    %v2537 = vunpack.c.l.b16 %v2363
    %v2538 = vunpack.c.h.b16 %v2363
    %v2539 = vunpack.c.l.b16 %v2364
    %v2540 = vunpack.c.h.b16 %v2364
    %v2541 = vunpack.c.l.b16 %v2365
    %v2542 = vunpack.c.h.b16 %v2365
    %v2543 = vunpack.c.l.b16 %v2366
    %v2544 = vunpack.c.h.b16 %v2366
    %v2545 = vunpack.c.l.b16 %v2367
    %v2546 = vunpack.c.h.b16 %v2367
    %v2547 = vunpack.c.l.b16 %v2368
    %v2548 = vunpack.c.h.b16 %v2368
    %v2549 = vunpack.c.l.b16 %v2369
    %v2550 = vunpack.c.h.b16 %v2369
    %v2551 = vunpack.c.l.b16 %v2370
    %v2552 = vunpack.c.h.b16 %v2370
    %v2553 = vunpack.c.l.b16 %v2371
    %v2554 = vunpack.c.h.b16 %v2371
    %v2555 = vunpack.c.l.b16 %v2372
    %v2556 = vunpack.c.h.b16 %v2372
    %v2557 = vunpack.c.l.b16 %v2373
    %v2558 = vunpack.c.h.b16 %v2373
    %v2559 = vunpack.c.l.b16 %v2374
    %v2560 = vunpack.c.h.b16 %v2374
    %v2561 = vunpack.c.l.b16 %v2375
    %v2562 = vunpack.c.h.b16 %v2375
    %v2563 = vunpack.c.l.b16 %v2376
    %v2564 = vunpack.c.h.b16 %v2376
    %v2565 = vunpack.c.l.b16 %v2377
    %v2566 = vunpack.c.h.b16 %v2377
    %v2567 = vunpack.c.l.b16 %v2378
    %v2568 = vunpack.c.h.b16 %v2378
    %v2569 = vunpack.c.l.b16 %v2379
    %v2570 = vunpack.c.h.b16 %v2379
    %v2571 = vunpack.c.l.b16 %v2380
    %v2572 = vunpack.c.h.b16 %v2380
    %v2573 = vunpack.c.l.b16 %v2381
    %v2574 = vunpack.c.h.b16 %v2381
    %v2575 = vpack.c.b16 %v2451, %v2447
    %v2576 = vpack.c.b16 %v2452, %v2448
    %v2577 = vpack.c.b16 %v2453, %v2449
    %v2578 = vpack.c.b16 %v2454, %v2450
    %v2579 = vpack.c.b16 %v2459, %v2455
    %v2580 = vpack.c.b16 %v2460, %v2456
    %v2581 = vpack.c.b16 %v2461, %v2457
    %v2582 = vpack.c.b16 %v2462, %v2458
    %v2583 = vpack.c.b16 %v2467, %v2463
    %v2584 = vpack.c.b16 %v2468, %v2464
    %v2585 = vpack.c.b16 %v2469, %v2465
    %v2586 = vpack.c.b16 %v2470, %v2466
    %v2587 = vpack.c.b16 %v2475, %v2471
    %v2588 = vpack.c.b16 %v2476, %v2472
    %v2589 = vpack.c.b16 %v2477, %v2473
    %v2590 = vpack.c.b16 %v2478, %v2474
    %v2591 = vpack.c.b16 %v2483, %v2479
    %v2592 = vpack.c.b16 %v2484, %v2480
    %v2593 = vpack.c.b16 %v2485, %v2481
    %v2594 = vpack.c.b16 %v2486, %v2482
    %v2595 = vpack.c.b16 %v2491, %v2487
    %v2596 = vpack.c.b16 %v2492, %v2488
    %v2597 = vpack.c.b16 %v2493, %v2489
    %v2598 = vpack.c.b16 %v2494, %v2490
    %v2599 = vpack.c.b16 %v2499, %v2495
    %v2600 = vpack.c.b16 %v2500, %v2496
    %v2601 = vpack.c.b16 %v2501, %v2497
    %v2602 = vpack.c.b16 %v2502, %v2498
    %v2603 = vpack.c.b16 %v2507, %v2503
    %v2604 = vpack.c.b16 %v2508, %v2504
    %v2605 = vpack.c.b16 %v2509, %v2505
    %v2606 = vpack.c.b16 %v2510, %v2506
    %v2607 = vpack.c.b16 %v2515, %v2511
    %v2608 = vpack.c.b16 %v2516, %v2512
    %v2609 = vpack.c.b16 %v2517, %v2513
    %v2610 = vpack.c.b16 %v2518, %v2514
    %v2611 = vpack.c.b16 %v2523, %v2519
    %v2612 = vpack.c.b16 %v2524, %v2520
    %v2613 = vpack.c.b16 %v2525, %v2521
    %v2614 = vpack.c.b16 %v2526, %v2522
    %v2615 = vpack.c.b16 %v2531, %v2527
    %v2616 = vpack.c.b16 %v2532, %v2528
    %v2617 = vpack.c.b16 %v2533, %v2529
    %v2618 = vpack.c.b16 %v2534, %v2530
    %v2619 = vpack.c.b16 %v2539, %v2535
    %v2620 = vpack.c.b16 %v2540, %v2536
    %v2621 = vpack.c.b16 %v2541, %v2537
    %v2622 = vpack.c.b16 %v2542, %v2538
    %v2623 = vpack.c.b16 %v2547, %v2543
    %v2624 = vpack.c.b16 %v2548, %v2544
    %v2625 = vpack.c.b16 %v2549, %v2545
    %v2626 = vpack.c.b16 %v2550, %v2546
    %v2627 = vpack.c.b16 %v2555, %v2551
    %v2628 = vpack.c.b16 %v2556, %v2552
    %v2629 = vpack.c.b16 %v2557, %v2553
    %v2630 = vpack.c.b16 %v2558, %v2554
    %v2631 = vpack.c.b16 %v2563, %v2559
    %v2632 = vpack.c.b16 %v2564, %v2560
    %v2633 = vpack.c.b16 %v2565, %v2561
    %v2634 = vpack.c.b16 %v2566, %v2562
    %v2635 = vpack.c.b16 %v2571, %v2567
    %v2636 = vpack.c.b16 %v2572, %v2568
    %v2637 = vpack.c.b16 %v2573, %v2569
    %v2638 = vpack.c.b16 %v2574, %v2570
    %v2704 = vperm.slane %v2382, 0
    %v2705 = vperm.slane %v2382, 1
    %v2706 = vperm.slane %v2382, 2
    %v2707 = vperm.slane %v2382, 3
    %2712 = vmatpush.bf16.msra.mxu0 %v2603
    %2713 = vmatpush.bf16.msra.mxu0 %v2599
    %2714 = vmatpush.bf16.msra.mxu0 %v2595
    %2715 = vmatpush.bf16.msra.mxu0 %v2591
    %2716 = vmatpush.bf16.msra.mxu0 %v2587
    %2717 = vmatpush.bf16.msra.mxu0 %v2583
    %2718 = vmatpush.bf16.msra.mxu0 %v2579
    %2719 = vmatpush.bf16.msra.mxu0 %v2575
    %2720 = vmatmul.bf16.gmra.mxu0 %v2316
    %v2721 = vpop.f32.mrf.mxu0
    %v2722 = vadd.f32 %v2704, %v2721
    %v2723 = vpop.f32.mrf.mxu0
    %2724 = vdwg.mxu0
    %2725 = vmatpush.bf16.msra.mxu0 %v2635
    %2726 = vmatpush.bf16.msra.mxu0 %v2631
    %2727 = vmatpush.bf16.msra.mxu0 %v2627
    %2728 = vmatpush.bf16.msra.mxu0 %v2623
    %2729 = vmatpush.bf16.msra.mxu0 %v2619
    %2730 = vmatpush.bf16.msra.mxu0 %v2615
    %2731 = vmatpush.bf16.msra.mxu0 %v2611
    %2732 = vmatpush.bf16.msra.mxu0 %v2607
    %2733 = vmatmul.bf16.gmra.mxu0 %v2317
    %v2734 = vpop.f32.mrf.mxu0
    %v2735 = vadd.f32 %v2722, %v2734
    %v2736 = vpop.f32.mrf.mxu0
    %2737 = vdwg.mxu0
    %2738 = vmatpush.bf16.msra.mxu0 %v2604
    %2739 = vmatpush.bf16.msra.mxu0 %v2600
    %2740 = vmatpush.bf16.msra.mxu0 %v2596
    %2741 = vmatpush.bf16.msra.mxu0 %v2592
    %2742 = vmatpush.bf16.msra.mxu0 %v2588
    %2743 = vmatpush.bf16.msra.mxu0 %v2584
    %2744 = vmatpush.bf16.msra.mxu0 %v2580
    %2745 = vmatpush.bf16.msra.mxu0 %v2576
    %2746 = vmatmul.bf16.gmra.mxu0 %v2316
    %v2747 = vpop.f32.mrf.mxu0
    %v2748 = vadd.f32 %v2705, %v2747
    %v2749 = vpop.f32.mrf.mxu0
    %2750 = vdwg.mxu0
    %2751 = vmatpush.bf16.msra.mxu0 %v2636
    %2752 = vmatpush.bf16.msra.mxu0 %v2632
    %2753 = vmatpush.bf16.msra.mxu0 %v2628
    %2754 = vmatpush.bf16.msra.mxu0 %v2624
    %2755 = vmatpush.bf16.msra.mxu0 %v2620
    %2756 = vmatpush.bf16.msra.mxu0 %v2616
    %2757 = vmatpush.bf16.msra.mxu0 %v2612
    %2758 = vmatpush.bf16.msra.mxu0 %v2608
    %2759 = vmatmul.bf16.gmra.mxu0 %v2317
    %v2760 = vpop.f32.mrf.mxu0
    %v2761 = vadd.f32 %v2748, %v2760
    %v2762 = vpop.f32.mrf.mxu0
    %2763 = vdwg.mxu0
    %2764 = vmatpush.bf16.msra.mxu0 %v2605
    %2765 = vmatpush.bf16.msra.mxu0 %v2601
    %2766 = vmatpush.bf16.msra.mxu0 %v2597
    %2767 = vmatpush.bf16.msra.mxu0 %v2593
    %2768 = vmatpush.bf16.msra.mxu0 %v2589
    %2769 = vmatpush.bf16.msra.mxu0 %v2585
    %2770 = vmatpush.bf16.msra.mxu0 %v2581
    %2771 = vmatpush.bf16.msra.mxu0 %v2577
    %2772 = vmatmul.bf16.gmra.mxu0 %v2316
    %v2773 = vpop.f32.mrf.mxu0
    %v2774 = vadd.f32 %v2706, %v2773
    %v2775 = vpop.f32.mrf.mxu0
    %2776 = vdwg.mxu0
    %2777 = vmatpush.bf16.msra.mxu0 %v2637
    %2778 = vmatpush.bf16.msra.mxu0 %v2633
    %2779 = vmatpush.bf16.msra.mxu0 %v2629
    %2780 = vmatpush.bf16.msra.mxu0 %v2625
    %2781 = vmatpush.bf16.msra.mxu0 %v2621
    %2782 = vmatpush.bf16.msra.mxu0 %v2617
    %2783 = vmatpush.bf16.msra.mxu0 %v2613
    %2784 = vmatpush.bf16.msra.mxu0 %v2609
    %2785 = vmatmul.bf16.gmra.mxu0 %v2317
    %v2786 = vpop.f32.mrf.mxu0
    %v2787 = vadd.f32 %v2774, %v2786
    %v2788 = vpop.f32.mrf.mxu0
    %2789 = vdwg.mxu0
    %2790 = vmatpush.bf16.msra.mxu0 %v2606
    %2791 = vmatpush.bf16.msra.mxu0 %v2602
    %2792 = vmatpush.bf16.msra.mxu0 %v2598
    %2793 = vmatpush.bf16.msra.mxu0 %v2594
    %2794 = vmatpush.bf16.msra.mxu0 %v2590
    %2795 = vmatpush.bf16.msra.mxu0 %v2586
    %2796 = vmatpush.bf16.msra.mxu0 %v2582
    %2797 = vmatpush.bf16.msra.mxu0 %v2578
    %2798 = vmatmul.bf16.gmra.mxu0 %v2316
    %v2799 = vpop.f32.mrf.mxu0
    %v2800 = vadd.f32 %v2707, %v2799
    %v2801 = vpop.f32.mrf.mxu0
    %2802 = vdwg.mxu0
    %2803 = vmatpush.bf16.msra.mxu0 %v2638
    %2804 = vmatpush.bf16.msra.mxu0 %v2634
    %2805 = vmatpush.bf16.msra.mxu0 %v2630
    %2806 = vmatpush.bf16.msra.mxu0 %v2626
    %2807 = vmatpush.bf16.msra.mxu0 %v2622
    %2808 = vmatpush.bf16.msra.mxu0 %v2618
    %2809 = vmatpush.bf16.msra.mxu0 %v2614
    %2810 = vmatpush.bf16.msra.mxu0 %v2610
    %2811 = vmatmul.bf16.gmra.mxu0 %v2317
    %v2812 = vpop.f32.mrf.mxu0
    %v2813 = vadd.f32 %v2800, %v2812
    %v2814 = vpop.f32.mrf.mxu0
    %2815 = vdwg.mxu0
    %v2816 = vxor.u32 %v2735, 2147483648
    %v2817 = vxor.u32 %v2761, 2147483648
    %v2818 = vxor.u32 %v2787, 2147483648
    %v2819 = vmul.f32 %v2816, 1.442695
    %v2820 = vpow.pop %v2819
    %v2821 = vmul.f32 %v2817, 1.442695
    %v2822 = vpow.pop %v2821
    %v2823 = vmul.f32 %v2818, 1.442695
    %v2824 = vpow.pop %v2823
    %v2825 = vadd.f32 %v2820, 1.0
    %v2826 = vadd.f32 %v2822, 1.0
    %v2827 = vadd.f32 %v2824, 1.0
    %v2828 = vrcp.pop %v2825
    %v2829 = vmul.f32 %v2825, %v2828
    %v2830 = vsub.f32 1.0, %v2829
    %v2831 = vmul.f32 %v2828, %v2830
    %v2832 = vadd.f32 %v2828, %v2831
    %vm2833 = vweird.f32 %v2825
    %vm2834 = vweird.f32 %v2828
    %vm2835 = vmor %vm2833, %vm2834
    %v2836 = vsel %vm2835, %v2828, %v2832
    %v2837 = vand.u32 2147483647, %v2825
    %vm2838 = vcmp.eq.f32.partialorder %v2837, 8.507059e+37
    %v2839 = vand.u32 %v2825, 2147483648
    %v2840 = vor.u32 1.1754944e-38, %v2839
    %v2841 = vsel %vm2838, %v2840, %v2836
    %v2842 = vmul.f32 1.0, %v2841
    %v2843 = vrcp.pop %v2826
    %v2844 = vmul.f32 %v2826, %v2843
    %v2845 = vsub.f32 1.0, %v2844
    %v2846 = vmul.f32 %v2843, %v2845
    %v2847 = vadd.f32 %v2843, %v2846
    %vm2848 = vweird.f32 %v2826
    %vm2849 = vweird.f32 %v2843
    %vm2850 = vmor %vm2848, %vm2849
    %v2851 = vsel %vm2850, %v2843, %v2847
    %v2852 = vand.u32 2147483647, %v2826
    %vm2853 = vcmp.eq.f32.partialorder %v2852, 8.507059e+37
    %v2854 = vand.u32 %v2826, 2147483648
    %v2855 = vor.u32 1.1754944e-38, %v2854
    %v2856 = vsel %vm2853, %v2855, %v2851
    %v2857 = vmul.f32 1.0, %v2856
    %v2858 = vrcp.pop %v2827
    %v2859 = vmul.f32 %v2827, %v2858
    %v2860 = vsub.f32 1.0, %v2859
    %v2861 = vmul.f32 %v2858, %v2860
    %v2862 = vadd.f32 %v2858, %v2861
    %vm2863 = vweird.f32 %v2827
    %vm2864 = vweird.f32 %v2858
    %vm2865 = vmor %vm2863, %vm2864
    %v2866 = vsel %vm2865, %v2858, %v2862
    %v2867 = vand.u32 2147483647, %v2827
    %vm2868 = vcmp.eq.f32.partialorder %v2867, 8.507059e+37
    %v2869 = vand.u32 %v2827, 2147483648
    %v2870 = vor.u32 1.1754944e-38, %v2869
    %v2871 = vsel %vm2868, %v2870, %v2866
    %v2872 = vmul.f32 1.0, %v2871
    %v2873 = vtanh.pop %v2813
    %v2874 = vmul.f32 %v2857, %v2021
    %v2875 = vmul.f32 %v2842, %v2873
    %v2876 = vadd.f32 %v2874, %v2875
    %v2877 = vtanh.pop %v2876
    %v2878 = vmul.f32 %v2872, %v2877
    %2879 = vst [vmem:[#allocation3 + $0x2] sm:$0x1] %v2878
    %s2880 = scalar_lea.vmem [#allocation2], 3
    %v2881 = vld [vmem:[%s2880] ss:$8 sm:$0xf]
    %v2882 = vld [vmem:[#allocation9] sm:$0xff]
    %v2883 = vld [vmem:[#allocation9 + $0x8] sm:$0xff]
    %v2884 = vld [vmem:[#allocation9 + $0x10] sm:$0xff]
    %v2885 = vld [vmem:[#allocation9 + $0x18] sm:$0xff]
    %v2886 = vld [vmem:[#allocation9 + $0x20] sm:$0xff]
    %v2887 = vld [vmem:[#allocation9 + $0x28] sm:$0xff]
    %v2888 = vld [vmem:[#allocation9 + $0x30] sm:$0xff]
    %v2889 = vld [vmem:[#allocation9 + $0x38] sm:$0xff]
    %v2890 = vld [vmem:[#allocation9 + $0x40] sm:$0xff]
    %v2891 = vld [vmem:[#allocation9 + $0x48] sm:$0xff]
    %v2892 = vld [vmem:[#allocation9 + $0x50] sm:$0xff]
    %v2893 = vld [vmem:[#allocation9 + $0x58] sm:$0xff]
    %v2894 = vld [vmem:[#allocation9 + $0x60] sm:$0xff]
    %v2895 = vld [vmem:[#allocation9 + $0x68] sm:$0xff]
    %v2896 = vld [vmem:[#allocation9 + $0x70] sm:$0xff]
    %v2897 = vld [vmem:[#allocation9 + $0x78] sm:$0xff]
    %v2898 = vld [vmem:[#allocation9 + $0x80] sm:$0xff]
    %v2899 = vld [vmem:[#allocation9 + $0x88] sm:$0xff]
    %v2900 = vld [vmem:[#allocation9 + $0x90] sm:$0xff]
    %v2901 = vld [vmem:[#allocation9 + $0x98] sm:$0xff]
    %v2902 = vld [vmem:[#allocation9 + $0xa0] sm:$0xff]
    %v2903 = vld [vmem:[#allocation9 + $0xa8] sm:$0xff]
    %v2904 = vld [vmem:[#allocation9 + $0xb0] sm:$0xff]
    %v2905 = vld [vmem:[#allocation9 + $0xb8] sm:$0xff]
    %v2906 = vld [vmem:[#allocation9 + $0xc0] sm:$0xff]
    %v2907 = vld [vmem:[#allocation9 + $0xc8] sm:$0xff]
    %v2908 = vld [vmem:[#allocation9 + $0xd0] sm:$0xff]
    %v2909 = vld [vmem:[#allocation9 + $0xd8] sm:$0xff]
    %v2910 = vld [vmem:[#allocation9 + $0xe0] sm:$0xff]
    %v2911 = vld [vmem:[#allocation9 + $0xe8] sm:$0xff]
    %v2912 = vld [vmem:[#allocation9 + $0xf0] sm:$0xff]
    %v2913 = vld [vmem:[#allocation9 + $0xf8] sm:$0xff]
    %v2946 = vunpack.c.l.b16 %v2882
    %v2947 = vunpack.c.h.b16 %v2882
    %v2948 = vunpack.c.l.b16 %v2883
    %v2949 = vunpack.c.h.b16 %v2883
    %v2950 = vunpack.c.l.b16 %v2884
    %v2951 = vunpack.c.h.b16 %v2884
    %v2952 = vunpack.c.l.b16 %v2885
    %v2953 = vunpack.c.h.b16 %v2885
    %v2954 = vunpack.c.l.b16 %v2886
    %v2955 = vunpack.c.h.b16 %v2886
    %v2956 = vunpack.c.l.b16 %v2887
    %v2957 = vunpack.c.h.b16 %v2887
    %v2958 = vunpack.c.l.b16 %v2888
    %v2959 = vunpack.c.h.b16 %v2888
    %v2960 = vunpack.c.l.b16 %v2889
    %v2961 = vunpack.c.h.b16 %v2889
    %v2962 = vunpack.c.l.b16 %v2890
    %v2963 = vunpack.c.h.b16 %v2890
    %v2964 = vunpack.c.l.b16 %v2891
    %v2965 = vunpack.c.h.b16 %v2891
    %v2966 = vunpack.c.l.b16 %v2892
    %v2967 = vunpack.c.h.b16 %v2892
    %v2968 = vunpack.c.l.b16 %v2893
    %v2969 = vunpack.c.h.b16 %v2893
    %v2970 = vunpack.c.l.b16 %v2894
    %v2971 = vunpack.c.h.b16 %v2894
    %v2972 = vunpack.c.l.b16 %v2895
    %v2973 = vunpack.c.h.b16 %v2895
    %v2974 = vunpack.c.l.b16 %v2896
    %v2975 = vunpack.c.h.b16 %v2896
    %v2976 = vunpack.c.l.b16 %v2897
    %v2977 = vunpack.c.h.b16 %v2897
    %v2978 = vunpack.c.l.b16 %v2898
    %v2979 = vunpack.c.h.b16 %v2898
    %v2980 = vunpack.c.l.b16 %v2899
    %v2981 = vunpack.c.h.b16 %v2899
    %v2982 = vunpack.c.l.b16 %v2900
    %v2983 = vunpack.c.h.b16 %v2900
    %v2984 = vunpack.c.l.b16 %v2901
    %v2985 = vunpack.c.h.b16 %v2901
    %v2986 = vunpack.c.l.b16 %v2902
    %v2987 = vunpack.c.h.b16 %v2902
    %v2988 = vunpack.c.l.b16 %v2903
    %v2989 = vunpack.c.h.b16 %v2903
    %v2990 = vunpack.c.l.b16 %v2904
    %v2991 = vunpack.c.h.b16 %v2904
    %v2992 = vunpack.c.l.b16 %v2905
    %v2993 = vunpack.c.h.b16 %v2905
    %v2994 = vunpack.c.l.b16 %v2906
    %v2995 = vunpack.c.h.b16 %v2906
    %v2996 = vunpack.c.l.b16 %v2907
    %v2997 = vunpack.c.h.b16 %v2907
    %v2998 = vunpack.c.l.b16 %v2908
    %v2999 = vunpack.c.h.b16 %v2908
    %v3000 = vunpack.c.l.b16 %v2909
    %v3001 = vunpack.c.h.b16 %v2909
    %v3002 = vunpack.c.l.b16 %v2910
    %v3003 = vunpack.c.h.b16 %v2910
    %v3004 = vunpack.c.l.b16 %v2911
    %v3005 = vunpack.c.h.b16 %v2911
    %v3006 = vunpack.c.l.b16 %v2912
    %v3007 = vunpack.c.h.b16 %v2912
    %v3008 = vunpack.c.l.b16 %v2913
    %v3009 = vunpack.c.h.b16 %v2913
    %v3010 = vpack.c.b16 %v2950, %v2946
    %v3011 = vpack.c.b16 %v2951, %v2947
    %v3012 = vpack.c.b16 %v2952, %v2948
    %v3013 = vpack.c.b16 %v2953, %v2949
    %v3014 = vpack.c.b16 %v2958, %v2954
    %v3015 = vpack.c.b16 %v2959, %v2955
    %v3016 = vpack.c.b16 %v2960, %v2956
    %v3017 = vpack.c.b16 %v2961, %v2957
    %v3018 = vpack.c.b16 %v2966, %v2962
    %v3019 = vpack.c.b16 %v2967, %v2963
    %v3020 = vpack.c.b16 %v2968, %v2964
    %v3021 = vpack.c.b16 %v2969, %v2965
    %v3022 = vpack.c.b16 %v2974, %v2970
    %v3023 = vpack.c.b16 %v2975, %v2971
    %v3024 = vpack.c.b16 %v2976, %v2972
    %v3025 = vpack.c.b16 %v2977, %v2973
    %v3026 = vpack.c.b16 %v2982, %v2978
    %v3027 = vpack.c.b16 %v2983, %v2979
    %v3028 = vpack.c.b16 %v2984, %v2980
    %v3029 = vpack.c.b16 %v2985, %v2981
    %v3030 = vpack.c.b16 %v2990, %v2986
    %v3031 = vpack.c.b16 %v2991, %v2987
    %v3032 = vpack.c.b16 %v2992, %v2988
    %v3033 = vpack.c.b16 %v2993, %v2989
    %v3034 = vpack.c.b16 %v2998, %v2994
    %v3035 = vpack.c.b16 %v2999, %v2995
    %v3036 = vpack.c.b16 %v3000, %v2996
    %v3037 = vpack.c.b16 %v3001, %v2997
    %v3038 = vpack.c.b16 %v3006, %v3002
    %v3039 = vpack.c.b16 %v3007, %v3003
    %v3040 = vpack.c.b16 %v3008, %v3004
    %v3041 = vpack.c.b16 %v3009, %v3005
    %3074 = vmatpush.bf16.msra.mxu0 %v3038
    %3075 = vmatpush.bf16.msra.mxu0 %v3034
    %3076 = vmatpush.bf16.msra.mxu0 %v3030
    %3077 = vmatpush.bf16.msra.mxu0 %v3026
    %3078 = vmatpush.bf16.msra.mxu0 %v3022
    %3079 = vmatpush.bf16.msra.mxu0 %v3018
    %3080 = vmatpush.bf16.msra.mxu0 %v3014
    %3081 = vmatpush.bf16.msra.mxu0 %v3010
    %3082 = vmatmul.bf16.gmra.mxu0 %v2316
    %v3083 = vpop.f32.mrf.mxu0
    %v3084 = vadd.f32 0.0, %v3083
    %v3085 = vpop.f32.mrf.mxu0
    %3086 = vdwg.mxu0
    %3087 = vmatpush.bf16.msra.mxu0 %v3039
    %3088 = vmatpush.bf16.msra.mxu0 %v3035
    %3089 = vmatpush.bf16.msra.mxu0 %v3031
    %3090 = vmatpush.bf16.msra.mxu0 %v3027
    %3091 = vmatpush.bf16.msra.mxu0 %v3023
    %3092 = vmatpush.bf16.msra.mxu0 %v3019
    %3093 = vmatpush.bf16.msra.mxu0 %v3015
    %3094 = vmatpush.bf16.msra.mxu0 %v3011
    %3095 = vmatmul.bf16.gmra.mxu0 %v2316
    %v3096 = vpop.f32.mrf.mxu0
    %v3097 = vadd.f32 0.0, %v3096
    %v3098 = vpop.f32.mrf.mxu0
    %3099 = vdwg.mxu0
    %3100 = vmatpush.bf16.msra.mxu0 %v3040
    %3101 = vmatpush.bf16.msra.mxu0 %v3036
    %3102 = vmatpush.bf16.msra.mxu0 %v3032
    %3103 = vmatpush.bf16.msra.mxu0 %v3028
    %3104 = vmatpush.bf16.msra.mxu0 %v3024
    %3105 = vmatpush.bf16.msra.mxu0 %v3020
    %3106 = vmatpush.bf16.msra.mxu0 %v3016
    %3107 = vmatpush.bf16.msra.mxu0 %v3012
    %3108 = vmatmul.bf16.gmra.mxu0 %v2316
    %v3109 = vpop.f32.mrf.mxu0
    %v3110 = vadd.f32 0.0, %v3109
    %v3111 = vpop.f32.mrf.mxu0
    %3112 = vdwg.mxu0
    %3113 = vmatpush.bf16.msra.mxu0 %v3041
    %3114 = vmatpush.bf16.msra.mxu0 %v3037
    %3115 = vmatpush.bf16.msra.mxu0 %v3033
    %3116 = vmatpush.bf16.msra.mxu0 %v3029
    %3117 = vmatpush.bf16.msra.mxu0 %v3025
    %3118 = vmatpush.bf16.msra.mxu0 %v3021
    %3119 = vmatpush.bf16.msra.mxu0 %v3017
    %3120 = vmatpush.bf16.msra.mxu0 %v3013
    %3121 = vmatmul.bf16.gmra.mxu0 %v2316
    %v3122 = vpop.f32.mrf.mxu0
    %v3123 = vadd.f32 0.0, %v3122
    %v3124 = vpop.f32.mrf.mxu0
    %3125 = vdwg.mxu0
    %v3130 = vrot.slane %v3097, 7
    %v3131 = vrot.slane %v3110, 6
    %v3132 = vrot.slane %v3123, 5
    %v3133 = vsel %vm565, %v3084, %v3130
    %v3134 = vsel %vm567, %v3131, %v3132
    %v3135 = vsel %vm569, %v3133, %v3134
    %v3137 = vadd.f32 %v2881, %v3135
    %v3138 = vxor.u32 %v3137, 2147483648
    %v3139 = vmul.f32 %v3138, 1.442695
    %v3140 = vpow.pop %v3139
    %v3141 = vadd.f32 %v3140, 1.0
    %v3142 = vrcp.pop %v3141
    %v3143 = vmul.f32 %v3141, %v3142
    %v3144 = vsub.f32 1.0, %v3143
    %v3145 = vmul.f32 %v3142, %v3144
    %v3146 = vadd.f32 %v3142, %v3145
    %vm3147 = vweird.f32 %v3141
    %vm3148 = vweird.f32 %v3142
    %vm3149 = vmor %vm3147, %vm3148
    %v3150 = vsel %vm3149, %v3142, %v3146
    %v3151 = vand.u32 2147483647, %v3141
    %vm3152 = vcmp.eq.f32.partialorder %v3151, 8.507059e+37
    %v3153 = vand.u32 %v3141, 2147483648
    %v3154 = vor.u32 1.1754944e-38, %v3153
    %v3155 = vsel %vm3152, %v3154, %v3150
    %v3156 = vmul.f32 1.0, %v3155
    %v3158 = vrot.slane %v3137, 3
    %v3160 = vtanh.pop %v3158
    %v3162 = vrot.slane %v3156, 1
    %v3164 = vmul.f32 %v3162, %v2311
    %v3165 = vmul.f32 %v3156, %v3160
    %v3166 = vadd.f32 %v3164, %v3165
    %v3167 = vtanh.pop %v3166
    %v3168 = vrot.slane %v3156, 2
    %v3170 = vmul.f32 %v3168, %v3167
    %v3171 = vpack.c.bf16 %v3170, %v3170
    %v3172 = vpack.c.bf16 %v2878, %v2878
    %v3173 = vld [vmem:[#allocation12] sm:$0xff]
    %v3174 = vld [vmem:[#allocation12 + $0x8] sm:$0xff]
    %v3175 = vld [vmem:[#allocation12 + $0x10] sm:$0xff]
    %v3176 = vld [vmem:[#allocation12 + $0x18] sm:$0xff]
    %v3177 = vld [vmem:[#allocation12 + $0x20] sm:$0xff]
    %v3178 = vld [vmem:[#allocation12 + $0x28] sm:$0xff]
    %v3179 = vld [vmem:[#allocation12 + $0x30] sm:$0xff]
    %v3180 = vld [vmem:[#allocation12 + $0x38] sm:$0xff]
    %v3181 = vld [vmem:[#allocation12 + $0x40] sm:$0xff]
    %v3182 = vld [vmem:[#allocation12 + $0x48] sm:$0xff]
    %v3183 = vld [vmem:[#allocation12 + $0x50] sm:$0xff]
    %v3184 = vld [vmem:[#allocation12 + $0x58] sm:$0xff]
    %v3185 = vld [vmem:[#allocation12 + $0x60] sm:$0xff]
    %v3186 = vld [vmem:[#allocation12 + $0x68] sm:$0xff]
    %v3187 = vld [vmem:[#allocation12 + $0x70] sm:$0xff]
    %v3188 = vld [vmem:[#allocation12 + $0x78] sm:$0xff]
    %v3189 = vld [vmem:[#allocation12 + $0x80] sm:$0xff]
    %v3190 = vld [vmem:[#allocation12 + $0x88] sm:$0xff]
    %v3191 = vld [vmem:[#allocation12 + $0x90] sm:$0xff]
    %v3192 = vld [vmem:[#allocation12 + $0x98] sm:$0xff]
    %v3193 = vld [vmem:[#allocation12 + $0xa0] sm:$0xff]
    %v3194 = vld [vmem:[#allocation12 + $0xa8] sm:$0xff]
    %v3195 = vld [vmem:[#allocation12 + $0xb0] sm:$0xff]
    %v3196 = vld [vmem:[#allocation12 + $0xb8] sm:$0xff]
    %v3197 = vld [vmem:[#allocation12 + $0xc0] sm:$0xff]
    %v3198 = vld [vmem:[#allocation12 + $0xc8] sm:$0xff]
    %v3199 = vld [vmem:[#allocation12 + $0xd0] sm:$0xff]
    %v3200 = vld [vmem:[#allocation12 + $0xd8] sm:$0xff]
    %v3201 = vld [vmem:[#allocation12 + $0xe0] sm:$0xff]
    %v3202 = vld [vmem:[#allocation12 + $0xe8] sm:$0xff]
    %v3203 = vld [vmem:[#allocation12 + $0xf0] sm:$0xff]
    %v3204 = vld [vmem:[#allocation12 + $0xf8] sm:$0xff]
    %v3205 = vld [vmem:[#allocation12 + $0x100] sm:$0xff]
    %v3206 = vld [vmem:[#allocation12 + $0x108] sm:$0xff]
    %v3207 = vld [vmem:[#allocation12 + $0x110] sm:$0xff]
    %v3208 = vld [vmem:[#allocation12 + $0x118] sm:$0xff]
    %v3209 = vld [vmem:[#allocation12 + $0x120] sm:$0xff]
    %v3210 = vld [vmem:[#allocation12 + $0x128] sm:$0xff]
    %v3211 = vld [vmem:[#allocation12 + $0x130] sm:$0xff]
    %v3212 = vld [vmem:[#allocation12 + $0x138] sm:$0xff]
    %v3213 = vld [vmem:[#allocation12 + $0x140] sm:$0xff]
    %v3214 = vld [vmem:[#allocation12 + $0x148] sm:$0xff]
    %v3215 = vld [vmem:[#allocation12 + $0x150] sm:$0xff]
    %v3216 = vld [vmem:[#allocation12 + $0x158] sm:$0xff]
    %v3217 = vld [vmem:[#allocation12 + $0x160] sm:$0xff]
    %v3218 = vld [vmem:[#allocation12 + $0x168] sm:$0xff]
    %v3219 = vld [vmem:[#allocation12 + $0x170] sm:$0xff]
    %v3220 = vld [vmem:[#allocation12 + $0x178] sm:$0xff]
    %v3221 = vld [vmem:[#allocation12 + $0x180] sm:$0xff]
    %v3222 = vld [vmem:[#allocation12 + $0x188] sm:$0xff]
    %v3223 = vld [vmem:[#allocation12 + $0x190] sm:$0xff]
    %v3224 = vld [vmem:[#allocation12 + $0x198] sm:$0xff]
    %v3225 = vld [vmem:[#allocation12 + $0x1a0] sm:$0xff]
    %v3226 = vld [vmem:[#allocation12 + $0x1a8] sm:$0xff]
    %v3227 = vld [vmem:[#allocation12 + $0x1b0] sm:$0xff]
    %v3228 = vld [vmem:[#allocation12 + $0x1b8] sm:$0xff]
    %v3229 = vld [vmem:[#allocation12 + $0x1c0] sm:$0xff]
    %v3230 = vld [vmem:[#allocation12 + $0x1c8] sm:$0xff]
    %v3231 = vld [vmem:[#allocation12 + $0x1d0] sm:$0xff]
    %v3232 = vld [vmem:[#allocation12 + $0x1d8] sm:$0xff]
    %v3233 = vld [vmem:[#allocation12 + $0x1e0] sm:$0xff]
    %v3234 = vld [vmem:[#allocation12 + $0x1e8] sm:$0xff]
    %v3235 = vld [vmem:[#allocation12 + $0x1f0] sm:$0xff]
    %v3236 = vld [vmem:[#allocation12 + $0x1f8] sm:$0xff]
    %v3237 = vld [vmem:[%s5] sm:$0xf]
    %v3302 = vunpack.c.l.b16 %v3173
    %v3303 = vunpack.c.h.b16 %v3173
    %v3304 = vunpack.c.l.b16 %v3174
    %v3305 = vunpack.c.h.b16 %v3174
    %v3306 = vunpack.c.l.b16 %v3175
    %v3307 = vunpack.c.h.b16 %v3175
    %v3308 = vunpack.c.l.b16 %v3176
    %v3309 = vunpack.c.h.b16 %v3176
    %v3310 = vunpack.c.l.b16 %v3177
    %v3311 = vunpack.c.h.b16 %v3177
    %v3312 = vunpack.c.l.b16 %v3178
    %v3313 = vunpack.c.h.b16 %v3178
    %v3314 = vunpack.c.l.b16 %v3179
    %v3315 = vunpack.c.h.b16 %v3179
    %v3316 = vunpack.c.l.b16 %v3180
    %v3317 = vunpack.c.h.b16 %v3180
    %v3318 = vunpack.c.l.b16 %v3181
    %v3319 = vunpack.c.h.b16 %v3181
    %v3320 = vunpack.c.l.b16 %v3182
    %v3321 = vunpack.c.h.b16 %v3182
    %v3322 = vunpack.c.l.b16 %v3183
    %v3323 = vunpack.c.h.b16 %v3183
    %v3324 = vunpack.c.l.b16 %v3184
    %v3325 = vunpack.c.h.b16 %v3184
    %v3326 = vunpack.c.l.b16 %v3185
    %v3327 = vunpack.c.h.b16 %v3185
    %v3328 = vunpack.c.l.b16 %v3186
    %v3329 = vunpack.c.h.b16 %v3186
    %v3330 = vunpack.c.l.b16 %v3187
    %v3331 = vunpack.c.h.b16 %v3187
    %v3332 = vunpack.c.l.b16 %v3188
    %v3333 = vunpack.c.h.b16 %v3188
    %v3334 = vunpack.c.l.b16 %v3189
    %v3335 = vunpack.c.h.b16 %v3189
    %v3336 = vunpack.c.l.b16 %v3190
    %v3337 = vunpack.c.h.b16 %v3190
    %v3338 = vunpack.c.l.b16 %v3191
    %v3339 = vunpack.c.h.b16 %v3191
    %v3340 = vunpack.c.l.b16 %v3192
    %v3341 = vunpack.c.h.b16 %v3192
    %v3342 = vunpack.c.l.b16 %v3193
    %v3343 = vunpack.c.h.b16 %v3193
    %v3344 = vunpack.c.l.b16 %v3194
    %v3345 = vunpack.c.h.b16 %v3194
    %v3346 = vunpack.c.l.b16 %v3195
    %v3347 = vunpack.c.h.b16 %v3195
    %v3348 = vunpack.c.l.b16 %v3196
    %v3349 = vunpack.c.h.b16 %v3196
    %v3350 = vunpack.c.l.b16 %v3197
    %v3351 = vunpack.c.h.b16 %v3197
    %v3352 = vunpack.c.l.b16 %v3198
    %v3353 = vunpack.c.h.b16 %v3198
    %v3354 = vunpack.c.l.b16 %v3199
    %v3355 = vunpack.c.h.b16 %v3199
    %v3356 = vunpack.c.l.b16 %v3200
    %v3357 = vunpack.c.h.b16 %v3200
    %v3358 = vunpack.c.l.b16 %v3201
    %v3359 = vunpack.c.h.b16 %v3201
    %v3360 = vunpack.c.l.b16 %v3202
    %v3361 = vunpack.c.h.b16 %v3202
    %v3362 = vunpack.c.l.b16 %v3203
    %v3363 = vunpack.c.h.b16 %v3203
    %v3364 = vunpack.c.l.b16 %v3204
    %v3365 = vunpack.c.h.b16 %v3204
    %v3366 = vunpack.c.l.b16 %v3205
    %v3367 = vunpack.c.h.b16 %v3205
    %v3368 = vunpack.c.l.b16 %v3206
    %v3369 = vunpack.c.h.b16 %v3206
    %v3370 = vunpack.c.l.b16 %v3207
    %v3371 = vunpack.c.h.b16 %v3207
    %v3372 = vunpack.c.l.b16 %v3208
    %v3373 = vunpack.c.h.b16 %v3208
    %v3374 = vunpack.c.l.b16 %v3209
    %v3375 = vunpack.c.h.b16 %v3209
    %v3376 = vunpack.c.l.b16 %v3210
    %v3377 = vunpack.c.h.b16 %v3210
    %v3378 = vunpack.c.l.b16 %v3211
    %v3379 = vunpack.c.h.b16 %v3211
    %v3380 = vunpack.c.l.b16 %v3212
    %v3381 = vunpack.c.h.b16 %v3212
    %v3382 = vunpack.c.l.b16 %v3213
    %v3383 = vunpack.c.h.b16 %v3213
    %v3384 = vunpack.c.l.b16 %v3214
    %v3385 = vunpack.c.h.b16 %v3214
    %v3386 = vunpack.c.l.b16 %v3215
    %v3387 = vunpack.c.h.b16 %v3215
    %v3388 = vunpack.c.l.b16 %v3216
    %v3389 = vunpack.c.h.b16 %v3216
    %v3390 = vunpack.c.l.b16 %v3217
    %v3391 = vunpack.c.h.b16 %v3217
    %v3392 = vunpack.c.l.b16 %v3218
    %v3393 = vunpack.c.h.b16 %v3218
    %v3394 = vunpack.c.l.b16 %v3219
    %v3395 = vunpack.c.h.b16 %v3219
    %v3396 = vunpack.c.l.b16 %v3220
    %v3397 = vunpack.c.h.b16 %v3220
    %v3398 = vunpack.c.l.b16 %v3221
    %v3399 = vunpack.c.h.b16 %v3221
    %v3400 = vunpack.c.l.b16 %v3222
    %v3401 = vunpack.c.h.b16 %v3222
    %v3402 = vunpack.c.l.b16 %v3223
    %v3403 = vunpack.c.h.b16 %v3223
    %v3404 = vunpack.c.l.b16 %v3224
    %v3405 = vunpack.c.h.b16 %v3224
    %v3406 = vunpack.c.l.b16 %v3225
    %v3407 = vunpack.c.h.b16 %v3225
    %v3408 = vunpack.c.l.b16 %v3226
    %v3409 = vunpack.c.h.b16 %v3226
    %v3410 = vunpack.c.l.b16 %v3227
    %v3411 = vunpack.c.h.b16 %v3227
    %v3412 = vunpack.c.l.b16 %v3228
    %v3413 = vunpack.c.h.b16 %v3228
    %v3414 = vunpack.c.l.b16 %v3229
    %v3415 = vunpack.c.h.b16 %v3229
    %v3416 = vunpack.c.l.b16 %v3230
    %v3417 = vunpack.c.h.b16 %v3230
    %v3418 = vunpack.c.l.b16 %v3231
    %v3419 = vunpack.c.h.b16 %v3231
    %v3420 = vunpack.c.l.b16 %v3232
    %v3421 = vunpack.c.h.b16 %v3232
    %v3422 = vunpack.c.l.b16 %v3233
    %v3423 = vunpack.c.h.b16 %v3233
    %v3424 = vunpack.c.l.b16 %v3234
    %v3425 = vunpack.c.h.b16 %v3234
    %v3426 = vunpack.c.l.b16 %v3235
    %v3427 = vunpack.c.h.b16 %v3235
    %v3428 = vunpack.c.l.b16 %v3236
    %v3429 = vunpack.c.h.b16 %v3236
    %v3430 = vpack.c.b16 %v3306, %v3302
    %v3431 = vpack.c.b16 %v3307, %v3303
    %v3432 = vpack.c.b16 %v3308, %v3304
    %v3433 = vpack.c.b16 %v3309, %v3305
    %v3434 = vpack.c.b16 %v3314, %v3310
    %v3435 = vpack.c.b16 %v3315, %v3311
    %v3436 = vpack.c.b16 %v3316, %v3312
    %v3437 = vpack.c.b16 %v3317, %v3313
    %v3438 = vpack.c.b16 %v3322, %v3318
    %v3439 = vpack.c.b16 %v3323, %v3319
    %v3440 = vpack.c.b16 %v3324, %v3320
    %v3441 = vpack.c.b16 %v3325, %v3321
    %v3442 = vpack.c.b16 %v3330, %v3326
    %v3443 = vpack.c.b16 %v3331, %v3327
    %v3444 = vpack.c.b16 %v3332, %v3328
    %v3445 = vpack.c.b16 %v3333, %v3329
    %v3446 = vpack.c.b16 %v3338, %v3334
    %v3447 = vpack.c.b16 %v3339, %v3335
    %v3448 = vpack.c.b16 %v3340, %v3336
    %v3449 = vpack.c.b16 %v3341, %v3337
    %v3450 = vpack.c.b16 %v3346, %v3342
    %v3451 = vpack.c.b16 %v3347, %v3343
    %v3452 = vpack.c.b16 %v3348, %v3344
    %v3453 = vpack.c.b16 %v3349, %v3345
    %v3454 = vpack.c.b16 %v3354, %v3350
    %v3455 = vpack.c.b16 %v3355, %v3351
    %v3456 = vpack.c.b16 %v3356, %v3352
    %v3457 = vpack.c.b16 %v3357, %v3353
    %v3458 = vpack.c.b16 %v3362, %v3358
    %v3459 = vpack.c.b16 %v3363, %v3359
    %v3460 = vpack.c.b16 %v3364, %v3360
    %v3461 = vpack.c.b16 %v3365, %v3361
    %v3462 = vpack.c.b16 %v3370, %v3366
    %v3463 = vpack.c.b16 %v3371, %v3367
    %v3464 = vpack.c.b16 %v3372, %v3368
    %v3465 = vpack.c.b16 %v3373, %v3369
    %v3466 = vpack.c.b16 %v3378, %v3374
    %v3467 = vpack.c.b16 %v3379, %v3375
    %v3468 = vpack.c.b16 %v3380, %v3376
    %v3469 = vpack.c.b16 %v3381, %v3377
    %v3470 = vpack.c.b16 %v3386, %v3382
    %v3471 = vpack.c.b16 %v3387, %v3383
    %v3472 = vpack.c.b16 %v3388, %v3384
    %v3473 = vpack.c.b16 %v3389, %v3385
    %v3474 = vpack.c.b16 %v3394, %v3390
    %v3475 = vpack.c.b16 %v3395, %v3391
    %v3476 = vpack.c.b16 %v3396, %v3392
    %v3477 = vpack.c.b16 %v3397, %v3393
    %v3478 = vpack.c.b16 %v3402, %v3398
    %v3479 = vpack.c.b16 %v3403, %v3399
    %v3480 = vpack.c.b16 %v3404, %v3400
    %v3481 = vpack.c.b16 %v3405, %v3401
    %v3482 = vpack.c.b16 %v3410, %v3406
    %v3483 = vpack.c.b16 %v3411, %v3407
    %v3484 = vpack.c.b16 %v3412, %v3408
    %v3485 = vpack.c.b16 %v3413, %v3409
    %v3486 = vpack.c.b16 %v3418, %v3414
    %v3487 = vpack.c.b16 %v3419, %v3415
    %v3488 = vpack.c.b16 %v3420, %v3416
    %v3489 = vpack.c.b16 %v3421, %v3417
    %v3490 = vpack.c.b16 %v3426, %v3422
    %v3491 = vpack.c.b16 %v3427, %v3423
    %v3492 = vpack.c.b16 %v3428, %v3424
    %v3493 = vpack.c.b16 %v3429, %v3425
    %v3559 = vperm.slane %v3237, 0
    %v3560 = vperm.slane %v3237, 1
    %v3561 = vperm.slane %v3237, 2
    %v3562 = vperm.slane %v3237, 3
    %3567 = vmatpush.bf16.msra.mxu0 %v3458
    %3568 = vmatpush.bf16.msra.mxu0 %v3454
    %3569 = vmatpush.bf16.msra.mxu0 %v3450
    %3570 = vmatpush.bf16.msra.mxu0 %v3446
    %3571 = vmatpush.bf16.msra.mxu0 %v3442
    %3572 = vmatpush.bf16.msra.mxu0 %v3438
    %3573 = vmatpush.bf16.msra.mxu0 %v3434
    %3574 = vmatpush.bf16.msra.mxu0 %v3430
    %3575 = vmatmul.bf16.gmra.mxu0 %v3171
    %v3576 = vpop.f32.mrf.mxu0
    %v3577 = vadd.f32 %v3559, %v3576
    %v3578 = vpop.f32.mrf.mxu0
    %3579 = vdwg.mxu0
    %3580 = vmatpush.bf16.msra.mxu0 %v3490
    %3581 = vmatpush.bf16.msra.mxu0 %v3486
    %3582 = vmatpush.bf16.msra.mxu0 %v3482
    %3583 = vmatpush.bf16.msra.mxu0 %v3478
    %3584 = vmatpush.bf16.msra.mxu0 %v3474
    %3585 = vmatpush.bf16.msra.mxu0 %v3470
    %3586 = vmatpush.bf16.msra.mxu0 %v3466
    %3587 = vmatpush.bf16.msra.mxu0 %v3462
    %3588 = vmatmul.bf16.gmra.mxu0 %v3172
    %v3589 = vpop.f32.mrf.mxu0
    %v3590 = vadd.f32 %v3577, %v3589
    %v3591 = vpop.f32.mrf.mxu0
    %3592 = vdwg.mxu0
    %3593 = vmatpush.bf16.msra.mxu0 %v3459
    %3594 = vmatpush.bf16.msra.mxu0 %v3455
    %3595 = vmatpush.bf16.msra.mxu0 %v3451
    %3596 = vmatpush.bf16.msra.mxu0 %v3447
    %3597 = vmatpush.bf16.msra.mxu0 %v3443
    %3598 = vmatpush.bf16.msra.mxu0 %v3439
    %3599 = vmatpush.bf16.msra.mxu0 %v3435
    %3600 = vmatpush.bf16.msra.mxu0 %v3431
    %3601 = vmatmul.bf16.gmra.mxu0 %v3171
    %v3602 = vpop.f32.mrf.mxu0
    %v3603 = vadd.f32 %v3560, %v3602
    %v3604 = vpop.f32.mrf.mxu0
    %3605 = vdwg.mxu0
    %3606 = vmatpush.bf16.msra.mxu0 %v3491
    %3607 = vmatpush.bf16.msra.mxu0 %v3487
    %3608 = vmatpush.bf16.msra.mxu0 %v3483
    %3609 = vmatpush.bf16.msra.mxu0 %v3479
    %3610 = vmatpush.bf16.msra.mxu0 %v3475
    %3611 = vmatpush.bf16.msra.mxu0 %v3471
    %3612 = vmatpush.bf16.msra.mxu0 %v3467
    %3613 = vmatpush.bf16.msra.mxu0 %v3463
    %3614 = vmatmul.bf16.gmra.mxu0 %v3172
    %v3615 = vpop.f32.mrf.mxu0
    %v3616 = vadd.f32 %v3603, %v3615
    %v3617 = vpop.f32.mrf.mxu0
    %3618 = vdwg.mxu0
    %3619 = vmatpush.bf16.msra.mxu0 %v3460
    %3620 = vmatpush.bf16.msra.mxu0 %v3456
    %3621 = vmatpush.bf16.msra.mxu0 %v3452
    %3622 = vmatpush.bf16.msra.mxu0 %v3448
    %3623 = vmatpush.bf16.msra.mxu0 %v3444
    %3624 = vmatpush.bf16.msra.mxu0 %v3440
    %3625 = vmatpush.bf16.msra.mxu0 %v3436
    %3626 = vmatpush.bf16.msra.mxu0 %v3432
    %3627 = vmatmul.bf16.gmra.mxu0 %v3171
    %v3628 = vpop.f32.mrf.mxu0
    %v3629 = vadd.f32 %v3561, %v3628
    %v3630 = vpop.f32.mrf.mxu0
    %3631 = vdwg.mxu0
    %3632 = vmatpush.bf16.msra.mxu0 %v3492
    %3633 = vmatpush.bf16.msra.mxu0 %v3488
    %3634 = vmatpush.bf16.msra.mxu0 %v3484
    %3635 = vmatpush.bf16.msra.mxu0 %v3480
    %3636 = vmatpush.bf16.msra.mxu0 %v3476
    %3637 = vmatpush.bf16.msra.mxu0 %v3472
    %3638 = vmatpush.bf16.msra.mxu0 %v3468
    %3639 = vmatpush.bf16.msra.mxu0 %v3464
    %3640 = vmatmul.bf16.gmra.mxu0 %v3172
    %v3641 = vpop.f32.mrf.mxu0
    %v3642 = vadd.f32 %v3629, %v3641
    %v3643 = vpop.f32.mrf.mxu0
    %3644 = vdwg.mxu0
    %3645 = vmatpush.bf16.msra.mxu0 %v3461
    %3646 = vmatpush.bf16.msra.mxu0 %v3457
    %3647 = vmatpush.bf16.msra.mxu0 %v3453
    %3648 = vmatpush.bf16.msra.mxu0 %v3449
    %3649 = vmatpush.bf16.msra.mxu0 %v3445
    %3650 = vmatpush.bf16.msra.mxu0 %v3441
    %3651 = vmatpush.bf16.msra.mxu0 %v3437
    %3652 = vmatpush.bf16.msra.mxu0 %v3433
    %3653 = vmatmul.bf16.gmra.mxu0 %v3171
    %v3654 = vpop.f32.mrf.mxu0
    %v3655 = vadd.f32 %v3562, %v3654
    %v3656 = vpop.f32.mrf.mxu0
    %3657 = vdwg.mxu0
    %3658 = vmatpush.bf16.msra.mxu0 %v3493
    %3659 = vmatpush.bf16.msra.mxu0 %v3489
    %3660 = vmatpush.bf16.msra.mxu0 %v3485
    %3661 = vmatpush.bf16.msra.mxu0 %v3481
    %3662 = vmatpush.bf16.msra.mxu0 %v3477
    %3663 = vmatpush.bf16.msra.mxu0 %v3473
    %3664 = vmatpush.bf16.msra.mxu0 %v3469
    %3665 = vmatpush.bf16.msra.mxu0 %v3465
    %3666 = vmatmul.bf16.gmra.mxu0 %v3172
    %v3667 = vpop.f32.mrf.mxu0
    %v3668 = vadd.f32 %v3655, %v3667
    %v3669 = vpop.f32.mrf.mxu0
    %3670 = vdwg.mxu0
    %v3671 = vxor.u32 %v3590, 2147483648
    %v3672 = vxor.u32 %v3616, 2147483648
    %v3673 = vxor.u32 %v3642, 2147483648
    %v3674 = vmul.f32 %v3671, 1.442695
    %v3675 = vpow.pop %v3674
    %v3676 = vmul.f32 %v3672, 1.442695
    %v3677 = vpow.pop %v3676
    %v3678 = vmul.f32 %v3673, 1.442695
    %v3679 = vpow.pop %v3678
    %v3680 = vadd.f32 %v3675, 1.0
    %v3681 = vadd.f32 %v3677, 1.0
    %v3682 = vadd.f32 %v3679, 1.0
    %v3683 = vrcp.pop %v3680
    %v3684 = vmul.f32 %v3680, %v3683
    %v3685 = vsub.f32 1.0, %v3684
    %v3686 = vmul.f32 %v3683, %v3685
    %v3687 = vadd.f32 %v3683, %v3686
    %vm3688 = vweird.f32 %v3680
    %vm3689 = vweird.f32 %v3683
    %vm3690 = vmor %vm3688, %vm3689
    %v3691 = vsel %vm3690, %v3683, %v3687
    %v3692 = vand.u32 2147483647, %v3680
    %vm3693 = vcmp.eq.f32.partialorder %v3692, 8.507059e+37
    %v3694 = vand.u32 %v3680, 2147483648
    %v3695 = vor.u32 1.1754944e-38, %v3694
    %v3696 = vsel %vm3693, %v3695, %v3691
    %v3697 = vmul.f32 1.0, %v3696
    %v3698 = vrcp.pop %v3681
    %v3699 = vmul.f32 %v3681, %v3698
    %v3700 = vsub.f32 1.0, %v3699
    %v3701 = vmul.f32 %v3698, %v3700
    %v3702 = vadd.f32 %v3698, %v3701
    %vm3703 = vweird.f32 %v3681
    %vm3704 = vweird.f32 %v3698
    %vm3705 = vmor %vm3703, %vm3704
    %v3706 = vsel %vm3705, %v3698, %v3702
    %v3707 = vand.u32 2147483647, %v3681
    %vm3708 = vcmp.eq.f32.partialorder %v3707, 8.507059e+37
    %v3709 = vand.u32 %v3681, 2147483648
    %v3710 = vor.u32 1.1754944e-38, %v3709
    %v3711 = vsel %vm3708, %v3710, %v3706
    %v3712 = vmul.f32 1.0, %v3711
    %v3713 = vrcp.pop %v3682
    %v3714 = vmul.f32 %v3682, %v3713
    %v3715 = vsub.f32 1.0, %v3714
    %v3716 = vmul.f32 %v3713, %v3715
    %v3717 = vadd.f32 %v3713, %v3716
    %vm3718 = vweird.f32 %v3682
    %vm3719 = vweird.f32 %v3713
    %vm3720 = vmor %vm3718, %vm3719
    %v3721 = vsel %vm3720, %v3713, %v3717
    %v3722 = vand.u32 2147483647, %v3682
    %vm3723 = vcmp.eq.f32.partialorder %v3722, 8.507059e+37
    %v3724 = vand.u32 %v3682, 2147483648
    %v3725 = vor.u32 1.1754944e-38, %v3724
    %v3726 = vsel %vm3723, %v3725, %v3721
    %v3727 = vmul.f32 1.0, %v3726
    %v3728 = vtanh.pop %v3668
    %v3729 = vmul.f32 %v3712, %v2876
    %v3730 = vmul.f32 %v3697, %v3728
    %v3731 = vadd.f32 %v3729, %v3730
    %v3732 = vtanh.pop %v3731
    %v3733 = vmul.f32 %v3727, %v3732
    %3734 = vst [vmem:[#allocation3 + $0x3] sm:$0x1] %v3733
    %s3735 = scalar_lea.vmem [#allocation2], 4
    %v3736 = vld [vmem:[%s3735] ss:$8 sm:$0xf]
    %v3737 = vld [vmem:[#allocation9] sm:$0xff]
    %v3738 = vld [vmem:[#allocation9 + $0x8] sm:$0xff]
    %v3739 = vld [vmem:[#allocation9 + $0x10] sm:$0xff]
    %v3740 = vld [vmem:[#allocation9 + $0x18] sm:$0xff]
    %v3741 = vld [vmem:[#allocation9 + $0x20] sm:$0xff]
    %v3742 = vld [vmem:[#allocation9 + $0x28] sm:$0xff]
    %v3743 = vld [vmem:[#allocation9 + $0x30] sm:$0xff]
    %v3744 = vld [vmem:[#allocation9 + $0x38] sm:$0xff]
    %v3745 = vld [vmem:[#allocation9 + $0x40] sm:$0xff]
    %v3746 = vld [vmem:[#allocation9 + $0x48] sm:$0xff]
    %v3747 = vld [vmem:[#allocation9 + $0x50] sm:$0xff]
    %v3748 = vld [vmem:[#allocation9 + $0x58] sm:$0xff]
    %v3749 = vld [vmem:[#allocation9 + $0x60] sm:$0xff]
    %v3750 = vld [vmem:[#allocation9 + $0x68] sm:$0xff]
    %v3751 = vld [vmem:[#allocation9 + $0x70] sm:$0xff]
    %v3752 = vld [vmem:[#allocation9 + $0x78] sm:$0xff]
    %v3753 = vld [vmem:[#allocation9 + $0x80] sm:$0xff]
    %v3754 = vld [vmem:[#allocation9 + $0x88] sm:$0xff]
    %v3755 = vld [vmem:[#allocation9 + $0x90] sm:$0xff]
    %v3756 = vld [vmem:[#allocation9 + $0x98] sm:$0xff]
    %v3757 = vld [vmem:[#allocation9 + $0xa0] sm:$0xff]
    %v3758 = vld [vmem:[#allocation9 + $0xa8] sm:$0xff]
    %v3759 = vld [vmem:[#allocation9 + $0xb0] sm:$0xff]
    %v3760 = vld [vmem:[#allocation9 + $0xb8] sm:$0xff]
    %v3761 = vld [vmem:[#allocation9 + $0xc0] sm:$0xff]
    %v3762 = vld [vmem:[#allocation9 + $0xc8] sm:$0xff]
    %v3763 = vld [vmem:[#allocation9 + $0xd0] sm:$0xff]
    %v3764 = vld [vmem:[#allocation9 + $0xd8] sm:$0xff]
    %v3765 = vld [vmem:[#allocation9 + $0xe0] sm:$0xff]
    %v3766 = vld [vmem:[#allocation9 + $0xe8] sm:$0xff]
    %v3767 = vld [vmem:[#allocation9 + $0xf0] sm:$0xff]
    %v3768 = vld [vmem:[#allocation9 + $0xf8] sm:$0xff]
    %v3801 = vunpack.c.l.b16 %v3737
    %v3802 = vunpack.c.h.b16 %v3737
    %v3803 = vunpack.c.l.b16 %v3738
    %v3804 = vunpack.c.h.b16 %v3738
    %v3805 = vunpack.c.l.b16 %v3739
    %v3806 = vunpack.c.h.b16 %v3739
    %v3807 = vunpack.c.l.b16 %v3740
    %v3808 = vunpack.c.h.b16 %v3740
    %v3809 = vunpack.c.l.b16 %v3741
    %v3810 = vunpack.c.h.b16 %v3741
    %v3811 = vunpack.c.l.b16 %v3742
    %v3812 = vunpack.c.h.b16 %v3742
    %v3813 = vunpack.c.l.b16 %v3743
    %v3814 = vunpack.c.h.b16 %v3743
    %v3815 = vunpack.c.l.b16 %v3744
    %v3816 = vunpack.c.h.b16 %v3744
    %v3817 = vunpack.c.l.b16 %v3745
    %v3818 = vunpack.c.h.b16 %v3745
    %v3819 = vunpack.c.l.b16 %v3746
    %v3820 = vunpack.c.h.b16 %v3746
    %v3821 = vunpack.c.l.b16 %v3747
    %v3822 = vunpack.c.h.b16 %v3747
    %v3823 = vunpack.c.l.b16 %v3748
    %v3824 = vunpack.c.h.b16 %v3748
    %v3825 = vunpack.c.l.b16 %v3749
    %v3826 = vunpack.c.h.b16 %v3749
    %v3827 = vunpack.c.l.b16 %v3750
    %v3828 = vunpack.c.h.b16 %v3750
    %v3829 = vunpack.c.l.b16 %v3751
    %v3830 = vunpack.c.h.b16 %v3751
    %v3831 = vunpack.c.l.b16 %v3752
    %v3832 = vunpack.c.h.b16 %v3752
    %v3833 = vunpack.c.l.b16 %v3753
    %v3834 = vunpack.c.h.b16 %v3753
    %v3835 = vunpack.c.l.b16 %v3754
    %v3836 = vunpack.c.h.b16 %v3754
    %v3837 = vunpack.c.l.b16 %v3755
    %v3838 = vunpack.c.h.b16 %v3755
    %v3839 = vunpack.c.l.b16 %v3756
    %v3840 = vunpack.c.h.b16 %v3756
    %v3841 = vunpack.c.l.b16 %v3757
    %v3842 = vunpack.c.h.b16 %v3757
    %v3843 = vunpack.c.l.b16 %v3758
    %v3844 = vunpack.c.h.b16 %v3758
    %v3845 = vunpack.c.l.b16 %v3759
    %v3846 = vunpack.c.h.b16 %v3759
    %v3847 = vunpack.c.l.b16 %v3760
    %v3848 = vunpack.c.h.b16 %v3760
    %v3849 = vunpack.c.l.b16 %v3761
    %v3850 = vunpack.c.h.b16 %v3761
    %v3851 = vunpack.c.l.b16 %v3762
    %v3852 = vunpack.c.h.b16 %v3762
    %v3853 = vunpack.c.l.b16 %v3763
    %v3854 = vunpack.c.h.b16 %v3763
    %v3855 = vunpack.c.l.b16 %v3764
    %v3856 = vunpack.c.h.b16 %v3764
    %v3857 = vunpack.c.l.b16 %v3765
    %v3858 = vunpack.c.h.b16 %v3765
    %v3859 = vunpack.c.l.b16 %v3766
    %v3860 = vunpack.c.h.b16 %v3766
    %v3861 = vunpack.c.l.b16 %v3767
    %v3862 = vunpack.c.h.b16 %v3767
    %v3863 = vunpack.c.l.b16 %v3768
    %v3864 = vunpack.c.h.b16 %v3768
    %v3865 = vpack.c.b16 %v3805, %v3801
    %v3866 = vpack.c.b16 %v3806, %v3802
    %v3867 = vpack.c.b16 %v3807, %v3803
    %v3868 = vpack.c.b16 %v3808, %v3804
    %v3869 = vpack.c.b16 %v3813, %v3809
    %v3870 = vpack.c.b16 %v3814, %v3810
    %v3871 = vpack.c.b16 %v3815, %v3811
    %v3872 = vpack.c.b16 %v3816, %v3812
    %v3873 = vpack.c.b16 %v3821, %v3817
    %v3874 = vpack.c.b16 %v3822, %v3818
    %v3875 = vpack.c.b16 %v3823, %v3819
    %v3876 = vpack.c.b16 %v3824, %v3820
    %v3877 = vpack.c.b16 %v3829, %v3825
    %v3878 = vpack.c.b16 %v3830, %v3826
    %v3879 = vpack.c.b16 %v3831, %v3827
    %v3880 = vpack.c.b16 %v3832, %v3828
    %v3881 = vpack.c.b16 %v3837, %v3833
    %v3882 = vpack.c.b16 %v3838, %v3834
    %v3883 = vpack.c.b16 %v3839, %v3835
    %v3884 = vpack.c.b16 %v3840, %v3836
    %v3885 = vpack.c.b16 %v3845, %v3841
    %v3886 = vpack.c.b16 %v3846, %v3842
    %v3887 = vpack.c.b16 %v3847, %v3843
    %v3888 = vpack.c.b16 %v3848, %v3844
    %v3889 = vpack.c.b16 %v3853, %v3849
    %v3890 = vpack.c.b16 %v3854, %v3850
    %v3891 = vpack.c.b16 %v3855, %v3851
    %v3892 = vpack.c.b16 %v3856, %v3852
    %v3893 = vpack.c.b16 %v3861, %v3857
    %v3894 = vpack.c.b16 %v3862, %v3858
    %v3895 = vpack.c.b16 %v3863, %v3859
    %v3896 = vpack.c.b16 %v3864, %v3860
    %3929 = vmatpush.bf16.msra.mxu0 %v3893
    %3930 = vmatpush.bf16.msra.mxu0 %v3889
    %3931 = vmatpush.bf16.msra.mxu0 %v3885
    %3932 = vmatpush.bf16.msra.mxu0 %v3881
    %3933 = vmatpush.bf16.msra.mxu0 %v3877
    %3934 = vmatpush.bf16.msra.mxu0 %v3873
    %3935 = vmatpush.bf16.msra.mxu0 %v3869
    %3936 = vmatpush.bf16.msra.mxu0 %v3865
    %3937 = vmatmul.bf16.gmra.mxu0 %v3171
    %v3938 = vpop.f32.mrf.mxu0
    %v3939 = vadd.f32 0.0, %v3938
    %v3940 = vpop.f32.mrf.mxu0
    %3941 = vdwg.mxu0
    %3942 = vmatpush.bf16.msra.mxu0 %v3894
    %3943 = vmatpush.bf16.msra.mxu0 %v3890
    %3944 = vmatpush.bf16.msra.mxu0 %v3886
    %3945 = vmatpush.bf16.msra.mxu0 %v3882
    %3946 = vmatpush.bf16.msra.mxu0 %v3878
    %3947 = vmatpush.bf16.msra.mxu0 %v3874
    %3948 = vmatpush.bf16.msra.mxu0 %v3870
    %3949 = vmatpush.bf16.msra.mxu0 %v3866
    %3950 = vmatmul.bf16.gmra.mxu0 %v3171
    %v3951 = vpop.f32.mrf.mxu0
    %v3952 = vadd.f32 0.0, %v3951
    %v3953 = vpop.f32.mrf.mxu0
    %3954 = vdwg.mxu0
    %3955 = vmatpush.bf16.msra.mxu0 %v3895
    %3956 = vmatpush.bf16.msra.mxu0 %v3891
    %3957 = vmatpush.bf16.msra.mxu0 %v3887
    %3958 = vmatpush.bf16.msra.mxu0 %v3883
    %3959 = vmatpush.bf16.msra.mxu0 %v3879
    %3960 = vmatpush.bf16.msra.mxu0 %v3875
    %3961 = vmatpush.bf16.msra.mxu0 %v3871
    %3962 = vmatpush.bf16.msra.mxu0 %v3867
    %3963 = vmatmul.bf16.gmra.mxu0 %v3171
    %v3964 = vpop.f32.mrf.mxu0
    %v3965 = vadd.f32 0.0, %v3964
    %v3966 = vpop.f32.mrf.mxu0
    %3967 = vdwg.mxu0
    %3968 = vmatpush.bf16.msra.mxu0 %v3896
    %3969 = vmatpush.bf16.msra.mxu0 %v3892
    %3970 = vmatpush.bf16.msra.mxu0 %v3888
    %3971 = vmatpush.bf16.msra.mxu0 %v3884
    %3972 = vmatpush.bf16.msra.mxu0 %v3880
    %3973 = vmatpush.bf16.msra.mxu0 %v3876
    %3974 = vmatpush.bf16.msra.mxu0 %v3872
    %3975 = vmatpush.bf16.msra.mxu0 %v3868
    %3976 = vmatmul.bf16.gmra.mxu0 %v3171
    %v3977 = vpop.f32.mrf.mxu0
    %v3978 = vadd.f32 0.0, %v3977
    %v3979 = vpop.f32.mrf.mxu0
    %3980 = vdwg.mxu0
    %v3985 = vrot.slane %v3952, 7
    %v3986 = vrot.slane %v3965, 6
    %v3987 = vrot.slane %v3978, 5
    %v3988 = vsel %vm565, %v3939, %v3985
    %v3989 = vsel %vm567, %v3986, %v3987
    %v3990 = vsel %vm569, %v3988, %v3989
    %v3992 = vadd.f32 %v3736, %v3990
    %v3993 = vxor.u32 %v3992, 2147483648
    %v3994 = vmul.f32 %v3993, 1.442695
    %v3995 = vpow.pop %v3994
    %v3996 = vadd.f32 %v3995, 1.0
    %v3997 = vrcp.pop %v3996
    %v3998 = vmul.f32 %v3996, %v3997
    %v3999 = vsub.f32 1.0, %v3998
    %v4000 = vmul.f32 %v3997, %v3999
    %v4001 = vadd.f32 %v3997, %v4000
    %vm4002 = vweird.f32 %v3996
    %vm4003 = vweird.f32 %v3997
    %vm4004 = vmor %vm4002, %vm4003
    %v4005 = vsel %vm4004, %v3997, %v4001
    %v4006 = vand.u32 2147483647, %v3996
    %vm4007 = vcmp.eq.f32.partialorder %v4006, 8.507059e+37
    %v4008 = vand.u32 %v3996, 2147483648
    %v4009 = vor.u32 1.1754944e-38, %v4008
    %v4010 = vsel %vm4007, %v4009, %v4005
    %v4011 = vmul.f32 1.0, %v4010
    %v4013 = vrot.slane %v3992, 3
    %v4015 = vtanh.pop %v4013
    %v4017 = vrot.slane %v4011, 1
    %v4019 = vmul.f32 %v4017, %v3166
    %v4020 = vmul.f32 %v4011, %v4015
    %v4021 = vadd.f32 %v4019, %v4020
    %v4022 = vtanh.pop %v4021
    %v4023 = vrot.slane %v4011, 2
    %v4025 = vmul.f32 %v4023, %v4022
    %v4026 = vpack.c.bf16 %v4025, %v4025
    %v4027 = vpack.c.bf16 %v3733, %v3733
    %v4028 = vld [vmem:[#allocation12] sm:$0xff]
    %v4029 = vld [vmem:[#allocation12 + $0x8] sm:$0xff]
    %v4030 = vld [vmem:[#allocation12 + $0x10] sm:$0xff]
    %v4031 = vld [vmem:[#allocation12 + $0x18] sm:$0xff]
    %v4032 = vld [vmem:[#allocation12 + $0x20] sm:$0xff]
    %v4033 = vld [vmem:[#allocation12 + $0x28] sm:$0xff]
    %v4034 = vld [vmem:[#allocation12 + $0x30] sm:$0xff]
    %v4035 = vld [vmem:[#allocation12 + $0x38] sm:$0xff]
    %v4036 = vld [vmem:[#allocation12 + $0x40] sm:$0xff]
    %v4037 = vld [vmem:[#allocation12 + $0x48] sm:$0xff]
    %v4038 = vld [vmem:[#allocation12 + $0x50] sm:$0xff]
    %v4039 = vld [vmem:[#allocation12 + $0x58] sm:$0xff]
    %v4040 = vld [vmem:[#allocation12 + $0x60] sm:$0xff]
    %v4041 = vld [vmem:[#allocation12 + $0x68] sm:$0xff]
    %v4042 = vld [vmem:[#allocation12 + $0x70] sm:$0xff]
    %v4043 = vld [vmem:[#allocation12 + $0x78] sm:$0xff]
    %v4044 = vld [vmem:[#allocation12 + $0x80] sm:$0xff]
    %v4045 = vld [vmem:[#allocation12 + $0x88] sm:$0xff]
    %v4046 = vld [vmem:[#allocation12 + $0x90] sm:$0xff]
    %v4047 = vld [vmem:[#allocation12 + $0x98] sm:$0xff]
    %v4048 = vld [vmem:[#allocation12 + $0xa0] sm:$0xff]
    %v4049 = vld [vmem:[#allocation12 + $0xa8] sm:$0xff]
    %v4050 = vld [vmem:[#allocation12 + $0xb0] sm:$0xff]
    %v4051 = vld [vmem:[#allocation12 + $0xb8] sm:$0xff]
    %v4052 = vld [vmem:[#allocation12 + $0xc0] sm:$0xff]
    %v4053 = vld [vmem:[#allocation12 + $0xc8] sm:$0xff]
    %v4054 = vld [vmem:[#allocation12 + $0xd0] sm:$0xff]
    %v4055 = vld [vmem:[#allocation12 + $0xd8] sm:$0xff]
    %v4056 = vld [vmem:[#allocation12 + $0xe0] sm:$0xff]
    %v4057 = vld [vmem:[#allocation12 + $0xe8] sm:$0xff]
    %v4058 = vld [vmem:[#allocation12 + $0xf0] sm:$0xff]
    %v4059 = vld [vmem:[#allocation12 + $0xf8] sm:$0xff]
    %v4060 = vld [vmem:[#allocation12 + $0x100] sm:$0xff]
    %v4061 = vld [vmem:[#allocation12 + $0x108] sm:$0xff]
    %v4062 = vld [vmem:[#allocation12 + $0x110] sm:$0xff]
    %v4063 = vld [vmem:[#allocation12 + $0x118] sm:$0xff]
    %v4064 = vld [vmem:[#allocation12 + $0x120] sm:$0xff]
    %v4065 = vld [vmem:[#allocation12 + $0x128] sm:$0xff]
    %v4066 = vld [vmem:[#allocation12 + $0x130] sm:$0xff]
    %v4067 = vld [vmem:[#allocation12 + $0x138] sm:$0xff]
    %v4068 = vld [vmem:[#allocation12 + $0x140] sm:$0xff]
    %v4069 = vld [vmem:[#allocation12 + $0x148] sm:$0xff]
    %v4070 = vld [vmem:[#allocation12 + $0x150] sm:$0xff]
    %v4071 = vld [vmem:[#allocation12 + $0x158] sm:$0xff]
    %v4072 = vld [vmem:[#allocation12 + $0x160] sm:$0xff]
    %v4073 = vld [vmem:[#allocation12 + $0x168] sm:$0xff]
    %v4074 = vld [vmem:[#allocation12 + $0x170] sm:$0xff]
    %v4075 = vld [vmem:[#allocation12 + $0x178] sm:$0xff]
    %v4076 = vld [vmem:[#allocation12 + $0x180] sm:$0xff]
    %v4077 = vld [vmem:[#allocation12 + $0x188] sm:$0xff]
    %v4078 = vld [vmem:[#allocation12 + $0x190] sm:$0xff]
    %v4079 = vld [vmem:[#allocation12 + $0x198] sm:$0xff]
    %v4080 = vld [vmem:[#allocation12 + $0x1a0] sm:$0xff]
    %v4081 = vld [vmem:[#allocation12 + $0x1a8] sm:$0xff]
    %v4082 = vld [vmem:[#allocation12 + $0x1b0] sm:$0xff]
    %v4083 = vld [vmem:[#allocation12 + $0x1b8] sm:$0xff]
    %v4084 = vld [vmem:[#allocation12 + $0x1c0] sm:$0xff]
    %v4085 = vld [vmem:[#allocation12 + $0x1c8] sm:$0xff]
    %v4086 = vld [vmem:[#allocation12 + $0x1d0] sm:$0xff]
    %v4087 = vld [vmem:[#allocation12 + $0x1d8] sm:$0xff]
    %v4088 = vld [vmem:[#allocation12 + $0x1e0] sm:$0xff]
    %v4089 = vld [vmem:[#allocation12 + $0x1e8] sm:$0xff]
    %v4090 = vld [vmem:[#allocation12 + $0x1f0] sm:$0xff]
    %v4091 = vld [vmem:[#allocation12 + $0x1f8] sm:$0xff]
    %v4092 = vld [vmem:[%s5] sm:$0xf]
    %v4157 = vunpack.c.l.b16 %v4028
    %v4158 = vunpack.c.h.b16 %v4028
    %v4159 = vunpack.c.l.b16 %v4029
    %v4160 = vunpack.c.h.b16 %v4029
    %v4161 = vunpack.c.l.b16 %v4030
    %v4162 = vunpack.c.h.b16 %v4030
    %v4163 = vunpack.c.l.b16 %v4031
    %v4164 = vunpack.c.h.b16 %v4031
    %v4165 = vunpack.c.l.b16 %v4032
    %v4166 = vunpack.c.h.b16 %v4032
    %v4167 = vunpack.c.l.b16 %v4033
    %v4168 = vunpack.c.h.b16 %v4033
    %v4169 = vunpack.c.l.b16 %v4034
    %v4170 = vunpack.c.h.b16 %v4034
    %v4171 = vunpack.c.l.b16 %v4035
    %v4172 = vunpack.c.h.b16 %v4035
    %v4173 = vunpack.c.l.b16 %v4036
    %v4174 = vunpack.c.h.b16 %v4036
    %v4175 = vunpack.c.l.b16 %v4037
    %v4176 = vunpack.c.h.b16 %v4037
    %v4177 = vunpack.c.l.b16 %v4038
    %v4178 = vunpack.c.h.b16 %v4038
    %v4179 = vunpack.c.l.b16 %v4039
    %v4180 = vunpack.c.h.b16 %v4039
    %v4181 = vunpack.c.l.b16 %v4040
    %v4182 = vunpack.c.h.b16 %v4040
    %v4183 = vunpack.c.l.b16 %v4041
    %v4184 = vunpack.c.h.b16 %v4041
    %v4185 = vunpack.c.l.b16 %v4042
    %v4186 = vunpack.c.h.b16 %v4042
    %v4187 = vunpack.c.l.b16 %v4043
    %v4188 = vunpack.c.h.b16 %v4043
    %v4189 = vunpack.c.l.b16 %v4044
    %v4190 = vunpack.c.h.b16 %v4044
    %v4191 = vunpack.c.l.b16 %v4045
    %v4192 = vunpack.c.h.b16 %v4045
    %v4193 = vunpack.c.l.b16 %v4046
    %v4194 = vunpack.c.h.b16 %v4046
    %v4195 = vunpack.c.l.b16 %v4047
    %v4196 = vunpack.c.h.b16 %v4047
    %v4197 = vunpack.c.l.b16 %v4048
    %v4198 = vunpack.c.h.b16 %v4048
    %v4199 = vunpack.c.l.b16 %v4049
    %v4200 = vunpack.c.h.b16 %v4049
    %v4201 = vunpack.c.l.b16 %v4050
    %v4202 = vunpack.c.h.b16 %v4050
    %v4203 = vunpack.c.l.b16 %v4051
    %v4204 = vunpack.c.h.b16 %v4051
    %v4205 = vunpack.c.l.b16 %v4052
    %v4206 = vunpack.c.h.b16 %v4052
    %v4207 = vunpack.c.l.b16 %v4053
    %v4208 = vunpack.c.h.b16 %v4053
    %v4209 = vunpack.c.l.b16 %v4054
    %v4210 = vunpack.c.h.b16 %v4054
    %v4211 = vunpack.c.l.b16 %v4055
    %v4212 = vunpack.c.h.b16 %v4055
    %v4213 = vunpack.c.l.b16 %v4056
    %v4214 = vunpack.c.h.b16 %v4056
    %v4215 = vunpack.c.l.b16 %v4057
    %v4216 = vunpack.c.h.b16 %v4057
    %v4217 = vunpack.c.l.b16 %v4058
    %v4218 = vunpack.c.h.b16 %v4058
    %v4219 = vunpack.c.l.b16 %v4059
    %v4220 = vunpack.c.h.b16 %v4059
    %v4221 = vunpack.c.l.b16 %v4060
    %v4222 = vunpack.c.h.b16 %v4060
    %v4223 = vunpack.c.l.b16 %v4061
    %v4224 = vunpack.c.h.b16 %v4061
    %v4225 = vunpack.c.l.b16 %v4062
    %v4226 = vunpack.c.h.b16 %v4062
    %v4227 = vunpack.c.l.b16 %v4063
    %v4228 = vunpack.c.h.b16 %v4063
    %v4229 = vunpack.c.l.b16 %v4064
    %v4230 = vunpack.c.h.b16 %v4064
    %v4231 = vunpack.c.l.b16 %v4065
    %v4232 = vunpack.c.h.b16 %v4065
    %v4233 = vunpack.c.l.b16 %v4066
    %v4234 = vunpack.c.h.b16 %v4066
    %v4235 = vunpack.c.l.b16 %v4067
    %v4236 = vunpack.c.h.b16 %v4067
    %v4237 = vunpack.c.l.b16 %v4068
    %v4238 = vunpack.c.h.b16 %v4068
    %v4239 = vunpack.c.l.b16 %v4069
    %v4240 = vunpack.c.h.b16 %v4069
    %v4241 = vunpack.c.l.b16 %v4070
    %v4242 = vunpack.c.h.b16 %v4070
    %v4243 = vunpack.c.l.b16 %v4071
    %v4244 = vunpack.c.h.b16 %v4071
    %v4245 = vunpack.c.l.b16 %v4072
    %v4246 = vunpack.c.h.b16 %v4072
    %v4247 = vunpack.c.l.b16 %v4073
    %v4248 = vunpack.c.h.b16 %v4073
    %v4249 = vunpack.c.l.b16 %v4074
    %v4250 = vunpack.c.h.b16 %v4074
    %v4251 = vunpack.c.l.b16 %v4075
    %v4252 = vunpack.c.h.b16 %v4075
    %v4253 = vunpack.c.l.b16 %v4076
    %v4254 = vunpack.c.h.b16 %v4076
    %v4255 = vunpack.c.l.b16 %v4077
    %v4256 = vunpack.c.h.b16 %v4077
    %v4257 = vunpack.c.l.b16 %v4078
    %v4258 = vunpack.c.h.b16 %v4078
    %v4259 = vunpack.c.l.b16 %v4079
    %v4260 = vunpack.c.h.b16 %v4079
    %v4261 = vunpack.c.l.b16 %v4080
    %v4262 = vunpack.c.h.b16 %v4080
    %v4263 = vunpack.c.l.b16 %v4081
    %v4264 = vunpack.c.h.b16 %v4081
    %v4265 = vunpack.c.l.b16 %v4082
    %v4266 = vunpack.c.h.b16 %v4082
    %v4267 = vunpack.c.l.b16 %v4083
    %v4268 = vunpack.c.h.b16 %v4083
    %v4269 = vunpack.c.l.b16 %v4084
    %v4270 = vunpack.c.h.b16 %v4084
    %v4271 = vunpack.c.l.b16 %v4085
    %v4272 = vunpack.c.h.b16 %v4085
    %v4273 = vunpack.c.l.b16 %v4086
    %v4274 = vunpack.c.h.b16 %v4086
    %v4275 = vunpack.c.l.b16 %v4087
    %v4276 = vunpack.c.h.b16 %v4087
    %v4277 = vunpack.c.l.b16 %v4088
    %v4278 = vunpack.c.h.b16 %v4088
    %v4279 = vunpack.c.l.b16 %v4089
    %v4280 = vunpack.c.h.b16 %v4089
    %v4281 = vunpack.c.l.b16 %v4090
    %v4282 = vunpack.c.h.b16 %v4090
    %v4283 = vunpack.c.l.b16 %v4091
    %v4284 = vunpack.c.h.b16 %v4091
    %v4285 = vpack.c.b16 %v4161, %v4157
    %v4286 = vpack.c.b16 %v4162, %v4158
    %v4287 = vpack.c.b16 %v4163, %v4159
    %v4288 = vpack.c.b16 %v4164, %v4160
    %v4289 = vpack.c.b16 %v4169, %v4165
    %v4290 = vpack.c.b16 %v4170, %v4166
    %v4291 = vpack.c.b16 %v4171, %v4167
    %v4292 = vpack.c.b16 %v4172, %v4168
    %v4293 = vpack.c.b16 %v4177, %v4173
    %v4294 = vpack.c.b16 %v4178, %v4174
    %v4295 = vpack.c.b16 %v4179, %v4175
    %v4296 = vpack.c.b16 %v4180, %v4176
    %v4297 = vpack.c.b16 %v4185, %v4181
    %v4298 = vpack.c.b16 %v4186, %v4182
    %v4299 = vpack.c.b16 %v4187, %v4183
    %v4300 = vpack.c.b16 %v4188, %v4184
    %v4301 = vpack.c.b16 %v4193, %v4189
    %v4302 = vpack.c.b16 %v4194, %v4190
    %v4303 = vpack.c.b16 %v4195, %v4191
    %v4304 = vpack.c.b16 %v4196, %v4192
    %v4305 = vpack.c.b16 %v4201, %v4197
    %v4306 = vpack.c.b16 %v4202, %v4198
    %v4307 = vpack.c.b16 %v4203, %v4199
    %v4308 = vpack.c.b16 %v4204, %v4200
    %v4309 = vpack.c.b16 %v4209, %v4205
    %v4310 = vpack.c.b16 %v4210, %v4206
    %v4311 = vpack.c.b16 %v4211, %v4207
    %v4312 = vpack.c.b16 %v4212, %v4208
    %v4313 = vpack.c.b16 %v4217, %v4213
    %v4314 = vpack.c.b16 %v4218, %v4214
    %v4315 = vpack.c.b16 %v4219, %v4215
    %v4316 = vpack.c.b16 %v4220, %v4216
    %v4317 = vpack.c.b16 %v4225, %v4221
    %v4318 = vpack.c.b16 %v4226, %v4222
    %v4319 = vpack.c.b16 %v4227, %v4223
    %v4320 = vpack.c.b16 %v4228, %v4224
    %v4321 = vpack.c.b16 %v4233, %v4229
    %v4322 = vpack.c.b16 %v4234, %v4230
    %v4323 = vpack.c.b16 %v4235, %v4231
    %v4324 = vpack.c.b16 %v4236, %v4232
    %v4325 = vpack.c.b16 %v4241, %v4237
    %v4326 = vpack.c.b16 %v4242, %v4238
    %v4327 = vpack.c.b16 %v4243, %v4239
    %v4328 = vpack.c.b16 %v4244, %v4240
    %v4329 = vpack.c.b16 %v4249, %v4245
    %v4330 = vpack.c.b16 %v4250, %v4246
    %v4331 = vpack.c.b16 %v4251, %v4247
    %v4332 = vpack.c.b16 %v4252, %v4248
    %v4333 = vpack.c.b16 %v4257, %v4253
    %v4334 = vpack.c.b16 %v4258, %v4254
    %v4335 = vpack.c.b16 %v4259, %v4255
    %v4336 = vpack.c.b16 %v4260, %v4256
    %v4337 = vpack.c.b16 %v4265, %v4261
    %v4338 = vpack.c.b16 %v4266, %v4262
    %v4339 = vpack.c.b16 %v4267, %v4263
    %v4340 = vpack.c.b16 %v4268, %v4264
    %v4341 = vpack.c.b16 %v4273, %v4269
    %v4342 = vpack.c.b16 %v4274, %v4270
    %v4343 = vpack.c.b16 %v4275, %v4271
    %v4344 = vpack.c.b16 %v4276, %v4272
    %v4345 = vpack.c.b16 %v4281, %v4277
    %v4346 = vpack.c.b16 %v4282, %v4278
    %v4347 = vpack.c.b16 %v4283, %v4279
    %v4348 = vpack.c.b16 %v4284, %v4280
    %v4414 = vperm.slane %v4092, 0
    %v4415 = vperm.slane %v4092, 1
    %v4416 = vperm.slane %v4092, 2
    %v4417 = vperm.slane %v4092, 3
    %4422 = vmatpush.bf16.msra.mxu0 %v4313
    %4423 = vmatpush.bf16.msra.mxu0 %v4309
    %4424 = vmatpush.bf16.msra.mxu0 %v4305
    %4425 = vmatpush.bf16.msra.mxu0 %v4301
    %4426 = vmatpush.bf16.msra.mxu0 %v4297
    %4427 = vmatpush.bf16.msra.mxu0 %v4293
    %4428 = vmatpush.bf16.msra.mxu0 %v4289
    %4429 = vmatpush.bf16.msra.mxu0 %v4285
    %4430 = vmatmul.bf16.gmra.mxu0 %v4026
    %v4431 = vpop.f32.mrf.mxu0
    %v4432 = vadd.f32 %v4414, %v4431
    %v4433 = vpop.f32.mrf.mxu0
    %4434 = vdwg.mxu0
    %4435 = vmatpush.bf16.msra.mxu0 %v4345
    %4436 = vmatpush.bf16.msra.mxu0 %v4341
    %4437 = vmatpush.bf16.msra.mxu0 %v4337
    %4438 = vmatpush.bf16.msra.mxu0 %v4333
    %4439 = vmatpush.bf16.msra.mxu0 %v4329
    %4440 = vmatpush.bf16.msra.mxu0 %v4325
    %4441 = vmatpush.bf16.msra.mxu0 %v4321
    %4442 = vmatpush.bf16.msra.mxu0 %v4317
    %4443 = vmatmul.bf16.gmra.mxu0 %v4027
    %v4444 = vpop.f32.mrf.mxu0
    %v4445 = vadd.f32 %v4432, %v4444
    %v4446 = vpop.f32.mrf.mxu0
    %4447 = vdwg.mxu0
    %4448 = vmatpush.bf16.msra.mxu0 %v4314
    %4449 = vmatpush.bf16.msra.mxu0 %v4310
    %4450 = vmatpush.bf16.msra.mxu0 %v4306
    %4451 = vmatpush.bf16.msra.mxu0 %v4302
    %4452 = vmatpush.bf16.msra.mxu0 %v4298
    %4453 = vmatpush.bf16.msra.mxu0 %v4294
    %4454 = vmatpush.bf16.msra.mxu0 %v4290
    %4455 = vmatpush.bf16.msra.mxu0 %v4286
    %4456 = vmatmul.bf16.gmra.mxu0 %v4026
    %v4457 = vpop.f32.mrf.mxu0
    %v4458 = vadd.f32 %v4415, %v4457
    %v4459 = vpop.f32.mrf.mxu0
    %4460 = vdwg.mxu0
    %4461 = vmatpush.bf16.msra.mxu0 %v4346
    %4462 = vmatpush.bf16.msra.mxu0 %v4342
    %4463 = vmatpush.bf16.msra.mxu0 %v4338
    %4464 = vmatpush.bf16.msra.mxu0 %v4334
    %4465 = vmatpush.bf16.msra.mxu0 %v4330
    %4466 = vmatpush.bf16.msra.mxu0 %v4326
    %4467 = vmatpush.bf16.msra.mxu0 %v4322
    %4468 = vmatpush.bf16.msra.mxu0 %v4318
    %4469 = vmatmul.bf16.gmra.mxu0 %v4027
    %v4470 = vpop.f32.mrf.mxu0
    %v4471 = vadd.f32 %v4458, %v4470
    %v4472 = vpop.f32.mrf.mxu0
    %4473 = vdwg.mxu0
    %4474 = vmatpush.bf16.msra.mxu0 %v4315
    %4475 = vmatpush.bf16.msra.mxu0 %v4311
    %4476 = vmatpush.bf16.msra.mxu0 %v4307
    %4477 = vmatpush.bf16.msra.mxu0 %v4303
    %4478 = vmatpush.bf16.msra.mxu0 %v4299
    %4479 = vmatpush.bf16.msra.mxu0 %v4295
    %4480 = vmatpush.bf16.msra.mxu0 %v4291
    %4481 = vmatpush.bf16.msra.mxu0 %v4287
    %4482 = vmatmul.bf16.gmra.mxu0 %v4026
    %v4483 = vpop.f32.mrf.mxu0
    %v4484 = vadd.f32 %v4416, %v4483
    %v4485 = vpop.f32.mrf.mxu0
    %4486 = vdwg.mxu0
    %4487 = vmatpush.bf16.msra.mxu0 %v4347
    %4488 = vmatpush.bf16.msra.mxu0 %v4343
    %4489 = vmatpush.bf16.msra.mxu0 %v4339
    %4490 = vmatpush.bf16.msra.mxu0 %v4335
    %4491 = vmatpush.bf16.msra.mxu0 %v4331
    %4492 = vmatpush.bf16.msra.mxu0 %v4327
    %4493 = vmatpush.bf16.msra.mxu0 %v4323
    %4494 = vmatpush.bf16.msra.mxu0 %v4319
    %4495 = vmatmul.bf16.gmra.mxu0 %v4027
    %v4496 = vpop.f32.mrf.mxu0
    %v4497 = vadd.f32 %v4484, %v4496
    %v4498 = vpop.f32.mrf.mxu0
    %4499 = vdwg.mxu0
    %4500 = vmatpush.bf16.msra.mxu0 %v4316
    %4501 = vmatpush.bf16.msra.mxu0 %v4312
    %4502 = vmatpush.bf16.msra.mxu0 %v4308
    %4503 = vmatpush.bf16.msra.mxu0 %v4304
    %4504 = vmatpush.bf16.msra.mxu0 %v4300
    %4505 = vmatpush.bf16.msra.mxu0 %v4296
    %4506 = vmatpush.bf16.msra.mxu0 %v4292
    %4507 = vmatpush.bf16.msra.mxu0 %v4288
    %4508 = vmatmul.bf16.gmra.mxu0 %v4026
    %v4509 = vpop.f32.mrf.mxu0
    %v4510 = vadd.f32 %v4417, %v4509
    %v4511 = vpop.f32.mrf.mxu0
    %4512 = vdwg.mxu0
    %4513 = vmatpush.bf16.msra.mxu0 %v4348
    %4514 = vmatpush.bf16.msra.mxu0 %v4344
    %4515 = vmatpush.bf16.msra.mxu0 %v4340
    %4516 = vmatpush.bf16.msra.mxu0 %v4336
    %4517 = vmatpush.bf16.msra.mxu0 %v4332
    %4518 = vmatpush.bf16.msra.mxu0 %v4328
    %4519 = vmatpush.bf16.msra.mxu0 %v4324
    %4520 = vmatpush.bf16.msra.mxu0 %v4320
    %4521 = vmatmul.bf16.gmra.mxu0 %v4027
    %v4522 = vpop.f32.mrf.mxu0
    %v4523 = vadd.f32 %v4510, %v4522
    %v4524 = vpop.f32.mrf.mxu0
    %4525 = vdwg.mxu0
    %v4526 = vxor.u32 %v4445, 2147483648
    %v4527 = vxor.u32 %v4471, 2147483648
    %v4528 = vxor.u32 %v4497, 2147483648
    %v4529 = vmul.f32 %v4526, 1.442695
    %v4530 = vpow.pop %v4529
    %v4531 = vmul.f32 %v4527, 1.442695
    %v4532 = vpow.pop %v4531
    %v4533 = vmul.f32 %v4528, 1.442695
    %v4534 = vpow.pop %v4533
    %v4535 = vadd.f32 %v4530, 1.0
    %v4536 = vadd.f32 %v4532, 1.0
    %v4537 = vadd.f32 %v4534, 1.0
    %v4538 = vrcp.pop %v4535
    %v4539 = vmul.f32 %v4535, %v4538
    %v4540 = vsub.f32 1.0, %v4539
    %v4541 = vmul.f32 %v4538, %v4540
    %v4542 = vadd.f32 %v4538, %v4541
    %vm4543 = vweird.f32 %v4535
    %vm4544 = vweird.f32 %v4538
    %vm4545 = vmor %vm4543, %vm4544
    %v4546 = vsel %vm4545, %v4538, %v4542
    %v4547 = vand.u32 2147483647, %v4535
    %vm4548 = vcmp.eq.f32.partialorder %v4547, 8.507059e+37
    %v4549 = vand.u32 %v4535, 2147483648
    %v4550 = vor.u32 1.1754944e-38, %v4549
    %v4551 = vsel %vm4548, %v4550, %v4546
    %v4552 = vmul.f32 1.0, %v4551
    %v4553 = vrcp.pop %v4536
    %v4554 = vmul.f32 %v4536, %v4553
    %v4555 = vsub.f32 1.0, %v4554
    %v4556 = vmul.f32 %v4553, %v4555
    %v4557 = vadd.f32 %v4553, %v4556
    %vm4558 = vweird.f32 %v4536
    %vm4559 = vweird.f32 %v4553
    %vm4560 = vmor %vm4558, %vm4559
    %v4561 = vsel %vm4560, %v4553, %v4557
    %v4562 = vand.u32 2147483647, %v4536
    %vm4563 = vcmp.eq.f32.partialorder %v4562, 8.507059e+37
    %v4564 = vand.u32 %v4536, 2147483648
    %v4565 = vor.u32 1.1754944e-38, %v4564
    %v4566 = vsel %vm4563, %v4565, %v4561
    %v4567 = vmul.f32 1.0, %v4566
    %v4568 = vrcp.pop %v4537
    %v4569 = vmul.f32 %v4537, %v4568
    %v4570 = vsub.f32 1.0, %v4569
    %v4571 = vmul.f32 %v4568, %v4570
    %v4572 = vadd.f32 %v4568, %v4571
    %vm4573 = vweird.f32 %v4537
    %vm4574 = vweird.f32 %v4568
    %vm4575 = vmor %vm4573, %vm4574
    %v4576 = vsel %vm4575, %v4568, %v4572
    %v4577 = vand.u32 2147483647, %v4537
    %vm4578 = vcmp.eq.f32.partialorder %v4577, 8.507059e+37
    %v4579 = vand.u32 %v4537, 2147483648
    %v4580 = vor.u32 1.1754944e-38, %v4579
    %v4581 = vsel %vm4578, %v4580, %v4576
    %v4582 = vmul.f32 1.0, %v4581
    %v4583 = vtanh.pop %v4523
    %v4584 = vmul.f32 %v4567, %v3731
    %v4585 = vmul.f32 %v4552, %v4583
    %v4586 = vadd.f32 %v4584, %v4585
    %v4587 = vtanh.pop %v4586
    %v4588 = vmul.f32 %v4582, %v4587
    %4589 = vst [vmem:[#allocation3 + $0x4] sm:$0x1] %v4588
    %s4590 = scalar_lea.vmem [#allocation2], 5
    %v4591 = vld [vmem:[%s4590] ss:$8 sm:$0xf]
    %v4592 = vld [vmem:[#allocation9] sm:$0xff]
    %v4593 = vld [vmem:[#allocation9 + $0x8] sm:$0xff]
    %v4594 = vld [vmem:[#allocation9 + $0x10] sm:$0xff]
    %v4595 = vld [vmem:[#allocation9 + $0x18] sm:$0xff]
    %v4596 = vld [vmem:[#allocation9 + $0x20] sm:$0xff]
    %v4597 = vld [vmem:[#allocation9 + $0x28] sm:$0xff]
    %v4598 = vld [vmem:[#allocation9 + $0x30] sm:$0xff]
    %v4599 = vld [vmem:[#allocation9 + $0x38] sm:$0xff]
    %v4600 = vld [vmem:[#allocation9 + $0x40] sm:$0xff]
    %v4601 = vld [vmem:[#allocation9 + $0x48] sm:$0xff]
    %v4602 = vld [vmem:[#allocation9 + $0x50] sm:$0xff]
    %v4603 = vld [vmem:[#allocation9 + $0x58] sm:$0xff]
    %v4604 = vld [vmem:[#allocation9 + $0x60] sm:$0xff]
    %v4605 = vld [vmem:[#allocation9 + $0x68] sm:$0xff]
    %v4606 = vld [vmem:[#allocation9 + $0x70] sm:$0xff]
    %v4607 = vld [vmem:[#allocation9 + $0x78] sm:$0xff]
    %v4608 = vld [vmem:[#allocation9 + $0x80] sm:$0xff]
    %v4609 = vld [vmem:[#allocation9 + $0x88] sm:$0xff]
    %v4610 = vld [vmem:[#allocation9 + $0x90] sm:$0xff]
    %v4611 = vld [vmem:[#allocation9 + $0x98] sm:$0xff]
    %v4612 = vld [vmem:[#allocation9 + $0xa0] sm:$0xff]
    %v4613 = vld [vmem:[#allocation9 + $0xa8] sm:$0xff]
    %v4614 = vld [vmem:[#allocation9 + $0xb0] sm:$0xff]
    %v4615 = vld [vmem:[#allocation9 + $0xb8] sm:$0xff]
    %v4616 = vld [vmem:[#allocation9 + $0xc0] sm:$0xff]
    %v4617 = vld [vmem:[#allocation9 + $0xc8] sm:$0xff]
    %v4618 = vld [vmem:[#allocation9 + $0xd0] sm:$0xff]
    %v4619 = vld [vmem:[#allocation9 + $0xd8] sm:$0xff]
    %v4620 = vld [vmem:[#allocation9 + $0xe0] sm:$0xff]
    %v4621 = vld [vmem:[#allocation9 + $0xe8] sm:$0xff]
    %v4622 = vld [vmem:[#allocation9 + $0xf0] sm:$0xff]
    %v4623 = vld [vmem:[#allocation9 + $0xf8] sm:$0xff]
    %v4656 = vunpack.c.l.b16 %v4592
    %v4657 = vunpack.c.h.b16 %v4592
    %v4658 = vunpack.c.l.b16 %v4593
    %v4659 = vunpack.c.h.b16 %v4593
    %v4660 = vunpack.c.l.b16 %v4594
    %v4661 = vunpack.c.h.b16 %v4594
    %v4662 = vunpack.c.l.b16 %v4595
    %v4663 = vunpack.c.h.b16 %v4595
    %v4664 = vunpack.c.l.b16 %v4596
    %v4665 = vunpack.c.h.b16 %v4596
    %v4666 = vunpack.c.l.b16 %v4597
    %v4667 = vunpack.c.h.b16 %v4597
    %v4668 = vunpack.c.l.b16 %v4598
    %v4669 = vunpack.c.h.b16 %v4598
    %v4670 = vunpack.c.l.b16 %v4599
    %v4671 = vunpack.c.h.b16 %v4599
    %v4672 = vunpack.c.l.b16 %v4600
    %v4673 = vunpack.c.h.b16 %v4600
    %v4674 = vunpack.c.l.b16 %v4601
    %v4675 = vunpack.c.h.b16 %v4601
    %v4676 = vunpack.c.l.b16 %v4602
    %v4677 = vunpack.c.h.b16 %v4602
    %v4678 = vunpack.c.l.b16 %v4603
    %v4679 = vunpack.c.h.b16 %v4603
    %v4680 = vunpack.c.l.b16 %v4604
    %v4681 = vunpack.c.h.b16 %v4604
    %v4682 = vunpack.c.l.b16 %v4605
    %v4683 = vunpack.c.h.b16 %v4605
    %v4684 = vunpack.c.l.b16 %v4606
    %v4685 = vunpack.c.h.b16 %v4606
    %v4686 = vunpack.c.l.b16 %v4607
    %v4687 = vunpack.c.h.b16 %v4607
    %v4688 = vunpack.c.l.b16 %v4608
    %v4689 = vunpack.c.h.b16 %v4608
    %v4690 = vunpack.c.l.b16 %v4609
    %v4691 = vunpack.c.h.b16 %v4609
    %v4692 = vunpack.c.l.b16 %v4610
    %v4693 = vunpack.c.h.b16 %v4610
    %v4694 = vunpack.c.l.b16 %v4611
    %v4695 = vunpack.c.h.b16 %v4611
    %v4696 = vunpack.c.l.b16 %v4612
    %v4697 = vunpack.c.h.b16 %v4612
    %v4698 = vunpack.c.l.b16 %v4613
    %v4699 = vunpack.c.h.b16 %v4613
    %v4700 = vunpack.c.l.b16 %v4614
    %v4701 = vunpack.c.h.b16 %v4614
    %v4702 = vunpack.c.l.b16 %v4615
    %v4703 = vunpack.c.h.b16 %v4615
    %v4704 = vunpack.c.l.b16 %v4616
    %v4705 = vunpack.c.h.b16 %v4616
    %v4706 = vunpack.c.l.b16 %v4617
    %v4707 = vunpack.c.h.b16 %v4617
    %v4708 = vunpack.c.l.b16 %v4618
    %v4709 = vunpack.c.h.b16 %v4618
    %v4710 = vunpack.c.l.b16 %v4619
    %v4711 = vunpack.c.h.b16 %v4619
    %v4712 = vunpack.c.l.b16 %v4620
    %v4713 = vunpack.c.h.b16 %v4620
    %v4714 = vunpack.c.l.b16 %v4621
    %v4715 = vunpack.c.h.b16 %v4621
    %v4716 = vunpack.c.l.b16 %v4622
    %v4717 = vunpack.c.h.b16 %v4622
    %v4718 = vunpack.c.l.b16 %v4623
    %v4719 = vunpack.c.h.b16 %v4623
    %v4720 = vpack.c.b16 %v4660, %v4656
    %v4721 = vpack.c.b16 %v4661, %v4657
    %v4722 = vpack.c.b16 %v4662, %v4658
    %v4723 = vpack.c.b16 %v4663, %v4659
    %v4724 = vpack.c.b16 %v4668, %v4664
    %v4725 = vpack.c.b16 %v4669, %v4665
    %v4726 = vpack.c.b16 %v4670, %v4666
    %v4727 = vpack.c.b16 %v4671, %v4667
    %v4728 = vpack.c.b16 %v4676, %v4672
    %v4729 = vpack.c.b16 %v4677, %v4673
    %v4730 = vpack.c.b16 %v4678, %v4674
    %v4731 = vpack.c.b16 %v4679, %v4675
    %v4732 = vpack.c.b16 %v4684, %v4680
    %v4733 = vpack.c.b16 %v4685, %v4681
    %v4734 = vpack.c.b16 %v4686, %v4682
    %v4735 = vpack.c.b16 %v4687, %v4683
    %v4736 = vpack.c.b16 %v4692, %v4688
    %v4737 = vpack.c.b16 %v4693, %v4689
    %v4738 = vpack.c.b16 %v4694, %v4690
    %v4739 = vpack.c.b16 %v4695, %v4691
    %v4740 = vpack.c.b16 %v4700, %v4696
    %v4741 = vpack.c.b16 %v4701, %v4697
    %v4742 = vpack.c.b16 %v4702, %v4698
    %v4743 = vpack.c.b16 %v4703, %v4699
    %v4744 = vpack.c.b16 %v4708, %v4704
    %v4745 = vpack.c.b16 %v4709, %v4705
    %v4746 = vpack.c.b16 %v4710, %v4706
    %v4747 = vpack.c.b16 %v4711, %v4707
    %v4748 = vpack.c.b16 %v4716, %v4712
    %v4749 = vpack.c.b16 %v4717, %v4713
    %v4750 = vpack.c.b16 %v4718, %v4714
    %v4751 = vpack.c.b16 %v4719, %v4715
    %4784 = vmatpush.bf16.msra.mxu0 %v4748
    %4785 = vmatpush.bf16.msra.mxu0 %v4744
    %4786 = vmatpush.bf16.msra.mxu0 %v4740
    %4787 = vmatpush.bf16.msra.mxu0 %v4736
    %4788 = vmatpush.bf16.msra.mxu0 %v4732
    %4789 = vmatpush.bf16.msra.mxu0 %v4728
    %4790 = vmatpush.bf16.msra.mxu0 %v4724
    %4791 = vmatpush.bf16.msra.mxu0 %v4720
    %4792 = vmatmul.bf16.gmra.mxu0 %v4026
    %v4793 = vpop.f32.mrf.mxu0
    %v4794 = vadd.f32 0.0, %v4793
    %v4795 = vpop.f32.mrf.mxu0
    %4796 = vdwg.mxu0
    %4797 = vmatpush.bf16.msra.mxu0 %v4749
    %4798 = vmatpush.bf16.msra.mxu0 %v4745
    %4799 = vmatpush.bf16.msra.mxu0 %v4741
    %4800 = vmatpush.bf16.msra.mxu0 %v4737
    %4801 = vmatpush.bf16.msra.mxu0 %v4733
    %4802 = vmatpush.bf16.msra.mxu0 %v4729
    %4803 = vmatpush.bf16.msra.mxu0 %v4725
    %4804 = vmatpush.bf16.msra.mxu0 %v4721
    %4805 = vmatmul.bf16.gmra.mxu0 %v4026
    %v4806 = vpop.f32.mrf.mxu0
    %v4807 = vadd.f32 0.0, %v4806
    %v4808 = vpop.f32.mrf.mxu0
    %4809 = vdwg.mxu0
    %4810 = vmatpush.bf16.msra.mxu0 %v4750
    %4811 = vmatpush.bf16.msra.mxu0 %v4746
    %4812 = vmatpush.bf16.msra.mxu0 %v4742
    %4813 = vmatpush.bf16.msra.mxu0 %v4738
    %4814 = vmatpush.bf16.msra.mxu0 %v4734
    %4815 = vmatpush.bf16.msra.mxu0 %v4730
    %4816 = vmatpush.bf16.msra.mxu0 %v4726
    %4817 = vmatpush.bf16.msra.mxu0 %v4722
    %4818 = vmatmul.bf16.gmra.mxu0 %v4026
    %v4819 = vpop.f32.mrf.mxu0
    %v4820 = vadd.f32 0.0, %v4819
    %v4821 = vpop.f32.mrf.mxu0
    %4822 = vdwg.mxu0
    %4823 = vmatpush.bf16.msra.mxu0 %v4751
    %4824 = vmatpush.bf16.msra.mxu0 %v4747
    %4825 = vmatpush.bf16.msra.mxu0 %v4743
    %4826 = vmatpush.bf16.msra.mxu0 %v4739
    %4827 = vmatpush.bf16.msra.mxu0 %v4735
    %4828 = vmatpush.bf16.msra.mxu0 %v4731
    %4829 = vmatpush.bf16.msra.mxu0 %v4727
    %4830 = vmatpush.bf16.msra.mxu0 %v4723
    %4831 = vmatmul.bf16.gmra.mxu0 %v4026
    %v4832 = vpop.f32.mrf.mxu0
    %v4833 = vadd.f32 0.0, %v4832
    %v4834 = vpop.f32.mrf.mxu0
    %4835 = vdwg.mxu0
    %v4840 = vrot.slane %v4807, 7
    %v4841 = vrot.slane %v4820, 6
    %v4842 = vrot.slane %v4833, 5
    %v4843 = vsel %vm565, %v4794, %v4840
    %v4844 = vsel %vm567, %v4841, %v4842
    %v4845 = vsel %vm569, %v4843, %v4844
    %v4847 = vadd.f32 %v4591, %v4845
    %v4848 = vxor.u32 %v4847, 2147483648
    %v4849 = vmul.f32 %v4848, 1.442695
    %v4850 = vpow.pop %v4849
    %v4851 = vadd.f32 %v4850, 1.0
    %v4852 = vrcp.pop %v4851
    %v4853 = vmul.f32 %v4851, %v4852
    %v4854 = vsub.f32 1.0, %v4853
    %v4855 = vmul.f32 %v4852, %v4854
    %v4856 = vadd.f32 %v4852, %v4855
    %vm4857 = vweird.f32 %v4851
    %vm4858 = vweird.f32 %v4852
    %vm4859 = vmor %vm4857, %vm4858
    %v4860 = vsel %vm4859, %v4852, %v4856
    %v4861 = vand.u32 2147483647, %v4851
    %vm4862 = vcmp.eq.f32.partialorder %v4861, 8.507059e+37
    %v4863 = vand.u32 %v4851, 2147483648
    %v4864 = vor.u32 1.1754944e-38, %v4863
    %v4865 = vsel %vm4862, %v4864, %v4860
    %v4866 = vmul.f32 1.0, %v4865
    %v4868 = vrot.slane %v4847, 3
    %v4870 = vtanh.pop %v4868
    %v4872 = vrot.slane %v4866, 1
    %v4874 = vmul.f32 %v4872, %v4021
    %v4875 = vmul.f32 %v4866, %v4870
    %v4876 = vadd.f32 %v4874, %v4875
    %v4877 = vtanh.pop %v4876
    %v4878 = vrot.slane %v4866, 2
    %v4880 = vmul.f32 %v4878, %v4877
    %v4881 = vpack.c.bf16 %v4880, %v4880
    %v4882 = vpack.c.bf16 %v4588, %v4588
    %v4883 = vld [vmem:[#allocation12] sm:$0xff]
    %v4884 = vld [vmem:[#allocation12 + $0x8] sm:$0xff]
    %v4885 = vld [vmem:[#allocation12 + $0x10] sm:$0xff]
    %v4886 = vld [vmem:[#allocation12 + $0x18] sm:$0xff]
    %v4887 = vld [vmem:[#allocation12 + $0x20] sm:$0xff]
    %v4888 = vld [vmem:[#allocation12 + $0x28] sm:$0xff]
    %v4889 = vld [vmem:[#allocation12 + $0x30] sm:$0xff]
    %v4890 = vld [vmem:[#allocation12 + $0x38] sm:$0xff]
    %v4891 = vld [vmem:[#allocation12 + $0x40] sm:$0xff]
    %v4892 = vld [vmem:[#allocation12 + $0x48] sm:$0xff]
    %v4893 = vld [vmem:[#allocation12 + $0x50] sm:$0xff]
    %v4894 = vld [vmem:[#allocation12 + $0x58] sm:$0xff]
    %v4895 = vld [vmem:[#allocation12 + $0x60] sm:$0xff]
    %v4896 = vld [vmem:[#allocation12 + $0x68] sm:$0xff]
    %v4897 = vld [vmem:[#allocation12 + $0x70] sm:$0xff]
    %v4898 = vld [vmem:[#allocation12 + $0x78] sm:$0xff]
    %v4899 = vld [vmem:[#allocation12 + $0x80] sm:$0xff]
    %v4900 = vld [vmem:[#allocation12 + $0x88] sm:$0xff]
    %v4901 = vld [vmem:[#allocation12 + $0x90] sm:$0xff]
    %v4902 = vld [vmem:[#allocation12 + $0x98] sm:$0xff]
    %v4903 = vld [vmem:[#allocation12 + $0xa0] sm:$0xff]
    %v4904 = vld [vmem:[#allocation12 + $0xa8] sm:$0xff]
    %v4905 = vld [vmem:[#allocation12 + $0xb0] sm:$0xff]
    %v4906 = vld [vmem:[#allocation12 + $0xb8] sm:$0xff]
    %v4907 = vld [vmem:[#allocation12 + $0xc0] sm:$0xff]
    %v4908 = vld [vmem:[#allocation12 + $0xc8] sm:$0xff]
    %v4909 = vld [vmem:[#allocation12 + $0xd0] sm:$0xff]
    %v4910 = vld [vmem:[#allocation12 + $0xd8] sm:$0xff]
    %v4911 = vld [vmem:[#allocation12 + $0xe0] sm:$0xff]
    %v4912 = vld [vmem:[#allocation12 + $0xe8] sm:$0xff]
    %v4913 = vld [vmem:[#allocation12 + $0xf0] sm:$0xff]
    %v4914 = vld [vmem:[#allocation12 + $0xf8] sm:$0xff]
    %v4915 = vld [vmem:[#allocation12 + $0x100] sm:$0xff]
    %v4916 = vld [vmem:[#allocation12 + $0x108] sm:$0xff]
    %v4917 = vld [vmem:[#allocation12 + $0x110] sm:$0xff]
    %v4918 = vld [vmem:[#allocation12 + $0x118] sm:$0xff]
    %v4919 = vld [vmem:[#allocation12 + $0x120] sm:$0xff]
    %v4920 = vld [vmem:[#allocation12 + $0x128] sm:$0xff]
    %v4921 = vld [vmem:[#allocation12 + $0x130] sm:$0xff]
    %v4922 = vld [vmem:[#allocation12 + $0x138] sm:$0xff]
    %v4923 = vld [vmem:[#allocation12 + $0x140] sm:$0xff]
    %v4924 = vld [vmem:[#allocation12 + $0x148] sm:$0xff]
    %v4925 = vld [vmem:[#allocation12 + $0x150] sm:$0xff]
    %v4926 = vld [vmem:[#allocation12 + $0x158] sm:$0xff]
    %v4927 = vld [vmem:[#allocation12 + $0x160] sm:$0xff]
    %v4928 = vld [vmem:[#allocation12 + $0x168] sm:$0xff]
    %v4929 = vld [vmem:[#allocation12 + $0x170] sm:$0xff]
    %v4930 = vld [vmem:[#allocation12 + $0x178] sm:$0xff]
    %v4931 = vld [vmem:[#allocation12 + $0x180] sm:$0xff]
    %v4932 = vld [vmem:[#allocation12 + $0x188] sm:$0xff]
    %v4933 = vld [vmem:[#allocation12 + $0x190] sm:$0xff]
    %v4934 = vld [vmem:[#allocation12 + $0x198] sm:$0xff]
    %v4935 = vld [vmem:[#allocation12 + $0x1a0] sm:$0xff]
    %v4936 = vld [vmem:[#allocation12 + $0x1a8] sm:$0xff]
    %v4937 = vld [vmem:[#allocation12 + $0x1b0] sm:$0xff]
    %v4938 = vld [vmem:[#allocation12 + $0x1b8] sm:$0xff]
    %v4939 = vld [vmem:[#allocation12 + $0x1c0] sm:$0xff]
    %v4940 = vld [vmem:[#allocation12 + $0x1c8] sm:$0xff]
    %v4941 = vld [vmem:[#allocation12 + $0x1d0] sm:$0xff]
    %v4942 = vld [vmem:[#allocation12 + $0x1d8] sm:$0xff]
    %v4943 = vld [vmem:[#allocation12 + $0x1e0] sm:$0xff]
    %v4944 = vld [vmem:[#allocation12 + $0x1e8] sm:$0xff]
    %v4945 = vld [vmem:[#allocation12 + $0x1f0] sm:$0xff]
    %v4946 = vld [vmem:[#allocation12 + $0x1f8] sm:$0xff]
    %v4947 = vld [vmem:[%s5] sm:$0xf]
    %v5012 = vunpack.c.l.b16 %v4883
    %v5013 = vunpack.c.h.b16 %v4883
    %v5014 = vunpack.c.l.b16 %v4884
    %v5015 = vunpack.c.h.b16 %v4884
    %v5016 = vunpack.c.l.b16 %v4885
    %v5017 = vunpack.c.h.b16 %v4885
    %v5018 = vunpack.c.l.b16 %v4886
    %v5019 = vunpack.c.h.b16 %v4886
    %v5020 = vunpack.c.l.b16 %v4887
    %v5021 = vunpack.c.h.b16 %v4887
    %v5022 = vunpack.c.l.b16 %v4888
    %v5023 = vunpack.c.h.b16 %v4888
    %v5024 = vunpack.c.l.b16 %v4889
    %v5025 = vunpack.c.h.b16 %v4889
    %v5026 = vunpack.c.l.b16 %v4890
    %v5027 = vunpack.c.h.b16 %v4890
    %v5028 = vunpack.c.l.b16 %v4891
    %v5029 = vunpack.c.h.b16 %v4891
    %v5030 = vunpack.c.l.b16 %v4892
    %v5031 = vunpack.c.h.b16 %v4892
    %v5032 = vunpack.c.l.b16 %v4893
    %v5033 = vunpack.c.h.b16 %v4893
    %v5034 = vunpack.c.l.b16 %v4894
    %v5035 = vunpack.c.h.b16 %v4894
    %v5036 = vunpack.c.l.b16 %v4895
    %v5037 = vunpack.c.h.b16 %v4895
    %v5038 = vunpack.c.l.b16 %v4896
    %v5039 = vunpack.c.h.b16 %v4896
    %v5040 = vunpack.c.l.b16 %v4897
    %v5041 = vunpack.c.h.b16 %v4897
    %v5042 = vunpack.c.l.b16 %v4898
    %v5043 = vunpack.c.h.b16 %v4898
    %v5044 = vunpack.c.l.b16 %v4899
    %v5045 = vunpack.c.h.b16 %v4899
    %v5046 = vunpack.c.l.b16 %v4900
    %v5047 = vunpack.c.h.b16 %v4900
    %v5048 = vunpack.c.l.b16 %v4901
    %v5049 = vunpack.c.h.b16 %v4901
    %v5050 = vunpack.c.l.b16 %v4902
    %v5051 = vunpack.c.h.b16 %v4902
    %v5052 = vunpack.c.l.b16 %v4903
    %v5053 = vunpack.c.h.b16 %v4903
    %v5054 = vunpack.c.l.b16 %v4904
    %v5055 = vunpack.c.h.b16 %v4904
    %v5056 = vunpack.c.l.b16 %v4905
    %v5057 = vunpack.c.h.b16 %v4905
    %v5058 = vunpack.c.l.b16 %v4906
    %v5059 = vunpack.c.h.b16 %v4906
    %v5060 = vunpack.c.l.b16 %v4907
    %v5061 = vunpack.c.h.b16 %v4907
    %v5062 = vunpack.c.l.b16 %v4908
    %v5063 = vunpack.c.h.b16 %v4908
    %v5064 = vunpack.c.l.b16 %v4909
    %v5065 = vunpack.c.h.b16 %v4909
    %v5066 = vunpack.c.l.b16 %v4910
    %v5067 = vunpack.c.h.b16 %v4910
    %v5068 = vunpack.c.l.b16 %v4911
    %v5069 = vunpack.c.h.b16 %v4911
    %v5070 = vunpack.c.l.b16 %v4912
    %v5071 = vunpack.c.h.b16 %v4912
    %v5072 = vunpack.c.l.b16 %v4913
    %v5073 = vunpack.c.h.b16 %v4913
    %v5074 = vunpack.c.l.b16 %v4914
    %v5075 = vunpack.c.h.b16 %v4914
    %v5076 = vunpack.c.l.b16 %v4915
    %v5077 = vunpack.c.h.b16 %v4915
    %v5078 = vunpack.c.l.b16 %v4916
    %v5079 = vunpack.c.h.b16 %v4916
    %v5080 = vunpack.c.l.b16 %v4917
    %v5081 = vunpack.c.h.b16 %v4917
    %v5082 = vunpack.c.l.b16 %v4918
    %v5083 = vunpack.c.h.b16 %v4918
    %v5084 = vunpack.c.l.b16 %v4919
    %v5085 = vunpack.c.h.b16 %v4919
    %v5086 = vunpack.c.l.b16 %v4920
    %v5087 = vunpack.c.h.b16 %v4920
    %v5088 = vunpack.c.l.b16 %v4921
    %v5089 = vunpack.c.h.b16 %v4921
    %v5090 = vunpack.c.l.b16 %v4922
    %v5091 = vunpack.c.h.b16 %v4922
    %v5092 = vunpack.c.l.b16 %v4923
    %v5093 = vunpack.c.h.b16 %v4923
    %v5094 = vunpack.c.l.b16 %v4924
    %v5095 = vunpack.c.h.b16 %v4924
    %v5096 = vunpack.c.l.b16 %v4925
    %v5097 = vunpack.c.h.b16 %v4925
    %v5098 = vunpack.c.l.b16 %v4926
    %v5099 = vunpack.c.h.b16 %v4926
    %v5100 = vunpack.c.l.b16 %v4927
    %v5101 = vunpack.c.h.b16 %v4927
    %v5102 = vunpack.c.l.b16 %v4928
    %v5103 = vunpack.c.h.b16 %v4928
    %v5104 = vunpack.c.l.b16 %v4929
    %v5105 = vunpack.c.h.b16 %v4929
    %v5106 = vunpack.c.l.b16 %v4930
    %v5107 = vunpack.c.h.b16 %v4930
    %v5108 = vunpack.c.l.b16 %v4931
    %v5109 = vunpack.c.h.b16 %v4931
    %v5110 = vunpack.c.l.b16 %v4932
    %v5111 = vunpack.c.h.b16 %v4932
    %v5112 = vunpack.c.l.b16 %v4933
    %v5113 = vunpack.c.h.b16 %v4933
    %v5114 = vunpack.c.l.b16 %v4934
    %v5115 = vunpack.c.h.b16 %v4934
    %v5116 = vunpack.c.l.b16 %v4935
    %v5117 = vunpack.c.h.b16 %v4935
    %v5118 = vunpack.c.l.b16 %v4936
    %v5119 = vunpack.c.h.b16 %v4936
    %v5120 = vunpack.c.l.b16 %v4937
    %v5121 = vunpack.c.h.b16 %v4937
    %v5122 = vunpack.c.l.b16 %v4938
    %v5123 = vunpack.c.h.b16 %v4938
    %v5124 = vunpack.c.l.b16 %v4939
    %v5125 = vunpack.c.h.b16 %v4939
    %v5126 = vunpack.c.l.b16 %v4940
    %v5127 = vunpack.c.h.b16 %v4940
    %v5128 = vunpack.c.l.b16 %v4941
    %v5129 = vunpack.c.h.b16 %v4941
    %v5130 = vunpack.c.l.b16 %v4942
    %v5131 = vunpack.c.h.b16 %v4942
    %v5132 = vunpack.c.l.b16 %v4943
    %v5133 = vunpack.c.h.b16 %v4943
    %v5134 = vunpack.c.l.b16 %v4944
    %v5135 = vunpack.c.h.b16 %v4944
    %v5136 = vunpack.c.l.b16 %v4945
    %v5137 = vunpack.c.h.b16 %v4945
    %v5138 = vunpack.c.l.b16 %v4946
    %v5139 = vunpack.c.h.b16 %v4946
    %v5140 = vpack.c.b16 %v5016, %v5012
    %v5141 = vpack.c.b16 %v5017, %v5013
    %v5142 = vpack.c.b16 %v5018, %v5014
    %v5143 = vpack.c.b16 %v5019, %v5015
    %v5144 = vpack.c.b16 %v5024, %v5020
    %v5145 = vpack.c.b16 %v5025, %v5021
    %v5146 = vpack.c.b16 %v5026, %v5022
    %v5147 = vpack.c.b16 %v5027, %v5023
    %v5148 = vpack.c.b16 %v5032, %v5028
    %v5149 = vpack.c.b16 %v5033, %v5029
    %v5150 = vpack.c.b16 %v5034, %v5030
    %v5151 = vpack.c.b16 %v5035, %v5031
    %v5152 = vpack.c.b16 %v5040, %v5036
    %v5153 = vpack.c.b16 %v5041, %v5037
    %v5154 = vpack.c.b16 %v5042, %v5038
    %v5155 = vpack.c.b16 %v5043, %v5039
    %v5156 = vpack.c.b16 %v5048, %v5044
    %v5157 = vpack.c.b16 %v5049, %v5045
    %v5158 = vpack.c.b16 %v5050, %v5046
    %v5159 = vpack.c.b16 %v5051, %v5047
    %v5160 = vpack.c.b16 %v5056, %v5052
    %v5161 = vpack.c.b16 %v5057, %v5053
    %v5162 = vpack.c.b16 %v5058, %v5054
    %v5163 = vpack.c.b16 %v5059, %v5055
    %v5164 = vpack.c.b16 %v5064, %v5060
    %v5165 = vpack.c.b16 %v5065, %v5061
    %v5166 = vpack.c.b16 %v5066, %v5062
    %v5167 = vpack.c.b16 %v5067, %v5063
    %v5168 = vpack.c.b16 %v5072, %v5068
    %v5169 = vpack.c.b16 %v5073, %v5069
    %v5170 = vpack.c.b16 %v5074, %v5070
    %v5171 = vpack.c.b16 %v5075, %v5071
    %v5172 = vpack.c.b16 %v5080, %v5076
    %v5173 = vpack.c.b16 %v5081, %v5077
    %v5174 = vpack.c.b16 %v5082, %v5078
    %v5175 = vpack.c.b16 %v5083, %v5079
    %v5176 = vpack.c.b16 %v5088, %v5084
    %v5177 = vpack.c.b16 %v5089, %v5085
    %v5178 = vpack.c.b16 %v5090, %v5086
    %v5179 = vpack.c.b16 %v5091, %v5087
    %v5180 = vpack.c.b16 %v5096, %v5092
    %v5181 = vpack.c.b16 %v5097, %v5093
    %v5182 = vpack.c.b16 %v5098, %v5094
    %v5183 = vpack.c.b16 %v5099, %v5095
    %v5184 = vpack.c.b16 %v5104, %v5100
    %v5185 = vpack.c.b16 %v5105, %v5101
    %v5186 = vpack.c.b16 %v5106, %v5102
    %v5187 = vpack.c.b16 %v5107, %v5103
    %v5188 = vpack.c.b16 %v5112, %v5108
    %v5189 = vpack.c.b16 %v5113, %v5109
    %v5190 = vpack.c.b16 %v5114, %v5110
    %v5191 = vpack.c.b16 %v5115, %v5111
    %v5192 = vpack.c.b16 %v5120, %v5116
    %v5193 = vpack.c.b16 %v5121, %v5117
    %v5194 = vpack.c.b16 %v5122, %v5118
    %v5195 = vpack.c.b16 %v5123, %v5119
    %v5196 = vpack.c.b16 %v5128, %v5124
    %v5197 = vpack.c.b16 %v5129, %v5125
    %v5198 = vpack.c.b16 %v5130, %v5126
    %v5199 = vpack.c.b16 %v5131, %v5127
    %v5200 = vpack.c.b16 %v5136, %v5132
    %v5201 = vpack.c.b16 %v5137, %v5133
    %v5202 = vpack.c.b16 %v5138, %v5134
    %v5203 = vpack.c.b16 %v5139, %v5135
    %v5269 = vperm.slane %v4947, 0
    %v5270 = vperm.slane %v4947, 1
    %v5271 = vperm.slane %v4947, 2
    %v5272 = vperm.slane %v4947, 3
    %5277 = vmatpush.bf16.msra.mxu0 %v5168
    %5278 = vmatpush.bf16.msra.mxu0 %v5164
    %5279 = vmatpush.bf16.msra.mxu0 %v5160
    %5280 = vmatpush.bf16.msra.mxu0 %v5156
    %5281 = vmatpush.bf16.msra.mxu0 %v5152
    %5282 = vmatpush.bf16.msra.mxu0 %v5148
    %5283 = vmatpush.bf16.msra.mxu0 %v5144
    %5284 = vmatpush.bf16.msra.mxu0 %v5140
    %5285 = vmatmul.bf16.gmra.mxu0 %v4881
    %v5286 = vpop.f32.mrf.mxu0
    %v5287 = vadd.f32 %v5269, %v5286
    %v5288 = vpop.f32.mrf.mxu0
    %5289 = vdwg.mxu0
    %5290 = vmatpush.bf16.msra.mxu0 %v5200
    %5291 = vmatpush.bf16.msra.mxu0 %v5196
    %5292 = vmatpush.bf16.msra.mxu0 %v5192
    %5293 = vmatpush.bf16.msra.mxu0 %v5188
    %5294 = vmatpush.bf16.msra.mxu0 %v5184
    %5295 = vmatpush.bf16.msra.mxu0 %v5180
    %5296 = vmatpush.bf16.msra.mxu0 %v5176
    %5297 = vmatpush.bf16.msra.mxu0 %v5172
    %5298 = vmatmul.bf16.gmra.mxu0 %v4882
    %v5299 = vpop.f32.mrf.mxu0
    %v5300 = vadd.f32 %v5287, %v5299
    %v5301 = vpop.f32.mrf.mxu0
    %5302 = vdwg.mxu0
    %5303 = vmatpush.bf16.msra.mxu0 %v5169
    %5304 = vmatpush.bf16.msra.mxu0 %v5165
    %5305 = vmatpush.bf16.msra.mxu0 %v5161
    %5306 = vmatpush.bf16.msra.mxu0 %v5157
    %5307 = vmatpush.bf16.msra.mxu0 %v5153
    %5308 = vmatpush.bf16.msra.mxu0 %v5149
    %5309 = vmatpush.bf16.msra.mxu0 %v5145
    %5310 = vmatpush.bf16.msra.mxu0 %v5141
    %5311 = vmatmul.bf16.gmra.mxu0 %v4881
    %v5312 = vpop.f32.mrf.mxu0
    %v5313 = vadd.f32 %v5270, %v5312
    %v5314 = vpop.f32.mrf.mxu0
    %5315 = vdwg.mxu0
    %5316 = vmatpush.bf16.msra.mxu0 %v5201
    %5317 = vmatpush.bf16.msra.mxu0 %v5197
    %5318 = vmatpush.bf16.msra.mxu0 %v5193
    %5319 = vmatpush.bf16.msra.mxu0 %v5189
    %5320 = vmatpush.bf16.msra.mxu0 %v5185
    %5321 = vmatpush.bf16.msra.mxu0 %v5181
    %5322 = vmatpush.bf16.msra.mxu0 %v5177
    %5323 = vmatpush.bf16.msra.mxu0 %v5173
    %5324 = vmatmul.bf16.gmra.mxu0 %v4882
    %v5325 = vpop.f32.mrf.mxu0
    %v5326 = vadd.f32 %v5313, %v5325
    %v5327 = vpop.f32.mrf.mxu0
    %5328 = vdwg.mxu0
    %5329 = vmatpush.bf16.msra.mxu0 %v5170
    %5330 = vmatpush.bf16.msra.mxu0 %v5166
    %5331 = vmatpush.bf16.msra.mxu0 %v5162
    %5332 = vmatpush.bf16.msra.mxu0 %v5158
    %5333 = vmatpush.bf16.msra.mxu0 %v5154
    %5334 = vmatpush.bf16.msra.mxu0 %v5150
    %5335 = vmatpush.bf16.msra.mxu0 %v5146
    %5336 = vmatpush.bf16.msra.mxu0 %v5142
    %5337 = vmatmul.bf16.gmra.mxu0 %v4881
    %v5338 = vpop.f32.mrf.mxu0
    %v5339 = vadd.f32 %v5271, %v5338
    %v5340 = vpop.f32.mrf.mxu0
    %5341 = vdwg.mxu0
    %5342 = vmatpush.bf16.msra.mxu0 %v5202
    %5343 = vmatpush.bf16.msra.mxu0 %v5198
    %5344 = vmatpush.bf16.msra.mxu0 %v5194
    %5345 = vmatpush.bf16.msra.mxu0 %v5190
    %5346 = vmatpush.bf16.msra.mxu0 %v5186
    %5347 = vmatpush.bf16.msra.mxu0 %v5182
    %5348 = vmatpush.bf16.msra.mxu0 %v5178
    %5349 = vmatpush.bf16.msra.mxu0 %v5174
    %5350 = vmatmul.bf16.gmra.mxu0 %v4882
    %v5351 = vpop.f32.mrf.mxu0
    %v5352 = vadd.f32 %v5339, %v5351
    %v5353 = vpop.f32.mrf.mxu0
    %5354 = vdwg.mxu0
    %5355 = vmatpush.bf16.msra.mxu0 %v5171
    %5356 = vmatpush.bf16.msra.mxu0 %v5167
    %5357 = vmatpush.bf16.msra.mxu0 %v5163
    %5358 = vmatpush.bf16.msra.mxu0 %v5159
    %5359 = vmatpush.bf16.msra.mxu0 %v5155
    %5360 = vmatpush.bf16.msra.mxu0 %v5151
    %5361 = vmatpush.bf16.msra.mxu0 %v5147
    %5362 = vmatpush.bf16.msra.mxu0 %v5143
    %5363 = vmatmul.bf16.gmra.mxu0 %v4881
    %v5364 = vpop.f32.mrf.mxu0
    %v5365 = vadd.f32 %v5272, %v5364
    %v5366 = vpop.f32.mrf.mxu0
    %5367 = vdwg.mxu0
    %5368 = vmatpush.bf16.msra.mxu0 %v5203
    %5369 = vmatpush.bf16.msra.mxu0 %v5199
    %5370 = vmatpush.bf16.msra.mxu0 %v5195
    %5371 = vmatpush.bf16.msra.mxu0 %v5191
    %5372 = vmatpush.bf16.msra.mxu0 %v5187
    %5373 = vmatpush.bf16.msra.mxu0 %v5183
    %5374 = vmatpush.bf16.msra.mxu0 %v5179
    %5375 = vmatpush.bf16.msra.mxu0 %v5175
    %5376 = vmatmul.bf16.gmra.mxu0 %v4882
    %v5377 = vpop.f32.mrf.mxu0
    %v5378 = vadd.f32 %v5365, %v5377
    %v5379 = vpop.f32.mrf.mxu0
    %5380 = vdwg.mxu0
    %v5381 = vxor.u32 %v5300, 2147483648
    %v5382 = vxor.u32 %v5326, 2147483648
    %v5383 = vxor.u32 %v5352, 2147483648
    %v5384 = vmul.f32 %v5381, 1.442695
    %v5385 = vpow.pop %v5384
    %v5386 = vmul.f32 %v5382, 1.442695
    %v5387 = vpow.pop %v5386
    %v5388 = vmul.f32 %v5383, 1.442695
    %v5389 = vpow.pop %v5388
    %v5390 = vadd.f32 %v5385, 1.0
    %v5391 = vadd.f32 %v5387, 1.0
    %v5392 = vadd.f32 %v5389, 1.0
    %v5393 = vrcp.pop %v5390
    %v5394 = vmul.f32 %v5390, %v5393
    %v5395 = vsub.f32 1.0, %v5394
    %v5396 = vmul.f32 %v5393, %v5395
    %v5397 = vadd.f32 %v5393, %v5396
    %vm5398 = vweird.f32 %v5390
    %vm5399 = vweird.f32 %v5393
    %vm5400 = vmor %vm5398, %vm5399
    %v5401 = vsel %vm5400, %v5393, %v5397
    %v5402 = vand.u32 2147483647, %v5390
    %vm5403 = vcmp.eq.f32.partialorder %v5402, 8.507059e+37
    %v5404 = vand.u32 %v5390, 2147483648
    %v5405 = vor.u32 1.1754944e-38, %v5404
    %v5406 = vsel %vm5403, %v5405, %v5401
    %v5407 = vmul.f32 1.0, %v5406
    %v5408 = vrcp.pop %v5391
    %v5409 = vmul.f32 %v5391, %v5408
    %v5410 = vsub.f32 1.0, %v5409
    %v5411 = vmul.f32 %v5408, %v5410
    %v5412 = vadd.f32 %v5408, %v5411
    %vm5413 = vweird.f32 %v5391
    %vm5414 = vweird.f32 %v5408
    %vm5415 = vmor %vm5413, %vm5414
    %v5416 = vsel %vm5415, %v5408, %v5412
    %v5417 = vand.u32 2147483647, %v5391
    %vm5418 = vcmp.eq.f32.partialorder %v5417, 8.507059e+37
    %v5419 = vand.u32 %v5391, 2147483648
    %v5420 = vor.u32 1.1754944e-38, %v5419
    %v5421 = vsel %vm5418, %v5420, %v5416
    %v5422 = vmul.f32 1.0, %v5421
    %v5423 = vrcp.pop %v5392
    %v5424 = vmul.f32 %v5392, %v5423
    %v5425 = vsub.f32 1.0, %v5424
    %v5426 = vmul.f32 %v5423, %v5425
    %v5427 = vadd.f32 %v5423, %v5426
    %vm5428 = vweird.f32 %v5392
    %vm5429 = vweird.f32 %v5423
    %vm5430 = vmor %vm5428, %vm5429
    %v5431 = vsel %vm5430, %v5423, %v5427
    %v5432 = vand.u32 2147483647, %v5392
    %vm5433 = vcmp.eq.f32.partialorder %v5432, 8.507059e+37
    %v5434 = vand.u32 %v5392, 2147483648
    %v5435 = vor.u32 1.1754944e-38, %v5434
    %v5436 = vsel %vm5433, %v5435, %v5431
    %v5437 = vmul.f32 1.0, %v5436
    %v5438 = vtanh.pop %v5378
    %v5439 = vmul.f32 %v5422, %v4586
    %v5440 = vmul.f32 %v5407, %v5438
    %v5441 = vadd.f32 %v5439, %v5440
    %v5442 = vtanh.pop %v5441
    %v5443 = vmul.f32 %v5437, %v5442
    %5444 = vst [vmem:[#allocation3 + $0x5] sm:$0x1] %v5443
    %s5445 = scalar_lea.vmem [#allocation2], 6
    %v5446 = vld [vmem:[%s5445] ss:$8 sm:$0xf]
    %v5447 = vld [vmem:[#allocation9] sm:$0xff]
    %v5448 = vld [vmem:[#allocation9 + $0x8] sm:$0xff]
    %v5449 = vld [vmem:[#allocation9 + $0x10] sm:$0xff]
    %v5450 = vld [vmem:[#allocation9 + $0x18] sm:$0xff]
    %v5451 = vld [vmem:[#allocation9 + $0x20] sm:$0xff]
    %v5452 = vld [vmem:[#allocation9 + $0x28] sm:$0xff]
    %v5453 = vld [vmem:[#allocation9 + $0x30] sm:$0xff]
    %v5454 = vld [vmem:[#allocation9 + $0x38] sm:$0xff]
    %v5455 = vld [vmem:[#allocation9 + $0x40] sm:$0xff]
    %v5456 = vld [vmem:[#allocation9 + $0x48] sm:$0xff]
    %v5457 = vld [vmem:[#allocation9 + $0x50] sm:$0xff]
    %v5458 = vld [vmem:[#allocation9 + $0x58] sm:$0xff]
    %v5459 = vld [vmem:[#allocation9 + $0x60] sm:$0xff]
    %v5460 = vld [vmem:[#allocation9 + $0x68] sm:$0xff]
    %v5461 = vld [vmem:[#allocation9 + $0x70] sm:$0xff]
    %v5462 = vld [vmem:[#allocation9 + $0x78] sm:$0xff]
    %v5463 = vld [vmem:[#allocation9 + $0x80] sm:$0xff]
    %v5464 = vld [vmem:[#allocation9 + $0x88] sm:$0xff]
    %v5465 = vld [vmem:[#allocation9 + $0x90] sm:$0xff]
    %v5466 = vld [vmem:[#allocation9 + $0x98] sm:$0xff]
    %v5467 = vld [vmem:[#allocation9 + $0xa0] sm:$0xff]
    %v5468 = vld [vmem:[#allocation9 + $0xa8] sm:$0xff]
    %v5469 = vld [vmem:[#allocation9 + $0xb0] sm:$0xff]
    %v5470 = vld [vmem:[#allocation9 + $0xb8] sm:$0xff]
    %v5471 = vld [vmem:[#allocation9 + $0xc0] sm:$0xff]
    %v5472 = vld [vmem:[#allocation9 + $0xc8] sm:$0xff]
    %v5473 = vld [vmem:[#allocation9 + $0xd0] sm:$0xff]
    %v5474 = vld [vmem:[#allocation9 + $0xd8] sm:$0xff]
    %v5475 = vld [vmem:[#allocation9 + $0xe0] sm:$0xff]
    %v5476 = vld [vmem:[#allocation9 + $0xe8] sm:$0xff]
    %v5477 = vld [vmem:[#allocation9 + $0xf0] sm:$0xff]
    %v5478 = vld [vmem:[#allocation9 + $0xf8] sm:$0xff]
    %v5511 = vunpack.c.l.b16 %v5447
    %v5512 = vunpack.c.h.b16 %v5447
    %v5513 = vunpack.c.l.b16 %v5448
    %v5514 = vunpack.c.h.b16 %v5448
    %v5515 = vunpack.c.l.b16 %v5449
    %v5516 = vunpack.c.h.b16 %v5449
    %v5517 = vunpack.c.l.b16 %v5450
    %v5518 = vunpack.c.h.b16 %v5450
    %v5519 = vunpack.c.l.b16 %v5451
    %v5520 = vunpack.c.h.b16 %v5451
    %v5521 = vunpack.c.l.b16 %v5452
    %v5522 = vunpack.c.h.b16 %v5452
    %v5523 = vunpack.c.l.b16 %v5453
    %v5524 = vunpack.c.h.b16 %v5453
    %v5525 = vunpack.c.l.b16 %v5454
    %v5526 = vunpack.c.h.b16 %v5454
    %v5527 = vunpack.c.l.b16 %v5455
    %v5528 = vunpack.c.h.b16 %v5455
    %v5529 = vunpack.c.l.b16 %v5456
    %v5530 = vunpack.c.h.b16 %v5456
    %v5531 = vunpack.c.l.b16 %v5457
    %v5532 = vunpack.c.h.b16 %v5457
    %v5533 = vunpack.c.l.b16 %v5458
    %v5534 = vunpack.c.h.b16 %v5458
    %v5535 = vunpack.c.l.b16 %v5459
    %v5536 = vunpack.c.h.b16 %v5459
    %v5537 = vunpack.c.l.b16 %v5460
    %v5538 = vunpack.c.h.b16 %v5460
    %v5539 = vunpack.c.l.b16 %v5461
    %v5540 = vunpack.c.h.b16 %v5461
    %v5541 = vunpack.c.l.b16 %v5462
    %v5542 = vunpack.c.h.b16 %v5462
    %v5543 = vunpack.c.l.b16 %v5463
    %v5544 = vunpack.c.h.b16 %v5463
    %v5545 = vunpack.c.l.b16 %v5464
    %v5546 = vunpack.c.h.b16 %v5464
    %v5547 = vunpack.c.l.b16 %v5465
    %v5548 = vunpack.c.h.b16 %v5465
    %v5549 = vunpack.c.l.b16 %v5466
    %v5550 = vunpack.c.h.b16 %v5466
    %v5551 = vunpack.c.l.b16 %v5467
    %v5552 = vunpack.c.h.b16 %v5467
    %v5553 = vunpack.c.l.b16 %v5468
    %v5554 = vunpack.c.h.b16 %v5468
    %v5555 = vunpack.c.l.b16 %v5469
    %v5556 = vunpack.c.h.b16 %v5469
    %v5557 = vunpack.c.l.b16 %v5470
    %v5558 = vunpack.c.h.b16 %v5470
    %v5559 = vunpack.c.l.b16 %v5471
    %v5560 = vunpack.c.h.b16 %v5471
    %v5561 = vunpack.c.l.b16 %v5472
    %v5562 = vunpack.c.h.b16 %v5472
    %v5563 = vunpack.c.l.b16 %v5473
    %v5564 = vunpack.c.h.b16 %v5473
    %v5565 = vunpack.c.l.b16 %v5474
    %v5566 = vunpack.c.h.b16 %v5474
    %v5567 = vunpack.c.l.b16 %v5475
    %v5568 = vunpack.c.h.b16 %v5475
    %v5569 = vunpack.c.l.b16 %v5476
    %v5570 = vunpack.c.h.b16 %v5476
    %v5571 = vunpack.c.l.b16 %v5477
    %v5572 = vunpack.c.h.b16 %v5477
    %v5573 = vunpack.c.l.b16 %v5478
    %v5574 = vunpack.c.h.b16 %v5478
    %v5575 = vpack.c.b16 %v5515, %v5511
    %v5576 = vpack.c.b16 %v5516, %v5512
    %v5577 = vpack.c.b16 %v5517, %v5513
    %v5578 = vpack.c.b16 %v5518, %v5514
    %v5579 = vpack.c.b16 %v5523, %v5519
    %v5580 = vpack.c.b16 %v5524, %v5520
    %v5581 = vpack.c.b16 %v5525, %v5521
    %v5582 = vpack.c.b16 %v5526, %v5522
    %v5583 = vpack.c.b16 %v5531, %v5527
    %v5584 = vpack.c.b16 %v5532, %v5528
    %v5585 = vpack.c.b16 %v5533, %v5529
    %v5586 = vpack.c.b16 %v5534, %v5530
    %v5587 = vpack.c.b16 %v5539, %v5535
    %v5588 = vpack.c.b16 %v5540, %v5536
    %v5589 = vpack.c.b16 %v5541, %v5537
    %v5590 = vpack.c.b16 %v5542, %v5538
    %v5591 = vpack.c.b16 %v5547, %v5543
    %v5592 = vpack.c.b16 %v5548, %v5544
    %v5593 = vpack.c.b16 %v5549, %v5545
    %v5594 = vpack.c.b16 %v5550, %v5546
    %v5595 = vpack.c.b16 %v5555, %v5551
    %v5596 = vpack.c.b16 %v5556, %v5552
    %v5597 = vpack.c.b16 %v5557, %v5553
    %v5598 = vpack.c.b16 %v5558, %v5554
    %v5599 = vpack.c.b16 %v5563, %v5559
    %v5600 = vpack.c.b16 %v5564, %v5560
    %v5601 = vpack.c.b16 %v5565, %v5561
    %v5602 = vpack.c.b16 %v5566, %v5562
    %v5603 = vpack.c.b16 %v5571, %v5567
    %v5604 = vpack.c.b16 %v5572, %v5568
    %v5605 = vpack.c.b16 %v5573, %v5569
    %v5606 = vpack.c.b16 %v5574, %v5570
    %5639 = vmatpush.bf16.msra.mxu0 %v5603
    %5640 = vmatpush.bf16.msra.mxu0 %v5599
    %5641 = vmatpush.bf16.msra.mxu0 %v5595
    %5642 = vmatpush.bf16.msra.mxu0 %v5591
    %5643 = vmatpush.bf16.msra.mxu0 %v5587
    %5644 = vmatpush.bf16.msra.mxu0 %v5583
    %5645 = vmatpush.bf16.msra.mxu0 %v5579
    %5646 = vmatpush.bf16.msra.mxu0 %v5575
    %5647 = vmatmul.bf16.gmra.mxu0 %v4881
    %v5648 = vpop.f32.mrf.mxu0
    %v5649 = vadd.f32 0.0, %v5648
    %v5650 = vpop.f32.mrf.mxu0
    %5651 = vdwg.mxu0
    %5652 = vmatpush.bf16.msra.mxu0 %v5604
    %5653 = vmatpush.bf16.msra.mxu0 %v5600
    %5654 = vmatpush.bf16.msra.mxu0 %v5596
    %5655 = vmatpush.bf16.msra.mxu0 %v5592
    %5656 = vmatpush.bf16.msra.mxu0 %v5588
    %5657 = vmatpush.bf16.msra.mxu0 %v5584
    %5658 = vmatpush.bf16.msra.mxu0 %v5580
    %5659 = vmatpush.bf16.msra.mxu0 %v5576
    %5660 = vmatmul.bf16.gmra.mxu0 %v4881
    %v5661 = vpop.f32.mrf.mxu0
    %v5662 = vadd.f32 0.0, %v5661
    %v5663 = vpop.f32.mrf.mxu0
    %5664 = vdwg.mxu0
    %5665 = vmatpush.bf16.msra.mxu0 %v5605
    %5666 = vmatpush.bf16.msra.mxu0 %v5601
    %5667 = vmatpush.bf16.msra.mxu0 %v5597
    %5668 = vmatpush.bf16.msra.mxu0 %v5593
    %5669 = vmatpush.bf16.msra.mxu0 %v5589
    %5670 = vmatpush.bf16.msra.mxu0 %v5585
    %5671 = vmatpush.bf16.msra.mxu0 %v5581
    %5672 = vmatpush.bf16.msra.mxu0 %v5577
    %5673 = vmatmul.bf16.gmra.mxu0 %v4881
    %v5674 = vpop.f32.mrf.mxu0
    %v5675 = vadd.f32 0.0, %v5674
    %v5676 = vpop.f32.mrf.mxu0
    %5677 = vdwg.mxu0
    %5678 = vmatpush.bf16.msra.mxu0 %v5606
    %5679 = vmatpush.bf16.msra.mxu0 %v5602
    %5680 = vmatpush.bf16.msra.mxu0 %v5598
    %5681 = vmatpush.bf16.msra.mxu0 %v5594
    %5682 = vmatpush.bf16.msra.mxu0 %v5590
    %5683 = vmatpush.bf16.msra.mxu0 %v5586
    %5684 = vmatpush.bf16.msra.mxu0 %v5582
    %5685 = vmatpush.bf16.msra.mxu0 %v5578
    %5686 = vmatmul.bf16.gmra.mxu0 %v4881
    %v5687 = vpop.f32.mrf.mxu0
    %v5688 = vadd.f32 0.0, %v5687
    %v5689 = vpop.f32.mrf.mxu0
    %5690 = vdwg.mxu0
    %v5695 = vrot.slane %v5662, 7
    %v5696 = vrot.slane %v5675, 6
    %v5697 = vrot.slane %v5688, 5
    %v5698 = vsel %vm565, %v5649, %v5695
    %v5699 = vsel %vm567, %v5696, %v5697
    %v5700 = vsel %vm569, %v5698, %v5699
    %v5702 = vadd.f32 %v5446, %v5700
    %v5703 = vxor.u32 %v5702, 2147483648
    %v5704 = vmul.f32 %v5703, 1.442695
    %v5705 = vpow.pop %v5704
    %v5706 = vadd.f32 %v5705, 1.0
    %v5707 = vrcp.pop %v5706
    %v5708 = vmul.f32 %v5706, %v5707
    %v5709 = vsub.f32 1.0, %v5708
    %v5710 = vmul.f32 %v5707, %v5709
    %v5711 = vadd.f32 %v5707, %v5710
    %vm5712 = vweird.f32 %v5706
    %vm5713 = vweird.f32 %v5707
    %vm5714 = vmor %vm5712, %vm5713
    %v5715 = vsel %vm5714, %v5707, %v5711
    %v5716 = vand.u32 2147483647, %v5706
    %vm5717 = vcmp.eq.f32.partialorder %v5716, 8.507059e+37
    %v5718 = vand.u32 %v5706, 2147483648
    %v5719 = vor.u32 1.1754944e-38, %v5718
    %v5720 = vsel %vm5717, %v5719, %v5715
    %v5721 = vmul.f32 1.0, %v5720
    %v5723 = vrot.slane %v5702, 3
    %v5725 = vtanh.pop %v5723
    %v5727 = vrot.slane %v5721, 1
    %v5729 = vmul.f32 %v5727, %v4876
    %v5730 = vmul.f32 %v5721, %v5725
    %v5731 = vadd.f32 %v5729, %v5730
    %v5732 = vtanh.pop %v5731
    %v5733 = vrot.slane %v5721, 2
    %v5735 = vmul.f32 %v5733, %v5732
    %v5736 = vpack.c.bf16 %v5735, %v5735
    %v5737 = vpack.c.bf16 %v5443, %v5443
    %v5738 = vld [vmem:[#allocation12] sm:$0xff]
    %v5739 = vld [vmem:[#allocation12 + $0x8] sm:$0xff]
    %v5740 = vld [vmem:[#allocation12 + $0x10] sm:$0xff]
    %v5741 = vld [vmem:[#allocation12 + $0x18] sm:$0xff]
    %v5742 = vld [vmem:[#allocation12 + $0x20] sm:$0xff]
    %v5743 = vld [vmem:[#allocation12 + $0x28] sm:$0xff]
    %v5744 = vld [vmem:[#allocation12 + $0x30] sm:$0xff]
    %v5745 = vld [vmem:[#allocation12 + $0x38] sm:$0xff]
    %v5746 = vld [vmem:[#allocation12 + $0x40] sm:$0xff]
    %v5747 = vld [vmem:[#allocation12 + $0x48] sm:$0xff]
    %v5748 = vld [vmem:[#allocation12 + $0x50] sm:$0xff]
    %v5749 = vld [vmem:[#allocation12 + $0x58] sm:$0xff]
    %v5750 = vld [vmem:[#allocation12 + $0x60] sm:$0xff]
    %v5751 = vld [vmem:[#allocation12 + $0x68] sm:$0xff]
    %v5752 = vld [vmem:[#allocation12 + $0x70] sm:$0xff]
    %v5753 = vld [vmem:[#allocation12 + $0x78] sm:$0xff]
    %v5754 = vld [vmem:[#allocation12 + $0x80] sm:$0xff]
    %v5755 = vld [vmem:[#allocation12 + $0x88] sm:$0xff]
    %v5756 = vld [vmem:[#allocation12 + $0x90] sm:$0xff]
    %v5757 = vld [vmem:[#allocation12 + $0x98] sm:$0xff]
    %v5758 = vld [vmem:[#allocation12 + $0xa0] sm:$0xff]
    %v5759 = vld [vmem:[#allocation12 + $0xa8] sm:$0xff]
    %v5760 = vld [vmem:[#allocation12 + $0xb0] sm:$0xff]
    %v5761 = vld [vmem:[#allocation12 + $0xb8] sm:$0xff]
    %v5762 = vld [vmem:[#allocation12 + $0xc0] sm:$0xff]
    %v5763 = vld [vmem:[#allocation12 + $0xc8] sm:$0xff]
    %v5764 = vld [vmem:[#allocation12 + $0xd0] sm:$0xff]
    %v5765 = vld [vmem:[#allocation12 + $0xd8] sm:$0xff]
    %v5766 = vld [vmem:[#allocation12 + $0xe0] sm:$0xff]
    %v5767 = vld [vmem:[#allocation12 + $0xe8] sm:$0xff]
    %v5768 = vld [vmem:[#allocation12 + $0xf0] sm:$0xff]
    %v5769 = vld [vmem:[#allocation12 + $0xf8] sm:$0xff]
    %v5770 = vld [vmem:[#allocation12 + $0x100] sm:$0xff]
    %v5771 = vld [vmem:[#allocation12 + $0x108] sm:$0xff]
    %v5772 = vld [vmem:[#allocation12 + $0x110] sm:$0xff]
    %v5773 = vld [vmem:[#allocation12 + $0x118] sm:$0xff]
    %v5774 = vld [vmem:[#allocation12 + $0x120] sm:$0xff]
    %v5775 = vld [vmem:[#allocation12 + $0x128] sm:$0xff]
    %v5776 = vld [vmem:[#allocation12 + $0x130] sm:$0xff]
    %v5777 = vld [vmem:[#allocation12 + $0x138] sm:$0xff]
    %v5778 = vld [vmem:[#allocation12 + $0x140] sm:$0xff]
    %v5779 = vld [vmem:[#allocation12 + $0x148] sm:$0xff]
    %v5780 = vld [vmem:[#allocation12 + $0x150] sm:$0xff]
    %v5781 = vld [vmem:[#allocation12 + $0x158] sm:$0xff]
    %v5782 = vld [vmem:[#allocation12 + $0x160] sm:$0xff]
    %v5783 = vld [vmem:[#allocation12 + $0x168] sm:$0xff]
    %v5784 = vld [vmem:[#allocation12 + $0x170] sm:$0xff]
    %v5785 = vld [vmem:[#allocation12 + $0x178] sm:$0xff]
    %v5786 = vld [vmem:[#allocation12 + $0x180] sm:$0xff]
    %v5787 = vld [vmem:[#allocation12 + $0x188] sm:$0xff]
    %v5788 = vld [vmem:[#allocation12 + $0x190] sm:$0xff]
    %v5789 = vld [vmem:[#allocation12 + $0x198] sm:$0xff]
    %v5790 = vld [vmem:[#allocation12 + $0x1a0] sm:$0xff]
    %v5791 = vld [vmem:[#allocation12 + $0x1a8] sm:$0xff]
    %v5792 = vld [vmem:[#allocation12 + $0x1b0] sm:$0xff]
    %v5793 = vld [vmem:[#allocation12 + $0x1b8] sm:$0xff]
    %v5794 = vld [vmem:[#allocation12 + $0x1c0] sm:$0xff]
    %v5795 = vld [vmem:[#allocation12 + $0x1c8] sm:$0xff]
    %v5796 = vld [vmem:[#allocation12 + $0x1d0] sm:$0xff]
    %v5797 = vld [vmem:[#allocation12 + $0x1d8] sm:$0xff]
    %v5798 = vld [vmem:[#allocation12 + $0x1e0] sm:$0xff]
    %v5799 = vld [vmem:[#allocation12 + $0x1e8] sm:$0xff]
    %v5800 = vld [vmem:[#allocation12 + $0x1f0] sm:$0xff]
    %v5801 = vld [vmem:[#allocation12 + $0x1f8] sm:$0xff]
    %v5802 = vld [vmem:[%s5] sm:$0xf]
    %v5867 = vunpack.c.l.b16 %v5738
    %v5868 = vunpack.c.h.b16 %v5738
    %v5869 = vunpack.c.l.b16 %v5739
    %v5870 = vunpack.c.h.b16 %v5739
    %v5871 = vunpack.c.l.b16 %v5740
    %v5872 = vunpack.c.h.b16 %v5740
    %v5873 = vunpack.c.l.b16 %v5741
    %v5874 = vunpack.c.h.b16 %v5741
    %v5875 = vunpack.c.l.b16 %v5742
    %v5876 = vunpack.c.h.b16 %v5742
    %v5877 = vunpack.c.l.b16 %v5743
    %v5878 = vunpack.c.h.b16 %v5743
    %v5879 = vunpack.c.l.b16 %v5744
    %v5880 = vunpack.c.h.b16 %v5744
    %v5881 = vunpack.c.l.b16 %v5745
    %v5882 = vunpack.c.h.b16 %v5745
    %v5883 = vunpack.c.l.b16 %v5746
    %v5884 = vunpack.c.h.b16 %v5746
    %v5885 = vunpack.c.l.b16 %v5747
    %v5886 = vunpack.c.h.b16 %v5747
    %v5887 = vunpack.c.l.b16 %v5748
    %v5888 = vunpack.c.h.b16 %v5748
    %v5889 = vunpack.c.l.b16 %v5749
    %v5890 = vunpack.c.h.b16 %v5749
    %v5891 = vunpack.c.l.b16 %v5750
    %v5892 = vunpack.c.h.b16 %v5750
    %v5893 = vunpack.c.l.b16 %v5751
    %v5894 = vunpack.c.h.b16 %v5751
    %v5895 = vunpack.c.l.b16 %v5752
    %v5896 = vunpack.c.h.b16 %v5752
    %v5897 = vunpack.c.l.b16 %v5753
    %v5898 = vunpack.c.h.b16 %v5753
    %v5899 = vunpack.c.l.b16 %v5754
    %v5900 = vunpack.c.h.b16 %v5754
    %v5901 = vunpack.c.l.b16 %v5755
    %v5902 = vunpack.c.h.b16 %v5755
    %v5903 = vunpack.c.l.b16 %v5756
    %v5904 = vunpack.c.h.b16 %v5756
    %v5905 = vunpack.c.l.b16 %v5757
    %v5906 = vunpack.c.h.b16 %v5757
    %v5907 = vunpack.c.l.b16 %v5758
    %v5908 = vunpack.c.h.b16 %v5758
    %v5909 = vunpack.c.l.b16 %v5759
    %v5910 = vunpack.c.h.b16 %v5759
    %v5911 = vunpack.c.l.b16 %v5760
    %v5912 = vunpack.c.h.b16 %v5760
    %v5913 = vunpack.c.l.b16 %v5761
    %v5914 = vunpack.c.h.b16 %v5761
    %v5915 = vunpack.c.l.b16 %v5762
    %v5916 = vunpack.c.h.b16 %v5762
    %v5917 = vunpack.c.l.b16 %v5763
    %v5918 = vunpack.c.h.b16 %v5763
    %v5919 = vunpack.c.l.b16 %v5764
    %v5920 = vunpack.c.h.b16 %v5764
    %v5921 = vunpack.c.l.b16 %v5765
    %v5922 = vunpack.c.h.b16 %v5765
    %v5923 = vunpack.c.l.b16 %v5766
    %v5924 = vunpack.c.h.b16 %v5766
    %v5925 = vunpack.c.l.b16 %v5767
    %v5926 = vunpack.c.h.b16 %v5767
    %v5927 = vunpack.c.l.b16 %v5768
    %v5928 = vunpack.c.h.b16 %v5768
    %v5929 = vunpack.c.l.b16 %v5769
    %v5930 = vunpack.c.h.b16 %v5769
    %v5931 = vunpack.c.l.b16 %v5770
    %v5932 = vunpack.c.h.b16 %v5770
    %v5933 = vunpack.c.l.b16 %v5771
    %v5934 = vunpack.c.h.b16 %v5771
    %v5935 = vunpack.c.l.b16 %v5772
    %v5936 = vunpack.c.h.b16 %v5772
    %v5937 = vunpack.c.l.b16 %v5773
    %v5938 = vunpack.c.h.b16 %v5773
    %v5939 = vunpack.c.l.b16 %v5774
    %v5940 = vunpack.c.h.b16 %v5774
    %v5941 = vunpack.c.l.b16 %v5775
    %v5942 = vunpack.c.h.b16 %v5775
    %v5943 = vunpack.c.l.b16 %v5776
    %v5944 = vunpack.c.h.b16 %v5776
    %v5945 = vunpack.c.l.b16 %v5777
    %v5946 = vunpack.c.h.b16 %v5777
    %v5947 = vunpack.c.l.b16 %v5778
    %v5948 = vunpack.c.h.b16 %v5778
    %v5949 = vunpack.c.l.b16 %v5779
    %v5950 = vunpack.c.h.b16 %v5779
    %v5951 = vunpack.c.l.b16 %v5780
    %v5952 = vunpack.c.h.b16 %v5780
    %v5953 = vunpack.c.l.b16 %v5781
    %v5954 = vunpack.c.h.b16 %v5781
    %v5955 = vunpack.c.l.b16 %v5782
    %v5956 = vunpack.c.h.b16 %v5782
    %v5957 = vunpack.c.l.b16 %v5783
    %v5958 = vunpack.c.h.b16 %v5783
    %v5959 = vunpack.c.l.b16 %v5784
    %v5960 = vunpack.c.h.b16 %v5784
    %v5961 = vunpack.c.l.b16 %v5785
    %v5962 = vunpack.c.h.b16 %v5785
    %v5963 = vunpack.c.l.b16 %v5786
    %v5964 = vunpack.c.h.b16 %v5786
    %v5965 = vunpack.c.l.b16 %v5787
    %v5966 = vunpack.c.h.b16 %v5787
    %v5967 = vunpack.c.l.b16 %v5788
    %v5968 = vunpack.c.h.b16 %v5788
    %v5969 = vunpack.c.l.b16 %v5789
    %v5970 = vunpack.c.h.b16 %v5789
    %v5971 = vunpack.c.l.b16 %v5790
    %v5972 = vunpack.c.h.b16 %v5790
    %v5973 = vunpack.c.l.b16 %v5791
    %v5974 = vunpack.c.h.b16 %v5791
    %v5975 = vunpack.c.l.b16 %v5792
    %v5976 = vunpack.c.h.b16 %v5792
    %v5977 = vunpack.c.l.b16 %v5793
    %v5978 = vunpack.c.h.b16 %v5793
    %v5979 = vunpack.c.l.b16 %v5794
    %v5980 = vunpack.c.h.b16 %v5794
    %v5981 = vunpack.c.l.b16 %v5795
    %v5982 = vunpack.c.h.b16 %v5795
    %v5983 = vunpack.c.l.b16 %v5796
    %v5984 = vunpack.c.h.b16 %v5796
    %v5985 = vunpack.c.l.b16 %v5797
    %v5986 = vunpack.c.h.b16 %v5797
    %v5987 = vunpack.c.l.b16 %v5798
    %v5988 = vunpack.c.h.b16 %v5798
    %v5989 = vunpack.c.l.b16 %v5799
    %v5990 = vunpack.c.h.b16 %v5799
    %v5991 = vunpack.c.l.b16 %v5800
    %v5992 = vunpack.c.h.b16 %v5800
    %v5993 = vunpack.c.l.b16 %v5801
    %v5994 = vunpack.c.h.b16 %v5801
    %v5995 = vpack.c.b16 %v5871, %v5867
    %v5996 = vpack.c.b16 %v5872, %v5868
    %v5997 = vpack.c.b16 %v5873, %v5869
    %v5998 = vpack.c.b16 %v5874, %v5870
    %v5999 = vpack.c.b16 %v5879, %v5875
    %v6000 = vpack.c.b16 %v5880, %v5876
    %v6001 = vpack.c.b16 %v5881, %v5877
    %v6002 = vpack.c.b16 %v5882, %v5878
    %v6003 = vpack.c.b16 %v5887, %v5883
    %v6004 = vpack.c.b16 %v5888, %v5884
    %v6005 = vpack.c.b16 %v5889, %v5885
    %v6006 = vpack.c.b16 %v5890, %v5886
    %v6007 = vpack.c.b16 %v5895, %v5891
    %v6008 = vpack.c.b16 %v5896, %v5892
    %v6009 = vpack.c.b16 %v5897, %v5893
    %v6010 = vpack.c.b16 %v5898, %v5894
    %v6011 = vpack.c.b16 %v5903, %v5899
    %v6012 = vpack.c.b16 %v5904, %v5900
    %v6013 = vpack.c.b16 %v5905, %v5901
    %v6014 = vpack.c.b16 %v5906, %v5902
    %v6015 = vpack.c.b16 %v5911, %v5907
    %v6016 = vpack.c.b16 %v5912, %v5908
    %v6017 = vpack.c.b16 %v5913, %v5909
    %v6018 = vpack.c.b16 %v5914, %v5910
    %v6019 = vpack.c.b16 %v5919, %v5915
    %v6020 = vpack.c.b16 %v5920, %v5916
    %v6021 = vpack.c.b16 %v5921, %v5917
    %v6022 = vpack.c.b16 %v5922, %v5918
    %v6023 = vpack.c.b16 %v5927, %v5923
    %v6024 = vpack.c.b16 %v5928, %v5924
    %v6025 = vpack.c.b16 %v5929, %v5925
    %v6026 = vpack.c.b16 %v5930, %v5926
    %v6027 = vpack.c.b16 %v5935, %v5931
    %v6028 = vpack.c.b16 %v5936, %v5932
    %v6029 = vpack.c.b16 %v5937, %v5933
    %v6030 = vpack.c.b16 %v5938, %v5934
    %v6031 = vpack.c.b16 %v5943, %v5939
    %v6032 = vpack.c.b16 %v5944, %v5940
    %v6033 = vpack.c.b16 %v5945, %v5941
    %v6034 = vpack.c.b16 %v5946, %v5942
    %v6035 = vpack.c.b16 %v5951, %v5947
    %v6036 = vpack.c.b16 %v5952, %v5948
    %v6037 = vpack.c.b16 %v5953, %v5949
    %v6038 = vpack.c.b16 %v5954, %v5950
    %v6039 = vpack.c.b16 %v5959, %v5955
    %v6040 = vpack.c.b16 %v5960, %v5956
    %v6041 = vpack.c.b16 %v5961, %v5957
    %v6042 = vpack.c.b16 %v5962, %v5958
    %v6043 = vpack.c.b16 %v5967, %v5963
    %v6044 = vpack.c.b16 %v5968, %v5964
    %v6045 = vpack.c.b16 %v5969, %v5965
    %v6046 = vpack.c.b16 %v5970, %v5966
    %v6047 = vpack.c.b16 %v5975, %v5971
    %v6048 = vpack.c.b16 %v5976, %v5972
    %v6049 = vpack.c.b16 %v5977, %v5973
    %v6050 = vpack.c.b16 %v5978, %v5974
    %v6051 = vpack.c.b16 %v5983, %v5979
    %v6052 = vpack.c.b16 %v5984, %v5980
    %v6053 = vpack.c.b16 %v5985, %v5981
    %v6054 = vpack.c.b16 %v5986, %v5982
    %v6055 = vpack.c.b16 %v5991, %v5987
    %v6056 = vpack.c.b16 %v5992, %v5988
    %v6057 = vpack.c.b16 %v5993, %v5989
    %v6058 = vpack.c.b16 %v5994, %v5990
    %v6124 = vperm.slane %v5802, 0
    %v6125 = vperm.slane %v5802, 1
    %v6126 = vperm.slane %v5802, 2
    %v6127 = vperm.slane %v5802, 3
    %6132 = vmatpush.bf16.msra.mxu0 %v6023
    %6133 = vmatpush.bf16.msra.mxu0 %v6019
    %6134 = vmatpush.bf16.msra.mxu0 %v6015
    %6135 = vmatpush.bf16.msra.mxu0 %v6011
    %6136 = vmatpush.bf16.msra.mxu0 %v6007
    %6137 = vmatpush.bf16.msra.mxu0 %v6003
    %6138 = vmatpush.bf16.msra.mxu0 %v5999
    %6139 = vmatpush.bf16.msra.mxu0 %v5995
    %6140 = vmatmul.bf16.gmra.mxu0 %v5736
    %v6141 = vpop.f32.mrf.mxu0
    %v6142 = vadd.f32 %v6124, %v6141
    %v6143 = vpop.f32.mrf.mxu0
    %6144 = vdwg.mxu0
    %6145 = vmatpush.bf16.msra.mxu0 %v6055
    %6146 = vmatpush.bf16.msra.mxu0 %v6051
    %6147 = vmatpush.bf16.msra.mxu0 %v6047
    %6148 = vmatpush.bf16.msra.mxu0 %v6043
    %6149 = vmatpush.bf16.msra.mxu0 %v6039
    %6150 = vmatpush.bf16.msra.mxu0 %v6035
    %6151 = vmatpush.bf16.msra.mxu0 %v6031
    %6152 = vmatpush.bf16.msra.mxu0 %v6027
    %6153 = vmatmul.bf16.gmra.mxu0 %v5737
    %v6154 = vpop.f32.mrf.mxu0
    %v6155 = vadd.f32 %v6142, %v6154
    %v6156 = vpop.f32.mrf.mxu0
    %6157 = vdwg.mxu0
    %6158 = vmatpush.bf16.msra.mxu0 %v6024
    %6159 = vmatpush.bf16.msra.mxu0 %v6020
    %6160 = vmatpush.bf16.msra.mxu0 %v6016
    %6161 = vmatpush.bf16.msra.mxu0 %v6012
    %6162 = vmatpush.bf16.msra.mxu0 %v6008
    %6163 = vmatpush.bf16.msra.mxu0 %v6004
    %6164 = vmatpush.bf16.msra.mxu0 %v6000
    %6165 = vmatpush.bf16.msra.mxu0 %v5996
    %6166 = vmatmul.bf16.gmra.mxu0 %v5736
    %v6167 = vpop.f32.mrf.mxu0
    %v6168 = vadd.f32 %v6125, %v6167
    %v6169 = vpop.f32.mrf.mxu0
    %6170 = vdwg.mxu0
    %6171 = vmatpush.bf16.msra.mxu0 %v6056
    %6172 = vmatpush.bf16.msra.mxu0 %v6052
    %6173 = vmatpush.bf16.msra.mxu0 %v6048
    %6174 = vmatpush.bf16.msra.mxu0 %v6044
    %6175 = vmatpush.bf16.msra.mxu0 %v6040
    %6176 = vmatpush.bf16.msra.mxu0 %v6036
    %6177 = vmatpush.bf16.msra.mxu0 %v6032
    %6178 = vmatpush.bf16.msra.mxu0 %v6028
    %6179 = vmatmul.bf16.gmra.mxu0 %v5737
    %v6180 = vpop.f32.mrf.mxu0
    %v6181 = vadd.f32 %v6168, %v6180
    %v6182 = vpop.f32.mrf.mxu0
    %6183 = vdwg.mxu0
    %6184 = vmatpush.bf16.msra.mxu0 %v6025
    %6185 = vmatpush.bf16.msra.mxu0 %v6021
    %6186 = vmatpush.bf16.msra.mxu0 %v6017
    %6187 = vmatpush.bf16.msra.mxu0 %v6013
    %6188 = vmatpush.bf16.msra.mxu0 %v6009
    %6189 = vmatpush.bf16.msra.mxu0 %v6005
    %6190 = vmatpush.bf16.msra.mxu0 %v6001
    %6191 = vmatpush.bf16.msra.mxu0 %v5997
    %6192 = vmatmul.bf16.gmra.mxu0 %v5736
    %v6193 = vpop.f32.mrf.mxu0
    %v6194 = vadd.f32 %v6126, %v6193
    %v6195 = vpop.f32.mrf.mxu0
    %6196 = vdwg.mxu0
    %6197 = vmatpush.bf16.msra.mxu0 %v6057
    %6198 = vmatpush.bf16.msra.mxu0 %v6053
    %6199 = vmatpush.bf16.msra.mxu0 %v6049
    %6200 = vmatpush.bf16.msra.mxu0 %v6045
    %6201 = vmatpush.bf16.msra.mxu0 %v6041
    %6202 = vmatpush.bf16.msra.mxu0 %v6037
    %6203 = vmatpush.bf16.msra.mxu0 %v6033
    %6204 = vmatpush.bf16.msra.mxu0 %v6029
    %6205 = vmatmul.bf16.gmra.mxu0 %v5737
    %v6206 = vpop.f32.mrf.mxu0
    %v6207 = vadd.f32 %v6194, %v6206
    %v6208 = vpop.f32.mrf.mxu0
    %6209 = vdwg.mxu0
    %6210 = vmatpush.bf16.msra.mxu0 %v6026
    %6211 = vmatpush.bf16.msra.mxu0 %v6022
    %6212 = vmatpush.bf16.msra.mxu0 %v6018
    %6213 = vmatpush.bf16.msra.mxu0 %v6014
    %6214 = vmatpush.bf16.msra.mxu0 %v6010
    %6215 = vmatpush.bf16.msra.mxu0 %v6006
    %6216 = vmatpush.bf16.msra.mxu0 %v6002
    %6217 = vmatpush.bf16.msra.mxu0 %v5998
    %6218 = vmatmul.bf16.gmra.mxu0 %v5736
    %v6219 = vpop.f32.mrf.mxu0
    %v6220 = vadd.f32 %v6127, %v6219
    %v6221 = vpop.f32.mrf.mxu0
    %6222 = vdwg.mxu0
    %6223 = vmatpush.bf16.msra.mxu0 %v6058
    %6224 = vmatpush.bf16.msra.mxu0 %v6054
    %6225 = vmatpush.bf16.msra.mxu0 %v6050
    %6226 = vmatpush.bf16.msra.mxu0 %v6046
    %6227 = vmatpush.bf16.msra.mxu0 %v6042
    %6228 = vmatpush.bf16.msra.mxu0 %v6038
    %6229 = vmatpush.bf16.msra.mxu0 %v6034
    %6230 = vmatpush.bf16.msra.mxu0 %v6030
    %6231 = vmatmul.bf16.gmra.mxu0 %v5737
    %v6232 = vpop.f32.mrf.mxu0
    %v6233 = vadd.f32 %v6220, %v6232
    %v6234 = vpop.f32.mrf.mxu0
    %6235 = vdwg.mxu0
    %v6236 = vxor.u32 %v6155, 2147483648
    %v6237 = vxor.u32 %v6181, 2147483648
    %v6238 = vxor.u32 %v6207, 2147483648
    %v6239 = vmul.f32 %v6236, 1.442695
    %v6240 = vpow.pop %v6239
    %v6241 = vmul.f32 %v6237, 1.442695
    %v6242 = vpow.pop %v6241
    %v6243 = vmul.f32 %v6238, 1.442695
    %v6244 = vpow.pop %v6243
    %v6245 = vadd.f32 %v6240, 1.0
    %v6246 = vadd.f32 %v6242, 1.0
    %v6247 = vadd.f32 %v6244, 1.0
    %v6248 = vrcp.pop %v6245
    %v6249 = vmul.f32 %v6245, %v6248
    %v6250 = vsub.f32 1.0, %v6249
    %v6251 = vmul.f32 %v6248, %v6250
    %v6252 = vadd.f32 %v6248, %v6251
    %vm6253 = vweird.f32 %v6245
    %vm6254 = vweird.f32 %v6248
    %vm6255 = vmor %vm6253, %vm6254
    %v6256 = vsel %vm6255, %v6248, %v6252
    %v6257 = vand.u32 2147483647, %v6245
    %vm6258 = vcmp.eq.f32.partialorder %v6257, 8.507059e+37
    %v6259 = vand.u32 %v6245, 2147483648
    %v6260 = vor.u32 1.1754944e-38, %v6259
    %v6261 = vsel %vm6258, %v6260, %v6256
    %v6262 = vmul.f32 1.0, %v6261
    %v6263 = vrcp.pop %v6246
    %v6264 = vmul.f32 %v6246, %v6263
    %v6265 = vsub.f32 1.0, %v6264
    %v6266 = vmul.f32 %v6263, %v6265
    %v6267 = vadd.f32 %v6263, %v6266
    %vm6268 = vweird.f32 %v6246
    %vm6269 = vweird.f32 %v6263
    %vm6270 = vmor %vm6268, %vm6269
    %v6271 = vsel %vm6270, %v6263, %v6267
    %v6272 = vand.u32 2147483647, %v6246
    %vm6273 = vcmp.eq.f32.partialorder %v6272, 8.507059e+37
    %v6274 = vand.u32 %v6246, 2147483648
    %v6275 = vor.u32 1.1754944e-38, %v6274
    %v6276 = vsel %vm6273, %v6275, %v6271
    %v6277 = vmul.f32 1.0, %v6276
    %v6278 = vrcp.pop %v6247
    %v6279 = vmul.f32 %v6247, %v6278
    %v6280 = vsub.f32 1.0, %v6279
    %v6281 = vmul.f32 %v6278, %v6280
    %v6282 = vadd.f32 %v6278, %v6281
    %vm6283 = vweird.f32 %v6247
    %vm6284 = vweird.f32 %v6278
    %vm6285 = vmor %vm6283, %vm6284
    %v6286 = vsel %vm6285, %v6278, %v6282
    %v6287 = vand.u32 2147483647, %v6247
    %vm6288 = vcmp.eq.f32.partialorder %v6287, 8.507059e+37
    %v6289 = vand.u32 %v6247, 2147483648
    %v6290 = vor.u32 1.1754944e-38, %v6289
    %v6291 = vsel %vm6288, %v6290, %v6286
    %v6292 = vmul.f32 1.0, %v6291
    %v6293 = vtanh.pop %v6233
    %v6294 = vmul.f32 %v6277, %v5441
    %v6295 = vmul.f32 %v6262, %v6293
    %v6296 = vadd.f32 %v6294, %v6295
    %v6297 = vtanh.pop %v6296
    %v6298 = vmul.f32 %v6292, %v6297
    %6299 = vst [vmem:[#allocation3 + $0x6] sm:$0x1] %v6298
    %s6300 = scalar_lea.vmem [#allocation2], 7
    %v6301 = vld [vmem:[%s6300] ss:$8 sm:$0xf]
    %v6302 = vld [vmem:[#allocation9] sm:$0xff]
    %v6303 = vld [vmem:[#allocation9 + $0x8] sm:$0xff]
    %v6304 = vld [vmem:[#allocation9 + $0x10] sm:$0xff]
    %v6305 = vld [vmem:[#allocation9 + $0x18] sm:$0xff]
    %v6306 = vld [vmem:[#allocation9 + $0x20] sm:$0xff]
    %v6307 = vld [vmem:[#allocation9 + $0x28] sm:$0xff]
    %v6308 = vld [vmem:[#allocation9 + $0x30] sm:$0xff]
    %v6309 = vld [vmem:[#allocation9 + $0x38] sm:$0xff]
    %v6310 = vld [vmem:[#allocation9 + $0x40] sm:$0xff]
    %v6311 = vld [vmem:[#allocation9 + $0x48] sm:$0xff]
    %v6312 = vld [vmem:[#allocation9 + $0x50] sm:$0xff]
    %v6313 = vld [vmem:[#allocation9 + $0x58] sm:$0xff]
    %v6314 = vld [vmem:[#allocation9 + $0x60] sm:$0xff]
    %v6315 = vld [vmem:[#allocation9 + $0x68] sm:$0xff]
    %v6316 = vld [vmem:[#allocation9 + $0x70] sm:$0xff]
    %v6317 = vld [vmem:[#allocation9 + $0x78] sm:$0xff]
    %v6318 = vld [vmem:[#allocation9 + $0x80] sm:$0xff]
    %v6319 = vld [vmem:[#allocation9 + $0x88] sm:$0xff]
    %v6320 = vld [vmem:[#allocation9 + $0x90] sm:$0xff]
    %v6321 = vld [vmem:[#allocation9 + $0x98] sm:$0xff]
    %v6322 = vld [vmem:[#allocation9 + $0xa0] sm:$0xff]
    %v6323 = vld [vmem:[#allocation9 + $0xa8] sm:$0xff]
    %v6324 = vld [vmem:[#allocation9 + $0xb0] sm:$0xff]
    %v6325 = vld [vmem:[#allocation9 + $0xb8] sm:$0xff]
    %v6326 = vld [vmem:[#allocation9 + $0xc0] sm:$0xff]
    %v6327 = vld [vmem:[#allocation9 + $0xc8] sm:$0xff]
    %v6328 = vld [vmem:[#allocation9 + $0xd0] sm:$0xff]
    %v6329 = vld [vmem:[#allocation9 + $0xd8] sm:$0xff]
    %v6330 = vld [vmem:[#allocation9 + $0xe0] sm:$0xff]
    %v6331 = vld [vmem:[#allocation9 + $0xe8] sm:$0xff]
    %v6332 = vld [vmem:[#allocation9 + $0xf0] sm:$0xff]
    %v6333 = vld [vmem:[#allocation9 + $0xf8] sm:$0xff]
    %v6366 = vunpack.c.l.b16 %v6302
    %v6367 = vunpack.c.h.b16 %v6302
    %v6368 = vunpack.c.l.b16 %v6303
    %v6369 = vunpack.c.h.b16 %v6303
    %v6370 = vunpack.c.l.b16 %v6304
    %v6371 = vunpack.c.h.b16 %v6304
    %v6372 = vunpack.c.l.b16 %v6305
    %v6373 = vunpack.c.h.b16 %v6305
    %v6374 = vunpack.c.l.b16 %v6306
    %v6375 = vunpack.c.h.b16 %v6306
    %v6376 = vunpack.c.l.b16 %v6307
    %v6377 = vunpack.c.h.b16 %v6307
    %v6378 = vunpack.c.l.b16 %v6308
    %v6379 = vunpack.c.h.b16 %v6308
    %v6380 = vunpack.c.l.b16 %v6309
    %v6381 = vunpack.c.h.b16 %v6309
    %v6382 = vunpack.c.l.b16 %v6310
    %v6383 = vunpack.c.h.b16 %v6310
    %v6384 = vunpack.c.l.b16 %v6311
    %v6385 = vunpack.c.h.b16 %v6311
    %v6386 = vunpack.c.l.b16 %v6312
    %v6387 = vunpack.c.h.b16 %v6312
    %v6388 = vunpack.c.l.b16 %v6313
    %v6389 = vunpack.c.h.b16 %v6313
    %v6390 = vunpack.c.l.b16 %v6314
    %v6391 = vunpack.c.h.b16 %v6314
    %v6392 = vunpack.c.l.b16 %v6315
    %v6393 = vunpack.c.h.b16 %v6315
    %v6394 = vunpack.c.l.b16 %v6316
    %v6395 = vunpack.c.h.b16 %v6316
    %v6396 = vunpack.c.l.b16 %v6317
    %v6397 = vunpack.c.h.b16 %v6317
    %v6398 = vunpack.c.l.b16 %v6318
    %v6399 = vunpack.c.h.b16 %v6318
    %v6400 = vunpack.c.l.b16 %v6319
    %v6401 = vunpack.c.h.b16 %v6319
    %v6402 = vunpack.c.l.b16 %v6320
    %v6403 = vunpack.c.h.b16 %v6320
    %v6404 = vunpack.c.l.b16 %v6321
    %v6405 = vunpack.c.h.b16 %v6321
    %v6406 = vunpack.c.l.b16 %v6322
    %v6407 = vunpack.c.h.b16 %v6322
    %v6408 = vunpack.c.l.b16 %v6323
    %v6409 = vunpack.c.h.b16 %v6323
    %v6410 = vunpack.c.l.b16 %v6324
    %v6411 = vunpack.c.h.b16 %v6324
    %v6412 = vunpack.c.l.b16 %v6325
    %v6413 = vunpack.c.h.b16 %v6325
    %v6414 = vunpack.c.l.b16 %v6326
    %v6415 = vunpack.c.h.b16 %v6326
    %v6416 = vunpack.c.l.b16 %v6327
    %v6417 = vunpack.c.h.b16 %v6327
    %v6418 = vunpack.c.l.b16 %v6328
    %v6419 = vunpack.c.h.b16 %v6328
    %v6420 = vunpack.c.l.b16 %v6329
    %v6421 = vunpack.c.h.b16 %v6329
    %v6422 = vunpack.c.l.b16 %v6330
    %v6423 = vunpack.c.h.b16 %v6330
    %v6424 = vunpack.c.l.b16 %v6331
    %v6425 = vunpack.c.h.b16 %v6331
    %v6426 = vunpack.c.l.b16 %v6332
    %v6427 = vunpack.c.h.b16 %v6332
    %v6428 = vunpack.c.l.b16 %v6333
    %v6429 = vunpack.c.h.b16 %v6333
    %v6430 = vpack.c.b16 %v6370, %v6366
    %v6431 = vpack.c.b16 %v6371, %v6367
    %v6432 = vpack.c.b16 %v6372, %v6368
    %v6433 = vpack.c.b16 %v6373, %v6369
    %v6434 = vpack.c.b16 %v6378, %v6374
    %v6435 = vpack.c.b16 %v6379, %v6375
    %v6436 = vpack.c.b16 %v6380, %v6376
    %v6437 = vpack.c.b16 %v6381, %v6377
    %v6438 = vpack.c.b16 %v6386, %v6382
    %v6439 = vpack.c.b16 %v6387, %v6383
    %v6440 = vpack.c.b16 %v6388, %v6384
    %v6441 = vpack.c.b16 %v6389, %v6385
    %v6442 = vpack.c.b16 %v6394, %v6390
    %v6443 = vpack.c.b16 %v6395, %v6391
    %v6444 = vpack.c.b16 %v6396, %v6392
    %v6445 = vpack.c.b16 %v6397, %v6393
    %v6446 = vpack.c.b16 %v6402, %v6398
    %v6447 = vpack.c.b16 %v6403, %v6399
    %v6448 = vpack.c.b16 %v6404, %v6400
    %v6449 = vpack.c.b16 %v6405, %v6401
    %v6450 = vpack.c.b16 %v6410, %v6406
    %v6451 = vpack.c.b16 %v6411, %v6407
    %v6452 = vpack.c.b16 %v6412, %v6408
    %v6453 = vpack.c.b16 %v6413, %v6409
    %v6454 = vpack.c.b16 %v6418, %v6414
    %v6455 = vpack.c.b16 %v6419, %v6415
    %v6456 = vpack.c.b16 %v6420, %v6416
    %v6457 = vpack.c.b16 %v6421, %v6417
    %v6458 = vpack.c.b16 %v6426, %v6422
    %v6459 = vpack.c.b16 %v6427, %v6423
    %v6460 = vpack.c.b16 %v6428, %v6424
    %v6461 = vpack.c.b16 %v6429, %v6425
    %6494 = vmatpush.bf16.msra.mxu0 %v6458
    %6495 = vmatpush.bf16.msra.mxu0 %v6454
    %6496 = vmatpush.bf16.msra.mxu0 %v6450
    %6497 = vmatpush.bf16.msra.mxu0 %v6446
    %6498 = vmatpush.bf16.msra.mxu0 %v6442
    %6499 = vmatpush.bf16.msra.mxu0 %v6438
    %6500 = vmatpush.bf16.msra.mxu0 %v6434
    %6501 = vmatpush.bf16.msra.mxu0 %v6430
    %6502 = vmatmul.bf16.gmra.mxu0 %v5736
    %v6503 = vpop.f32.mrf.mxu0
    %v6504 = vadd.f32 0.0, %v6503
    %v6505 = vpop.f32.mrf.mxu0
    %6506 = vdwg.mxu0
    %6507 = vmatpush.bf16.msra.mxu0 %v6459
    %6508 = vmatpush.bf16.msra.mxu0 %v6455
    %6509 = vmatpush.bf16.msra.mxu0 %v6451
    %6510 = vmatpush.bf16.msra.mxu0 %v6447
    %6511 = vmatpush.bf16.msra.mxu0 %v6443
    %6512 = vmatpush.bf16.msra.mxu0 %v6439
    %6513 = vmatpush.bf16.msra.mxu0 %v6435
    %6514 = vmatpush.bf16.msra.mxu0 %v6431
    %6515 = vmatmul.bf16.gmra.mxu0 %v5736
    %v6516 = vpop.f32.mrf.mxu0
    %v6517 = vadd.f32 0.0, %v6516
    %v6518 = vpop.f32.mrf.mxu0
    %6519 = vdwg.mxu0
    %6520 = vmatpush.bf16.msra.mxu0 %v6460
    %6521 = vmatpush.bf16.msra.mxu0 %v6456
    %6522 = vmatpush.bf16.msra.mxu0 %v6452
    %6523 = vmatpush.bf16.msra.mxu0 %v6448
    %6524 = vmatpush.bf16.msra.mxu0 %v6444
    %6525 = vmatpush.bf16.msra.mxu0 %v6440
    %6526 = vmatpush.bf16.msra.mxu0 %v6436
    %6527 = vmatpush.bf16.msra.mxu0 %v6432
    %6528 = vmatmul.bf16.gmra.mxu0 %v5736
    %v6529 = vpop.f32.mrf.mxu0
    %v6530 = vadd.f32 0.0, %v6529
    %v6531 = vpop.f32.mrf.mxu0
    %6532 = vdwg.mxu0
    %6533 = vmatpush.bf16.msra.mxu0 %v6461
    %6534 = vmatpush.bf16.msra.mxu0 %v6457
    %6535 = vmatpush.bf16.msra.mxu0 %v6453
    %6536 = vmatpush.bf16.msra.mxu0 %v6449
    %6537 = vmatpush.bf16.msra.mxu0 %v6445
    %6538 = vmatpush.bf16.msra.mxu0 %v6441
    %6539 = vmatpush.bf16.msra.mxu0 %v6437
    %6540 = vmatpush.bf16.msra.mxu0 %v6433
    %6541 = vmatmul.bf16.gmra.mxu0 %v5736
    %v6542 = vpop.f32.mrf.mxu0
    %v6543 = vadd.f32 0.0, %v6542
    %v6544 = vpop.f32.mrf.mxu0
    %6545 = vdwg.mxu0
    %v6550 = vrot.slane %v6517, 7
    %v6551 = vrot.slane %v6530, 6
    %v6552 = vrot.slane %v6543, 5
    %v6553 = vsel %vm565, %v6504, %v6550
    %v6554 = vsel %vm567, %v6551, %v6552
    %v6555 = vsel %vm569, %v6553, %v6554
    %v6557 = vadd.f32 %v6301, %v6555
    %v6558 = vxor.u32 %v6557, 2147483648
    %v6559 = vmul.f32 %v6558, 1.442695
    %v6560 = vpow.pop %v6559
    %v6561 = vadd.f32 %v6560, 1.0
    %v6562 = vrcp.pop %v6561
    %v6563 = vmul.f32 %v6561, %v6562
    %v6564 = vsub.f32 1.0, %v6563
    %v6565 = vmul.f32 %v6562, %v6564
    %v6566 = vadd.f32 %v6562, %v6565
    %vm6567 = vweird.f32 %v6561
    %vm6568 = vweird.f32 %v6562
    %vm6569 = vmor %vm6567, %vm6568
    %v6570 = vsel %vm6569, %v6562, %v6566
    %v6571 = vand.u32 2147483647, %v6561
    %vm6572 = vcmp.eq.f32.partialorder %v6571, 8.507059e+37
    %v6573 = vand.u32 %v6561, 2147483648
    %v6574 = vor.u32 1.1754944e-38, %v6573
    %v6575 = vsel %vm6572, %v6574, %v6570
    %v6576 = vmul.f32 1.0, %v6575
    %v6578 = vrot.slane %v6557, 3
    %v6580 = vtanh.pop %v6578
    %v6582 = vrot.slane %v6576, 1
    %v6584 = vmul.f32 %v6582, %v5731
    %v6585 = vmul.f32 %v6576, %v6580
    %v6586 = vadd.f32 %v6584, %v6585
    %v6587 = vtanh.pop %v6586
    %v6588 = vrot.slane %v6576, 2
    %v6590 = vmul.f32 %v6588, %v6587
    %v6591 = vpack.c.bf16 %v6590, %v6590
    %v6592 = vpack.c.bf16 %v6298, %v6298
    %v6593 = vld [vmem:[#allocation12] sm:$0xff]
    %v6594 = vld [vmem:[#allocation12 + $0x8] sm:$0xff]
    %v6595 = vld [vmem:[#allocation12 + $0x10] sm:$0xff]
    %v6596 = vld [vmem:[#allocation12 + $0x18] sm:$0xff]
    %v6597 = vld [vmem:[#allocation12 + $0x20] sm:$0xff]
    %v6598 = vld [vmem:[#allocation12 + $0x28] sm:$0xff]
    %v6599 = vld [vmem:[#allocation12 + $0x30] sm:$0xff]
    %v6600 = vld [vmem:[#allocation12 + $0x38] sm:$0xff]
    %v6601 = vld [vmem:[#allocation12 + $0x40] sm:$0xff]
    %v6602 = vld [vmem:[#allocation12 + $0x48] sm:$0xff]
    %v6603 = vld [vmem:[#allocation12 + $0x50] sm:$0xff]
    %v6604 = vld [vmem:[#allocation12 + $0x58] sm:$0xff]
    %v6605 = vld [vmem:[#allocation12 + $0x60] sm:$0xff]
    %v6606 = vld [vmem:[#allocation12 + $0x68] sm:$0xff]
    %v6607 = vld [vmem:[#allocation12 + $0x70] sm:$0xff]
    %v6608 = vld [vmem:[#allocation12 + $0x78] sm:$0xff]
    %v6609 = vld [vmem:[#allocation12 + $0x80] sm:$0xff]
    %v6610 = vld [vmem:[#allocation12 + $0x88] sm:$0xff]
    %v6611 = vld [vmem:[#allocation12 + $0x90] sm:$0xff]
    %v6612 = vld [vmem:[#allocation12 + $0x98] sm:$0xff]
    %v6613 = vld [vmem:[#allocation12 + $0xa0] sm:$0xff]
    %v6614 = vld [vmem:[#allocation12 + $0xa8] sm:$0xff]
    %v6615 = vld [vmem:[#allocation12 + $0xb0] sm:$0xff]
    %v6616 = vld [vmem:[#allocation12 + $0xb8] sm:$0xff]
    %v6617 = vld [vmem:[#allocation12 + $0xc0] sm:$0xff]
    %v6618 = vld [vmem:[#allocation12 + $0xc8] sm:$0xff]
    %v6619 = vld [vmem:[#allocation12 + $0xd0] sm:$0xff]
    %v6620 = vld [vmem:[#allocation12 + $0xd8] sm:$0xff]
    %v6621 = vld [vmem:[#allocation12 + $0xe0] sm:$0xff]
    %v6622 = vld [vmem:[#allocation12 + $0xe8] sm:$0xff]
    %v6623 = vld [vmem:[#allocation12 + $0xf0] sm:$0xff]
    %v6624 = vld [vmem:[#allocation12 + $0xf8] sm:$0xff]
    %v6625 = vld [vmem:[#allocation12 + $0x100] sm:$0xff]
    %v6626 = vld [vmem:[#allocation12 + $0x108] sm:$0xff]
    %v6627 = vld [vmem:[#allocation12 + $0x110] sm:$0xff]
    %v6628 = vld [vmem:[#allocation12 + $0x118] sm:$0xff]
    %v6629 = vld [vmem:[#allocation12 + $0x120] sm:$0xff]
    %v6630 = vld [vmem:[#allocation12 + $0x128] sm:$0xff]
    %v6631 = vld [vmem:[#allocation12 + $0x130] sm:$0xff]
    %v6632 = vld [vmem:[#allocation12 + $0x138] sm:$0xff]
    %v6633 = vld [vmem:[#allocation12 + $0x140] sm:$0xff]
    %v6634 = vld [vmem:[#allocation12 + $0x148] sm:$0xff]
    %v6635 = vld [vmem:[#allocation12 + $0x150] sm:$0xff]
    %v6636 = vld [vmem:[#allocation12 + $0x158] sm:$0xff]
    %v6637 = vld [vmem:[#allocation12 + $0x160] sm:$0xff]
    %v6638 = vld [vmem:[#allocation12 + $0x168] sm:$0xff]
    %v6639 = vld [vmem:[#allocation12 + $0x170] sm:$0xff]
    %v6640 = vld [vmem:[#allocation12 + $0x178] sm:$0xff]
    %v6641 = vld [vmem:[#allocation12 + $0x180] sm:$0xff]
    %v6642 = vld [vmem:[#allocation12 + $0x188] sm:$0xff]
    %v6643 = vld [vmem:[#allocation12 + $0x190] sm:$0xff]
    %v6644 = vld [vmem:[#allocation12 + $0x198] sm:$0xff]
    %v6645 = vld [vmem:[#allocation12 + $0x1a0] sm:$0xff]
    %v6646 = vld [vmem:[#allocation12 + $0x1a8] sm:$0xff]
    %v6647 = vld [vmem:[#allocation12 + $0x1b0] sm:$0xff]
    %v6648 = vld [vmem:[#allocation12 + $0x1b8] sm:$0xff]
    %v6649 = vld [vmem:[#allocation12 + $0x1c0] sm:$0xff]
    %v6650 = vld [vmem:[#allocation12 + $0x1c8] sm:$0xff]
    %v6651 = vld [vmem:[#allocation12 + $0x1d0] sm:$0xff]
    %v6652 = vld [vmem:[#allocation12 + $0x1d8] sm:$0xff]
    %v6653 = vld [vmem:[#allocation12 + $0x1e0] sm:$0xff]
    %v6654 = vld [vmem:[#allocation12 + $0x1e8] sm:$0xff]
    %v6655 = vld [vmem:[#allocation12 + $0x1f0] sm:$0xff]
    %v6656 = vld [vmem:[#allocation12 + $0x1f8] sm:$0xff]
    %v6657 = vld [vmem:[%s5] sm:$0xf]
    %v6722 = vunpack.c.l.b16 %v6593
    %v6723 = vunpack.c.h.b16 %v6593
    %v6724 = vunpack.c.l.b16 %v6594
    %v6725 = vunpack.c.h.b16 %v6594
    %v6726 = vunpack.c.l.b16 %v6595
    %v6727 = vunpack.c.h.b16 %v6595
    %v6728 = vunpack.c.l.b16 %v6596
    %v6729 = vunpack.c.h.b16 %v6596
    %v6730 = vunpack.c.l.b16 %v6597
    %v6731 = vunpack.c.h.b16 %v6597
    %v6732 = vunpack.c.l.b16 %v6598
    %v6733 = vunpack.c.h.b16 %v6598
    %v6734 = vunpack.c.l.b16 %v6599
    %v6735 = vunpack.c.h.b16 %v6599
    %v6736 = vunpack.c.l.b16 %v6600
    %v6737 = vunpack.c.h.b16 %v6600
    %v6738 = vunpack.c.l.b16 %v6601
    %v6739 = vunpack.c.h.b16 %v6601
    %v6740 = vunpack.c.l.b16 %v6602
    %v6741 = vunpack.c.h.b16 %v6602
    %v6742 = vunpack.c.l.b16 %v6603
    %v6743 = vunpack.c.h.b16 %v6603
    %v6744 = vunpack.c.l.b16 %v6604
    %v6745 = vunpack.c.h.b16 %v6604
    %v6746 = vunpack.c.l.b16 %v6605
    %v6747 = vunpack.c.h.b16 %v6605
    %v6748 = vunpack.c.l.b16 %v6606
    %v6749 = vunpack.c.h.b16 %v6606
    %v6750 = vunpack.c.l.b16 %v6607
    %v6751 = vunpack.c.h.b16 %v6607
    %v6752 = vunpack.c.l.b16 %v6608
    %v6753 = vunpack.c.h.b16 %v6608
    %v6754 = vunpack.c.l.b16 %v6609
    %v6755 = vunpack.c.h.b16 %v6609
    %v6756 = vunpack.c.l.b16 %v6610
    %v6757 = vunpack.c.h.b16 %v6610
    %v6758 = vunpack.c.l.b16 %v6611
    %v6759 = vunpack.c.h.b16 %v6611
    %v6760 = vunpack.c.l.b16 %v6612
    %v6761 = vunpack.c.h.b16 %v6612
    %v6762 = vunpack.c.l.b16 %v6613
    %v6763 = vunpack.c.h.b16 %v6613
    %v6764 = vunpack.c.l.b16 %v6614
    %v6765 = vunpack.c.h.b16 %v6614
    %v6766 = vunpack.c.l.b16 %v6615
    %v6767 = vunpack.c.h.b16 %v6615
    %v6768 = vunpack.c.l.b16 %v6616
    %v6769 = vunpack.c.h.b16 %v6616
    %v6770 = vunpack.c.l.b16 %v6617
    %v6771 = vunpack.c.h.b16 %v6617
    %v6772 = vunpack.c.l.b16 %v6618
    %v6773 = vunpack.c.h.b16 %v6618
    %v6774 = vunpack.c.l.b16 %v6619
    %v6775 = vunpack.c.h.b16 %v6619
    %v6776 = vunpack.c.l.b16 %v6620
    %v6777 = vunpack.c.h.b16 %v6620
    %v6778 = vunpack.c.l.b16 %v6621
    %v6779 = vunpack.c.h.b16 %v6621
    %v6780 = vunpack.c.l.b16 %v6622
    %v6781 = vunpack.c.h.b16 %v6622
    %v6782 = vunpack.c.l.b16 %v6623
    %v6783 = vunpack.c.h.b16 %v6623
    %v6784 = vunpack.c.l.b16 %v6624
    %v6785 = vunpack.c.h.b16 %v6624
    %v6786 = vunpack.c.l.b16 %v6625
    %v6787 = vunpack.c.h.b16 %v6625
    %v6788 = vunpack.c.l.b16 %v6626
    %v6789 = vunpack.c.h.b16 %v6626
    %v6790 = vunpack.c.l.b16 %v6627
    %v6791 = vunpack.c.h.b16 %v6627
    %v6792 = vunpack.c.l.b16 %v6628
    %v6793 = vunpack.c.h.b16 %v6628
    %v6794 = vunpack.c.l.b16 %v6629
    %v6795 = vunpack.c.h.b16 %v6629
    %v6796 = vunpack.c.l.b16 %v6630
    %v6797 = vunpack.c.h.b16 %v6630
    %v6798 = vunpack.c.l.b16 %v6631
    %v6799 = vunpack.c.h.b16 %v6631
    %v6800 = vunpack.c.l.b16 %v6632
    %v6801 = vunpack.c.h.b16 %v6632
    %v6802 = vunpack.c.l.b16 %v6633
    %v6803 = vunpack.c.h.b16 %v6633
    %v6804 = vunpack.c.l.b16 %v6634
    %v6805 = vunpack.c.h.b16 %v6634
    %v6806 = vunpack.c.l.b16 %v6635
    %v6807 = vunpack.c.h.b16 %v6635
    %v6808 = vunpack.c.l.b16 %v6636
    %v6809 = vunpack.c.h.b16 %v6636
    %v6810 = vunpack.c.l.b16 %v6637
    %v6811 = vunpack.c.h.b16 %v6637
    %v6812 = vunpack.c.l.b16 %v6638
    %v6813 = vunpack.c.h.b16 %v6638
    %v6814 = vunpack.c.l.b16 %v6639
    %v6815 = vunpack.c.h.b16 %v6639
    %v6816 = vunpack.c.l.b16 %v6640
    %v6817 = vunpack.c.h.b16 %v6640
    %v6818 = vunpack.c.l.b16 %v6641
    %v6819 = vunpack.c.h.b16 %v6641
    %v6820 = vunpack.c.l.b16 %v6642
    %v6821 = vunpack.c.h.b16 %v6642
    %v6822 = vunpack.c.l.b16 %v6643
    %v6823 = vunpack.c.h.b16 %v6643
    %v6824 = vunpack.c.l.b16 %v6644
    %v6825 = vunpack.c.h.b16 %v6644
    %v6826 = vunpack.c.l.b16 %v6645
    %v6827 = vunpack.c.h.b16 %v6645
    %v6828 = vunpack.c.l.b16 %v6646
    %v6829 = vunpack.c.h.b16 %v6646
    %v6830 = vunpack.c.l.b16 %v6647
    %v6831 = vunpack.c.h.b16 %v6647
    %v6832 = vunpack.c.l.b16 %v6648
    %v6833 = vunpack.c.h.b16 %v6648
    %v6834 = vunpack.c.l.b16 %v6649
    %v6835 = vunpack.c.h.b16 %v6649
    %v6836 = vunpack.c.l.b16 %v6650
    %v6837 = vunpack.c.h.b16 %v6650
    %v6838 = vunpack.c.l.b16 %v6651
    %v6839 = vunpack.c.h.b16 %v6651
    %v6840 = vunpack.c.l.b16 %v6652
    %v6841 = vunpack.c.h.b16 %v6652
    %v6842 = vunpack.c.l.b16 %v6653
    %v6843 = vunpack.c.h.b16 %v6653
    %v6844 = vunpack.c.l.b16 %v6654
    %v6845 = vunpack.c.h.b16 %v6654
    %v6846 = vunpack.c.l.b16 %v6655
    %v6847 = vunpack.c.h.b16 %v6655
    %v6848 = vunpack.c.l.b16 %v6656
    %v6849 = vunpack.c.h.b16 %v6656
    %v6850 = vpack.c.b16 %v6726, %v6722
    %v6851 = vpack.c.b16 %v6727, %v6723
    %v6852 = vpack.c.b16 %v6728, %v6724
    %v6853 = vpack.c.b16 %v6729, %v6725
    %v6854 = vpack.c.b16 %v6734, %v6730
    %v6855 = vpack.c.b16 %v6735, %v6731
    %v6856 = vpack.c.b16 %v6736, %v6732
    %v6857 = vpack.c.b16 %v6737, %v6733
    %v6858 = vpack.c.b16 %v6742, %v6738
    %v6859 = vpack.c.b16 %v6743, %v6739
    %v6860 = vpack.c.b16 %v6744, %v6740
    %v6861 = vpack.c.b16 %v6745, %v6741
    %v6862 = vpack.c.b16 %v6750, %v6746
    %v6863 = vpack.c.b16 %v6751, %v6747
    %v6864 = vpack.c.b16 %v6752, %v6748
    %v6865 = vpack.c.b16 %v6753, %v6749
    %v6866 = vpack.c.b16 %v6758, %v6754
    %v6867 = vpack.c.b16 %v6759, %v6755
    %v6868 = vpack.c.b16 %v6760, %v6756
    %v6869 = vpack.c.b16 %v6761, %v6757
    %v6870 = vpack.c.b16 %v6766, %v6762
    %v6871 = vpack.c.b16 %v6767, %v6763
    %v6872 = vpack.c.b16 %v6768, %v6764
    %v6873 = vpack.c.b16 %v6769, %v6765
    %v6874 = vpack.c.b16 %v6774, %v6770
    %v6875 = vpack.c.b16 %v6775, %v6771
    %v6876 = vpack.c.b16 %v6776, %v6772
    %v6877 = vpack.c.b16 %v6777, %v6773
    %v6878 = vpack.c.b16 %v6782, %v6778
    %v6879 = vpack.c.b16 %v6783, %v6779
    %v6880 = vpack.c.b16 %v6784, %v6780
    %v6881 = vpack.c.b16 %v6785, %v6781
    %v6882 = vpack.c.b16 %v6790, %v6786
    %v6883 = vpack.c.b16 %v6791, %v6787
    %v6884 = vpack.c.b16 %v6792, %v6788
    %v6885 = vpack.c.b16 %v6793, %v6789
    %v6886 = vpack.c.b16 %v6798, %v6794
    %v6887 = vpack.c.b16 %v6799, %v6795
    %v6888 = vpack.c.b16 %v6800, %v6796
    %v6889 = vpack.c.b16 %v6801, %v6797
    %v6890 = vpack.c.b16 %v6806, %v6802
    %v6891 = vpack.c.b16 %v6807, %v6803
    %v6892 = vpack.c.b16 %v6808, %v6804
    %v6893 = vpack.c.b16 %v6809, %v6805
    %v6894 = vpack.c.b16 %v6814, %v6810
    %v6895 = vpack.c.b16 %v6815, %v6811
    %v6896 = vpack.c.b16 %v6816, %v6812
    %v6897 = vpack.c.b16 %v6817, %v6813
    %v6898 = vpack.c.b16 %v6822, %v6818
    %v6899 = vpack.c.b16 %v6823, %v6819
    %v6900 = vpack.c.b16 %v6824, %v6820
    %v6901 = vpack.c.b16 %v6825, %v6821
    %v6902 = vpack.c.b16 %v6830, %v6826
    %v6903 = vpack.c.b16 %v6831, %v6827
    %v6904 = vpack.c.b16 %v6832, %v6828
    %v6905 = vpack.c.b16 %v6833, %v6829
    %v6906 = vpack.c.b16 %v6838, %v6834
    %v6907 = vpack.c.b16 %v6839, %v6835
    %v6908 = vpack.c.b16 %v6840, %v6836
    %v6909 = vpack.c.b16 %v6841, %v6837
    %v6910 = vpack.c.b16 %v6846, %v6842
    %v6911 = vpack.c.b16 %v6847, %v6843
    %v6912 = vpack.c.b16 %v6848, %v6844
    %v6913 = vpack.c.b16 %v6849, %v6845
    %v6979 = vperm.slane %v6657, 0
    %v6980 = vperm.slane %v6657, 1
    %v6981 = vperm.slane %v6657, 2
    %v6982 = vperm.slane %v6657, 3
    %6987 = vmatpush.bf16.msra.mxu0 %v6878
    %6988 = vmatpush.bf16.msra.mxu0 %v6874
    %6989 = vmatpush.bf16.msra.mxu0 %v6870
    %6990 = vmatpush.bf16.msra.mxu0 %v6866
    %6991 = vmatpush.bf16.msra.mxu0 %v6862
    %6992 = vmatpush.bf16.msra.mxu0 %v6858
    %6993 = vmatpush.bf16.msra.mxu0 %v6854
    %6994 = vmatpush.bf16.msra.mxu0 %v6850
    %6995 = vmatmul.bf16.gmra.mxu0 %v6591
    %v6996 = vpop.f32.mrf.mxu0
    %v6997 = vadd.f32 %v6979, %v6996
    %v6998 = vpop.f32.mrf.mxu0
    %6999 = vdwg.mxu0
    %7000 = vmatpush.bf16.msra.mxu0 %v6910
    %7001 = vmatpush.bf16.msra.mxu0 %v6906
    %7002 = vmatpush.bf16.msra.mxu0 %v6902
    %7003 = vmatpush.bf16.msra.mxu0 %v6898
    %7004 = vmatpush.bf16.msra.mxu0 %v6894
    %7005 = vmatpush.bf16.msra.mxu0 %v6890
    %7006 = vmatpush.bf16.msra.mxu0 %v6886
    %7007 = vmatpush.bf16.msra.mxu0 %v6882
    %7008 = vmatmul.bf16.gmra.mxu0 %v6592
    %v7009 = vpop.f32.mrf.mxu0
    %v7010 = vadd.f32 %v6997, %v7009
    %v7011 = vpop.f32.mrf.mxu0
    %7012 = vdwg.mxu0
    %7013 = vmatpush.bf16.msra.mxu0 %v6879
    %7014 = vmatpush.bf16.msra.mxu0 %v6875
    %7015 = vmatpush.bf16.msra.mxu0 %v6871
    %7016 = vmatpush.bf16.msra.mxu0 %v6867
    %7017 = vmatpush.bf16.msra.mxu0 %v6863
    %7018 = vmatpush.bf16.msra.mxu0 %v6859
    %7019 = vmatpush.bf16.msra.mxu0 %v6855
    %7020 = vmatpush.bf16.msra.mxu0 %v6851
    %7021 = vmatmul.bf16.gmra.mxu0 %v6591
    %v7022 = vpop.f32.mrf.mxu0
    %v7023 = vadd.f32 %v6980, %v7022
    %v7024 = vpop.f32.mrf.mxu0
    %7025 = vdwg.mxu0
    %7026 = vmatpush.bf16.msra.mxu0 %v6911
    %7027 = vmatpush.bf16.msra.mxu0 %v6907
    %7028 = vmatpush.bf16.msra.mxu0 %v6903
    %7029 = vmatpush.bf16.msra.mxu0 %v6899
    %7030 = vmatpush.bf16.msra.mxu0 %v6895
    %7031 = vmatpush.bf16.msra.mxu0 %v6891
    %7032 = vmatpush.bf16.msra.mxu0 %v6887
    %7033 = vmatpush.bf16.msra.mxu0 %v6883
    %7034 = vmatmul.bf16.gmra.mxu0 %v6592
    %v7035 = vpop.f32.mrf.mxu0
    %v7036 = vadd.f32 %v7023, %v7035
    %v7037 = vpop.f32.mrf.mxu0
    %7038 = vdwg.mxu0
    %7039 = vmatpush.bf16.msra.mxu0 %v6880
    %7040 = vmatpush.bf16.msra.mxu0 %v6876
    %7041 = vmatpush.bf16.msra.mxu0 %v6872
    %7042 = vmatpush.bf16.msra.mxu0 %v6868
    %7043 = vmatpush.bf16.msra.mxu0 %v6864
    %7044 = vmatpush.bf16.msra.mxu0 %v6860
    %7045 = vmatpush.bf16.msra.mxu0 %v6856
    %7046 = vmatpush.bf16.msra.mxu0 %v6852
    %7047 = vmatmul.bf16.gmra.mxu0 %v6591
    %v7048 = vpop.f32.mrf.mxu0
    %v7049 = vadd.f32 %v6981, %v7048
    %v7050 = vpop.f32.mrf.mxu0
    %7051 = vdwg.mxu0
    %7052 = vmatpush.bf16.msra.mxu0 %v6912
    %7053 = vmatpush.bf16.msra.mxu0 %v6908
    %7054 = vmatpush.bf16.msra.mxu0 %v6904
    %7055 = vmatpush.bf16.msra.mxu0 %v6900
    %7056 = vmatpush.bf16.msra.mxu0 %v6896
    %7057 = vmatpush.bf16.msra.mxu0 %v6892
    %7058 = vmatpush.bf16.msra.mxu0 %v6888
    %7059 = vmatpush.bf16.msra.mxu0 %v6884
    %7060 = vmatmul.bf16.gmra.mxu0 %v6592
    %v7061 = vpop.f32.mrf.mxu0
    %v7062 = vadd.f32 %v7049, %v7061
    %v7063 = vpop.f32.mrf.mxu0
    %7064 = vdwg.mxu0
    %7065 = vmatpush.bf16.msra.mxu0 %v6881
    %7066 = vmatpush.bf16.msra.mxu0 %v6877
    %7067 = vmatpush.bf16.msra.mxu0 %v6873
    %7068 = vmatpush.bf16.msra.mxu0 %v6869
    %7069 = vmatpush.bf16.msra.mxu0 %v6865
    %7070 = vmatpush.bf16.msra.mxu0 %v6861
    %7071 = vmatpush.bf16.msra.mxu0 %v6857
    %7072 = vmatpush.bf16.msra.mxu0 %v6853
    %7073 = vmatmul.bf16.gmra.mxu0 %v6591
    %v7074 = vpop.f32.mrf.mxu0
    %v7075 = vadd.f32 %v6982, %v7074
    %v7076 = vpop.f32.mrf.mxu0
    %7077 = vdwg.mxu0
    %7078 = vmatpush.bf16.msra.mxu0 %v6913
    %7079 = vmatpush.bf16.msra.mxu0 %v6909
    %7080 = vmatpush.bf16.msra.mxu0 %v6905
    %7081 = vmatpush.bf16.msra.mxu0 %v6901
    %7082 = vmatpush.bf16.msra.mxu0 %v6897
    %7083 = vmatpush.bf16.msra.mxu0 %v6893
    %7084 = vmatpush.bf16.msra.mxu0 %v6889
    %7085 = vmatpush.bf16.msra.mxu0 %v6885
    %7086 = vmatmul.bf16.gmra.mxu0 %v6592
    %v7087 = vpop.f32.mrf.mxu0
    %v7088 = vadd.f32 %v7075, %v7087
    %v7089 = vpop.f32.mrf.mxu0
    %7090 = vdwg.mxu0
    %v7091 = vxor.u32 %v7010, 2147483648
    %v7092 = vxor.u32 %v7036, 2147483648
    %v7093 = vxor.u32 %v7062, 2147483648
    %v7094 = vmul.f32 %v7091, 1.442695
    %v7095 = vpow.pop %v7094
    %v7096 = vmul.f32 %v7092, 1.442695
    %v7097 = vpow.pop %v7096
    %v7098 = vmul.f32 %v7093, 1.442695
    %v7099 = vpow.pop %v7098
    %v7100 = vadd.f32 %v7095, 1.0
    %v7101 = vadd.f32 %v7097, 1.0
    %v7102 = vadd.f32 %v7099, 1.0
    %v7103 = vrcp.pop %v7100
    %v7104 = vmul.f32 %v7100, %v7103
    %v7105 = vsub.f32 1.0, %v7104
    %v7106 = vmul.f32 %v7103, %v7105
    %v7107 = vadd.f32 %v7103, %v7106
    %vm7108 = vweird.f32 %v7100
    %vm7109 = vweird.f32 %v7103
    %vm7110 = vmor %vm7108, %vm7109
    %v7111 = vsel %vm7110, %v7103, %v7107
    %v7112 = vand.u32 2147483647, %v7100
    %vm7113 = vcmp.eq.f32.partialorder %v7112, 8.507059e+37
    %v7114 = vand.u32 %v7100, 2147483648
    %v7115 = vor.u32 1.1754944e-38, %v7114
    %v7116 = vsel %vm7113, %v7115, %v7111
    %v7117 = vmul.f32 1.0, %v7116
    %v7118 = vrcp.pop %v7101
    %v7119 = vmul.f32 %v7101, %v7118
    %v7120 = vsub.f32 1.0, %v7119
    %v7121 = vmul.f32 %v7118, %v7120
    %v7122 = vadd.f32 %v7118, %v7121
    %vm7123 = vweird.f32 %v7101
    %vm7124 = vweird.f32 %v7118
    %vm7125 = vmor %vm7123, %vm7124
    %v7126 = vsel %vm7125, %v7118, %v7122
    %v7127 = vand.u32 2147483647, %v7101
    %vm7128 = vcmp.eq.f32.partialorder %v7127, 8.507059e+37
    %v7129 = vand.u32 %v7101, 2147483648
    %v7130 = vor.u32 1.1754944e-38, %v7129
    %v7131 = vsel %vm7128, %v7130, %v7126
    %v7132 = vmul.f32 1.0, %v7131
    %v7133 = vrcp.pop %v7102
    %v7134 = vmul.f32 %v7102, %v7133
    %v7135 = vsub.f32 1.0, %v7134
    %v7136 = vmul.f32 %v7133, %v7135
    %v7137 = vadd.f32 %v7133, %v7136
    %vm7138 = vweird.f32 %v7102
    %vm7139 = vweird.f32 %v7133
    %vm7140 = vmor %vm7138, %vm7139
    %v7141 = vsel %vm7140, %v7133, %v7137
    %v7142 = vand.u32 2147483647, %v7102
    %vm7143 = vcmp.eq.f32.partialorder %v7142, 8.507059e+37
    %v7144 = vand.u32 %v7102, 2147483648
    %v7145 = vor.u32 1.1754944e-38, %v7144
    %v7146 = vsel %vm7143, %v7145, %v7141
    %v7147 = vmul.f32 1.0, %v7146
    %v7148 = vtanh.pop %v7088
    %v7149 = vmul.f32 %v7132, %v6296
    %v7150 = vmul.f32 %v7117, %v7148
    %v7151 = vadd.f32 %v7149, %v7150
    %v7152 = vtanh.pop %v7151
    %v7153 = vmul.f32 %v7147, %v7152
    %7154 = vst [vmem:[#allocation3 + $0x7] sm:$0x1] %v7153
    %7155 = vst [vmem:[#allocation20] sm:$0x1] %v6590
    %7156 = vst [vmem:[#allocation20 + $0x1] sm:$0x1] %v7153
    %7157 = vst [vmem:[#allocation22] sm:$0x1] %v6586
    %7158 = vst [vmem:[#allocation22 + $0x1] sm:$0x1] %v7151
    %v7159 = vld [vmem:[#allocation3] sm:$0xff]
    %v7160 = vpack.c.bf16 %v7159, %v7159
    %v7161 = vld [vmem:[#allocation13] sm:$0xf]
    %v7162 = vld [vmem:[#allocation13 + $0x4] sm:$0xf]
    %v7163 = vld [vmem:[#allocation13 + $0x8] sm:$0xf]
    %v7164 = vld [vmem:[#allocation13 + $0xc] sm:$0xf]
    %v7165 = vld [vmem:[#allocation13 + $0x10] sm:$0xf]
    %v7166 = vld [vmem:[#allocation13 + $0x14] sm:$0xf]
    %v7167 = vld [vmem:[#allocation13 + $0x18] sm:$0xf]
    %v7168 = vld [vmem:[#allocation13 + $0x1c] sm:$0xf]
    %v7169 = vld [vmem:[#allocation13 + $0x20] sm:$0xf]
    %v7170 = vld [vmem:[#allocation13 + $0x24] sm:$0xf]
    %v7171 = vld [vmem:[#allocation13 + $0x28] sm:$0xf]
    %v7172 = vld [vmem:[#allocation13 + $0x2c] sm:$0xf]
    %v7173 = vld [vmem:[#allocation13 + $0x30] sm:$0xf]
    %v7174 = vld [vmem:[#allocation13 + $0x34] sm:$0xf]
    %v7175 = vld [vmem:[#allocation13 + $0x38] sm:$0xf]
    %v7176 = vld [vmem:[#allocation13 + $0x3c] sm:$0xf]
    %v7177 = vld [vmem:[#allocation15] sm:$0x1]
    %v7179 = vperm.slane %v7177, 0
    %v7197 = vunpack.c.l.b16 %v7161
    %v7198 = vunpack.c.l.b16 %v7162
    %v7199 = vunpack.c.l.b16 %v7163
    %v7200 = vunpack.c.l.b16 %v7164
    %v7201 = vunpack.c.l.b16 %v7165
    %v7202 = vunpack.c.l.b16 %v7166
    %v7203 = vunpack.c.l.b16 %v7167
    %v7204 = vunpack.c.l.b16 %v7168
    %v7205 = vunpack.c.l.b16 %v7169
    %v7206 = vunpack.c.l.b16 %v7170
    %v7207 = vunpack.c.l.b16 %v7171
    %v7208 = vunpack.c.l.b16 %v7172
    %v7209 = vunpack.c.l.b16 %v7173
    %v7210 = vunpack.c.l.b16 %v7174
    %v7211 = vunpack.c.l.b16 %v7175
    %v7212 = vunpack.c.l.b16 %v7176
    %v7213 = vpack.c.b16 %v7198, %v7197
    %v7214 = vpack.c.b16 %v7200, %v7199
    %v7215 = vpack.c.b16 %v7202, %v7201
    %v7216 = vpack.c.b16 %v7204, %v7203
    %v7217 = vpack.c.b16 %v7206, %v7205
    %v7218 = vpack.c.b16 %v7208, %v7207
    %v7219 = vpack.c.b16 %v7210, %v7209
    %v7220 = vpack.c.b16 %v7212, %v7211
    %7229 = vmatpush.bf16.msra.mxu0 %v7220
    %7230 = vmatpush.bf16.msra.mxu0 %v7219
    %7231 = vmatpush.bf16.msra.mxu0 %v7218
    %7232 = vmatpush.bf16.msra.mxu0 %v7217
    %7233 = vmatpush.bf16.msra.mxu0 %v7216
    %7234 = vmatpush.bf16.msra.mxu0 %v7215
    %7235 = vmatpush.bf16.msra.mxu0 %v7214
    %7236 = vmatpush.bf16.msra.mxu0 %v7213
    %7237 = vmatmul.bf16.gmra.mxu0 %v7160
    %v7238 = vpop.f32.mrf.mxu0
    %v7239 = vadd.f32 %v7179, %v7238
    %v7240 = vpop.f32.mrf.mxu0
    %7241 = vdwg.mxu0
    %v7242 = vpack.c.bf16 %v7239, %v7239
    %v7243 = vld [vmem:[#allocation16] sm:$0xf]
    %v7244 = vld [vmem:[#allocation16 + $0x4] sm:$0xf]
    %v7245 = vld [vmem:[#allocation16 + $0x8] sm:$0xf]
    %v7246 = vld [vmem:[#allocation16 + $0xc] sm:$0xf]
    %v7247 = vld [vmem:[#allocation16 + $0x10] sm:$0xf]
    %v7248 = vld [vmem:[#allocation16 + $0x14] sm:$0xf]
    %v7249 = vld [vmem:[#allocation16 + $0x18] sm:$0xf]
    %v7250 = vld [vmem:[#allocation16 + $0x1c] sm:$0xf]
    %v7251 = vld [vmem:[#allocation16 + $0x20] sm:$0xf]
    %v7252 = vld [vmem:[#allocation16 + $0x24] sm:$0xf]
    %v7253 = vld [vmem:[#allocation16 + $0x28] sm:$0xf]
    %v7254 = vld [vmem:[#allocation16 + $0x2c] sm:$0xf]
    %v7255 = vld [vmem:[#allocation16 + $0x30] sm:$0xf]
    %v7256 = vld [vmem:[#allocation16 + $0x34] sm:$0xf]
    %v7257 = vld [vmem:[#allocation16 + $0x38] sm:$0xf]
    %v7258 = vld [vmem:[#allocation16 + $0x3c] sm:$0xf]
    %v7259 = vld [vmem:[#allocation18] sm:$0x1]
    %v7261 = vperm.slane %v7259, 0
    %v7279 = vunpack.c.l.b16 %v7243
    %v7280 = vunpack.c.l.b16 %v7244
    %v7281 = vunpack.c.l.b16 %v7245
    %v7282 = vunpack.c.l.b16 %v7246
    %v7283 = vunpack.c.l.b16 %v7247
    %v7284 = vunpack.c.l.b16 %v7248
    %v7285 = vunpack.c.l.b16 %v7249
    %v7286 = vunpack.c.l.b16 %v7250
    %v7287 = vunpack.c.l.b16 %v7251
    %v7288 = vunpack.c.l.b16 %v7252
    %v7289 = vunpack.c.l.b16 %v7253
    %v7290 = vunpack.c.l.b16 %v7254
    %v7291 = vunpack.c.l.b16 %v7255
    %v7292 = vunpack.c.l.b16 %v7256
    %v7293 = vunpack.c.l.b16 %v7257
    %v7294 = vunpack.c.l.b16 %v7258
    %v7295 = vpack.c.b16 %v7280, %v7279
    %v7296 = vpack.c.b16 %v7282, %v7281
    %v7297 = vpack.c.b16 %v7284, %v7283
    %v7298 = vpack.c.b16 %v7286, %v7285
    %v7299 = vpack.c.b16 %v7288, %v7287
    %v7300 = vpack.c.b16 %v7290, %v7289
    %v7301 = vpack.c.b16 %v7292, %v7291
    %v7302 = vpack.c.b16 %v7294, %v7293
    %7311 = vmatpush.bf16.msra.mxu0 %v7302
    %7312 = vmatpush.bf16.msra.mxu0 %v7301
    %7313 = vmatpush.bf16.msra.mxu0 %v7300
    %7314 = vmatpush.bf16.msra.mxu0 %v7299
    %7315 = vmatpush.bf16.msra.mxu0 %v7298
    %7316 = vmatpush.bf16.msra.mxu0 %v7297
    %7317 = vmatpush.bf16.msra.mxu0 %v7296
    %7318 = vmatpush.bf16.msra.mxu0 %v7295
    %7319 = vmatmul.bf16.gmra.mxu0 %v7242
    %v7320 = vpop.f32.mrf.mxu0
    %v7321 = vadd.f32 %v7261, %v7320
    %v7322 = vpop.f32.mrf.mxu0
    %7323 = vdwg.mxu0
    %7324 = vst [vmem:[#allocation19] sm:$0xff] %v7321
    // Predicated region
    $region86: #{tpu_custom_call.1} parent=1 // pred_check
      _
    $region87: #{tpu_custom_call.1} parent=1 // pred_check_branch
      %7326 = sbr.rel (0) target = $region89
    $region88: #{tpu_custom_call.1} parent=1 // pred_region
      %7328 = vsyncadd [#allocation6], 0
      %s7330 = sshll.u32 [#allocation19], 4
      %s7331 = int_to_ptr.vmem [resolvable:$true] %s7330
      %s7332 = sshll.u32 %s12, 4
      %s7333 = int_to_ptr.hbm [resolvable:$true] %s7332
      %7335 = dma.vmem_to_hbm [thread:$0]  %s7331, 128, %s7333, [#allocation6]
    $region89: #{tpu_custom_call.1} parent=1 // pred_fallthru
      _
    // Predicated region
    $region90: #{tpu_custom_call.1} parent=1 // pred_check
      _
    $region91: #{tpu_custom_call.1} parent=1 // pred_check_branch
      %7337 = sbr.rel (0) target = $region93
    $region92: #{tpu_custom_call.1} parent=1 // pred_region
      %7339 = vsyncadd [#allocation21], 0
      %s7341 = sshll.u32 [#allocation20], 4
      %s7342 = int_to_ptr.vmem [resolvable:$true] %s7341
      %s7343 = sshll.u32 %s13, 4
      %s7344 = int_to_ptr.hbm [resolvable:$true] %s7343
      %7346 = dma.vmem_to_hbm [thread:$0]  %s7342, 32, %s7344, [#allocation21]
    $region93: #{tpu_custom_call.1} parent=1 // pred_fallthru
      _
    // Predicated region
    $region94: #{tpu_custom_call.1} parent=1 // pred_check
      _
    $region95: #{tpu_custom_call.1} parent=1 // pred_check_branch
      %7348 = sbr.rel (0) target = $region97
    $region96: #{tpu_custom_call.1} parent=1 // pred_region
      %7350 = vsyncadd [#allocation21], 0
      %s7352 = sshll.u32 [#allocation22], 4
      %s7353 = int_to_ptr.vmem [resolvable:$true] %s7352
      %s7354 = sshll.u32 %s14, 4
      %s7355 = int_to_ptr.hbm [resolvable:$true] %s7354
      %7357 = dma.vmem_to_hbm [thread:$0]  %s7353, 32, %s7355, [#allocation21]
    $region97: #{tpu_custom_call.1} parent=1 // pred_fallthru
      _
    // Predicated region
    $region98: #{tpu_custom_call.1} parent=1 // pred_check
      _
    $region99: #{tpu_custom_call.1} parent=1 // pred_check_branch
      %7359 = sbr.rel (0) target = $region101
    $region100: #{tpu_custom_call.1} parent=1 // pred_region
      %7361 = dma.done [#allocation6], 128
    $region101: #{tpu_custom_call.1} parent=1 // pred_fallthru
      _
    // Predicated region
    $region102: #{tpu_custom_call.1} parent=1 // pred_check
      _
    $region103: #{tpu_custom_call.1} parent=1 // pred_check_branch
      %7363 = sbr.rel (0) target = $region105
    $region104: #{tpu_custom_call.1} parent=1 // pred_region
      %7365 = dma.done [#allocation21], 32
    $region105: #{tpu_custom_call.1} parent=1 // pred_fallthru
      _
    // Predicated region
    $region106: #{tpu_custom_call.1} parent=1 // pred_check
      _
    $region107: #{tpu_custom_call.1} parent=1 // pred_check_branch
      %7367 = sbr.rel (0) target = $region109
    $region108: #{tpu_custom_call.1} parent=1 // pred_region
      %7369 = dma.done [#allocation21], 32
    $region109: #{tpu_custom_call.1} parent=1 // pred_fallthru
      _
    %7370 = vsyncpa [#allocation5], 1
    %7371 = vsyncpa [#allocation8], 1
    %7372 = vsyncpa [#allocation11], 1
    %7373 = vsyncpa [#allocation14], 1
    %7374 = vsyncpa [#allocation17], 1
    %7375 = vsyncpa [#allocation6], 1
    %7376 = vsyncpa [#allocation21], 1

</llo_original>
